<compile_context>
chip_gen: v7x
topology: tpu7x:2x2x1
jax: 0.10.0
libtpu: 0.0.40
codegen_flags: <defaults>
</compile_context>

<pallas_src>
import functools
import math

import jax
import jax.numpy as jnp
from jax.experimental import pallas as pl
from jax.experimental.pallas import tpu as pltpu


def _round_up(x, m):
    return (x + m - 1) // m * m


def make_positional_encoding_table(d_model, max_len=1000, dtype=jnp.float32):
    """Replicates the PyTorch __init__ buffer `pe` of shape (max_len, d_model)."""
    assert d_model % 2 == 0, "d_model must be even (matches the torch module)"
    position = jnp.arange(max_len, dtype=jnp.float32)[:, None]            # (L, 1)
    div_term = jnp.exp(
        jnp.arange(0, d_model, 2, dtype=jnp.float32)
        * (-math.log(10000.0) / d_model))                                  # (d/2,)
    angles = position * div_term                                           # (L, d/2)
    pe = jnp.zeros((max_len, d_model), jnp.float32)
    pe = pe.at[:, 0::2].set(jnp.sin(angles))
    pe = pe.at[:, 1::2].set(jnp.cos(angles))
    return pe.astype(dtype)


def prepare_pe_gather_tables(pe):
    """__init__ glue: pack the f32 pe buffer for the Pallas gather kernel.

    Returns (tbl, max_len) where tbl has shape (3, pack, k_pad, pack*d_model) in
    bf16:
      * 3 planes  = exact hi/mid/lo bf16 decomposition of the f32 table, so the
        bf16 MXU matmul reconstructs f32 values to ~1e-7.
      * pack      = 128 // d_model logical rows packed per 128-lane output row;
        plane/group (p, j) holds pe in lane block [j*d_model, (j+1)*d_model) and
        zeros elsewhere, which makes the one-hot matmul emit a lane-dense tile.
      * k_pad     = max_len rounded up to a multiple of 128 (zero rows).
    """
    max_len, d_model = pe.shape
    pack = 128 // d_model if (d_model <= 128 and 128 % d_model == 0) else 1
    k_pad = _round_up(max_len, 128)

    pe32 = pe.astype(jnp.float32)
    hi = pe32.astype(jnp.bfloat16)
    r1 = pe32 - hi.astype(jnp.float32)
    mid = r1.astype(jnp.bfloat16)
    r2 = r1 - mid.astype(jnp.float32)
    lo = r2.astype(jnp.bfloat16)
    planes = jnp.stack([hi, mid, lo], axis=0)                    # (3, L, d)
    planes = jnp.pad(planes, ((0, 0), (0, k_pad - max_len), (0, 0)))

    tbl = jnp.zeros((3, pack, k_pad, pack * d_model), jnp.bfloat16)
    for j in range(pack):                                        # host-side init glue
        tbl = tbl.at[:, j, :, j * d_model:(j + 1) * d_model].set(planes)
    return tbl, max_len


def _pe_gather_kernel(idx_ref, tbl_ref, out_ref, *, max_len):
    # idx_ref: (p_tile, pack) int32 in VMEM -- this tile's gather indices.
    # tbl_ref: (3, pack, k_pad, pack*d_model) bf16, VMEM-resident (constant
    #          index_map -> DMA'd once, reused across all grid steps).
    # out_ref: (p_tile, pack*d_model) f32, lane-dense packed output tile.
    n_planes, pack, k_pad, _ = tbl_ref.shape
    p_tile = out_ref.shape[0]

    # Clamp: VMEM refs have no runtime OOB check; keep bad indices in range.
    idx = jnp.clip(idx_ref[...], 0, max_len - 1)                 # (p_tile, pack)
    k_iota = jax.lax.broadcasted_iota(jnp.int32, (p_tile, k_pad), 1)

    acc = jnp.zeros(out_ref.shape, jnp.float32)
    for j in range(pack):            # static, short (<=4): one-hot reused over planes
        onehot = jnp.where(idx[:, j:j + 1] == k_iota, 1.0, 0.0)  # (p_tile, k_pad) f32
        onehot = onehot.astype(jnp.bfloat16)                     # exact 0/1 in bf16
        for p in range(n_planes):    # static (3): hi/mid/lo planes, f32 accumulation
            acc = acc + jnp.dot(onehot, tbl_ref[p, j],
                                preferred_element_type=jnp.float32)
    out_ref[...] = acc


def positional_encoding_forward(tables, x, *, p_tile=128):
    """forward(x) = pe[x]; x is an integer array of any shape."""
    tbl, max_len = tables
    n_planes, pack, k_pad, n_lane = tbl.shape
    d_model = n_lane // pack

    idx = x.reshape(-1).astype(jnp.int32)
    n = idx.shape[0]

    packed_rows = pl.cdiv(n, pack)
    n_packed = _round_up(packed_rows, p_tile)    # packed rows (pack logical rows each)
    n_pad = n_packed * pack                      # padded logical row count
    if n_pad != n:
        # Padded indices gather row 0; the extra output rows are sliced off below.
        idx = jnp.pad(idx, (0, n_pad - n))
    idx2 = idx.reshape(n_packed, pack)

    grid = (n_packed // p_tile,)
    kernel = functools.partial(_pe_gather_kernel, max_len=max_len)

    out = pl.pallas_call(
        kernel,
        out_shape=jax.ShapeDtypeStruct((n_packed, n_lane), jnp.float32),
        grid=grid,
        in_specs=[
            # Per-tile index block, pipelined alongside the output tiles.
            pl.BlockSpec((p_tile, pack), lambda i: (i, 0)),
            # Whole packed table as one block; constant index map keeps it
            # resident in VMEM across all grid steps (DMA'd once).
            # On v7x with much larger tables, add pipeline_mode=pl.Buffered(1)
            # here to single-buffer it against the smaller 64 MiB VMEM.
            pl.BlockSpec((n_planes, pack, k_pad, n_lane), lambda i: (0, 0, 0, 0)),
        ],
        out_specs=pl.BlockSpec((p_tile, n_lane), lambda i: (i, 0)),
        compiler_params=pltpu.CompilerParams(
            dimension_semantics=("parallel",),
            vmem_limit_bytes=32 * 1024 * 1024,
        ),
    )(idx2, tbl)

    # (n_packed, pack*d_model) -> (n_pad, d_model) is a byte-identical reshape;
    # then drop padding rows and restore the input batch shape.
    out = out.reshape(n_pad, d_model)[:n]
    return out.reshape(x.shape + (d_model,))


if __name__ == "__main__":
    key = jax.random.PRNGKey(0)

    d_model, max_len = 32, 1000
    batch, seq = 2, 8

    # __init__: build the sinusoidal buffer and the kernel's packed tables once.
    pe = make_positional_encoding_table(d_model, max_len)
    tables = prepare_pe_gather_tables(pe)

    # forward input: integer timestep / position indices.
    x = jax.random.randint(key, (batch, seq), 0, max_len, dtype=jnp.int32)

    out = jax.block_until_ready(positional_encoding_forward(tables, x))

    # Reference: PyTorch's forward is simply self.pe[x].
    ref = pe[x]
    assert out.shape == (batch, seq, d_model), out.shape
    max_err = float(jnp.max(jnp.abs(out - ref)))
    assert jnp.allclose(out, ref, atol=1e-5, rtol=1e-5), f"max abs err {max_err}"

    print("KERNEL_OK")
</pallas_src>

<mosaic_0001>
module attributes {stable_mosaic.version = 11 : i64} {
  func.func @_pe_gather_kernel(%arg0: i32, %arg1: memref<128x4xi32, #tpu.memory_space<vmem>>, %arg2: memref<3x4x1024x128xbf16, #tpu.memory_space<vmem>>, %arg3: memref<128x128xf32, #tpu.memory_space<vmem>>) attributes {dimension_semantics = [#tpu.dimension_semantics<parallel>], iteration_bounds = array<i64: 1>, scalar_prefetch = 0 : i64, scratch_operands = 0 : i64, tpu.core_type = #tpu.core_type<tc>, window_params = [{transform_indices = @transform_0, window_bounds = array<i64: 128, 4>}, {pipeline_mode = #tpu.pipeline_mode<synchronous>, transform_indices = @transform_1, window_bounds = array<i64: 3, 4, 1024, 128>}, {transform_indices = @transform_2, window_bounds = array<i64: 128, 128>}]} {
    %c0 = arith.constant 0 : index
    %c0_0 = arith.constant 0 : index
    %0 = vector.load %arg1[%c0, %c0_0] : memref<128x4xi32, #tpu.memory_space<vmem>>, vector<128x4xi32>
    %c0_i32 = arith.constant 0 : i32
    %c999_i32 = arith.constant 999 : i32
    %1 = vector.broadcast %c0_i32 : i32 to vector<128x4xi32>
    %2 = arith.maxsi %1, %0 : vector<128x4xi32>
    %3 = vector.broadcast %c999_i32 : i32 to vector<128x4xi32>
    %4 = arith.minsi %3, %2 : vector<128x4xi32>
    %5 = tpu.iota {dimensions = array<i32: 1>} : vector<128x1024xi32>
    %cst = arith.constant 0.000000e+00 : f32
    %6 = vector.broadcast %cst : f32 to vector<128x128xf32>
    %7 = vector.extract_strided_slice %4 {offsets = [0, 0], sizes = [128, 1], strides = [1, 1]} : vector<128x4xi32> to vector<128x1xi32>
    %8 = vector.broadcast %7 : vector<128x1xi32> to vector<128x1024xi32>
    %9 = arith.cmpi eq, %8, %5 : vector<128x1024xi32>
    %cst_1 = arith.constant 1.000000e+00 : f32
    %cst_2 = arith.constant 0.000000e+00 : f32
    %10 = vector.broadcast %cst_1 : f32 to vector<128x1024xf32>
    %11 = vector.broadcast %cst_2 : f32 to vector<128x1024xf32>
    %12 = arith.select %9, %10, %11 : vector<128x1024xi1>, vector<128x1024xf32>
    %13 = arith.truncf %12 : vector<128x1024xf32> to vector<128x1024xbf16>
    %c0_3 = arith.constant 0 : index
    %c0_4 = arith.constant 0 : index
    %c0_5 = arith.constant 0 : index
    %c0_6 = arith.constant 0 : index
    %14 = vector.load %arg2[%c0_3, %c0_4, %c0_5, %c0_6] : memref<3x4x1024x128xbf16, #tpu.memory_space<vmem>>, vector<1x1x1024x128xbf16>
    %15 = vector.shape_cast %14 : vector<1x1x1024x128xbf16> to vector<1024x128xbf16>
    %cst_7 = arith.constant dense<0.000000e+00> : vector<128x128xf32>
    %16 = tpu.matmul %13, %15, %cst_7 {dimension_numbers = #tpu.dot_dimension_numbers<[1], [0], [0], [1], [0, 0, 1, 1], [], []>} : vector<128x1024xbf16>, vector<1024x128xbf16>, vector<128x128xf32> -> vector<128x128xf32>
    %17 = arith.addf %6, %16 : vector<128x128xf32>
    %c1 = arith.constant 1 : index
    %c0_8 = arith.constant 0 : index
    %c0_9 = arith.constant 0 : index
    %c0_10 = arith.constant 0 : index
    %18 = vector.load %arg2[%c1, %c0_8, %c0_9, %c0_10] : memref<3x4x1024x128xbf16, #tpu.memory_space<vmem>>, vector<1x1x1024x128xbf16>
    %19 = vector.shape_cast %18 : vector<1x1x1024x128xbf16> to vector<1024x128xbf16>
    %cst_11 = arith.constant dense<0.000000e+00> : vector<128x128xf32>
    %20 = tpu.matmul %13, %19, %cst_11 {dimension_numbers = #tpu.dot_dimension_numbers<[1], [0], [0], [1], [0, 0, 1, 1], [], []>} : vector<128x1024xbf16>, vector<1024x128xbf16>, vector<128x128xf32> -> vector<128x128xf32>
    %21 = arith.addf %17, %20 : vector<128x128xf32>
    %c2 = arith.constant 2 : index
    %c0_12 = arith.constant 0 : index
    %c0_13 = arith.constant 0 : index
    %c0_14 = arith.constant 0 : index
    %22 = vector.load %arg2[%c2, %c0_12, %c0_13, %c0_14] : memref<3x4x1024x128xbf16, #tpu.memory_space<vmem>>, vector<1x1x1024x128xbf16>
    %23 = vector.shape_cast %22 : vector<1x1x1024x128xbf16> to vector<1024x128xbf16>
    %cst_15 = arith.constant dense<0.000000e+00> : vector<128x128xf32>
    %24 = tpu.matmul %13, %23, %cst_15 {dimension_numbers = #tpu.dot_dimension_numbers<[1], [0], [0], [1], [0, 0, 1, 1], [], []>} : vector<128x1024xbf16>, vector<1024x128xbf16>, vector<128x128xf32> -> vector<128x128xf32>
    %25 = arith.addf %21, %24 : vector<128x128xf32>
    %26 = vector.extract_strided_slice %4 {offsets = [0, 1], sizes = [128, 1], strides = [1, 1]} : vector<128x4xi32> to vector<128x1xi32>
    %27 = vector.broadcast %26 : vector<128x1xi32> to vector<128x1024xi32>
    %28 = arith.cmpi eq, %27, %5 : vector<128x1024xi32>
    %cst_16 = arith.constant 1.000000e+00 : f32
    %cst_17 = arith.constant 0.000000e+00 : f32
    %29 = vector.broadcast %cst_16 : f32 to vector<128x1024xf32>
    %30 = vector.broadcast %cst_17 : f32 to vector<128x1024xf32>
    %31 = arith.select %28, %29, %30 : vector<128x1024xi1>, vector<128x1024xf32>
    %32 = arith.truncf %31 : vector<128x1024xf32> to vector<128x1024xbf16>
    %c0_18 = arith.constant 0 : index
    %c1_19 = arith.constant 1 : index
    %c0_20 = arith.constant 0 : index
    %c0_21 = arith.constant 0 : index
    %33 = vector.load %arg2[%c0_18, %c1_19, %c0_20, %c0_21] : memref<3x4x1024x128xbf16, #tpu.memory_space<vmem>>, vector<1x1x1024x128xbf16>
    %34 = vector.shape_cast %33 : vector<1x1x1024x128xbf16> to vector<1024x128xbf16>
    %cst_22 = arith.constant dense<0.000000e+00> : vector<128x128xf32>
    %35 = tpu.matmul %32, %34, %cst_22 {dimension_numbers = #tpu.dot_dimension_numbers<[1], [0], [0], [1], [0, 0, 1, 1], [], []>} : vector<128x1024xbf16>, vector<1024x128xbf16>, vector<128x128xf32> -> vector<128x128xf32>
    %36 = arith.addf %25, %35 : vector<128x128xf32>
    %c1_23 = arith.constant 1 : index
    %c1_24 = arith.constant 1 : index
    %c0_25 = arith.constant 0 : index
    %c0_26 = arith.constant 0 : index
    %37 = vector.load %arg2[%c1_23, %c1_24, %c0_25, %c0_26] : memref<3x4x1024x128xbf16, #tpu.memory_space<vmem>>, vector<1x1x1024x128xbf16>
    %38 = vector.shape_cast %37 : vector<1x1x1024x128xbf16> to vector<1024x128xbf16>
    %cst_27 = arith.constant dense<0.000000e+00> : vector<128x128xf32>
    %39 = tpu.matmul %32, %38, %cst_27 {dimension_numbers = #tpu.dot_dimension_numbers<[1], [0], [0], [1], [0, 0, 1, 1], [], []>} : vector<128x1024xbf16>, vector<1024x128xbf16>, vector<128x128xf32> -> vector<128x128xf32>
    %40 = arith.addf %36, %39 : vector<128x128xf32>
    %c2_28 = arith.constant 2 : index
    %c1_29 = arith.constant 1 : index
    %c0_30 = arith.constant 0 : index
    %c0_31 = arith.constant 0 : index
    %41 = vector.load %arg2[%c2_28, %c1_29, %c0_30, %c0_31] : memref<3x4x1024x128xbf16, #tpu.memory_space<vmem>>, vector<1x1x1024x128xbf16>
    %42 = vector.shape_cast %41 : vector<1x1x1024x128xbf16> to vector<1024x128xbf16>
    %cst_32 = arith.constant dense<0.000000e+00> : vector<128x128xf32>
    %43 = tpu.matmul %32, %42, %cst_32 {dimension_numbers = #tpu.dot_dimension_numbers<[1], [0], [0], [1], [0, 0, 1, 1], [], []>} : vector<128x1024xbf16>, vector<1024x128xbf16>, vector<128x128xf32> -> vector<128x128xf32>
    %44 = arith.addf %40, %43 : vector<128x128xf32>
    %45 = vector.extract_strided_slice %4 {offsets = [0, 2], sizes = [128, 1], strides = [1, 1]} : vector<128x4xi32> to vector<128x1xi32>
    %46 = vector.broadcast %45 : vector<128x1xi32> to vector<128x1024xi32>
    %47 = arith.cmpi eq, %46, %5 : vector<128x1024xi32>
    %cst_33 = arith.constant 1.000000e+00 : f32
    %cst_34 = arith.constant 0.000000e+00 : f32
    %48 = vector.broadcast %cst_33 : f32 to vector<128x1024xf32>
    %49 = vector.broadcast %cst_34 : f32 to vector<128x1024xf32>
    %50 = arith.select %47, %48, %49 : vector<128x1024xi1>, vector<128x1024xf32>
    %51 = arith.truncf %50 : vector<128x1024xf32> to vector<128x1024xbf16>
    %c0_35 = arith.constant 0 : index
    %c2_36 = arith.constant 2 : index
    %c0_37 = arith.constant 0 : index
    %c0_38 = arith.constant 0 : index
    %52 = vector.load %arg2[%c0_35, %c2_36, %c0_37, %c0_38] : memref<3x4x1024x128xbf16, #tpu.memory_space<vmem>>, vector<1x1x1024x128xbf16>
    %53 = vector.shape_cast %52 : vector<1x1x1024x128xbf16> to vector<1024x128xbf16>
    %cst_39 = arith.constant dense<0.000000e+00> : vector<128x128xf32>
    %54 = tpu.matmul %51, %53, %cst_39 {dimension_numbers = #tpu.dot_dimension_numbers<[1], [0], [0], [1], [0, 0, 1, 1], [], []>} : vector<128x1024xbf16>, vector<1024x128xbf16>, vector<128x128xf32> -> vector<128x128xf32>
    %55 = arith.addf %44, %54 : vector<128x128xf32>
    %c1_40 = arith.constant 1 : index
    %c2_41 = arith.constant 2 : index
    %c0_42 = arith.constant 0 : index
    %c0_43 = arith.constant 0 : index
    %56 = vector.load %arg2[%c1_40, %c2_41, %c0_42, %c0_43] : memref<3x4x1024x128xbf16, #tpu.memory_space<vmem>>, vector<1x1x1024x128xbf16>
    %57 = vector.shape_cast %56 : vector<1x1x1024x128xbf16> to vector<1024x128xbf16>
    %cst_44 = arith.constant dense<0.000000e+00> : vector<128x128xf32>
    %58 = tpu.matmul %51, %57, %cst_44 {dimension_numbers = #tpu.dot_dimension_numbers<[1], [0], [0], [1], [0, 0, 1, 1], [], []>} : vector<128x1024xbf16>, vector<1024x128xbf16>, vector<128x128xf32> -> vector<128x128xf32>
    %59 = arith.addf %55, %58 : vector<128x128xf32>
    %c2_45 = arith.constant 2 : index
    %c2_46 = arith.constant 2 : index
    %c0_47 = arith.constant 0 : index
    %c0_48 = arith.constant 0 : index
    %60 = vector.load %arg2[%c2_45, %c2_46, %c0_47, %c0_48] : memref<3x4x1024x128xbf16, #tpu.memory_space<vmem>>, vector<1x1x1024x128xbf16>
    %61 = vector.shape_cast %60 : vector<1x1x1024x128xbf16> to vector<1024x128xbf16>
    %cst_49 = arith.constant dense<0.000000e+00> : vector<128x128xf32>
    %62 = tpu.matmul %51, %61, %cst_49 {dimension_numbers = #tpu.dot_dimension_numbers<[1], [0], [0], [1], [0, 0, 1, 1], [], []>} : vector<128x1024xbf16>, vector<1024x128xbf16>, vector<128x128xf32> -> vector<128x128xf32>
    %63 = arith.addf %59, %62 : vector<128x128xf32>
    %64 = vector.extract_strided_slice %4 {offsets = [0, 3], sizes = [128, 1], strides = [1, 1]} : vector<128x4xi32> to vector<128x1xi32>
    %65 = vector.broadcast %64 : vector<128x1xi32> to vector<128x1024xi32>
    %66 = arith.cmpi eq, %65, %5 : vector<128x1024xi32>
    %cst_50 = arith.constant 1.000000e+00 : f32
    %cst_51 = arith.constant 0.000000e+00 : f32
    %67 = vector.broadcast %cst_50 : f32 to vector<128x1024xf32>
    %68 = vector.broadcast %cst_51 : f32 to vector<128x1024xf32>
    %69 = arith.select %66, %67, %68 : vector<128x1024xi1>, vector<128x1024xf32>
    %70 = arith.truncf %69 : vector<128x1024xf32> to vector<128x1024xbf16>
    %c0_52 = arith.constant 0 : index
    %c3 = arith.constant 3 : index
    %c0_53 = arith.constant 0 : index
    %c0_54 = arith.constant 0 : index
    %71 = vector.load %arg2[%c0_52, %c3, %c0_53, %c0_54] : memref<3x4x1024x128xbf16, #tpu.memory_space<vmem>>, vector<1x1x1024x128xbf16>
    %72 = vector.shape_cast %71 : vector<1x1x1024x128xbf16> to vector<1024x128xbf16>
    %cst_55 = arith.constant dense<0.000000e+00> : vector<128x128xf32>
    %73 = tpu.matmul %70, %72, %cst_55 {dimension_numbers = #tpu.dot_dimension_numbers<[1], [0], [0], [1], [0, 0, 1, 1], [], []>} : vector<128x1024xbf16>, vector<1024x128xbf16>, vector<128x128xf32> -> vector<128x128xf32>
    %74 = arith.addf %63, %73 : vector<128x128xf32>
    %c1_56 = arith.constant 1 : index
    %c3_57 = arith.constant 3 : index
    %c0_58 = arith.constant 0 : index
    %c0_59 = arith.constant 0 : index
    %75 = vector.load %arg2[%c1_56, %c3_57, %c0_58, %c0_59] : memref<3x4x1024x128xbf16, #tpu.memory_space<vmem>>, vector<1x1x1024x128xbf16>
    %76 = vector.shape_cast %75 : vector<1x1x1024x128xbf16> to vector<1024x128xbf16>
    %cst_60 = arith.constant dense<0.000000e+00> : vector<128x128xf32>
    %77 = tpu.matmul %70, %76, %cst_60 {dimension_numbers = #tpu.dot_dimension_numbers<[1], [0], [0], [1], [0, 0, 1, 1], [], []>} : vector<128x1024xbf16>, vector<1024x128xbf16>, vector<128x128xf32> -> vector<128x128xf32>
    %78 = arith.addf %74, %77 : vector<128x128xf32>
    %c2_61 = arith.constant 2 : index
    %c3_62 = arith.constant 3 : index
    %c0_63 = arith.constant 0 : index
    %c0_64 = arith.constant 0 : index
    %79 = vector.load %arg2[%c2_61, %c3_62, %c0_63, %c0_64] : memref<3x4x1024x128xbf16, #tpu.memory_space<vmem>>, vector<1x1x1024x128xbf16>
    %80 = vector.shape_cast %79 : vector<1x1x1024x128xbf16> to vector<1024x128xbf16>
    %cst_65 = arith.constant dense<0.000000e+00> : vector<128x128xf32>
    %81 = tpu.matmul %70, %80, %cst_65 {dimension_numbers = #tpu.dot_dimension_numbers<[1], [0], [0], [1], [0, 0, 1, 1], [], []>} : vector<128x1024xbf16>, vector<1024x128xbf16>, vector<128x128xf32> -> vector<128x128xf32>
    %82 = arith.addf %78, %81 : vector<128x128xf32>
    %c0_66 = arith.constant 0 : index
    %c0_67 = arith.constant 0 : index
    %83 = vector.load %arg3[%c0_66, %c0_67] : memref<128x128xf32, #tpu.memory_space<vmem>>, vector<128x128xf32>
    tpu.vector_store %arg3[%c0_66, %c0_67], %82 {strides = array<i32>} : memref<128x128xf32, #tpu.memory_space<vmem>>, vector<128x128xf32>,
    return
  }
  func.func @transform_0(%arg0: i32) -> (i32, i32) {
    %c0_i32 = arith.constant 0 : i32
    %c0_i32_0 = arith.constant 0 : i32
    return %arg0, %c0_i32 : i32, i32
  }
  func.func @transform_1(%arg0: i32) -> (i32, i32, i32, i32) {
    %c0_i32 = arith.constant 0 : i32
    %c0_i32_0 = arith.constant 0 : i32
    %c0_i32_1 = arith.constant 0 : i32
    %c0_i32_2 = arith.constant 0 : i32
    %c0_i32_3 = arith.constant 0 : i32
    return %c0_i32, %c0_i32_0, %c0_i32_1, %c0_i32_2 : i32, i32, i32, i32
  }
  func.func @transform_2(%arg0: i32) -> (i32, i32) {
    %c0_i32 = arith.constant 0 : i32
    %c0_i32_0 = arith.constant 0 : i32
    return %arg0, %c0_i32 : i32, i32
  }
}

</mosaic_0001>

<llo_original>
// kernel: tpu_custom_call.1
$region0: #{tpu_custom_call.1}
  #allocation0 [shape = 'u32[]', space=smem, size = 0x4, offset = 0x4, fixed_abs, tag = 'smem constant byte address 0x4 - core index']
  #allocation1 [shape = 'u32[144,128]{1,0:T(1,128)}', space=vmem, size = 0x12000, scoped, tag = 'internal scratch']
  %s0 = inlined_call_operand.vmem [shape: s32[128,4], index: 0, kind: input, shape index: {}]
  %s1 = inlined_call_operand.hbm [shape: bf16[3,4,1024,128], index: 1, kind: input, shape index: {}]
  %s2 = inlined_call_operand.hbm [shape: f32[128,128], index: 2, kind: output, shape index: {}]
  %s3 = sld [smem:[#allocation0]]
  $region22: #{tpu_custom_call.1} parent=0
    _
  %s5 = ssub.s32 1, %s3
  %s6 = scalar_select 0, %s5, %s3
  $region1: #{tpu_custom_call.1} parent=0
    #allocation2 [shape = 'u8[3145728]{0}', space=vmem, size = 0x300000, scoped, tag = 'input window, operand 1, single buffered']
    #allocation3 [shape = 's32[1]{0}', space=sflag, size = 0x4, scoped, tag = 'scoped memory for tpu_custom_call.1']
    #allocation4 [shape = 's32[1]{0}', space=sflag, size = 0x4, scoped, tag = 'scoped memory for tpu_custom_call.1']
    #allocation5 [shape = 'u8[65536]{0}', space=vmem, size = 0x10000, scoped, tag = 'output window, operand 0, single buffered']
    %7 = vsyncpa [#allocation3], 0
    %8 = vsyncpa [#allocation4], 0
    // Predicated region
    $region2: #{tpu_custom_call.1} parent=1 // pred_check
      _
    $region3: #{tpu_custom_call.1} parent=1 // pred_check_branch
      %10 = sbr.rel (0) target = $region5
    $region4: #{tpu_custom_call.1} parent=1 // pred_region
      _
    $region5: #{tpu_custom_call.1} parent=1 // pred_fallthru
      _
    // Predicated region
    $region6: #{tpu_custom_call.1} parent=1 // pred_check
      _
    $region7: #{tpu_custom_call.1} parent=1 // pred_check_branch
      %12 = sbr.rel (0) target = $region9
    $region8: #{tpu_custom_call.1} parent=1 // pred_region
      %s14 = ssub.s32 98304, 98304
      %15 = vsyncadd [#allocation3], %s14
      %s16 = sshll.u32 [#allocation2], 4
      %s17 = int_to_ptr.vmem [resolvable:$true] %s16
      %22 = dma.hbm_to_vmem [thread:$0]  %s1, 98304, %s17, [#allocation3], 64, 64, 4
    $region9: #{tpu_custom_call.1} parent=1 // pred_fallthru
      _
    // Predicated region
    $region10: #{tpu_custom_call.1} parent=1 // pred_check
      _
    $region11: #{tpu_custom_call.1} parent=1 // pred_check_branch
      %24 = sbr.rel (0) target = $region13
    $region12: #{tpu_custom_call.1} parent=1 // pred_region
      %25 = dma.done [#allocation3], 98304
    $region13: #{tpu_custom_call.1} parent=1 // pred_fallthru
      _
    %v27 = vld [vmem:[%s0] sm:$0xff]
    %v28 = vld [vmem:[%s0 + $0x8] sm:$0xff]
    %v29 = vld [vmem:[%s0 + $0x10] sm:$0xff]
    %v30 = vld [vmem:[%s0 + $0x18] sm:$0xff]
    %v31 = vld [vmem:[%s0 + $0x20] sm:$0xff]
    %v32 = vld [vmem:[%s0 + $0x28] sm:$0xff]
    %v33 = vld [vmem:[%s0 + $0x30] sm:$0xff]
    %v34 = vld [vmem:[%s0 + $0x38] sm:$0xff]
    %v35 = vld [vmem:[%s0 + $0x40] sm:$0xff]
    %v36 = vld [vmem:[%s0 + $0x48] sm:$0xff]
    %v37 = vld [vmem:[%s0 + $0x50] sm:$0xff]
    %v38 = vld [vmem:[%s0 + $0x58] sm:$0xff]
    %v39 = vld [vmem:[%s0 + $0x60] sm:$0xff]
    %v40 = vld [vmem:[%s0 + $0x68] sm:$0xff]
    %v41 = vld [vmem:[%s0 + $0x70] sm:$0xff]
    %v42 = vld [vmem:[%s0 + $0x78] sm:$0xff]
    %vm43 = vcmp.gt.s32.totalorder %v27, 0
    %v44 = vsel %vm43, %v27, 0
    %vm45 = vcmp.gt.s32.totalorder %v28, 0
    %v46 = vsel %vm45, %v28, 0
    %vm47 = vcmp.gt.s32.totalorder %v29, 0
    %v48 = vsel %vm47, %v29, 0
    %vm49 = vcmp.gt.s32.totalorder %v30, 0
    %v50 = vsel %vm49, %v30, 0
    %vm51 = vcmp.gt.s32.totalorder %v31, 0
    %v52 = vsel %vm51, %v31, 0
    %vm53 = vcmp.gt.s32.totalorder %v32, 0
    %v54 = vsel %vm53, %v32, 0
    %vm55 = vcmp.gt.s32.totalorder %v33, 0
    %v56 = vsel %vm55, %v33, 0
    %vm57 = vcmp.gt.s32.totalorder %v34, 0
    %v58 = vsel %vm57, %v34, 0
    %vm59 = vcmp.gt.s32.totalorder %v35, 0
    %v60 = vsel %vm59, %v35, 0
    %vm61 = vcmp.gt.s32.totalorder %v36, 0
    %v62 = vsel %vm61, %v36, 0
    %vm63 = vcmp.gt.s32.totalorder %v37, 0
    %v64 = vsel %vm63, %v37, 0
    %vm65 = vcmp.gt.s32.totalorder %v38, 0
    %v66 = vsel %vm65, %v38, 0
    %vm67 = vcmp.gt.s32.totalorder %v39, 0
    %v68 = vsel %vm67, %v39, 0
    %vm69 = vcmp.gt.s32.totalorder %v40, 0
    %v70 = vsel %vm69, %v40, 0
    %vm71 = vcmp.gt.s32.totalorder %v41, 0
    %v72 = vsel %vm71, %v41, 0
    %vm73 = vcmp.gt.s32.totalorder %v42, 0
    %v74 = vsel %vm73, %v42, 0
    %vm75 = vcmp.lt.s32.totalorder %v44, 999
    %v76 = vsel %vm75, %v44, 999
    %vm77 = vcmp.lt.s32.totalorder %v46, 999
    %v78 = vsel %vm77, %v46, 999
    %vm79 = vcmp.lt.s32.totalorder %v48, 999
    %v80 = vsel %vm79, %v48, 999
    %vm81 = vcmp.lt.s32.totalorder %v50, 999
    %v82 = vsel %vm81, %v50, 999
    %vm83 = vcmp.lt.s32.totalorder %v52, 999
    %v84 = vsel %vm83, %v52, 999
    %vm85 = vcmp.lt.s32.totalorder %v54, 999
    %v86 = vsel %vm85, %v54, 999
    %vm87 = vcmp.lt.s32.totalorder %v56, 999
    %v88 = vsel %vm87, %v56, 999
    %vm89 = vcmp.lt.s32.totalorder %v58, 999
    %v90 = vsel %vm89, %v58, 999
    %vm91 = vcmp.lt.s32.totalorder %v60, 999
    %v92 = vsel %vm91, %v60, 999
    %vm93 = vcmp.lt.s32.totalorder %v62, 999
    %v94 = vsel %vm93, %v62, 999
    %vm95 = vcmp.lt.s32.totalorder %v64, 999
    %v96 = vsel %vm95, %v64, 999
    %vm97 = vcmp.lt.s32.totalorder %v66, 999
    %v98 = vsel %vm97, %v66, 999
    %vm99 = vcmp.lt.s32.totalorder %v68, 999
    %v100 = vsel %vm99, %v68, 999
    %vm101 = vcmp.lt.s32.totalorder %v70, 999
    %v102 = vsel %vm101, %v70, 999
    %vm103 = vcmp.lt.s32.totalorder %v72, 999
    %v104 = vsel %vm103, %v72, 999
    %vm105 = vcmp.lt.s32.totalorder %v74, 999
    %v106 = vsel %vm105, %v74, 999
    %v107 = vlaneseq
    %v108 = vand.u32 %v107, 127
    %v109 = vadd.s32 %v108, 128
    %v110 = vadd.s32 %v108, 256
    %v111 = vadd.s32 %v108, 384
    %v112 = vadd.s32 %v108, 512
    %v113 = vadd.s32 %v108, 640
    %v114 = vadd.s32 %v108, 768
    %v115 = vadd.s32 %v108, 896
    %116 = vset.pattern.permute.xlu0 0
    %117 = vperm.xlu0 %116, %v76
    %v118 = vpop.permute.xlu0 %117
    %119 = vset.pattern.permute.xlu0 0
    %120 = vperm.xlu0 %119, %v78
    %v121 = vpop.permute.xlu0 %120
    %122 = vset.pattern.permute.xlu0 0
    %123 = vperm.xlu0 %122, %v80
    %v124 = vpop.permute.xlu0 %123
    %125 = vset.pattern.permute.xlu0 0
    %126 = vperm.xlu0 %125, %v82
    %v127 = vpop.permute.xlu0 %126
    %128 = vset.pattern.permute.xlu0 0
    %129 = vperm.xlu0 %128, %v84
    %v130 = vpop.permute.xlu0 %129
    %131 = vset.pattern.permute.xlu0 0
    %132 = vperm.xlu0 %131, %v86
    %v133 = vpop.permute.xlu0 %132
    %134 = vset.pattern.permute.xlu0 0
    %135 = vperm.xlu0 %134, %v88
    %v136 = vpop.permute.xlu0 %135
    %137 = vset.pattern.permute.xlu0 0
    %138 = vperm.xlu0 %137, %v90
    %v139 = vpop.permute.xlu0 %138
    %140 = vset.pattern.permute.xlu0 0
    %141 = vperm.xlu0 %140, %v92
    %v142 = vpop.permute.xlu0 %141
    %143 = vset.pattern.permute.xlu0 0
    %144 = vperm.xlu0 %143, %v94
    %v145 = vpop.permute.xlu0 %144
    %146 = vset.pattern.permute.xlu0 0
    %147 = vperm.xlu0 %146, %v96
    %v148 = vpop.permute.xlu0 %147
    %149 = vset.pattern.permute.xlu0 0
    %150 = vperm.xlu0 %149, %v98
    %v151 = vpop.permute.xlu0 %150
    %152 = vset.pattern.permute.xlu0 0
    %153 = vperm.xlu0 %152, %v100
    %v154 = vpop.permute.xlu0 %153
    %155 = vset.pattern.permute.xlu0 0
    %156 = vperm.xlu0 %155, %v102
    %v157 = vpop.permute.xlu0 %156
    %158 = vset.pattern.permute.xlu0 0
    %159 = vperm.xlu0 %158, %v104
    %v160 = vpop.permute.xlu0 %159
    %161 = vset.pattern.permute.xlu0 0
    %162 = vperm.xlu0 %161, %v106
    %v163 = vpop.permute.xlu0 %162
    %vm164 = vcmp.eq.s32.totalorder %v118, %v108
    %vm165 = vcmp.eq.s32.totalorder %v118, %v109
    %vm166 = vcmp.eq.s32.totalorder %v118, %v110
    %vm167 = vcmp.eq.s32.totalorder %v118, %v111
    %vm168 = vcmp.eq.s32.totalorder %v118, %v112
    %vm169 = vcmp.eq.s32.totalorder %v118, %v113
    %vm170 = vcmp.eq.s32.totalorder %v118, %v114
    %vm171 = vcmp.eq.s32.totalorder %v118, %v115
    %vm172 = vcmp.eq.s32.totalorder %v121, %v108
    %vm173 = vcmp.eq.s32.totalorder %v121, %v109
    %vm174 = vcmp.eq.s32.totalorder %v121, %v110
    %vm175 = vcmp.eq.s32.totalorder %v121, %v111
    %vm176 = vcmp.eq.s32.totalorder %v121, %v112
    %vm177 = vcmp.eq.s32.totalorder %v121, %v113
    %vm178 = vcmp.eq.s32.totalorder %v121, %v114
    %vm179 = vcmp.eq.s32.totalorder %v121, %v115
    %vm180 = vcmp.eq.s32.totalorder %v124, %v108
    %vm181 = vcmp.eq.s32.totalorder %v124, %v109
    %vm182 = vcmp.eq.s32.totalorder %v124, %v110
    %vm183 = vcmp.eq.s32.totalorder %v124, %v111
    %vm184 = vcmp.eq.s32.totalorder %v124, %v112
    %vm185 = vcmp.eq.s32.totalorder %v124, %v113
    %vm186 = vcmp.eq.s32.totalorder %v124, %v114
    %vm187 = vcmp.eq.s32.totalorder %v124, %v115
    %vm188 = vcmp.eq.s32.totalorder %v127, %v108
    %vm189 = vcmp.eq.s32.totalorder %v127, %v109
    %vm190 = vcmp.eq.s32.totalorder %v127, %v110
    %vm191 = vcmp.eq.s32.totalorder %v127, %v111
    %vm192 = vcmp.eq.s32.totalorder %v127, %v112
    %vm193 = vcmp.eq.s32.totalorder %v127, %v113
    %vm194 = vcmp.eq.s32.totalorder %v127, %v114
    %vm195 = vcmp.eq.s32.totalorder %v127, %v115
    %vm196 = vcmp.eq.s32.totalorder %v130, %v108
    %vm197 = vcmp.eq.s32.totalorder %v130, %v109
    %vm198 = vcmp.eq.s32.totalorder %v130, %v110
    %vm199 = vcmp.eq.s32.totalorder %v130, %v111
    %vm200 = vcmp.eq.s32.totalorder %v130, %v112
    %vm201 = vcmp.eq.s32.totalorder %v130, %v113
    %vm202 = vcmp.eq.s32.totalorder %v130, %v114
    %vm203 = vcmp.eq.s32.totalorder %v130, %v115
    %vm204 = vcmp.eq.s32.totalorder %v133, %v108
    %vm205 = vcmp.eq.s32.totalorder %v133, %v109
    %vm206 = vcmp.eq.s32.totalorder %v133, %v110
    %vm207 = vcmp.eq.s32.totalorder %v133, %v111
    %vm208 = vcmp.eq.s32.totalorder %v133, %v112
    %vm209 = vcmp.eq.s32.totalorder %v133, %v113
    %vm210 = vcmp.eq.s32.totalorder %v133, %v114
    %vm211 = vcmp.eq.s32.totalorder %v133, %v115
    %vm212 = vcmp.eq.s32.totalorder %v136, %v108
    %vm213 = vcmp.eq.s32.totalorder %v136, %v109
    %vm214 = vcmp.eq.s32.totalorder %v136, %v110
    %vm215 = vcmp.eq.s32.totalorder %v136, %v111
    %vm216 = vcmp.eq.s32.totalorder %v136, %v112
    %vm217 = vcmp.eq.s32.totalorder %v136, %v113
    %vm218 = vcmp.eq.s32.totalorder %v136, %v114
    %vm219 = vcmp.eq.s32.totalorder %v136, %v115
    %vm220 = vcmp.eq.s32.totalorder %v139, %v108
    %vm221 = vcmp.eq.s32.totalorder %v139, %v109
    %vm222 = vcmp.eq.s32.totalorder %v139, %v110
    %vm223 = vcmp.eq.s32.totalorder %v139, %v111
    %vm224 = vcmp.eq.s32.totalorder %v139, %v112
    %vm225 = vcmp.eq.s32.totalorder %v139, %v113
    %vm226 = vcmp.eq.s32.totalorder %v139, %v114
    %vm227 = vcmp.eq.s32.totalorder %v139, %v115
    %vm228 = vcmp.eq.s32.totalorder %v142, %v108
    %vm229 = vcmp.eq.s32.totalorder %v142, %v109
    %vm230 = vcmp.eq.s32.totalorder %v142, %v110
    %vm231 = vcmp.eq.s32.totalorder %v142, %v111
    %vm232 = vcmp.eq.s32.totalorder %v142, %v112
    %vm233 = vcmp.eq.s32.totalorder %v142, %v113
    %vm234 = vcmp.eq.s32.totalorder %v142, %v114
    %vm235 = vcmp.eq.s32.totalorder %v142, %v115
    %vm236 = vcmp.eq.s32.totalorder %v145, %v108
    %vm237 = vcmp.eq.s32.totalorder %v145, %v109
    %vm238 = vcmp.eq.s32.totalorder %v145, %v110
    %vm239 = vcmp.eq.s32.totalorder %v145, %v111
    %vm240 = vcmp.eq.s32.totalorder %v145, %v112
    %vm241 = vcmp.eq.s32.totalorder %v145, %v113
    %vm242 = vcmp.eq.s32.totalorder %v145, %v114
    %vm243 = vcmp.eq.s32.totalorder %v145, %v115
    %vm244 = vcmp.eq.s32.totalorder %v148, %v108
    %vm245 = vcmp.eq.s32.totalorder %v148, %v109
    %vm246 = vcmp.eq.s32.totalorder %v148, %v110
    %vm247 = vcmp.eq.s32.totalorder %v148, %v111
    %vm248 = vcmp.eq.s32.totalorder %v148, %v112
    %vm249 = vcmp.eq.s32.totalorder %v148, %v113
    %vm250 = vcmp.eq.s32.totalorder %v148, %v114
    %vm251 = vcmp.eq.s32.totalorder %v148, %v115
    %vm252 = vcmp.eq.s32.totalorder %v151, %v108
    %vm253 = vcmp.eq.s32.totalorder %v151, %v109
    %vm254 = vcmp.eq.s32.totalorder %v151, %v110
    %vm255 = vcmp.eq.s32.totalorder %v151, %v111
    %vm256 = vcmp.eq.s32.totalorder %v151, %v112
    %vm257 = vcmp.eq.s32.totalorder %v151, %v113
    %vm258 = vcmp.eq.s32.totalorder %v151, %v114
    %vm259 = vcmp.eq.s32.totalorder %v151, %v115
    %vm260 = vcmp.eq.s32.totalorder %v154, %v108
    %vm261 = vcmp.eq.s32.totalorder %v154, %v109
    %vm262 = vcmp.eq.s32.totalorder %v154, %v110
    %vm263 = vcmp.eq.s32.totalorder %v154, %v111
    %vm264 = vcmp.eq.s32.totalorder %v154, %v112
    %vm265 = vcmp.eq.s32.totalorder %v154, %v113
    %vm266 = vcmp.eq.s32.totalorder %v154, %v114
    %vm267 = vcmp.eq.s32.totalorder %v154, %v115
    %vm268 = vcmp.eq.s32.totalorder %v157, %v108
    %vm269 = vcmp.eq.s32.totalorder %v157, %v109
    %vm270 = vcmp.eq.s32.totalorder %v157, %v110
    %vm271 = vcmp.eq.s32.totalorder %v157, %v111
    %vm272 = vcmp.eq.s32.totalorder %v157, %v112
    %vm273 = vcmp.eq.s32.totalorder %v157, %v113
    %vm274 = vcmp.eq.s32.totalorder %v157, %v114
    %vm275 = vcmp.eq.s32.totalorder %v157, %v115
    %vm276 = vcmp.eq.s32.totalorder %v160, %v108
    %vm277 = vcmp.eq.s32.totalorder %v160, %v109
    %vm278 = vcmp.eq.s32.totalorder %v160, %v110
    %vm279 = vcmp.eq.s32.totalorder %v160, %v111
    %vm280 = vcmp.eq.s32.totalorder %v160, %v112
    %vm281 = vcmp.eq.s32.totalorder %v160, %v113
    %vm282 = vcmp.eq.s32.totalorder %v160, %v114
    %vm283 = vcmp.eq.s32.totalorder %v160, %v115
    %vm284 = vcmp.eq.s32.totalorder %v163, %v108
    %vm285 = vcmp.eq.s32.totalorder %v163, %v109
    %vm286 = vcmp.eq.s32.totalorder %v163, %v110
    %vm287 = vcmp.eq.s32.totalorder %v163, %v111
    %vm288 = vcmp.eq.s32.totalorder %v163, %v112
    %vm289 = vcmp.eq.s32.totalorder %v163, %v113
    %vm290 = vcmp.eq.s32.totalorder %v163, %v114
    %vm291 = vcmp.eq.s32.totalorder %v163, %v115
    %v292 = vsel %vm164, 1.0, 0.0
    %v293 = vsel %vm165, 1.0, 0.0
    %v294 = vsel %vm166, 1.0, 0.0
    %v295 = vsel %vm167, 1.0, 0.0
    %v296 = vsel %vm168, 1.0, 0.0
    %v297 = vsel %vm169, 1.0, 0.0
    %v298 = vsel %vm170, 1.0, 0.0
    %v299 = vsel %vm171, 1.0, 0.0
    %v300 = vsel %vm172, 1.0, 0.0
    %v301 = vsel %vm173, 1.0, 0.0
    %v302 = vsel %vm174, 1.0, 0.0
    %v303 = vsel %vm175, 1.0, 0.0
    %v304 = vsel %vm176, 1.0, 0.0
    %v305 = vsel %vm177, 1.0, 0.0
    %v306 = vsel %vm178, 1.0, 0.0
    %v307 = vsel %vm179, 1.0, 0.0
    %v308 = vsel %vm180, 1.0, 0.0
    %v309 = vsel %vm181, 1.0, 0.0
    %v310 = vsel %vm182, 1.0, 0.0
    %v311 = vsel %vm183, 1.0, 0.0
    %v312 = vsel %vm184, 1.0, 0.0
    %v313 = vsel %vm185, 1.0, 0.0
    %v314 = vsel %vm186, 1.0, 0.0
    %v315 = vsel %vm187, 1.0, 0.0
    %v316 = vsel %vm188, 1.0, 0.0
    %v317 = vsel %vm189, 1.0, 0.0
    %v318 = vsel %vm190, 1.0, 0.0
    %v319 = vsel %vm191, 1.0, 0.0
    %v320 = vsel %vm192, 1.0, 0.0
    %v321 = vsel %vm193, 1.0, 0.0
    %v322 = vsel %vm194, 1.0, 0.0
    %v323 = vsel %vm195, 1.0, 0.0
    %v324 = vsel %vm196, 1.0, 0.0
    %v325 = vsel %vm197, 1.0, 0.0
    %v326 = vsel %vm198, 1.0, 0.0
    %v327 = vsel %vm199, 1.0, 0.0
    %v328 = vsel %vm200, 1.0, 0.0
    %v329 = vsel %vm201, 1.0, 0.0
    %v330 = vsel %vm202, 1.0, 0.0
    %v331 = vsel %vm203, 1.0, 0.0
    %v332 = vsel %vm204, 1.0, 0.0
    %v333 = vsel %vm205, 1.0, 0.0
    %v334 = vsel %vm206, 1.0, 0.0
    %v335 = vsel %vm207, 1.0, 0.0
    %v336 = vsel %vm208, 1.0, 0.0
    %v337 = vsel %vm209, 1.0, 0.0
    %v338 = vsel %vm210, 1.0, 0.0
    %v339 = vsel %vm211, 1.0, 0.0
    %v340 = vsel %vm212, 1.0, 0.0
    %v341 = vsel %vm213, 1.0, 0.0
    %v342 = vsel %vm214, 1.0, 0.0
    %v343 = vsel %vm215, 1.0, 0.0
    %v344 = vsel %vm216, 1.0, 0.0
    %v345 = vsel %vm217, 1.0, 0.0
    %v346 = vsel %vm218, 1.0, 0.0
    %v347 = vsel %vm219, 1.0, 0.0
    %v348 = vsel %vm220, 1.0, 0.0
    %v349 = vsel %vm221, 1.0, 0.0
    %v350 = vsel %vm222, 1.0, 0.0
    %v351 = vsel %vm223, 1.0, 0.0
    %v352 = vsel %vm224, 1.0, 0.0
    %v353 = vsel %vm225, 1.0, 0.0
    %v354 = vsel %vm226, 1.0, 0.0
    %v355 = vsel %vm227, 1.0, 0.0
    %v356 = vsel %vm228, 1.0, 0.0
    %v357 = vsel %vm229, 1.0, 0.0
    %v358 = vsel %vm230, 1.0, 0.0
    %v359 = vsel %vm231, 1.0, 0.0
    %v360 = vsel %vm232, 1.0, 0.0
    %v361 = vsel %vm233, 1.0, 0.0
    %v362 = vsel %vm234, 1.0, 0.0
    %v363 = vsel %vm235, 1.0, 0.0
    %v364 = vsel %vm236, 1.0, 0.0
    %v365 = vsel %vm237, 1.0, 0.0
    %v366 = vsel %vm238, 1.0, 0.0
    %v367 = vsel %vm239, 1.0, 0.0
    %v368 = vsel %vm240, 1.0, 0.0
    %v369 = vsel %vm241, 1.0, 0.0
    %v370 = vsel %vm242, 1.0, 0.0
    %v371 = vsel %vm243, 1.0, 0.0
    %v372 = vsel %vm244, 1.0, 0.0
    %v373 = vsel %vm245, 1.0, 0.0
    %v374 = vsel %vm246, 1.0, 0.0
    %v375 = vsel %vm247, 1.0, 0.0
    %v376 = vsel %vm248, 1.0, 0.0
    %v377 = vsel %vm249, 1.0, 0.0
    %v378 = vsel %vm250, 1.0, 0.0
    %v379 = vsel %vm251, 1.0, 0.0
    %v380 = vsel %vm252, 1.0, 0.0
    %v381 = vsel %vm253, 1.0, 0.0
    %v382 = vsel %vm254, 1.0, 0.0
    %v383 = vsel %vm255, 1.0, 0.0
    %v384 = vsel %vm256, 1.0, 0.0
    %v385 = vsel %vm257, 1.0, 0.0
    %v386 = vsel %vm258, 1.0, 0.0
    %v387 = vsel %vm259, 1.0, 0.0
    %v388 = vsel %vm260, 1.0, 0.0
    %v389 = vsel %vm261, 1.0, 0.0
    %v390 = vsel %vm262, 1.0, 0.0
    %v391 = vsel %vm263, 1.0, 0.0
    %v392 = vsel %vm264, 1.0, 0.0
    %v393 = vsel %vm265, 1.0, 0.0
    %v394 = vsel %vm266, 1.0, 0.0
    %v395 = vsel %vm267, 1.0, 0.0
    %v396 = vsel %vm268, 1.0, 0.0
    %v397 = vsel %vm269, 1.0, 0.0
    %v398 = vsel %vm270, 1.0, 0.0
    %v399 = vsel %vm271, 1.0, 0.0
    %v400 = vsel %vm272, 1.0, 0.0
    %v401 = vsel %vm273, 1.0, 0.0
    %v402 = vsel %vm274, 1.0, 0.0
    %v403 = vsel %vm275, 1.0, 0.0
    %v404 = vsel %vm276, 1.0, 0.0
    %v405 = vsel %vm277, 1.0, 0.0
    %v406 = vsel %vm278, 1.0, 0.0
    %v407 = vsel %vm279, 1.0, 0.0
    %v408 = vsel %vm280, 1.0, 0.0
    %v409 = vsel %vm281, 1.0, 0.0
    %v410 = vsel %vm282, 1.0, 0.0
    %v411 = vsel %vm283, 1.0, 0.0
    %v412 = vsel %vm284, 1.0, 0.0
    %v413 = vsel %vm285, 1.0, 0.0
    %v414 = vsel %vm286, 1.0, 0.0
    %v415 = vsel %vm287, 1.0, 0.0
    %v416 = vsel %vm288, 1.0, 0.0
    %v417 = vsel %vm289, 1.0, 0.0
    %v418 = vsel %vm290, 1.0, 0.0
    %v419 = vsel %vm291, 1.0, 0.0
    %v420 = vpack.c.bf16 %v300, %v292
    %v421 = vpack.c.bf16 %v301, %v293
    %v422 = vpack.c.bf16 %v302, %v294
    %v423 = vpack.c.bf16 %v303, %v295
    %v424 = vpack.c.bf16 %v304, %v296
    %v425 = vpack.c.bf16 %v305, %v297
    %v426 = vpack.c.bf16 %v306, %v298
    %v427 = vpack.c.bf16 %v307, %v299
    %v428 = vpack.c.bf16 %v316, %v308
    %v429 = vpack.c.bf16 %v317, %v309
    %v430 = vpack.c.bf16 %v318, %v310
    %v431 = vpack.c.bf16 %v319, %v311
    %v432 = vpack.c.bf16 %v320, %v312
    %v433 = vpack.c.bf16 %v321, %v313
    %v434 = vpack.c.bf16 %v322, %v314
    %v435 = vpack.c.bf16 %v323, %v315
    %v436 = vpack.c.bf16 %v332, %v324
    %v437 = vpack.c.bf16 %v333, %v325
    %v438 = vpack.c.bf16 %v334, %v326
    %v439 = vpack.c.bf16 %v335, %v327
    %v440 = vpack.c.bf16 %v336, %v328
    %v441 = vpack.c.bf16 %v337, %v329
    %v442 = vpack.c.bf16 %v338, %v330
    %v443 = vpack.c.bf16 %v339, %v331
    %v444 = vpack.c.bf16 %v348, %v340
    %v445 = vpack.c.bf16 %v349, %v341
    %v446 = vpack.c.bf16 %v350, %v342
    %v447 = vpack.c.bf16 %v351, %v343
    %v448 = vpack.c.bf16 %v352, %v344
    %v449 = vpack.c.bf16 %v353, %v345
    %v450 = vpack.c.bf16 %v354, %v346
    %v451 = vpack.c.bf16 %v355, %v347
    %v452 = vpack.c.bf16 %v364, %v356
    %v453 = vpack.c.bf16 %v365, %v357
    %v454 = vpack.c.bf16 %v366, %v358
    %v455 = vpack.c.bf16 %v367, %v359
    %v456 = vpack.c.bf16 %v368, %v360
    %v457 = vpack.c.bf16 %v369, %v361
    %v458 = vpack.c.bf16 %v370, %v362
    %v459 = vpack.c.bf16 %v371, %v363
    %v460 = vpack.c.bf16 %v380, %v372
    %v461 = vpack.c.bf16 %v381, %v373
    %v462 = vpack.c.bf16 %v382, %v374
    %v463 = vpack.c.bf16 %v383, %v375
    %v464 = vpack.c.bf16 %v384, %v376
    %v465 = vpack.c.bf16 %v385, %v377
    %v466 = vpack.c.bf16 %v386, %v378
    %v467 = vpack.c.bf16 %v387, %v379
    %v468 = vpack.c.bf16 %v396, %v388
    %v469 = vpack.c.bf16 %v397, %v389
    %v470 = vpack.c.bf16 %v398, %v390
    %v471 = vpack.c.bf16 %v399, %v391
    %v472 = vpack.c.bf16 %v400, %v392
    %v473 = vpack.c.bf16 %v401, %v393
    %v474 = vpack.c.bf16 %v402, %v394
    %v475 = vpack.c.bf16 %v403, %v395
    %v476 = vpack.c.bf16 %v412, %v404
    %v477 = vpack.c.bf16 %v413, %v405
    %v478 = vpack.c.bf16 %v414, %v406
    %v479 = vpack.c.bf16 %v415, %v407
    %v480 = vpack.c.bf16 %v416, %v408
    %v481 = vpack.c.bf16 %v417, %v409
    %v482 = vpack.c.bf16 %v418, %v410
    %v483 = vpack.c.bf16 %v419, %v411
    %v484 = vld [vmem:[#allocation2] sm:$0xf]
    %v485 = vld [vmem:[#allocation2 + $0x4] sm:$0xf]
    %v486 = vld [vmem:[#allocation2 + $0x8] sm:$0xf]
    %v487 = vld [vmem:[#allocation2 + $0xc] sm:$0xf]
    %v488 = vld [vmem:[#allocation2 + $0x10] sm:$0xf]
    %v489 = vld [vmem:[#allocation2 + $0x14] sm:$0xf]
    %v490 = vld [vmem:[#allocation2 + $0x18] sm:$0xf]
    %v491 = vld [vmem:[#allocation2 + $0x1c] sm:$0xf]
    %v492 = vld [vmem:[#allocation2 + $0x20] sm:$0xf]
    %v493 = vld [vmem:[#allocation2 + $0x24] sm:$0xf]
    %v494 = vld [vmem:[#allocation2 + $0x28] sm:$0xf]
    %v495 = vld [vmem:[#allocation2 + $0x2c] sm:$0xf]
    %v496 = vld [vmem:[#allocation2 + $0x30] sm:$0xf]
    %v497 = vld [vmem:[#allocation2 + $0x34] sm:$0xf]
    %v498 = vld [vmem:[#allocation2 + $0x38] sm:$0xf]
    %v499 = vld [vmem:[#allocation2 + $0x3c] sm:$0xf]
    %v500 = vld [vmem:[#allocation2 + $0x40] sm:$0xf]
    %v501 = vld [vmem:[#allocation2 + $0x44] sm:$0xf]
    %v502 = vld [vmem:[#allocation2 + $0x48] sm:$0xf]
    %v503 = vld [vmem:[#allocation2 + $0x4c] sm:$0xf]
    %v504 = vld [vmem:[#allocation2 + $0x50] sm:$0xf]
    %v505 = vld [vmem:[#allocation2 + $0x54] sm:$0xf]
    %v506 = vld [vmem:[#allocation2 + $0x58] sm:$0xf]
    %v507 = vld [vmem:[#allocation2 + $0x5c] sm:$0xf]
    %v508 = vld [vmem:[#allocation2 + $0x60] sm:$0xf]
    %v509 = vld [vmem:[#allocation2 + $0x64] sm:$0xf]
    %v510 = vld [vmem:[#allocation2 + $0x68] sm:$0xf]
    %v511 = vld [vmem:[#allocation2 + $0x6c] sm:$0xf]
    %v512 = vld [vmem:[#allocation2 + $0x70] sm:$0xf]
    %v513 = vld [vmem:[#allocation2 + $0x74] sm:$0xf]
    %v514 = vld [vmem:[#allocation2 + $0x78] sm:$0xf]
    %v515 = vld [vmem:[#allocation2 + $0x7c] sm:$0xf]
    %v516 = vld [vmem:[#allocation2 + $0x80] sm:$0xf]
    %v517 = vld [vmem:[#allocation2 + $0x84] sm:$0xf]
    %v518 = vld [vmem:[#allocation2 + $0x88] sm:$0xf]
    %v519 = vld [vmem:[#allocation2 + $0x8c] sm:$0xf]
    %v520 = vld [vmem:[#allocation2 + $0x90] sm:$0xf]
    %v521 = vld [vmem:[#allocation2 + $0x94] sm:$0xf]
    %v522 = vld [vmem:[#allocation2 + $0x98] sm:$0xf]
    %v523 = vld [vmem:[#allocation2 + $0x9c] sm:$0xf]
    %v524 = vld [vmem:[#allocation2 + $0xa0] sm:$0xf]
    %v525 = vld [vmem:[#allocation2 + $0xa4] sm:$0xf]
    %v526 = vld [vmem:[#allocation2 + $0xa8] sm:$0xf]
    %v527 = vld [vmem:[#allocation2 + $0xac] sm:$0xf]
    %v528 = vld [vmem:[#allocation2 + $0xb0] sm:$0xf]
    %v529 = vld [vmem:[#allocation2 + $0xb4] sm:$0xf]
    %v530 = vld [vmem:[#allocation2 + $0xb8] sm:$0xf]
    %v531 = vld [vmem:[#allocation2 + $0xbc] sm:$0xf]
    %v532 = vld [vmem:[#allocation2 + $0xc0] sm:$0xf]
    %v533 = vld [vmem:[#allocation2 + $0xc4] sm:$0xf]
    %v534 = vld [vmem:[#allocation2 + $0xc8] sm:$0xf]
    %v535 = vld [vmem:[#allocation2 + $0xcc] sm:$0xf]
    %v536 = vld [vmem:[#allocation2 + $0xd0] sm:$0xf]
    %v537 = vld [vmem:[#allocation2 + $0xd4] sm:$0xf]
    %v538 = vld [vmem:[#allocation2 + $0xd8] sm:$0xf]
    %v539 = vld [vmem:[#allocation2 + $0xdc] sm:$0xf]
    %v540 = vld [vmem:[#allocation2 + $0xe0] sm:$0xf]
    %v541 = vld [vmem:[#allocation2 + $0xe4] sm:$0xf]
    %v542 = vld [vmem:[#allocation2 + $0xe8] sm:$0xf]
    %v543 = vld [vmem:[#allocation2 + $0xec] sm:$0xf]
    %v544 = vld [vmem:[#allocation2 + $0xf0] sm:$0xf]
    %v545 = vld [vmem:[#allocation2 + $0xf4] sm:$0xf]
    %v546 = vld [vmem:[#allocation2 + $0xf8] sm:$0xf]
    %v547 = vld [vmem:[#allocation2 + $0xfc] sm:$0xf]
    %v548 = vld [vmem:[#allocation2 + $0x100] sm:$0xf]
    %v549 = vld [vmem:[#allocation2 + $0x104] sm:$0xf]
    %v550 = vld [vmem:[#allocation2 + $0x108] sm:$0xf]
    %v551 = vld [vmem:[#allocation2 + $0x10c] sm:$0xf]
    %v552 = vld [vmem:[#allocation2 + $0x110] sm:$0xf]
    %v553 = vld [vmem:[#allocation2 + $0x114] sm:$0xf]
    %v554 = vld [vmem:[#allocation2 + $0x118] sm:$0xf]
    %v555 = vld [vmem:[#allocation2 + $0x11c] sm:$0xf]
    %v556 = vld [vmem:[#allocation2 + $0x120] sm:$0xf]
    %v557 = vld [vmem:[#allocation2 + $0x124] sm:$0xf]
    %v558 = vld [vmem:[#allocation2 + $0x128] sm:$0xf]
    %v559 = vld [vmem:[#allocation2 + $0x12c] sm:$0xf]
    %v560 = vld [vmem:[#allocation2 + $0x130] sm:$0xf]
    %v561 = vld [vmem:[#allocation2 + $0x134] sm:$0xf]
    %v562 = vld [vmem:[#allocation2 + $0x138] sm:$0xf]
    %v563 = vld [vmem:[#allocation2 + $0x13c] sm:$0xf]
    %v564 = vld [vmem:[#allocation2 + $0x140] sm:$0xf]
    %v565 = vld [vmem:[#allocation2 + $0x144] sm:$0xf]
    %v566 = vld [vmem:[#allocation2 + $0x148] sm:$0xf]
    %v567 = vld [vmem:[#allocation2 + $0x14c] sm:$0xf]
    %v568 = vld [vmem:[#allocation2 + $0x150] sm:$0xf]
    %v569 = vld [vmem:[#allocation2 + $0x154] sm:$0xf]
    %v570 = vld [vmem:[#allocation2 + $0x158] sm:$0xf]
    %v571 = vld [vmem:[#allocation2 + $0x15c] sm:$0xf]
    %v572 = vld [vmem:[#allocation2 + $0x160] sm:$0xf]
    %v573 = vld [vmem:[#allocation2 + $0x164] sm:$0xf]
    %v574 = vld [vmem:[#allocation2 + $0x168] sm:$0xf]
    %v575 = vld [vmem:[#allocation2 + $0x16c] sm:$0xf]
    %v576 = vld [vmem:[#allocation2 + $0x170] sm:$0xf]
    %v577 = vld [vmem:[#allocation2 + $0x174] sm:$0xf]
    %v578 = vld [vmem:[#allocation2 + $0x178] sm:$0xf]
    %v579 = vld [vmem:[#allocation2 + $0x17c] sm:$0xf]
    %v580 = vld [vmem:[#allocation2 + $0x180] sm:$0xf]
    %v581 = vld [vmem:[#allocation2 + $0x184] sm:$0xf]
    %v582 = vld [vmem:[#allocation2 + $0x188] sm:$0xf]
    %v583 = vld [vmem:[#allocation2 + $0x18c] sm:$0xf]
    %v584 = vld [vmem:[#allocation2 + $0x190] sm:$0xf]
    %v585 = vld [vmem:[#allocation2 + $0x194] sm:$0xf]
    %v586 = vld [vmem:[#allocation2 + $0x198] sm:$0xf]
    %v587 = vld [vmem:[#allocation2 + $0x19c] sm:$0xf]
    %v588 = vld [vmem:[#allocation2 + $0x1a0] sm:$0xf]
    %v589 = vld [vmem:[#allocation2 + $0x1a4] sm:$0xf]
    %v590 = vld [vmem:[#allocation2 + $0x1a8] sm:$0xf]
    %v591 = vld [vmem:[#allocation2 + $0x1ac] sm:$0xf]
    %v592 = vld [vmem:[#allocation2 + $0x1b0] sm:$0xf]
    %v593 = vld [vmem:[#allocation2 + $0x1b4] sm:$0xf]
    %v594 = vld [vmem:[#allocation2 + $0x1b8] sm:$0xf]
    %v595 = vld [vmem:[#allocation2 + $0x1bc] sm:$0xf]
    %v596 = vld [vmem:[#allocation2 + $0x1c0] sm:$0xf]
    %v597 = vld [vmem:[#allocation2 + $0x1c4] sm:$0xf]
    %v598 = vld [vmem:[#allocation2 + $0x1c8] sm:$0xf]
    %v599 = vld [vmem:[#allocation2 + $0x1cc] sm:$0xf]
    %v600 = vld [vmem:[#allocation2 + $0x1d0] sm:$0xf]
    %v601 = vld [vmem:[#allocation2 + $0x1d4] sm:$0xf]
    %v602 = vld [vmem:[#allocation2 + $0x1d8] sm:$0xf]
    %v603 = vld [vmem:[#allocation2 + $0x1dc] sm:$0xf]
    %v604 = vld [vmem:[#allocation2 + $0x1e0] sm:$0xf]
    %v605 = vld [vmem:[#allocation2 + $0x1e4] sm:$0xf]
    %v606 = vld [vmem:[#allocation2 + $0x1e8] sm:$0xf]
    %v607 = vld [vmem:[#allocation2 + $0x1ec] sm:$0xf]
    %v608 = vld [vmem:[#allocation2 + $0x1f0] sm:$0xf]
    %v609 = vld [vmem:[#allocation2 + $0x1f4] sm:$0xf]
    %v610 = vld [vmem:[#allocation2 + $0x1f8] sm:$0xf]
    %v611 = vld [vmem:[#allocation2 + $0x1fc] sm:$0xf]
    %s612 = scalar_lea.vmem [#allocation2], 2048
    %v613 = vld [vmem:[%s612] sm:$0xf]
    %v614 = vld [vmem:[%s612 + $0x4] sm:$0xf]
    %v615 = vld [vmem:[%s612 + $0x8] sm:$0xf]
    %v616 = vld [vmem:[%s612 + $0xc] sm:$0xf]
    %v617 = vld [vmem:[%s612 + $0x10] sm:$0xf]
    %v618 = vld [vmem:[%s612 + $0x14] sm:$0xf]
    %v619 = vld [vmem:[%s612 + $0x18] sm:$0xf]
    %v620 = vld [vmem:[%s612 + $0x1c] sm:$0xf]
    %v621 = vld [vmem:[%s612 + $0x20] sm:$0xf]
    %v622 = vld [vmem:[%s612 + $0x24] sm:$0xf]
    %v623 = vld [vmem:[%s612 + $0x28] sm:$0xf]
    %v624 = vld [vmem:[%s612 + $0x2c] sm:$0xf]
    %v625 = vld [vmem:[%s612 + $0x30] sm:$0xf]
    %v626 = vld [vmem:[%s612 + $0x34] sm:$0xf]
    %v627 = vld [vmem:[%s612 + $0x38] sm:$0xf]
    %v628 = vld [vmem:[%s612 + $0x3c] sm:$0xf]
    %v629 = vld [vmem:[%s612 + $0x40] sm:$0xf]
    %v630 = vld [vmem:[%s612 + $0x44] sm:$0xf]
    %v631 = vld [vmem:[%s612 + $0x48] sm:$0xf]
    %v632 = vld [vmem:[%s612 + $0x4c] sm:$0xf]
    %v633 = vld [vmem:[%s612 + $0x50] sm:$0xf]
    %v634 = vld [vmem:[%s612 + $0x54] sm:$0xf]
    %v635 = vld [vmem:[%s612 + $0x58] sm:$0xf]
    %v636 = vld [vmem:[%s612 + $0x5c] sm:$0xf]
    %v637 = vld [vmem:[%s612 + $0x60] sm:$0xf]
    %v638 = vld [vmem:[%s612 + $0x64] sm:$0xf]
    %v639 = vld [vmem:[%s612 + $0x68] sm:$0xf]
    %v640 = vld [vmem:[%s612 + $0x6c] sm:$0xf]
    %v641 = vld [vmem:[%s612 + $0x70] sm:$0xf]
    %v642 = vld [vmem:[%s612 + $0x74] sm:$0xf]
    %v643 = vld [vmem:[%s612 + $0x78] sm:$0xf]
    %v644 = vld [vmem:[%s612 + $0x7c] sm:$0xf]
    %v645 = vld [vmem:[%s612 + $0x80] sm:$0xf]
    %v646 = vld [vmem:[%s612 + $0x84] sm:$0xf]
    %v647 = vld [vmem:[%s612 + $0x88] sm:$0xf]
    %v648 = vld [vmem:[%s612 + $0x8c] sm:$0xf]
    %v649 = vld [vmem:[%s612 + $0x90] sm:$0xf]
    %v650 = vld [vmem:[%s612 + $0x94] sm:$0xf]
    %v651 = vld [vmem:[%s612 + $0x98] sm:$0xf]
    %v652 = vld [vmem:[%s612 + $0x9c] sm:$0xf]
    %v653 = vld [vmem:[%s612 + $0xa0] sm:$0xf]
    %v654 = vld [vmem:[%s612 + $0xa4] sm:$0xf]
    %v655 = vld [vmem:[%s612 + $0xa8] sm:$0xf]
    %v656 = vld [vmem:[%s612 + $0xac] sm:$0xf]
    %v657 = vld [vmem:[%s612 + $0xb0] sm:$0xf]
    %v658 = vld [vmem:[%s612 + $0xb4] sm:$0xf]
    %v659 = vld [vmem:[%s612 + $0xb8] sm:$0xf]
    %v660 = vld [vmem:[%s612 + $0xbc] sm:$0xf]
    %v661 = vld [vmem:[%s612 + $0xc0] sm:$0xf]
    %v662 = vld [vmem:[%s612 + $0xc4] sm:$0xf]
    %v663 = vld [vmem:[%s612 + $0xc8] sm:$0xf]
    %v664 = vld [vmem:[%s612 + $0xcc] sm:$0xf]
    %v665 = vld [vmem:[%s612 + $0xd0] sm:$0xf]
    %v666 = vld [vmem:[%s612 + $0xd4] sm:$0xf]
    %v667 = vld [vmem:[%s612 + $0xd8] sm:$0xf]
    %v668 = vld [vmem:[%s612 + $0xdc] sm:$0xf]
    %v669 = vld [vmem:[%s612 + $0xe0] sm:$0xf]
    %v670 = vld [vmem:[%s612 + $0xe4] sm:$0xf]
    %v671 = vld [vmem:[%s612 + $0xe8] sm:$0xf]
    %v672 = vld [vmem:[%s612 + $0xec] sm:$0xf]
    %v673 = vld [vmem:[%s612 + $0xf0] sm:$0xf]
    %v674 = vld [vmem:[%s612 + $0xf4] sm:$0xf]
    %v675 = vld [vmem:[%s612 + $0xf8] sm:$0xf]
    %v676 = vld [vmem:[%s612 + $0xfc] sm:$0xf]
    %v677 = vld [vmem:[%s612 + $0x100] sm:$0xf]
    %v678 = vld [vmem:[%s612 + $0x104] sm:$0xf]
    %v679 = vld [vmem:[%s612 + $0x108] sm:$0xf]
    %v680 = vld [vmem:[%s612 + $0x10c] sm:$0xf]
    %v681 = vld [vmem:[%s612 + $0x110] sm:$0xf]
    %v682 = vld [vmem:[%s612 + $0x114] sm:$0xf]
    %v683 = vld [vmem:[%s612 + $0x118] sm:$0xf]
    %v684 = vld [vmem:[%s612 + $0x11c] sm:$0xf]
    %v685 = vld [vmem:[%s612 + $0x120] sm:$0xf]
    %v686 = vld [vmem:[%s612 + $0x124] sm:$0xf]
    %v687 = vld [vmem:[%s612 + $0x128] sm:$0xf]
    %v688 = vld [vmem:[%s612 + $0x12c] sm:$0xf]
    %v689 = vld [vmem:[%s612 + $0x130] sm:$0xf]
    %v690 = vld [vmem:[%s612 + $0x134] sm:$0xf]
    %v691 = vld [vmem:[%s612 + $0x138] sm:$0xf]
    %v692 = vld [vmem:[%s612 + $0x13c] sm:$0xf]
    %v693 = vld [vmem:[%s612 + $0x140] sm:$0xf]
    %v694 = vld [vmem:[%s612 + $0x144] sm:$0xf]
    %v695 = vld [vmem:[%s612 + $0x148] sm:$0xf]
    %v696 = vld [vmem:[%s612 + $0x14c] sm:$0xf]
    %v697 = vld [vmem:[%s612 + $0x150] sm:$0xf]
    %v698 = vld [vmem:[%s612 + $0x154] sm:$0xf]
    %v699 = vld [vmem:[%s612 + $0x158] sm:$0xf]
    %v700 = vld [vmem:[%s612 + $0x15c] sm:$0xf]
    %v701 = vld [vmem:[%s612 + $0x160] sm:$0xf]
    %v702 = vld [vmem:[%s612 + $0x164] sm:$0xf]
    %v703 = vld [vmem:[%s612 + $0x168] sm:$0xf]
    %v704 = vld [vmem:[%s612 + $0x16c] sm:$0xf]
    %v705 = vld [vmem:[%s612 + $0x170] sm:$0xf]
    %v706 = vld [vmem:[%s612 + $0x174] sm:$0xf]
    %v707 = vld [vmem:[%s612 + $0x178] sm:$0xf]
    %v708 = vld [vmem:[%s612 + $0x17c] sm:$0xf]
    %v709 = vld [vmem:[%s612 + $0x180] sm:$0xf]
    %v710 = vld [vmem:[%s612 + $0x184] sm:$0xf]
    %v711 = vld [vmem:[%s612 + $0x188] sm:$0xf]
    %v712 = vld [vmem:[%s612 + $0x18c] sm:$0xf]
    %v713 = vld [vmem:[%s612 + $0x190] sm:$0xf]
    %v714 = vld [vmem:[%s612 + $0x194] sm:$0xf]
    %v715 = vld [vmem:[%s612 + $0x198] sm:$0xf]
    %v716 = vld [vmem:[%s612 + $0x19c] sm:$0xf]
    %v717 = vld [vmem:[%s612 + $0x1a0] sm:$0xf]
    %v718 = vld [vmem:[%s612 + $0x1a4] sm:$0xf]
    %v719 = vld [vmem:[%s612 + $0x1a8] sm:$0xf]
    %v720 = vld [vmem:[%s612 + $0x1ac] sm:$0xf]
    %v721 = vld [vmem:[%s612 + $0x1b0] sm:$0xf]
    %v722 = vld [vmem:[%s612 + $0x1b4] sm:$0xf]
    %v723 = vld [vmem:[%s612 + $0x1b8] sm:$0xf]
    %v724 = vld [vmem:[%s612 + $0x1bc] sm:$0xf]
    %v725 = vld [vmem:[%s612 + $0x1c0] sm:$0xf]
    %v726 = vld [vmem:[%s612 + $0x1c4] sm:$0xf]
    %v727 = vld [vmem:[%s612 + $0x1c8] sm:$0xf]
    %v728 = vld [vmem:[%s612 + $0x1cc] sm:$0xf]
    %v729 = vld [vmem:[%s612 + $0x1d0] sm:$0xf]
    %v730 = vld [vmem:[%s612 + $0x1d4] sm:$0xf]
    %v731 = vld [vmem:[%s612 + $0x1d8] sm:$0xf]
    %v732 = vld [vmem:[%s612 + $0x1dc] sm:$0xf]
    %v733 = vld [vmem:[%s612 + $0x1e0] sm:$0xf]
    %v734 = vld [vmem:[%s612 + $0x1e4] sm:$0xf]
    %v735 = vld [vmem:[%s612 + $0x1e8] sm:$0xf]
    %v736 = vld [vmem:[%s612 + $0x1ec] sm:$0xf]
    %v737 = vld [vmem:[%s612 + $0x1f0] sm:$0xf]
    %v738 = vld [vmem:[%s612 + $0x1f4] sm:$0xf]
    %v739 = vld [vmem:[%s612 + $0x1f8] sm:$0xf]
    %v740 = vld [vmem:[%s612 + $0x1fc] sm:$0xf]
    %v869 = vunpack.c.l.b16 %v613
    %v870 = vunpack.c.l.b16 %v614
    %v871 = vunpack.c.l.b16 %v615
    %v872 = vunpack.c.l.b16 %v616
    %v873 = vunpack.c.l.b16 %v617
    %v874 = vunpack.c.l.b16 %v618
    %v875 = vunpack.c.l.b16 %v619
    %v876 = vunpack.c.l.b16 %v620
    %v877 = vunpack.c.l.b16 %v621
    %v878 = vunpack.c.l.b16 %v622
    %v879 = vunpack.c.l.b16 %v623
    %v880 = vunpack.c.l.b16 %v624
    %v881 = vunpack.c.l.b16 %v625
    %v882 = vunpack.c.l.b16 %v626
    %v883 = vunpack.c.l.b16 %v627
    %v884 = vunpack.c.l.b16 %v628
    %v885 = vunpack.c.l.b16 %v629
    %v886 = vunpack.c.l.b16 %v630
    %v887 = vunpack.c.l.b16 %v631
    %v888 = vunpack.c.l.b16 %v632
    %v889 = vunpack.c.l.b16 %v633
    %v890 = vunpack.c.l.b16 %v634
    %v891 = vunpack.c.l.b16 %v635
    %v892 = vunpack.c.l.b16 %v636
    %v893 = vunpack.c.l.b16 %v637
    %v894 = vunpack.c.l.b16 %v638
    %v895 = vunpack.c.l.b16 %v639
    %v896 = vunpack.c.l.b16 %v640
    %v897 = vunpack.c.l.b16 %v641
    %v898 = vunpack.c.l.b16 %v642
    %v899 = vunpack.c.l.b16 %v643
    %v900 = vunpack.c.l.b16 %v644
    %v901 = vunpack.c.l.b16 %v645
    %v902 = vunpack.c.l.b16 %v646
    %v903 = vunpack.c.l.b16 %v647
    %v904 = vunpack.c.l.b16 %v648
    %v905 = vunpack.c.l.b16 %v649
    %v906 = vunpack.c.l.b16 %v650
    %v907 = vunpack.c.l.b16 %v651
    %v908 = vunpack.c.l.b16 %v652
    %v909 = vunpack.c.l.b16 %v653
    %v910 = vunpack.c.l.b16 %v654
    %v911 = vunpack.c.l.b16 %v655
    %v912 = vunpack.c.l.b16 %v656
    %v913 = vunpack.c.l.b16 %v657
    %v914 = vunpack.c.l.b16 %v658
    %v915 = vunpack.c.l.b16 %v659
    %v916 = vunpack.c.l.b16 %v660
    %v917 = vunpack.c.l.b16 %v661
    %v918 = vunpack.c.l.b16 %v662
    %v919 = vunpack.c.l.b16 %v663
    %v920 = vunpack.c.l.b16 %v664
    %v921 = vunpack.c.l.b16 %v665
    %v922 = vunpack.c.l.b16 %v666
    %v923 = vunpack.c.l.b16 %v667
    %v924 = vunpack.c.l.b16 %v668
    %v925 = vunpack.c.l.b16 %v669
    %v926 = vunpack.c.l.b16 %v670
    %v927 = vunpack.c.l.b16 %v671
    %v928 = vunpack.c.l.b16 %v672
    %v929 = vunpack.c.l.b16 %v673
    %v930 = vunpack.c.l.b16 %v674
    %v931 = vunpack.c.l.b16 %v675
    %v932 = vunpack.c.l.b16 %v676
    %v933 = vunpack.c.l.b16 %v677
    %v934 = vunpack.c.l.b16 %v678
    %v935 = vunpack.c.l.b16 %v679
    %v936 = vunpack.c.l.b16 %v680
    %v937 = vunpack.c.l.b16 %v681
    %v938 = vunpack.c.l.b16 %v682
    %v939 = vunpack.c.l.b16 %v683
    %v940 = vunpack.c.l.b16 %v684
    %v941 = vunpack.c.l.b16 %v685
    %v942 = vunpack.c.l.b16 %v686
    %v943 = vunpack.c.l.b16 %v687
    %v944 = vunpack.c.l.b16 %v688
    %v945 = vunpack.c.l.b16 %v689
    %v946 = vunpack.c.l.b16 %v690
    %v947 = vunpack.c.l.b16 %v691
    %v948 = vunpack.c.l.b16 %v692
    %v949 = vunpack.c.l.b16 %v693
    %v950 = vunpack.c.l.b16 %v694
    %v951 = vunpack.c.l.b16 %v695
    %v952 = vunpack.c.l.b16 %v696
    %v953 = vunpack.c.l.b16 %v697
    %v954 = vunpack.c.l.b16 %v698
    %v955 = vunpack.c.l.b16 %v699
    %v956 = vunpack.c.l.b16 %v700
    %v957 = vunpack.c.l.b16 %v701
    %v958 = vunpack.c.l.b16 %v702
    %v959 = vunpack.c.l.b16 %v703
    %v960 = vunpack.c.l.b16 %v704
    %v961 = vunpack.c.l.b16 %v705
    %v962 = vunpack.c.l.b16 %v706
    %v963 = vunpack.c.l.b16 %v707
    %v964 = vunpack.c.l.b16 %v708
    %v965 = vunpack.c.l.b16 %v709
    %v966 = vunpack.c.l.b16 %v710
    %v967 = vunpack.c.l.b16 %v711
    %v968 = vunpack.c.l.b16 %v712
    %v969 = vunpack.c.l.b16 %v713
    %v970 = vunpack.c.l.b16 %v714
    %v971 = vunpack.c.l.b16 %v715
    %v972 = vunpack.c.l.b16 %v716
    %v973 = vunpack.c.l.b16 %v717
    %v974 = vunpack.c.l.b16 %v718
    %v975 = vunpack.c.l.b16 %v719
    %v976 = vunpack.c.l.b16 %v720
    %v977 = vunpack.c.l.b16 %v721
    %v978 = vunpack.c.l.b16 %v722
    %v979 = vunpack.c.l.b16 %v723
    %v980 = vunpack.c.l.b16 %v724
    %v981 = vunpack.c.l.b16 %v725
    %v982 = vunpack.c.l.b16 %v726
    %v983 = vunpack.c.l.b16 %v727
    %v984 = vunpack.c.l.b16 %v728
    %v985 = vunpack.c.l.b16 %v729
    %v986 = vunpack.c.l.b16 %v730
    %v987 = vunpack.c.l.b16 %v731
    %v988 = vunpack.c.l.b16 %v732
    %v989 = vunpack.c.l.b16 %v733
    %v990 = vunpack.c.l.b16 %v734
    %v991 = vunpack.c.l.b16 %v735
    %v992 = vunpack.c.l.b16 %v736
    %v993 = vunpack.c.l.b16 %v737
    %v994 = vunpack.c.l.b16 %v738
    %v995 = vunpack.c.l.b16 %v739
    %v996 = vunpack.c.l.b16 %v740
    %v997 = vpack.c.b16 %v870, %v869
    %v998 = vpack.c.b16 %v872, %v871
    %v999 = vpack.c.b16 %v874, %v873
    %v1000 = vpack.c.b16 %v876, %v875
    %v1001 = vpack.c.b16 %v878, %v877
    %v1002 = vpack.c.b16 %v880, %v879
    %v1003 = vpack.c.b16 %v882, %v881
    %v1004 = vpack.c.b16 %v884, %v883
    %v1005 = vpack.c.b16 %v886, %v885
    %v1006 = vpack.c.b16 %v888, %v887
    %v1007 = vpack.c.b16 %v890, %v889
    %v1008 = vpack.c.b16 %v892, %v891
    %v1009 = vpack.c.b16 %v894, %v893
    %v1010 = vpack.c.b16 %v896, %v895
    %v1011 = vpack.c.b16 %v898, %v897
    %v1012 = vpack.c.b16 %v900, %v899
    %v1013 = vpack.c.b16 %v902, %v901
    %v1014 = vpack.c.b16 %v904, %v903
    %v1015 = vpack.c.b16 %v906, %v905
    %v1016 = vpack.c.b16 %v908, %v907
    %v1017 = vpack.c.b16 %v910, %v909
    %v1018 = vpack.c.b16 %v912, %v911
    %v1019 = vpack.c.b16 %v914, %v913
    %v1020 = vpack.c.b16 %v916, %v915
    %v1021 = vpack.c.b16 %v918, %v917
    %v1022 = vpack.c.b16 %v920, %v919
    %v1023 = vpack.c.b16 %v922, %v921
    %v1024 = vpack.c.b16 %v924, %v923
    %v1025 = vpack.c.b16 %v926, %v925
    %v1026 = vpack.c.b16 %v928, %v927
    %v1027 = vpack.c.b16 %v930, %v929
    %v1028 = vpack.c.b16 %v932, %v931
    %v1029 = vpack.c.b16 %v934, %v933
    %v1030 = vpack.c.b16 %v936, %v935
    %v1031 = vpack.c.b16 %v938, %v937
    %v1032 = vpack.c.b16 %v940, %v939
    %v1033 = vpack.c.b16 %v942, %v941
    %v1034 = vpack.c.b16 %v944, %v943
    %v1035 = vpack.c.b16 %v946, %v945
    %v1036 = vpack.c.b16 %v948, %v947
    %v1037 = vpack.c.b16 %v950, %v949
    %v1038 = vpack.c.b16 %v952, %v951
    %v1039 = vpack.c.b16 %v954, %v953
    %v1040 = vpack.c.b16 %v956, %v955
    %v1041 = vpack.c.b16 %v958, %v957
    %v1042 = vpack.c.b16 %v960, %v959
    %v1043 = vpack.c.b16 %v962, %v961
    %v1044 = vpack.c.b16 %v964, %v963
    %v1045 = vpack.c.b16 %v966, %v965
    %v1046 = vpack.c.b16 %v968, %v967
    %v1047 = vpack.c.b16 %v970, %v969
    %v1048 = vpack.c.b16 %v972, %v971
    %v1049 = vpack.c.b16 %v974, %v973
    %v1050 = vpack.c.b16 %v976, %v975
    %v1051 = vpack.c.b16 %v978, %v977
    %v1052 = vpack.c.b16 %v980, %v979
    %v1053 = vpack.c.b16 %v982, %v981
    %v1054 = vpack.c.b16 %v984, %v983
    %v1055 = vpack.c.b16 %v986, %v985
    %v1056 = vpack.c.b16 %v988, %v987
    %v1057 = vpack.c.b16 %v990, %v989
    %v1058 = vpack.c.b16 %v992, %v991
    %v1059 = vpack.c.b16 %v994, %v993
    %v1060 = vpack.c.b16 %v996, %v995
    %1125 = vmatprep.subr.bf16.mxu0 0
    %1126 = vmatpush1.bf16.msra.mxu0 %v997
    %1127 = vmatprep.subr.bf16.mxu0 0
    %1128 = vmatpush1.bf16.msra.mxu0 %v998
    %1129 = vmatprep.subr.bf16.mxu0 0
    %1130 = vmatpush1.bf16.msra.mxu0 %v999
    %1131 = vmatprep.subr.bf16.mxu0 0
    %1132 = vmatpush1.bf16.msra.mxu0 %v1000
    %1133 = vmatprep.subr.bf16.mxu0 0
    %1134 = vmatpush1.bf16.msra.mxu0 %v1001
    %1135 = vmatprep.subr.bf16.mxu0 0
    %1136 = vmatpush1.bf16.msra.mxu0 %v1002
    %1137 = vmatprep.subr.bf16.mxu0 0
    %1138 = vmatpush1.bf16.msra.mxu0 %v1003
    %1139 = vmatprep.subr.bf16.mxu0 0
    %1140 = vmatpush1.bf16.msra.mxu0 %v1004
    %1141 = vmatprep.subr.bf16.mxu0 0
    %1142 = vmatpush1.bf16.msra.mxu0 %v1005
    %1143 = vmatprep.subr.bf16.mxu0 0
    %1144 = vmatpush1.bf16.msra.mxu0 %v1006
    %1145 = vmatprep.subr.bf16.mxu0 0
    %1146 = vmatpush1.bf16.msra.mxu0 %v1007
    %1147 = vmatprep.subr.bf16.mxu0 0
    %1148 = vmatpush1.bf16.msra.mxu0 %v1008
    %1149 = vmatprep.subr.bf16.mxu0 0
    %1150 = vmatpush1.bf16.msra.mxu0 %v1009
    %1151 = vmatprep.subr.bf16.mxu0 0
    %1152 = vmatpush1.bf16.msra.mxu0 %v1010
    %1153 = vmatprep.subr.bf16.mxu0 0
    %1154 = vmatpush1.bf16.msra.mxu0 %v1011
    %1155 = vmatprep.subr.bf16.mxu0 0
    %1156 = vmatpush1.bf16.msra.mxu0 %v1012
    %1157 = vmatprep.mubr.bf16.mxu0 %v421
    %1158 = vmatmul.mubr.bf16.gmra.mrb[0].mxu0 %v420
    %v1159 = vpop.f32.mrb[0].mxu0
    %v1160 = vadd.f32 0.0, %v1159
    %v1161 = vpop.f32.mrb[0].mxu0
    %v1162 = vpop.f32.mrb[0].mxu0
    %v1163 = vadd.f32 0.0, %v1162
    %v1164 = vpop.f32.mrb[0].mxu0
    %1165 = vmatprep.mubr.bf16.mxu0 %v429
    %1166 = vmatmul.mubr.bf16.gmra.mrb[0].mxu0 %v428
    %v1167 = vpop.f32.mrb[0].mxu0
    %v1168 = vadd.f32 0.0, %v1167
    %v1169 = vpop.f32.mrb[0].mxu0
    %v1170 = vpop.f32.mrb[0].mxu0
    %v1171 = vadd.f32 0.0, %v1170
    %v1172 = vpop.f32.mrb[0].mxu0
    %1173 = vmatprep.mubr.bf16.mxu0 %v437
    %1174 = vmatmul.mubr.bf16.gmra.mrb[0].mxu0 %v436
    %v1175 = vpop.f32.mrb[0].mxu0
    %v1176 = vadd.f32 0.0, %v1175
    %v1177 = vpop.f32.mrb[0].mxu0
    %v1178 = vpop.f32.mrb[0].mxu0
    %v1179 = vadd.f32 0.0, %v1178
    %v1180 = vpop.f32.mrb[0].mxu0
    %1181 = vmatprep.mubr.bf16.mxu0 %v445
    %1182 = vmatmul.mubr.bf16.gmra.mrb[0].mxu0 %v444
    %v1183 = vpop.f32.mrb[0].mxu0
    %v1184 = vadd.f32 0.0, %v1183
    %v1185 = vpop.f32.mrb[0].mxu0
    %v1186 = vpop.f32.mrb[0].mxu0
    %v1187 = vadd.f32 0.0, %v1186
    %v1188 = vpop.f32.mrb[0].mxu0
    %1189 = vmatprep.mubr.bf16.mxu0 %v453
    %1190 = vmatmul.mubr.bf16.gmra.mrb[0].mxu0 %v452
    %v1191 = vpop.f32.mrb[0].mxu0
    %v1192 = vadd.f32 0.0, %v1191
    %v1193 = vpop.f32.mrb[0].mxu0
    %v1194 = vpop.f32.mrb[0].mxu0
    %v1195 = vadd.f32 0.0, %v1194
    %v1196 = vpop.f32.mrb[0].mxu0
    %1197 = vmatprep.mubr.bf16.mxu0 %v461
    %1198 = vmatmul.mubr.bf16.gmra.mrb[0].mxu0 %v460
    %v1199 = vpop.f32.mrb[0].mxu0
    %v1200 = vadd.f32 0.0, %v1199
    %v1201 = vpop.f32.mrb[0].mxu0
    %v1202 = vpop.f32.mrb[0].mxu0
    %v1203 = vadd.f32 0.0, %v1202
    %v1204 = vpop.f32.mrb[0].mxu0
    %1205 = vmatprep.mubr.bf16.mxu0 %v469
    %1206 = vmatmul.mubr.bf16.gmra.mrb[0].mxu0 %v468
    %v1207 = vpop.f32.mrb[0].mxu0
    %v1208 = vadd.f32 0.0, %v1207
    %v1209 = vpop.f32.mrb[0].mxu0
    %v1210 = vpop.f32.mrb[0].mxu0
    %v1211 = vadd.f32 0.0, %v1210
    %v1212 = vpop.f32.mrb[0].mxu0
    %1213 = vmatprep.mubr.bf16.mxu0 %v477
    %1214 = vmatmul.mubr.bf16.gmra.mrb[0].mxu0 %v476
    %v1215 = vpop.f32.mrb[0].mxu0
    %v1216 = vadd.f32 0.0, %v1215
    %v1217 = vpop.f32.mrb[0].mxu0
    %v1218 = vpop.f32.mrb[0].mxu0
    %v1219 = vadd.f32 0.0, %v1218
    %v1220 = vpop.f32.mrb[0].mxu0
    %1221 = vdwg.mxu0
    %1222 = vmatprep.subr.bf16.mxu0 0
    %1223 = vmatpush1.bf16.msra.mxu0 %v1013
    %1224 = vmatprep.subr.bf16.mxu0 0
    %1225 = vmatpush1.bf16.msra.mxu0 %v1014
    %1226 = vmatprep.subr.bf16.mxu0 0
    %1227 = vmatpush1.bf16.msra.mxu0 %v1015
    %1228 = vmatprep.subr.bf16.mxu0 0
    %1229 = vmatpush1.bf16.msra.mxu0 %v1016
    %1230 = vmatprep.subr.bf16.mxu0 0
    %1231 = vmatpush1.bf16.msra.mxu0 %v1017
    %1232 = vmatprep.subr.bf16.mxu0 0
    %1233 = vmatpush1.bf16.msra.mxu0 %v1018
    %1234 = vmatprep.subr.bf16.mxu0 0
    %1235 = vmatpush1.bf16.msra.mxu0 %v1019
    %1236 = vmatprep.subr.bf16.mxu0 0
    %1237 = vmatpush1.bf16.msra.mxu0 %v1020
    %1238 = vmatprep.subr.bf16.mxu0 0
    %1239 = vmatpush1.bf16.msra.mxu0 %v1021
    %1240 = vmatprep.subr.bf16.mxu0 0
    %1241 = vmatpush1.bf16.msra.mxu0 %v1022
    %1242 = vmatprep.subr.bf16.mxu0 0
    %1243 = vmatpush1.bf16.msra.mxu0 %v1023
    %1244 = vmatprep.subr.bf16.mxu0 0
    %1245 = vmatpush1.bf16.msra.mxu0 %v1024
    %1246 = vmatprep.subr.bf16.mxu0 0
    %1247 = vmatpush1.bf16.msra.mxu0 %v1025
    %1248 = vmatprep.subr.bf16.mxu0 0
    %1249 = vmatpush1.bf16.msra.mxu0 %v1026
    %1250 = vmatprep.subr.bf16.mxu0 0
    %1251 = vmatpush1.bf16.msra.mxu0 %v1027
    %1252 = vmatprep.subr.bf16.mxu0 0
    %1253 = vmatpush1.bf16.msra.mxu0 %v1028
    %1254 = vmatprep.mubr.bf16.mxu0 %v423
    %1255 = vmatmul.mubr.bf16.gmra.mrb[0].mxu0 %v422
    %v1256 = vpop.f32.mrb[0].mxu0
    %v1257 = vadd.f32 %v1160, %v1256
    %v1258 = vpop.f32.mrb[0].mxu0
    %v1259 = vpop.f32.mrb[0].mxu0
    %v1260 = vadd.f32 %v1163, %v1259
    %v1261 = vpop.f32.mrb[0].mxu0
    %1262 = vmatprep.mubr.bf16.mxu0 %v431
    %1263 = vmatmul.mubr.bf16.gmra.mrb[0].mxu0 %v430
    %v1264 = vpop.f32.mrb[0].mxu0
    %v1265 = vadd.f32 %v1168, %v1264
    %v1266 = vpop.f32.mrb[0].mxu0
    %v1267 = vpop.f32.mrb[0].mxu0
    %v1268 = vadd.f32 %v1171, %v1267
    %v1269 = vpop.f32.mrb[0].mxu0
    %1270 = vmatprep.mubr.bf16.mxu0 %v439
    %1271 = vmatmul.mubr.bf16.gmra.mrb[0].mxu0 %v438
    %v1272 = vpop.f32.mrb[0].mxu0
    %v1273 = vadd.f32 %v1176, %v1272
    %v1274 = vpop.f32.mrb[0].mxu0
    %v1275 = vpop.f32.mrb[0].mxu0
    %v1276 = vadd.f32 %v1179, %v1275
    %v1277 = vpop.f32.mrb[0].mxu0
    %1278 = vmatprep.mubr.bf16.mxu0 %v447
    %1279 = vmatmul.mubr.bf16.gmra.mrb[0].mxu0 %v446
    %v1280 = vpop.f32.mrb[0].mxu0
    %v1281 = vadd.f32 %v1184, %v1280
    %v1282 = vpop.f32.mrb[0].mxu0
    %v1283 = vpop.f32.mrb[0].mxu0
    %v1284 = vadd.f32 %v1187, %v1283
    %v1285 = vpop.f32.mrb[0].mxu0
    %1286 = vmatprep.mubr.bf16.mxu0 %v455
    %1287 = vmatmul.mubr.bf16.gmra.mrb[0].mxu0 %v454
    %v1288 = vpop.f32.mrb[0].mxu0
    %v1289 = vadd.f32 %v1192, %v1288
    %v1290 = vpop.f32.mrb[0].mxu0
    %v1291 = vpop.f32.mrb[0].mxu0
    %v1292 = vadd.f32 %v1195, %v1291
    %v1293 = vpop.f32.mrb[0].mxu0
    %1294 = vmatprep.mubr.bf16.mxu0 %v463
    %1295 = vmatmul.mubr.bf16.gmra.mrb[0].mxu0 %v462
    %v1296 = vpop.f32.mrb[0].mxu0
    %v1297 = vadd.f32 %v1200, %v1296
    %v1298 = vpop.f32.mrb[0].mxu0
    %v1299 = vpop.f32.mrb[0].mxu0
    %v1300 = vadd.f32 %v1203, %v1299
    %v1301 = vpop.f32.mrb[0].mxu0
    %1302 = vmatprep.mubr.bf16.mxu0 %v471
    %1303 = vmatmul.mubr.bf16.gmra.mrb[0].mxu0 %v470
    %v1304 = vpop.f32.mrb[0].mxu0
    %v1305 = vadd.f32 %v1208, %v1304
    %v1306 = vpop.f32.mrb[0].mxu0
    %v1307 = vpop.f32.mrb[0].mxu0
    %v1308 = vadd.f32 %v1211, %v1307
    %v1309 = vpop.f32.mrb[0].mxu0
    %1310 = vmatprep.mubr.bf16.mxu0 %v479
    %1311 = vmatmul.mubr.bf16.gmra.mrb[0].mxu0 %v478
    %v1312 = vpop.f32.mrb[0].mxu0
    %v1313 = vadd.f32 %v1216, %v1312
    %v1314 = vpop.f32.mrb[0].mxu0
    %v1315 = vpop.f32.mrb[0].mxu0
    %v1316 = vadd.f32 %v1219, %v1315
    %v1317 = vpop.f32.mrb[0].mxu0
    %1318 = vdwg.mxu0
    %1319 = vmatprep.subr.bf16.mxu0 0
    %1320 = vmatpush1.bf16.msra.mxu0 %v1029
    %1321 = vmatprep.subr.bf16.mxu0 0
    %1322 = vmatpush1.bf16.msra.mxu0 %v1030
    %1323 = vmatprep.subr.bf16.mxu0 0
    %1324 = vmatpush1.bf16.msra.mxu0 %v1031
    %1325 = vmatprep.subr.bf16.mxu0 0
    %1326 = vmatpush1.bf16.msra.mxu0 %v1032
    %1327 = vmatprep.subr.bf16.mxu0 0
    %1328 = vmatpush1.bf16.msra.mxu0 %v1033
    %1329 = vmatprep.subr.bf16.mxu0 0
    %1330 = vmatpush1.bf16.msra.mxu0 %v1034
    %1331 = vmatprep.subr.bf16.mxu0 0
    %1332 = vmatpush1.bf16.msra.mxu0 %v1035
    %1333 = vmatprep.subr.bf16.mxu0 0
    %1334 = vmatpush1.bf16.msra.mxu0 %v1036
    %1335 = vmatprep.subr.bf16.mxu0 0
    %1336 = vmatpush1.bf16.msra.mxu0 %v1037
    %1337 = vmatprep.subr.bf16.mxu0 0
    %1338 = vmatpush1.bf16.msra.mxu0 %v1038
    %1339 = vmatprep.subr.bf16.mxu0 0
    %1340 = vmatpush1.bf16.msra.mxu0 %v1039
    %1341 = vmatprep.subr.bf16.mxu0 0
    %1342 = vmatpush1.bf16.msra.mxu0 %v1040
    %1343 = vmatprep.subr.bf16.mxu0 0
    %1344 = vmatpush1.bf16.msra.mxu0 %v1041
    %1345 = vmatprep.subr.bf16.mxu0 0
    %1346 = vmatpush1.bf16.msra.mxu0 %v1042
    %1347 = vmatprep.subr.bf16.mxu0 0
    %1348 = vmatpush1.bf16.msra.mxu0 %v1043
    %1349 = vmatprep.subr.bf16.mxu0 0
    %1350 = vmatpush1.bf16.msra.mxu0 %v1044
    %1351 = vmatprep.mubr.bf16.mxu0 %v425
    %1352 = vmatmul.mubr.bf16.gmra.mrb[0].mxu0 %v424
    %v1353 = vpop.f32.mrb[0].mxu0
    %v1354 = vadd.f32 %v1257, %v1353
    %v1355 = vpop.f32.mrb[0].mxu0
    %v1356 = vpop.f32.mrb[0].mxu0
    %v1357 = vadd.f32 %v1260, %v1356
    %v1358 = vpop.f32.mrb[0].mxu0
    %1359 = vmatprep.mubr.bf16.mxu0 %v433
    %1360 = vmatmul.mubr.bf16.gmra.mrb[0].mxu0 %v432
    %v1361 = vpop.f32.mrb[0].mxu0
    %v1362 = vadd.f32 %v1265, %v1361
    %v1363 = vpop.f32.mrb[0].mxu0
    %v1364 = vpop.f32.mrb[0].mxu0
    %v1365 = vadd.f32 %v1268, %v1364
    %v1366 = vpop.f32.mrb[0].mxu0
    %1367 = vmatprep.mubr.bf16.mxu0 %v441
    %1368 = vmatmul.mubr.bf16.gmra.mrb[0].mxu0 %v440
    %v1369 = vpop.f32.mrb[0].mxu0
    %v1370 = vadd.f32 %v1273, %v1369
    %v1371 = vpop.f32.mrb[0].mxu0
    %v1372 = vpop.f32.mrb[0].mxu0
    %v1373 = vadd.f32 %v1276, %v1372
    %v1374 = vpop.f32.mrb[0].mxu0
    %1375 = vmatprep.mubr.bf16.mxu0 %v449
    %1376 = vmatmul.mubr.bf16.gmra.mrb[0].mxu0 %v448
    %v1377 = vpop.f32.mrb[0].mxu0
    %v1378 = vadd.f32 %v1281, %v1377
    %v1379 = vpop.f32.mrb[0].mxu0
    %v1380 = vpop.f32.mrb[0].mxu0
    %v1381 = vadd.f32 %v1284, %v1380
    %v1382 = vpop.f32.mrb[0].mxu0
    %1383 = vmatprep.mubr.bf16.mxu0 %v457
    %1384 = vmatmul.mubr.bf16.gmra.mrb[0].mxu0 %v456
    %v1385 = vpop.f32.mrb[0].mxu0
    %v1386 = vadd.f32 %v1289, %v1385
    %v1387 = vpop.f32.mrb[0].mxu0
    %v1388 = vpop.f32.mrb[0].mxu0
    %v1389 = vadd.f32 %v1292, %v1388
    %v1390 = vpop.f32.mrb[0].mxu0
    %1391 = vmatprep.mubr.bf16.mxu0 %v465
    %1392 = vmatmul.mubr.bf16.gmra.mrb[0].mxu0 %v464
    %v1393 = vpop.f32.mrb[0].mxu0
    %v1394 = vadd.f32 %v1297, %v1393
    %v1395 = vpop.f32.mrb[0].mxu0
    %v1396 = vpop.f32.mrb[0].mxu0
    %v1397 = vadd.f32 %v1300, %v1396
    %v1398 = vpop.f32.mrb[0].mxu0
    %1399 = vmatprep.mubr.bf16.mxu0 %v473
    %1400 = vmatmul.mubr.bf16.gmra.mrb[0].mxu0 %v472
    %v1401 = vpop.f32.mrb[0].mxu0
    %v1402 = vadd.f32 %v1305, %v1401
    %v1403 = vpop.f32.mrb[0].mxu0
    %v1404 = vpop.f32.mrb[0].mxu0
    %v1405 = vadd.f32 %v1308, %v1404
    %v1406 = vpop.f32.mrb[0].mxu0
    %1407 = vmatprep.mubr.bf16.mxu0 %v481
    %1408 = vmatmul.mubr.bf16.gmra.mrb[0].mxu0 %v480
    %v1409 = vpop.f32.mrb[0].mxu0
    %v1410 = vadd.f32 %v1313, %v1409
    %v1411 = vpop.f32.mrb[0].mxu0
    %v1412 = vpop.f32.mrb[0].mxu0
    %v1413 = vadd.f32 %v1316, %v1412
    %v1414 = vpop.f32.mrb[0].mxu0
    %1415 = vdwg.mxu0
    %1416 = vmatprep.subr.bf16.mxu0 0
    %1417 = vmatpush1.bf16.msra.mxu0 %v1045
    %1418 = vmatprep.subr.bf16.mxu0 0
    %1419 = vmatpush1.bf16.msra.mxu0 %v1046
    %1420 = vmatprep.subr.bf16.mxu0 0
    %1421 = vmatpush1.bf16.msra.mxu0 %v1047
    %1422 = vmatprep.subr.bf16.mxu0 0
    %1423 = vmatpush1.bf16.msra.mxu0 %v1048
    %1424 = vmatprep.subr.bf16.mxu0 0
    %1425 = vmatpush1.bf16.msra.mxu0 %v1049
    %1426 = vmatprep.subr.bf16.mxu0 0
    %1427 = vmatpush1.bf16.msra.mxu0 %v1050
    %1428 = vmatprep.subr.bf16.mxu0 0
    %1429 = vmatpush1.bf16.msra.mxu0 %v1051
    %1430 = vmatprep.subr.bf16.mxu0 0
    %1431 = vmatpush1.bf16.msra.mxu0 %v1052
    %1432 = vmatprep.subr.bf16.mxu0 0
    %1433 = vmatpush1.bf16.msra.mxu0 %v1053
    %1434 = vmatprep.subr.bf16.mxu0 0
    %1435 = vmatpush1.bf16.msra.mxu0 %v1054
    %1436 = vmatprep.subr.bf16.mxu0 0
    %1437 = vmatpush1.bf16.msra.mxu0 %v1055
    %1438 = vmatprep.subr.bf16.mxu0 0
    %1439 = vmatpush1.bf16.msra.mxu0 %v1056
    %1440 = vmatprep.subr.bf16.mxu0 0
    %1441 = vmatpush1.bf16.msra.mxu0 %v1057
    %1442 = vmatprep.subr.bf16.mxu0 0
    %1443 = vmatpush1.bf16.msra.mxu0 %v1058
    %1444 = vmatprep.subr.bf16.mxu0 0
    %1445 = vmatpush1.bf16.msra.mxu0 %v1059
    %1446 = vmatprep.subr.bf16.mxu0 0
    %1447 = vmatpush1.bf16.msra.mxu0 %v1060
    %1448 = vmatprep.mubr.bf16.mxu0 %v427
    %1449 = vmatmul.mubr.bf16.gmra.mrb[0].mxu0 %v426
    %v1450 = vpop.f32.mrb[0].mxu0
    %v1451 = vadd.f32 %v1354, %v1450
    %v1452 = vpop.f32.mrb[0].mxu0
    %v1453 = vpop.f32.mrb[0].mxu0
    %v1454 = vadd.f32 %v1357, %v1453
    %v1455 = vpop.f32.mrb[0].mxu0
    %1456 = vmatprep.mubr.bf16.mxu0 %v435
    %1457 = vmatmul.mubr.bf16.gmra.mrb[0].mxu0 %v434
    %v1458 = vpop.f32.mrb[0].mxu0
    %v1459 = vadd.f32 %v1362, %v1458
    %v1460 = vpop.f32.mrb[0].mxu0
    %v1461 = vpop.f32.mrb[0].mxu0
    %v1462 = vadd.f32 %v1365, %v1461
    %v1463 = vpop.f32.mrb[0].mxu0
    %1464 = vmatprep.mubr.bf16.mxu0 %v443
    %1465 = vmatmul.mubr.bf16.gmra.mrb[0].mxu0 %v442
    %v1466 = vpop.f32.mrb[0].mxu0
    %v1467 = vadd.f32 %v1370, %v1466
    %v1468 = vpop.f32.mrb[0].mxu0
    %v1469 = vpop.f32.mrb[0].mxu0
    %v1470 = vadd.f32 %v1373, %v1469
    %v1471 = vpop.f32.mrb[0].mxu0
    %1472 = vmatprep.mubr.bf16.mxu0 %v451
    %1473 = vmatmul.mubr.bf16.gmra.mrb[0].mxu0 %v450
    %v1474 = vpop.f32.mrb[0].mxu0
    %v1475 = vadd.f32 %v1378, %v1474
    %v1476 = vpop.f32.mrb[0].mxu0
    %v1477 = vpop.f32.mrb[0].mxu0
    %v1478 = vadd.f32 %v1381, %v1477
    %v1479 = vpop.f32.mrb[0].mxu0
    %1480 = vmatprep.mubr.bf16.mxu0 %v459
    %1481 = vmatmul.mubr.bf16.gmra.mrb[0].mxu0 %v458
    %v1482 = vpop.f32.mrb[0].mxu0
    %v1483 = vadd.f32 %v1386, %v1482
    %v1484 = vpop.f32.mrb[0].mxu0
    %v1485 = vpop.f32.mrb[0].mxu0
    %v1486 = vadd.f32 %v1389, %v1485
    %v1487 = vpop.f32.mrb[0].mxu0
    %1488 = vmatprep.mubr.bf16.mxu0 %v467
    %1489 = vmatmul.mubr.bf16.gmra.mrb[0].mxu0 %v466
    %v1490 = vpop.f32.mrb[0].mxu0
    %v1491 = vadd.f32 %v1394, %v1490
    %v1492 = vpop.f32.mrb[0].mxu0
    %v1493 = vpop.f32.mrb[0].mxu0
    %v1494 = vadd.f32 %v1397, %v1493
    %v1495 = vpop.f32.mrb[0].mxu0
    %1496 = vmatprep.mubr.bf16.mxu0 %v475
    %1497 = vmatmul.mubr.bf16.gmra.mrb[0].mxu0 %v474
    %v1498 = vpop.f32.mrb[0].mxu0
    %v1499 = vadd.f32 %v1402, %v1498
    %v1500 = vpop.f32.mrb[0].mxu0
    %v1501 = vpop.f32.mrb[0].mxu0
    %v1502 = vadd.f32 %v1405, %v1501
    %v1503 = vpop.f32.mrb[0].mxu0
    %1504 = vmatprep.mubr.bf16.mxu0 %v483
    %1505 = vmatmul.mubr.bf16.gmra.mrb[0].mxu0 %v482
    %v1506 = vpop.f32.mrb[0].mxu0
    %v1507 = vadd.f32 %v1410, %v1506
    %v1508 = vpop.f32.mrb[0].mxu0
    %v1509 = vpop.f32.mrb[0].mxu0
    %v1510 = vadd.f32 %v1413, %v1509
    %v1511 = vpop.f32.mrb[0].mxu0
    %1512 = vdwg.mxu0
    %v1641 = vunpack.c.l.b16 %v484
    %v1642 = vunpack.c.l.b16 %v485
    %v1643 = vunpack.c.l.b16 %v486
    %v1644 = vunpack.c.l.b16 %v487
    %v1645 = vunpack.c.l.b16 %v488
    %v1646 = vunpack.c.l.b16 %v489
    %v1647 = vunpack.c.l.b16 %v490
    %v1648 = vunpack.c.l.b16 %v491
    %v1649 = vunpack.c.l.b16 %v492
    %v1650 = vunpack.c.l.b16 %v493
    %v1651 = vunpack.c.l.b16 %v494
    %v1652 = vunpack.c.l.b16 %v495
    %v1653 = vunpack.c.l.b16 %v496
    %v1654 = vunpack.c.l.b16 %v497
    %v1655 = vunpack.c.l.b16 %v498
    %v1656 = vunpack.c.l.b16 %v499
    %v1657 = vunpack.c.l.b16 %v500
    %v1658 = vunpack.c.l.b16 %v501
    %v1659 = vunpack.c.l.b16 %v502
    %v1660 = vunpack.c.l.b16 %v503
    %v1661 = vunpack.c.l.b16 %v504
    %v1662 = vunpack.c.l.b16 %v505
    %v1663 = vunpack.c.l.b16 %v506
    %v1664 = vunpack.c.l.b16 %v507
    %v1665 = vunpack.c.l.b16 %v508
    %v1666 = vunpack.c.l.b16 %v509
    %v1667 = vunpack.c.l.b16 %v510
    %v1668 = vunpack.c.l.b16 %v511
    %v1669 = vunpack.c.l.b16 %v512
    %v1670 = vunpack.c.l.b16 %v513
    %v1671 = vunpack.c.l.b16 %v514
    %v1672 = vunpack.c.l.b16 %v515
    %v1673 = vunpack.c.l.b16 %v516
    %v1674 = vunpack.c.l.b16 %v517
    %v1675 = vunpack.c.l.b16 %v518
    %v1676 = vunpack.c.l.b16 %v519
    %v1677 = vunpack.c.l.b16 %v520
    %v1678 = vunpack.c.l.b16 %v521
    %v1679 = vunpack.c.l.b16 %v522
    %v1680 = vunpack.c.l.b16 %v523
    %v1681 = vunpack.c.l.b16 %v524
    %v1682 = vunpack.c.l.b16 %v525
    %v1683 = vunpack.c.l.b16 %v526
    %v1684 = vunpack.c.l.b16 %v527
    %v1685 = vunpack.c.l.b16 %v528
    %v1686 = vunpack.c.l.b16 %v529
    %v1687 = vunpack.c.l.b16 %v530
    %v1688 = vunpack.c.l.b16 %v531
    %v1689 = vunpack.c.l.b16 %v532
    %v1690 = vunpack.c.l.b16 %v533
    %v1691 = vunpack.c.l.b16 %v534
    %v1692 = vunpack.c.l.b16 %v535
    %v1693 = vunpack.c.l.b16 %v536
    %v1694 = vunpack.c.l.b16 %v537
    %v1695 = vunpack.c.l.b16 %v538
    %v1696 = vunpack.c.l.b16 %v539
    %v1697 = vunpack.c.l.b16 %v540
    %v1698 = vunpack.c.l.b16 %v541
    %v1699 = vunpack.c.l.b16 %v542
    %v1700 = vunpack.c.l.b16 %v543
    %v1701 = vunpack.c.l.b16 %v544
    %v1702 = vunpack.c.l.b16 %v545
    %v1703 = vunpack.c.l.b16 %v546
    %v1704 = vunpack.c.l.b16 %v547
    %v1705 = vunpack.c.l.b16 %v548
    %v1706 = vunpack.c.l.b16 %v549
    %v1707 = vunpack.c.l.b16 %v550
    %v1708 = vunpack.c.l.b16 %v551
    %v1709 = vunpack.c.l.b16 %v552
    %v1710 = vunpack.c.l.b16 %v553
    %v1711 = vunpack.c.l.b16 %v554
    %v1712 = vunpack.c.l.b16 %v555
    %v1713 = vunpack.c.l.b16 %v556
    %v1714 = vunpack.c.l.b16 %v557
    %v1715 = vunpack.c.l.b16 %v558
    %v1716 = vunpack.c.l.b16 %v559
    %v1717 = vunpack.c.l.b16 %v560
    %v1718 = vunpack.c.l.b16 %v561
    %v1719 = vunpack.c.l.b16 %v562
    %v1720 = vunpack.c.l.b16 %v563
    %v1721 = vunpack.c.l.b16 %v564
    %v1722 = vunpack.c.l.b16 %v565
    %v1723 = vunpack.c.l.b16 %v566
    %v1724 = vunpack.c.l.b16 %v567
    %v1725 = vunpack.c.l.b16 %v568
    %v1726 = vunpack.c.l.b16 %v569
    %v1727 = vunpack.c.l.b16 %v570
    %v1728 = vunpack.c.l.b16 %v571
    %v1729 = vunpack.c.l.b16 %v572
    %v1730 = vunpack.c.l.b16 %v573
    %v1731 = vunpack.c.l.b16 %v574
    %v1732 = vunpack.c.l.b16 %v575
    %v1733 = vunpack.c.l.b16 %v576
    %v1734 = vunpack.c.l.b16 %v577
    %v1735 = vunpack.c.l.b16 %v578
    %v1736 = vunpack.c.l.b16 %v579
    %v1737 = vunpack.c.l.b16 %v580
    %v1738 = vunpack.c.l.b16 %v581
    %v1739 = vunpack.c.l.b16 %v582
    %v1740 = vunpack.c.l.b16 %v583
    %v1741 = vunpack.c.l.b16 %v584
    %v1742 = vunpack.c.l.b16 %v585
    %v1743 = vunpack.c.l.b16 %v586
    %v1744 = vunpack.c.l.b16 %v587
    %v1745 = vunpack.c.l.b16 %v588
    %v1746 = vunpack.c.l.b16 %v589
    %v1747 = vunpack.c.l.b16 %v590
    %v1748 = vunpack.c.l.b16 %v591
    %v1749 = vunpack.c.l.b16 %v592
    %v1750 = vunpack.c.l.b16 %v593
    %v1751 = vunpack.c.l.b16 %v594
    %v1752 = vunpack.c.l.b16 %v595
    %v1753 = vunpack.c.l.b16 %v596
    %v1754 = vunpack.c.l.b16 %v597
    %v1755 = vunpack.c.l.b16 %v598
    %v1756 = vunpack.c.l.b16 %v599
    %v1757 = vunpack.c.l.b16 %v600
    %v1758 = vunpack.c.l.b16 %v601
    %v1759 = vunpack.c.l.b16 %v602
    %v1760 = vunpack.c.l.b16 %v603
    %v1761 = vunpack.c.l.b16 %v604
    %v1762 = vunpack.c.l.b16 %v605
    %v1763 = vunpack.c.l.b16 %v606
    %v1764 = vunpack.c.l.b16 %v607
    %v1765 = vunpack.c.l.b16 %v608
    %v1766 = vunpack.c.l.b16 %v609
    %v1767 = vunpack.c.l.b16 %v610
    %v1768 = vunpack.c.l.b16 %v611
    %v1769 = vpack.c.b16 %v1642, %v1641
    %v1770 = vpack.c.b16 %v1644, %v1643
    %v1771 = vpack.c.b16 %v1646, %v1645
    %v1772 = vpack.c.b16 %v1648, %v1647
    %v1773 = vpack.c.b16 %v1650, %v1649
    %v1774 = vpack.c.b16 %v1652, %v1651
    %v1775 = vpack.c.b16 %v1654, %v1653
    %v1776 = vpack.c.b16 %v1656, %v1655
    %v1777 = vpack.c.b16 %v1658, %v1657
    %v1778 = vpack.c.b16 %v1660, %v1659
    %v1779 = vpack.c.b16 %v1662, %v1661
    %v1780 = vpack.c.b16 %v1664, %v1663
    %v1781 = vpack.c.b16 %v1666, %v1665
    %v1782 = vpack.c.b16 %v1668, %v1667
    %v1783 = vpack.c.b16 %v1670, %v1669
    %v1784 = vpack.c.b16 %v1672, %v1671
    %v1785 = vpack.c.b16 %v1674, %v1673
    %v1786 = vpack.c.b16 %v1676, %v1675
    %v1787 = vpack.c.b16 %v1678, %v1677
    %v1788 = vpack.c.b16 %v1680, %v1679
    %v1789 = vpack.c.b16 %v1682, %v1681
    %v1790 = vpack.c.b16 %v1684, %v1683
    %v1791 = vpack.c.b16 %v1686, %v1685
    %v1792 = vpack.c.b16 %v1688, %v1687
    %v1793 = vpack.c.b16 %v1690, %v1689
    %v1794 = vpack.c.b16 %v1692, %v1691
    %v1795 = vpack.c.b16 %v1694, %v1693
    %v1796 = vpack.c.b16 %v1696, %v1695
    %v1797 = vpack.c.b16 %v1698, %v1697
    %v1798 = vpack.c.b16 %v1700, %v1699
    %v1799 = vpack.c.b16 %v1702, %v1701
    %v1800 = vpack.c.b16 %v1704, %v1703
    %v1801 = vpack.c.b16 %v1706, %v1705
    %v1802 = vpack.c.b16 %v1708, %v1707
    %v1803 = vpack.c.b16 %v1710, %v1709
    %v1804 = vpack.c.b16 %v1712, %v1711
    %v1805 = vpack.c.b16 %v1714, %v1713
    %v1806 = vpack.c.b16 %v1716, %v1715
    %v1807 = vpack.c.b16 %v1718, %v1717
    %v1808 = vpack.c.b16 %v1720, %v1719
    %v1809 = vpack.c.b16 %v1722, %v1721
    %v1810 = vpack.c.b16 %v1724, %v1723
    %v1811 = vpack.c.b16 %v1726, %v1725
    %v1812 = vpack.c.b16 %v1728, %v1727
    %v1813 = vpack.c.b16 %v1730, %v1729
    %v1814 = vpack.c.b16 %v1732, %v1731
    %v1815 = vpack.c.b16 %v1734, %v1733
    %v1816 = vpack.c.b16 %v1736, %v1735
    %v1817 = vpack.c.b16 %v1738, %v1737
    %v1818 = vpack.c.b16 %v1740, %v1739
    %v1819 = vpack.c.b16 %v1742, %v1741
    %v1820 = vpack.c.b16 %v1744, %v1743
    %v1821 = vpack.c.b16 %v1746, %v1745
    %v1822 = vpack.c.b16 %v1748, %v1747
    %v1823 = vpack.c.b16 %v1750, %v1749
    %v1824 = vpack.c.b16 %v1752, %v1751
    %v1825 = vpack.c.b16 %v1754, %v1753
    %v1826 = vpack.c.b16 %v1756, %v1755
    %v1827 = vpack.c.b16 %v1758, %v1757
    %v1828 = vpack.c.b16 %v1760, %v1759
    %v1829 = vpack.c.b16 %v1762, %v1761
    %v1830 = vpack.c.b16 %v1764, %v1763
    %v1831 = vpack.c.b16 %v1766, %v1765
    %v1832 = vpack.c.b16 %v1768, %v1767
    %1897 = vmatprep.subr.bf16.mxu0 0
    %1898 = vmatpush1.bf16.msra.mxu0 %v1769
    %1899 = vmatprep.subr.bf16.mxu0 0
    %1900 = vmatpush1.bf16.msra.mxu0 %v1770
    %1901 = vmatprep.subr.bf16.mxu0 0
    %1902 = vmatpush1.bf16.msra.mxu0 %v1771
    %1903 = vmatprep.subr.bf16.mxu0 0
    %1904 = vmatpush1.bf16.msra.mxu0 %v1772
    %1905 = vmatprep.subr.bf16.mxu0 0
    %1906 = vmatpush1.bf16.msra.mxu0 %v1773
    %1907 = vmatprep.subr.bf16.mxu0 0
    %1908 = vmatpush1.bf16.msra.mxu0 %v1774
    %1909 = vmatprep.subr.bf16.mxu0 0
    %1910 = vmatpush1.bf16.msra.mxu0 %v1775
    %1911 = vmatprep.subr.bf16.mxu0 0
    %1912 = vmatpush1.bf16.msra.mxu0 %v1776
    %1913 = vmatprep.subr.bf16.mxu0 0
    %1914 = vmatpush1.bf16.msra.mxu0 %v1777
    %1915 = vmatprep.subr.bf16.mxu0 0
    %1916 = vmatpush1.bf16.msra.mxu0 %v1778
    %1917 = vmatprep.subr.bf16.mxu0 0
    %1918 = vmatpush1.bf16.msra.mxu0 %v1779
    %1919 = vmatprep.subr.bf16.mxu0 0
    %1920 = vmatpush1.bf16.msra.mxu0 %v1780
    %1921 = vmatprep.subr.bf16.mxu0 0
    %1922 = vmatpush1.bf16.msra.mxu0 %v1781
    %1923 = vmatprep.subr.bf16.mxu0 0
    %1924 = vmatpush1.bf16.msra.mxu0 %v1782
    %1925 = vmatprep.subr.bf16.mxu0 0
    %1926 = vmatpush1.bf16.msra.mxu0 %v1783
    %1927 = vmatprep.subr.bf16.mxu0 0
    %1928 = vmatpush1.bf16.msra.mxu0 %v1784
    %1929 = vmatprep.mubr.bf16.mxu0 %v421
    %1930 = vmatmul.mubr.bf16.gmra.mrb[0].mxu0 %v420
    %v1931 = vpop.f32.mrb[0].mxu0
    %v1932 = vadd.f32 %v1451, %v1931
    %v1933 = vpop.f32.mrb[0].mxu0
    %v1934 = vpop.f32.mrb[0].mxu0
    %v1935 = vadd.f32 %v1454, %v1934
    %v1936 = vpop.f32.mrb[0].mxu0
    %1937 = vmatprep.mubr.bf16.mxu0 %v429
    %1938 = vmatmul.mubr.bf16.gmra.mrb[0].mxu0 %v428
    %v1939 = vpop.f32.mrb[0].mxu0
    %v1940 = vadd.f32 %v1459, %v1939
    %v1941 = vpop.f32.mrb[0].mxu0
    %v1942 = vpop.f32.mrb[0].mxu0
    %v1943 = vadd.f32 %v1462, %v1942
    %v1944 = vpop.f32.mrb[0].mxu0
    %1945 = vmatprep.mubr.bf16.mxu0 %v437
    %1946 = vmatmul.mubr.bf16.gmra.mrb[0].mxu0 %v436
    %v1947 = vpop.f32.mrb[0].mxu0
    %v1948 = vadd.f32 %v1467, %v1947
    %v1949 = vpop.f32.mrb[0].mxu0
    %v1950 = vpop.f32.mrb[0].mxu0
    %v1951 = vadd.f32 %v1470, %v1950
    %v1952 = vpop.f32.mrb[0].mxu0
    %1953 = vmatprep.mubr.bf16.mxu0 %v445
    %1954 = vmatmul.mubr.bf16.gmra.mrb[0].mxu0 %v444
    %v1955 = vpop.f32.mrb[0].mxu0
    %v1956 = vadd.f32 %v1475, %v1955
    %v1957 = vpop.f32.mrb[0].mxu0
    %v1958 = vpop.f32.mrb[0].mxu0
    %v1959 = vadd.f32 %v1478, %v1958
    %v1960 = vpop.f32.mrb[0].mxu0
    %1961 = vmatprep.mubr.bf16.mxu0 %v453
    %1962 = vmatmul.mubr.bf16.gmra.mrb[0].mxu0 %v452
    %v1963 = vpop.f32.mrb[0].mxu0
    %v1964 = vadd.f32 %v1483, %v1963
    %v1965 = vpop.f32.mrb[0].mxu0
    %v1966 = vpop.f32.mrb[0].mxu0
    %v1967 = vadd.f32 %v1486, %v1966
    %v1968 = vpop.f32.mrb[0].mxu0
    %1969 = vmatprep.mubr.bf16.mxu0 %v461
    %1970 = vmatmul.mubr.bf16.gmra.mrb[0].mxu0 %v460
    %v1971 = vpop.f32.mrb[0].mxu0
    %v1972 = vadd.f32 %v1491, %v1971
    %v1973 = vpop.f32.mrb[0].mxu0
    %v1974 = vpop.f32.mrb[0].mxu0
    %v1975 = vadd.f32 %v1494, %v1974
    %v1976 = vpop.f32.mrb[0].mxu0
    %1977 = vmatprep.mubr.bf16.mxu0 %v469
    %1978 = vmatmul.mubr.bf16.gmra.mrb[0].mxu0 %v468
    %v1979 = vpop.f32.mrb[0].mxu0
    %v1980 = vadd.f32 %v1499, %v1979
    %v1981 = vpop.f32.mrb[0].mxu0
    %v1982 = vpop.f32.mrb[0].mxu0
    %v1983 = vadd.f32 %v1502, %v1982
    %v1984 = vpop.f32.mrb[0].mxu0
    %1985 = vmatprep.mubr.bf16.mxu0 %v477
    %1986 = vmatmul.mubr.bf16.gmra.mrb[0].mxu0 %v476
    %v1987 = vpop.f32.mrb[0].mxu0
    %v1988 = vadd.f32 %v1507, %v1987
    %v1989 = vpop.f32.mrb[0].mxu0
    %v1990 = vpop.f32.mrb[0].mxu0
    %v1991 = vadd.f32 %v1510, %v1990
    %v1992 = vpop.f32.mrb[0].mxu0
    %1993 = vdwg.mxu0
    %1994 = vmatprep.subr.bf16.mxu0 0
    %1995 = vmatpush1.bf16.msra.mxu0 %v1785
    %1996 = vmatprep.subr.bf16.mxu0 0
    %1997 = vmatpush1.bf16.msra.mxu0 %v1786
    %1998 = vmatprep.subr.bf16.mxu0 0
    %1999 = vmatpush1.bf16.msra.mxu0 %v1787
    %2000 = vmatprep.subr.bf16.mxu0 0
    %2001 = vmatpush1.bf16.msra.mxu0 %v1788
    %2002 = vmatprep.subr.bf16.mxu0 0
    %2003 = vmatpush1.bf16.msra.mxu0 %v1789
    %2004 = vmatprep.subr.bf16.mxu0 0
    %2005 = vmatpush1.bf16.msra.mxu0 %v1790
    %2006 = vmatprep.subr.bf16.mxu0 0
    %2007 = vmatpush1.bf16.msra.mxu0 %v1791
    %2008 = vmatprep.subr.bf16.mxu0 0
    %2009 = vmatpush1.bf16.msra.mxu0 %v1792
    %2010 = vmatprep.subr.bf16.mxu0 0
    %2011 = vmatpush1.bf16.msra.mxu0 %v1793
    %2012 = vmatprep.subr.bf16.mxu0 0
    %2013 = vmatpush1.bf16.msra.mxu0 %v1794
    %2014 = vmatprep.subr.bf16.mxu0 0
    %2015 = vmatpush1.bf16.msra.mxu0 %v1795
    %2016 = vmatprep.subr.bf16.mxu0 0
    %2017 = vmatpush1.bf16.msra.mxu0 %v1796
    %2018 = vmatprep.subr.bf16.mxu0 0
    %2019 = vmatpush1.bf16.msra.mxu0 %v1797
    %2020 = vmatprep.subr.bf16.mxu0 0
    %2021 = vmatpush1.bf16.msra.mxu0 %v1798
    %2022 = vmatprep.subr.bf16.mxu0 0
    %2023 = vmatpush1.bf16.msra.mxu0 %v1799
    %2024 = vmatprep.subr.bf16.mxu0 0
    %2025 = vmatpush1.bf16.msra.mxu0 %v1800
    %2026 = vmatprep.mubr.bf16.mxu0 %v423
    %2027 = vmatmul.mubr.bf16.gmra.mrb[0].mxu0 %v422
    %v2028 = vpop.f32.mrb[0].mxu0
    %v2029 = vadd.f32 %v1932, %v2028
    %v2030 = vpop.f32.mrb[0].mxu0
    %v2031 = vpop.f32.mrb[0].mxu0
    %v2032 = vadd.f32 %v1935, %v2031
    %v2033 = vpop.f32.mrb[0].mxu0
    %2034 = vmatprep.mubr.bf16.mxu0 %v431
    %2035 = vmatmul.mubr.bf16.gmra.mrb[0].mxu0 %v430
    %v2036 = vpop.f32.mrb[0].mxu0
    %v2037 = vadd.f32 %v1940, %v2036
    %v2038 = vpop.f32.mrb[0].mxu0
    %v2039 = vpop.f32.mrb[0].mxu0
    %v2040 = vadd.f32 %v1943, %v2039
    %v2041 = vpop.f32.mrb[0].mxu0
    %2042 = vmatprep.mubr.bf16.mxu0 %v439
    %2043 = vmatmul.mubr.bf16.gmra.mrb[0].mxu0 %v438
    %v2044 = vpop.f32.mrb[0].mxu0
    %v2045 = vadd.f32 %v1948, %v2044
    %v2046 = vpop.f32.mrb[0].mxu0
    %v2047 = vpop.f32.mrb[0].mxu0
    %v2048 = vadd.f32 %v1951, %v2047
    %v2049 = vpop.f32.mrb[0].mxu0
    %2050 = vmatprep.mubr.bf16.mxu0 %v447
    %2051 = vmatmul.mubr.bf16.gmra.mrb[0].mxu0 %v446
    %v2052 = vpop.f32.mrb[0].mxu0
    %v2053 = vadd.f32 %v1956, %v2052
    %v2054 = vpop.f32.mrb[0].mxu0
    %v2055 = vpop.f32.mrb[0].mxu0
    %v2056 = vadd.f32 %v1959, %v2055
    %v2057 = vpop.f32.mrb[0].mxu0
    %2058 = vmatprep.mubr.bf16.mxu0 %v455
    %2059 = vmatmul.mubr.bf16.gmra.mrb[0].mxu0 %v454
    %v2060 = vpop.f32.mrb[0].mxu0
    %v2061 = vadd.f32 %v1964, %v2060
    %v2062 = vpop.f32.mrb[0].mxu0
    %v2063 = vpop.f32.mrb[0].mxu0
    %v2064 = vadd.f32 %v1967, %v2063
    %v2065 = vpop.f32.mrb[0].mxu0
    %2066 = vmatprep.mubr.bf16.mxu0 %v463
    %2067 = vmatmul.mubr.bf16.gmra.mrb[0].mxu0 %v462
    %v2068 = vpop.f32.mrb[0].mxu0
    %v2069 = vadd.f32 %v1972, %v2068
    %v2070 = vpop.f32.mrb[0].mxu0
    %v2071 = vpop.f32.mrb[0].mxu0
    %v2072 = vadd.f32 %v1975, %v2071
    %v2073 = vpop.f32.mrb[0].mxu0
    %2074 = vmatprep.mubr.bf16.mxu0 %v471
    %2075 = vmatmul.mubr.bf16.gmra.mrb[0].mxu0 %v470
    %v2076 = vpop.f32.mrb[0].mxu0
    %v2077 = vadd.f32 %v1980, %v2076
    %v2078 = vpop.f32.mrb[0].mxu0
    %v2079 = vpop.f32.mrb[0].mxu0
    %v2080 = vadd.f32 %v1983, %v2079
    %v2081 = vpop.f32.mrb[0].mxu0
    %2082 = vmatprep.mubr.bf16.mxu0 %v479
    %2083 = vmatmul.mubr.bf16.gmra.mrb[0].mxu0 %v478
    %v2084 = vpop.f32.mrb[0].mxu0
    %v2085 = vadd.f32 %v1988, %v2084
    %v2086 = vpop.f32.mrb[0].mxu0
    %v2087 = vpop.f32.mrb[0].mxu0
    %v2088 = vadd.f32 %v1991, %v2087
    %v2089 = vpop.f32.mrb[0].mxu0
    %2090 = vdwg.mxu0
    %2091 = vmatprep.subr.bf16.mxu0 0
    %2092 = vmatpush1.bf16.msra.mxu0 %v1801
    %2093 = vmatprep.subr.bf16.mxu0 0
    %2094 = vmatpush1.bf16.msra.mxu0 %v1802
    %2095 = vmatprep.subr.bf16.mxu0 0
    %2096 = vmatpush1.bf16.msra.mxu0 %v1803
    %2097 = vmatprep.subr.bf16.mxu0 0
    %2098 = vmatpush1.bf16.msra.mxu0 %v1804
    %2099 = vmatprep.subr.bf16.mxu0 0
    %2100 = vmatpush1.bf16.msra.mxu0 %v1805
    %2101 = vmatprep.subr.bf16.mxu0 0
    %2102 = vmatpush1.bf16.msra.mxu0 %v1806
    %2103 = vmatprep.subr.bf16.mxu0 0
    %2104 = vmatpush1.bf16.msra.mxu0 %v1807
    %2105 = vmatprep.subr.bf16.mxu0 0
    %2106 = vmatpush1.bf16.msra.mxu0 %v1808
    %2107 = vmatprep.subr.bf16.mxu0 0
    %2108 = vmatpush1.bf16.msra.mxu0 %v1809
    %2109 = vmatprep.subr.bf16.mxu0 0
    %2110 = vmatpush1.bf16.msra.mxu0 %v1810
    %2111 = vmatprep.subr.bf16.mxu0 0
    %2112 = vmatpush1.bf16.msra.mxu0 %v1811
    %2113 = vmatprep.subr.bf16.mxu0 0
    %2114 = vmatpush1.bf16.msra.mxu0 %v1812
    %2115 = vmatprep.subr.bf16.mxu0 0
    %2116 = vmatpush1.bf16.msra.mxu0 %v1813
    %2117 = vmatprep.subr.bf16.mxu0 0
    %2118 = vmatpush1.bf16.msra.mxu0 %v1814
    %2119 = vmatprep.subr.bf16.mxu0 0
    %2120 = vmatpush1.bf16.msra.mxu0 %v1815
    %2121 = vmatprep.subr.bf16.mxu0 0
    %2122 = vmatpush1.bf16.msra.mxu0 %v1816
    %2123 = vmatprep.mubr.bf16.mxu0 %v425
    %2124 = vmatmul.mubr.bf16.gmra.mrb[0].mxu0 %v424
    %v2125 = vpop.f32.mrb[0].mxu0
    %v2126 = vadd.f32 %v2029, %v2125
    %v2127 = vpop.f32.mrb[0].mxu0
    %v2128 = vpop.f32.mrb[0].mxu0
    %v2129 = vadd.f32 %v2032, %v2128
    %v2130 = vpop.f32.mrb[0].mxu0
    %2131 = vmatprep.mubr.bf16.mxu0 %v433
    %2132 = vmatmul.mubr.bf16.gmra.mrb[0].mxu0 %v432
    %v2133 = vpop.f32.mrb[0].mxu0
    %v2134 = vadd.f32 %v2037, %v2133
    %v2135 = vpop.f32.mrb[0].mxu0
    %v2136 = vpop.f32.mrb[0].mxu0
    %v2137 = vadd.f32 %v2040, %v2136
    %v2138 = vpop.f32.mrb[0].mxu0
    %2139 = vmatprep.mubr.bf16.mxu0 %v441
    %2140 = vmatmul.mubr.bf16.gmra.mrb[0].mxu0 %v440
    %v2141 = vpop.f32.mrb[0].mxu0
    %v2142 = vadd.f32 %v2045, %v2141
    %v2143 = vpop.f32.mrb[0].mxu0
    %v2144 = vpop.f32.mrb[0].mxu0
    %v2145 = vadd.f32 %v2048, %v2144
    %v2146 = vpop.f32.mrb[0].mxu0
    %2147 = vmatprep.mubr.bf16.mxu0 %v449
    %2148 = vmatmul.mubr.bf16.gmra.mrb[0].mxu0 %v448
    %v2149 = vpop.f32.mrb[0].mxu0
    %v2150 = vadd.f32 %v2053, %v2149
    %v2151 = vpop.f32.mrb[0].mxu0
    %v2152 = vpop.f32.mrb[0].mxu0
    %v2153 = vadd.f32 %v2056, %v2152
    %v2154 = vpop.f32.mrb[0].mxu0
    %2155 = vmatprep.mubr.bf16.mxu0 %v457
    %2156 = vmatmul.mubr.bf16.gmra.mrb[0].mxu0 %v456
    %v2157 = vpop.f32.mrb[0].mxu0
    %v2158 = vadd.f32 %v2061, %v2157
    %v2159 = vpop.f32.mrb[0].mxu0
    %v2160 = vpop.f32.mrb[0].mxu0
    %v2161 = vadd.f32 %v2064, %v2160
    %v2162 = vpop.f32.mrb[0].mxu0
    %2163 = vmatprep.mubr.bf16.mxu0 %v465
    %2164 = vmatmul.mubr.bf16.gmra.mrb[0].mxu0 %v464
    %v2165 = vpop.f32.mrb[0].mxu0
    %v2166 = vadd.f32 %v2069, %v2165
    %v2167 = vpop.f32.mrb[0].mxu0
    %v2168 = vpop.f32.mrb[0].mxu0
    %v2169 = vadd.f32 %v2072, %v2168
    %v2170 = vpop.f32.mrb[0].mxu0
    %2171 = vmatprep.mubr.bf16.mxu0 %v473
    %2172 = vmatmul.mubr.bf16.gmra.mrb[0].mxu0 %v472
    %v2173 = vpop.f32.mrb[0].mxu0
    %v2174 = vadd.f32 %v2077, %v2173
    %v2175 = vpop.f32.mrb[0].mxu0
    %v2176 = vpop.f32.mrb[0].mxu0
    %v2177 = vadd.f32 %v2080, %v2176
    %v2178 = vpop.f32.mrb[0].mxu0
    %2179 = vmatprep.mubr.bf16.mxu0 %v481
    %2180 = vmatmul.mubr.bf16.gmra.mrb[0].mxu0 %v480
    %v2181 = vpop.f32.mrb[0].mxu0
    %v2182 = vadd.f32 %v2085, %v2181
    %v2183 = vpop.f32.mrb[0].mxu0
    %v2184 = vpop.f32.mrb[0].mxu0
    %v2185 = vadd.f32 %v2088, %v2184
    %v2186 = vpop.f32.mrb[0].mxu0
    %2187 = vdwg.mxu0
    %2188 = vmatprep.subr.bf16.mxu0 0
    %2189 = vmatpush1.bf16.msra.mxu0 %v1817
    %2190 = vmatprep.subr.bf16.mxu0 0
    %2191 = vmatpush1.bf16.msra.mxu0 %v1818
    %2192 = vmatprep.subr.bf16.mxu0 0
    %2193 = vmatpush1.bf16.msra.mxu0 %v1819
    %2194 = vmatprep.subr.bf16.mxu0 0
    %2195 = vmatpush1.bf16.msra.mxu0 %v1820
    %2196 = vmatprep.subr.bf16.mxu0 0
    %2197 = vmatpush1.bf16.msra.mxu0 %v1821
    %2198 = vmatprep.subr.bf16.mxu0 0
    %2199 = vmatpush1.bf16.msra.mxu0 %v1822
    %2200 = vmatprep.subr.bf16.mxu0 0
    %2201 = vmatpush1.bf16.msra.mxu0 %v1823
    %2202 = vmatprep.subr.bf16.mxu0 0
    %2203 = vmatpush1.bf16.msra.mxu0 %v1824
    %2204 = vmatprep.subr.bf16.mxu0 0
    %2205 = vmatpush1.bf16.msra.mxu0 %v1825
    %2206 = vmatprep.subr.bf16.mxu0 0
    %2207 = vmatpush1.bf16.msra.mxu0 %v1826
    %2208 = vmatprep.subr.bf16.mxu0 0
    %2209 = vmatpush1.bf16.msra.mxu0 %v1827
    %2210 = vmatprep.subr.bf16.mxu0 0
    %2211 = vmatpush1.bf16.msra.mxu0 %v1828
    %2212 = vmatprep.subr.bf16.mxu0 0
    %2213 = vmatpush1.bf16.msra.mxu0 %v1829
    %2214 = vmatprep.subr.bf16.mxu0 0
    %2215 = vmatpush1.bf16.msra.mxu0 %v1830
    %2216 = vmatprep.subr.bf16.mxu0 0
    %2217 = vmatpush1.bf16.msra.mxu0 %v1831
    %2218 = vmatprep.subr.bf16.mxu0 0
    %2219 = vmatpush1.bf16.msra.mxu0 %v1832
    %2220 = vmatprep.mubr.bf16.mxu0 %v427
    %2221 = vmatmul.mubr.bf16.gmra.mrb[0].mxu0 %v426
    %v2222 = vpop.f32.mrb[0].mxu0
    %v2223 = vadd.f32 %v2126, %v2222
    %v2224 = vpop.f32.mrb[0].mxu0
    %v2225 = vpop.f32.mrb[0].mxu0
    %v2226 = vadd.f32 %v2129, %v2225
    %v2227 = vpop.f32.mrb[0].mxu0
    %2228 = vmatprep.mubr.bf16.mxu0 %v435
    %2229 = vmatmul.mubr.bf16.gmra.mrb[0].mxu0 %v434
    %v2230 = vpop.f32.mrb[0].mxu0
    %v2231 = vadd.f32 %v2134, %v2230
    %v2232 = vpop.f32.mrb[0].mxu0
    %v2233 = vpop.f32.mrb[0].mxu0
    %v2234 = vadd.f32 %v2137, %v2233
    %v2235 = vpop.f32.mrb[0].mxu0
    %2236 = vmatprep.mubr.bf16.mxu0 %v443
    %2237 = vmatmul.mubr.bf16.gmra.mrb[0].mxu0 %v442
    %v2238 = vpop.f32.mrb[0].mxu0
    %v2239 = vadd.f32 %v2142, %v2238
    %v2240 = vpop.f32.mrb[0].mxu0
    %v2241 = vpop.f32.mrb[0].mxu0
    %v2242 = vadd.f32 %v2145, %v2241
    %v2243 = vpop.f32.mrb[0].mxu0
    %2244 = vmatprep.mubr.bf16.mxu0 %v451
    %2245 = vmatmul.mubr.bf16.gmra.mrb[0].mxu0 %v450
    %v2246 = vpop.f32.mrb[0].mxu0
    %v2247 = vadd.f32 %v2150, %v2246
    %v2248 = vpop.f32.mrb[0].mxu0
    %v2249 = vpop.f32.mrb[0].mxu0
    %v2250 = vadd.f32 %v2153, %v2249
    %v2251 = vpop.f32.mrb[0].mxu0
    %2252 = vmatprep.mubr.bf16.mxu0 %v459
    %2253 = vmatmul.mubr.bf16.gmra.mrb[0].mxu0 %v458
    %v2254 = vpop.f32.mrb[0].mxu0
    %v2255 = vadd.f32 %v2158, %v2254
    %v2256 = vpop.f32.mrb[0].mxu0
    %v2257 = vpop.f32.mrb[0].mxu0
    %v2258 = vadd.f32 %v2161, %v2257
    %v2259 = vpop.f32.mrb[0].mxu0
    %2260 = vmatprep.mubr.bf16.mxu0 %v467
    %2261 = vmatmul.mubr.bf16.gmra.mrb[0].mxu0 %v466
    %v2262 = vpop.f32.mrb[0].mxu0
    %v2263 = vadd.f32 %v2166, %v2262
    %v2264 = vpop.f32.mrb[0].mxu0
    %v2265 = vpop.f32.mrb[0].mxu0
    %v2266 = vadd.f32 %v2169, %v2265
    %v2267 = vpop.f32.mrb[0].mxu0
    %2268 = vmatprep.mubr.bf16.mxu0 %v475
    %2269 = vmatmul.mubr.bf16.gmra.mrb[0].mxu0 %v474
    %v2270 = vpop.f32.mrb[0].mxu0
    %v2271 = vadd.f32 %v2174, %v2270
    %v2272 = vpop.f32.mrb[0].mxu0
    %v2273 = vpop.f32.mrb[0].mxu0
    %v2274 = vadd.f32 %v2177, %v2273
    %v2275 = vpop.f32.mrb[0].mxu0
    %2276 = vmatprep.mubr.bf16.mxu0 %v483
    %2277 = vmatmul.mubr.bf16.gmra.mrb[0].mxu0 %v482
    %v2278 = vpop.f32.mrb[0].mxu0
    %v2279 = vadd.f32 %v2182, %v2278
    %v2280 = vpop.f32.mrb[0].mxu0
    %v2281 = vpop.f32.mrb[0].mxu0
    %v2282 = vadd.f32 %v2185, %v2281
    %v2283 = vpop.f32.mrb[0].mxu0
    %2284 = vdwg.mxu0
    %s2285 = scalar_lea.vmem [#allocation2], 4096
    %v2286 = vld [vmem:[%s2285] sm:$0xf]
    %v2287 = vld [vmem:[%s2285 + $0x4] sm:$0xf]
    %v2288 = vld [vmem:[%s2285 + $0x8] sm:$0xf]
    %v2289 = vld [vmem:[%s2285 + $0xc] sm:$0xf]
    %v2290 = vld [vmem:[%s2285 + $0x10] sm:$0xf]
    %v2291 = vld [vmem:[%s2285 + $0x14] sm:$0xf]
    %v2292 = vld [vmem:[%s2285 + $0x18] sm:$0xf]
    %v2293 = vld [vmem:[%s2285 + $0x1c] sm:$0xf]
    %v2294 = vld [vmem:[%s2285 + $0x20] sm:$0xf]
    %v2295 = vld [vmem:[%s2285 + $0x24] sm:$0xf]
    %v2296 = vld [vmem:[%s2285 + $0x28] sm:$0xf]
    %v2297 = vld [vmem:[%s2285 + $0x2c] sm:$0xf]
    %v2298 = vld [vmem:[%s2285 + $0x30] sm:$0xf]
    %v2299 = vld [vmem:[%s2285 + $0x34] sm:$0xf]
    %v2300 = vld [vmem:[%s2285 + $0x38] sm:$0xf]
    %v2301 = vld [vmem:[%s2285 + $0x3c] sm:$0xf]
    %v2302 = vld [vmem:[%s2285 + $0x40] sm:$0xf]
    %v2303 = vld [vmem:[%s2285 + $0x44] sm:$0xf]
    %v2304 = vld [vmem:[%s2285 + $0x48] sm:$0xf]
    %v2305 = vld [vmem:[%s2285 + $0x4c] sm:$0xf]
    %v2306 = vld [vmem:[%s2285 + $0x50] sm:$0xf]
    %v2307 = vld [vmem:[%s2285 + $0x54] sm:$0xf]
    %v2308 = vld [vmem:[%s2285 + $0x58] sm:$0xf]
    %v2309 = vld [vmem:[%s2285 + $0x5c] sm:$0xf]
    %v2310 = vld [vmem:[%s2285 + $0x60] sm:$0xf]
    %v2311 = vld [vmem:[%s2285 + $0x64] sm:$0xf]
    %v2312 = vld [vmem:[%s2285 + $0x68] sm:$0xf]
    %v2313 = vld [vmem:[%s2285 + $0x6c] sm:$0xf]
    %v2314 = vld [vmem:[%s2285 + $0x70] sm:$0xf]
    %v2315 = vld [vmem:[%s2285 + $0x74] sm:$0xf]
    %v2316 = vld [vmem:[%s2285 + $0x78] sm:$0xf]
    %v2317 = vld [vmem:[%s2285 + $0x7c] sm:$0xf]
    %v2318 = vld [vmem:[%s2285 + $0x80] sm:$0xf]
    %v2319 = vld [vmem:[%s2285 + $0x84] sm:$0xf]
    %v2320 = vld [vmem:[%s2285 + $0x88] sm:$0xf]
    %v2321 = vld [vmem:[%s2285 + $0x8c] sm:$0xf]
    %v2322 = vld [vmem:[%s2285 + $0x90] sm:$0xf]
    %v2323 = vld [vmem:[%s2285 + $0x94] sm:$0xf]
    %v2324 = vld [vmem:[%s2285 + $0x98] sm:$0xf]
    %v2325 = vld [vmem:[%s2285 + $0x9c] sm:$0xf]
    %v2326 = vld [vmem:[%s2285 + $0xa0] sm:$0xf]
    %v2327 = vld [vmem:[%s2285 + $0xa4] sm:$0xf]
    %v2328 = vld [vmem:[%s2285 + $0xa8] sm:$0xf]
    %v2329 = vld [vmem:[%s2285 + $0xac] sm:$0xf]
    %v2330 = vld [vmem:[%s2285 + $0xb0] sm:$0xf]
    %v2331 = vld [vmem:[%s2285 + $0xb4] sm:$0xf]
    %v2332 = vld [vmem:[%s2285 + $0xb8] sm:$0xf]
    %v2333 = vld [vmem:[%s2285 + $0xbc] sm:$0xf]
    %v2334 = vld [vmem:[%s2285 + $0xc0] sm:$0xf]
    %v2335 = vld [vmem:[%s2285 + $0xc4] sm:$0xf]
    %v2336 = vld [vmem:[%s2285 + $0xc8] sm:$0xf]
    %v2337 = vld [vmem:[%s2285 + $0xcc] sm:$0xf]
    %v2338 = vld [vmem:[%s2285 + $0xd0] sm:$0xf]
    %v2339 = vld [vmem:[%s2285 + $0xd4] sm:$0xf]
    %v2340 = vld [vmem:[%s2285 + $0xd8] sm:$0xf]
    %v2341 = vld [vmem:[%s2285 + $0xdc] sm:$0xf]
    %v2342 = vld [vmem:[%s2285 + $0xe0] sm:$0xf]
    %v2343 = vld [vmem:[%s2285 + $0xe4] sm:$0xf]
    %v2344 = vld [vmem:[%s2285 + $0xe8] sm:$0xf]
    %v2345 = vld [vmem:[%s2285 + $0xec] sm:$0xf]
    %v2346 = vld [vmem:[%s2285 + $0xf0] sm:$0xf]
    %v2347 = vld [vmem:[%s2285 + $0xf4] sm:$0xf]
    %v2348 = vld [vmem:[%s2285 + $0xf8] sm:$0xf]
    %v2349 = vld [vmem:[%s2285 + $0xfc] sm:$0xf]
    %v2350 = vld [vmem:[%s2285 + $0x100] sm:$0xf]
    %v2351 = vld [vmem:[%s2285 + $0x104] sm:$0xf]
    %v2352 = vld [vmem:[%s2285 + $0x108] sm:$0xf]
    %v2353 = vld [vmem:[%s2285 + $0x10c] sm:$0xf]
    %v2354 = vld [vmem:[%s2285 + $0x110] sm:$0xf]
    %v2355 = vld [vmem:[%s2285 + $0x114] sm:$0xf]
    %v2356 = vld [vmem:[%s2285 + $0x118] sm:$0xf]
    %v2357 = vld [vmem:[%s2285 + $0x11c] sm:$0xf]
    %v2358 = vld [vmem:[%s2285 + $0x120] sm:$0xf]
    %v2359 = vld [vmem:[%s2285 + $0x124] sm:$0xf]
    %v2360 = vld [vmem:[%s2285 + $0x128] sm:$0xf]
    %v2361 = vld [vmem:[%s2285 + $0x12c] sm:$0xf]
    %v2362 = vld [vmem:[%s2285 + $0x130] sm:$0xf]
    %v2363 = vld [vmem:[%s2285 + $0x134] sm:$0xf]
    %v2364 = vld [vmem:[%s2285 + $0x138] sm:$0xf]
    %v2365 = vld [vmem:[%s2285 + $0x13c] sm:$0xf]
    %v2366 = vld [vmem:[%s2285 + $0x140] sm:$0xf]
    %v2367 = vld [vmem:[%s2285 + $0x144] sm:$0xf]
    %v2368 = vld [vmem:[%s2285 + $0x148] sm:$0xf]
    %v2369 = vld [vmem:[%s2285 + $0x14c] sm:$0xf]
    %v2370 = vld [vmem:[%s2285 + $0x150] sm:$0xf]
    %v2371 = vld [vmem:[%s2285 + $0x154] sm:$0xf]
    %v2372 = vld [vmem:[%s2285 + $0x158] sm:$0xf]
    %v2373 = vld [vmem:[%s2285 + $0x15c] sm:$0xf]
    %v2374 = vld [vmem:[%s2285 + $0x160] sm:$0xf]
    %v2375 = vld [vmem:[%s2285 + $0x164] sm:$0xf]
    %v2376 = vld [vmem:[%s2285 + $0x168] sm:$0xf]
    %v2377 = vld [vmem:[%s2285 + $0x16c] sm:$0xf]
    %v2378 = vld [vmem:[%s2285 + $0x170] sm:$0xf]
    %v2379 = vld [vmem:[%s2285 + $0x174] sm:$0xf]
    %v2380 = vld [vmem:[%s2285 + $0x178] sm:$0xf]
    %v2381 = vld [vmem:[%s2285 + $0x17c] sm:$0xf]
    %v2382 = vld [vmem:[%s2285 + $0x180] sm:$0xf]
    %v2383 = vld [vmem:[%s2285 + $0x184] sm:$0xf]
    %v2384 = vld [vmem:[%s2285 + $0x188] sm:$0xf]
    %v2385 = vld [vmem:[%s2285 + $0x18c] sm:$0xf]
    %v2386 = vld [vmem:[%s2285 + $0x190] sm:$0xf]
    %v2387 = vld [vmem:[%s2285 + $0x194] sm:$0xf]
    %v2388 = vld [vmem:[%s2285 + $0x198] sm:$0xf]
    %v2389 = vld [vmem:[%s2285 + $0x19c] sm:$0xf]
    %v2390 = vld [vmem:[%s2285 + $0x1a0] sm:$0xf]
    %v2391 = vld [vmem:[%s2285 + $0x1a4] sm:$0xf]
    %v2392 = vld [vmem:[%s2285 + $0x1a8] sm:$0xf]
    %v2393 = vld [vmem:[%s2285 + $0x1ac] sm:$0xf]
    %v2394 = vld [vmem:[%s2285 + $0x1b0] sm:$0xf]
    %v2395 = vld [vmem:[%s2285 + $0x1b4] sm:$0xf]
    %v2396 = vld [vmem:[%s2285 + $0x1b8] sm:$0xf]
    %v2397 = vld [vmem:[%s2285 + $0x1bc] sm:$0xf]
    %v2398 = vld [vmem:[%s2285 + $0x1c0] sm:$0xf]
    %v2399 = vld [vmem:[%s2285 + $0x1c4] sm:$0xf]
    %v2400 = vld [vmem:[%s2285 + $0x1c8] sm:$0xf]
    %v2401 = vld [vmem:[%s2285 + $0x1cc] sm:$0xf]
    %v2402 = vld [vmem:[%s2285 + $0x1d0] sm:$0xf]
    %v2403 = vld [vmem:[%s2285 + $0x1d4] sm:$0xf]
    %v2404 = vld [vmem:[%s2285 + $0x1d8] sm:$0xf]
    %v2405 = vld [vmem:[%s2285 + $0x1dc] sm:$0xf]
    %v2406 = vld [vmem:[%s2285 + $0x1e0] sm:$0xf]
    %v2407 = vld [vmem:[%s2285 + $0x1e4] sm:$0xf]
    %v2408 = vld [vmem:[%s2285 + $0x1e8] sm:$0xf]
    %v2409 = vld [vmem:[%s2285 + $0x1ec] sm:$0xf]
    %v2410 = vld [vmem:[%s2285 + $0x1f0] sm:$0xf]
    %v2411 = vld [vmem:[%s2285 + $0x1f4] sm:$0xf]
    %v2412 = vld [vmem:[%s2285 + $0x1f8] sm:$0xf]
    %v2413 = vld [vmem:[%s2285 + $0x1fc] sm:$0xf]
    %v2542 = vunpack.c.l.b16 %v2286
    %v2543 = vunpack.c.l.b16 %v2287
    %v2544 = vunpack.c.l.b16 %v2288
    %v2545 = vunpack.c.l.b16 %v2289
    %v2546 = vunpack.c.l.b16 %v2290
    %v2547 = vunpack.c.l.b16 %v2291
    %v2548 = vunpack.c.l.b16 %v2292
    %v2549 = vunpack.c.l.b16 %v2293
    %v2550 = vunpack.c.l.b16 %v2294
    %v2551 = vunpack.c.l.b16 %v2295
    %v2552 = vunpack.c.l.b16 %v2296
    %v2553 = vunpack.c.l.b16 %v2297
    %v2554 = vunpack.c.l.b16 %v2298
    %v2555 = vunpack.c.l.b16 %v2299
    %v2556 = vunpack.c.l.b16 %v2300
    %v2557 = vunpack.c.l.b16 %v2301
    %v2558 = vunpack.c.l.b16 %v2302
    %v2559 = vunpack.c.l.b16 %v2303
    %v2560 = vunpack.c.l.b16 %v2304
    %v2561 = vunpack.c.l.b16 %v2305
    %v2562 = vunpack.c.l.b16 %v2306
    %v2563 = vunpack.c.l.b16 %v2307
    %v2564 = vunpack.c.l.b16 %v2308
    %v2565 = vunpack.c.l.b16 %v2309
    %v2566 = vunpack.c.l.b16 %v2310
    %v2567 = vunpack.c.l.b16 %v2311
    %v2568 = vunpack.c.l.b16 %v2312
    %v2569 = vunpack.c.l.b16 %v2313
    %v2570 = vunpack.c.l.b16 %v2314
    %v2571 = vunpack.c.l.b16 %v2315
    %v2572 = vunpack.c.l.b16 %v2316
    %v2573 = vunpack.c.l.b16 %v2317
    %v2574 = vunpack.c.l.b16 %v2318
    %v2575 = vunpack.c.l.b16 %v2319
    %v2576 = vunpack.c.l.b16 %v2320
    %v2577 = vunpack.c.l.b16 %v2321
    %v2578 = vunpack.c.l.b16 %v2322
    %v2579 = vunpack.c.l.b16 %v2323
    %v2580 = vunpack.c.l.b16 %v2324
    %v2581 = vunpack.c.l.b16 %v2325
    %v2582 = vunpack.c.l.b16 %v2326
    %v2583 = vunpack.c.l.b16 %v2327
    %v2584 = vunpack.c.l.b16 %v2328
    %v2585 = vunpack.c.l.b16 %v2329
    %v2586 = vunpack.c.l.b16 %v2330
    %v2587 = vunpack.c.l.b16 %v2331
    %v2588 = vunpack.c.l.b16 %v2332
    %v2589 = vunpack.c.l.b16 %v2333
    %v2590 = vunpack.c.l.b16 %v2334
    %v2591 = vunpack.c.l.b16 %v2335
    %v2592 = vunpack.c.l.b16 %v2336
    %v2593 = vunpack.c.l.b16 %v2337
    %v2594 = vunpack.c.l.b16 %v2338
    %v2595 = vunpack.c.l.b16 %v2339
    %v2596 = vunpack.c.l.b16 %v2340
    %v2597 = vunpack.c.l.b16 %v2341
    %v2598 = vunpack.c.l.b16 %v2342
    %v2599 = vunpack.c.l.b16 %v2343
    %v2600 = vunpack.c.l.b16 %v2344
    %v2601 = vunpack.c.l.b16 %v2345
    %v2602 = vunpack.c.l.b16 %v2346
    %v2603 = vunpack.c.l.b16 %v2347
    %v2604 = vunpack.c.l.b16 %v2348
    %v2605 = vunpack.c.l.b16 %v2349
    %v2606 = vunpack.c.l.b16 %v2350
    %v2607 = vunpack.c.l.b16 %v2351
    %v2608 = vunpack.c.l.b16 %v2352
    %v2609 = vunpack.c.l.b16 %v2353
    %v2610 = vunpack.c.l.b16 %v2354
    %v2611 = vunpack.c.l.b16 %v2355
    %v2612 = vunpack.c.l.b16 %v2356
    %v2613 = vunpack.c.l.b16 %v2357
    %v2614 = vunpack.c.l.b16 %v2358
    %v2615 = vunpack.c.l.b16 %v2359
    %v2616 = vunpack.c.l.b16 %v2360
    %v2617 = vunpack.c.l.b16 %v2361
    %v2618 = vunpack.c.l.b16 %v2362
    %v2619 = vunpack.c.l.b16 %v2363
    %v2620 = vunpack.c.l.b16 %v2364
    %v2621 = vunpack.c.l.b16 %v2365
    %v2622 = vunpack.c.l.b16 %v2366
    %v2623 = vunpack.c.l.b16 %v2367
    %v2624 = vunpack.c.l.b16 %v2368
    %v2625 = vunpack.c.l.b16 %v2369
    %v2626 = vunpack.c.l.b16 %v2370
    %v2627 = vunpack.c.l.b16 %v2371
    %v2628 = vunpack.c.l.b16 %v2372
    %v2629 = vunpack.c.l.b16 %v2373
    %v2630 = vunpack.c.l.b16 %v2374
    %v2631 = vunpack.c.l.b16 %v2375
    %v2632 = vunpack.c.l.b16 %v2376
    %v2633 = vunpack.c.l.b16 %v2377
    %v2634 = vunpack.c.l.b16 %v2378
    %v2635 = vunpack.c.l.b16 %v2379
    %v2636 = vunpack.c.l.b16 %v2380
    %v2637 = vunpack.c.l.b16 %v2381
    %v2638 = vunpack.c.l.b16 %v2382
    %v2639 = vunpack.c.l.b16 %v2383
    %v2640 = vunpack.c.l.b16 %v2384
    %v2641 = vunpack.c.l.b16 %v2385
    %v2642 = vunpack.c.l.b16 %v2386
    %v2643 = vunpack.c.l.b16 %v2387
    %v2644 = vunpack.c.l.b16 %v2388
    %v2645 = vunpack.c.l.b16 %v2389
    %v2646 = vunpack.c.l.b16 %v2390
    %v2647 = vunpack.c.l.b16 %v2391
    %v2648 = vunpack.c.l.b16 %v2392
    %v2649 = vunpack.c.l.b16 %v2393
    %v2650 = vunpack.c.l.b16 %v2394
    %v2651 = vunpack.c.l.b16 %v2395
    %v2652 = vunpack.c.l.b16 %v2396
    %v2653 = vunpack.c.l.b16 %v2397
    %v2654 = vunpack.c.l.b16 %v2398
    %v2655 = vunpack.c.l.b16 %v2399
    %v2656 = vunpack.c.l.b16 %v2400
    %v2657 = vunpack.c.l.b16 %v2401
    %v2658 = vunpack.c.l.b16 %v2402
    %v2659 = vunpack.c.l.b16 %v2403
    %v2660 = vunpack.c.l.b16 %v2404
    %v2661 = vunpack.c.l.b16 %v2405
    %v2662 = vunpack.c.l.b16 %v2406
    %v2663 = vunpack.c.l.b16 %v2407
    %v2664 = vunpack.c.l.b16 %v2408
    %v2665 = vunpack.c.l.b16 %v2409
    %v2666 = vunpack.c.l.b16 %v2410
    %v2667 = vunpack.c.l.b16 %v2411
    %v2668 = vunpack.c.l.b16 %v2412
    %v2669 = vunpack.c.l.b16 %v2413
    %v2670 = vpack.c.b16 %v2543, %v2542
    %v2671 = vpack.c.b16 %v2545, %v2544
    %v2672 = vpack.c.b16 %v2547, %v2546
    %v2673 = vpack.c.b16 %v2549, %v2548
    %v2674 = vpack.c.b16 %v2551, %v2550
    %v2675 = vpack.c.b16 %v2553, %v2552
    %v2676 = vpack.c.b16 %v2555, %v2554
    %v2677 = vpack.c.b16 %v2557, %v2556
    %v2678 = vpack.c.b16 %v2559, %v2558
    %v2679 = vpack.c.b16 %v2561, %v2560
    %v2680 = vpack.c.b16 %v2563, %v2562
    %v2681 = vpack.c.b16 %v2565, %v2564
    %v2682 = vpack.c.b16 %v2567, %v2566
    %v2683 = vpack.c.b16 %v2569, %v2568
    %v2684 = vpack.c.b16 %v2571, %v2570
    %v2685 = vpack.c.b16 %v2573, %v2572
    %v2686 = vpack.c.b16 %v2575, %v2574
    %v2687 = vpack.c.b16 %v2577, %v2576
    %v2688 = vpack.c.b16 %v2579, %v2578
    %v2689 = vpack.c.b16 %v2581, %v2580
    %v2690 = vpack.c.b16 %v2583, %v2582
    %v2691 = vpack.c.b16 %v2585, %v2584
    %v2692 = vpack.c.b16 %v2587, %v2586
    %v2693 = vpack.c.b16 %v2589, %v2588
    %v2694 = vpack.c.b16 %v2591, %v2590
    %v2695 = vpack.c.b16 %v2593, %v2592
    %v2696 = vpack.c.b16 %v2595, %v2594
    %v2697 = vpack.c.b16 %v2597, %v2596
    %v2698 = vpack.c.b16 %v2599, %v2598
    %v2699 = vpack.c.b16 %v2601, %v2600
    %v2700 = vpack.c.b16 %v2603, %v2602
    %v2701 = vpack.c.b16 %v2605, %v2604
    %v2702 = vpack.c.b16 %v2607, %v2606
    %v2703 = vpack.c.b16 %v2609, %v2608
    %v2704 = vpack.c.b16 %v2611, %v2610
    %v2705 = vpack.c.b16 %v2613, %v2612
    %v2706 = vpack.c.b16 %v2615, %v2614
    %v2707 = vpack.c.b16 %v2617, %v2616
    %v2708 = vpack.c.b16 %v2619, %v2618
    %v2709 = vpack.c.b16 %v2621, %v2620
    %v2710 = vpack.c.b16 %v2623, %v2622
    %v2711 = vpack.c.b16 %v2625, %v2624
    %v2712 = vpack.c.b16 %v2627, %v2626
    %v2713 = vpack.c.b16 %v2629, %v2628
    %v2714 = vpack.c.b16 %v2631, %v2630
    %v2715 = vpack.c.b16 %v2633, %v2632
    %v2716 = vpack.c.b16 %v2635, %v2634
    %v2717 = vpack.c.b16 %v2637, %v2636
    %v2718 = vpack.c.b16 %v2639, %v2638
    %v2719 = vpack.c.b16 %v2641, %v2640
    %v2720 = vpack.c.b16 %v2643, %v2642
    %v2721 = vpack.c.b16 %v2645, %v2644
    %v2722 = vpack.c.b16 %v2647, %v2646
    %v2723 = vpack.c.b16 %v2649, %v2648
    %v2724 = vpack.c.b16 %v2651, %v2650
    %v2725 = vpack.c.b16 %v2653, %v2652
    %v2726 = vpack.c.b16 %v2655, %v2654
    %v2727 = vpack.c.b16 %v2657, %v2656
    %v2728 = vpack.c.b16 %v2659, %v2658
    %v2729 = vpack.c.b16 %v2661, %v2660
    %v2730 = vpack.c.b16 %v2663, %v2662
    %v2731 = vpack.c.b16 %v2665, %v2664
    %v2732 = vpack.c.b16 %v2667, %v2666
    %v2733 = vpack.c.b16 %v2669, %v2668
    %2798 = vmatprep.subr.bf16.mxu0 0
    %2799 = vmatpush1.bf16.msra.mxu0 %v2670
    %2800 = vmatprep.subr.bf16.mxu0 0
    %2801 = vmatpush1.bf16.msra.mxu0 %v2671
    %2802 = vmatprep.subr.bf16.mxu0 0
    %2803 = vmatpush1.bf16.msra.mxu0 %v2672
    %2804 = vmatprep.subr.bf16.mxu0 0
    %2805 = vmatpush1.bf16.msra.mxu0 %v2673
    %2806 = vmatprep.subr.bf16.mxu0 0
    %2807 = vmatpush1.bf16.msra.mxu0 %v2674
    %2808 = vmatprep.subr.bf16.mxu0 0
    %2809 = vmatpush1.bf16.msra.mxu0 %v2675
    %2810 = vmatprep.subr.bf16.mxu0 0
    %2811 = vmatpush1.bf16.msra.mxu0 %v2676
    %2812 = vmatprep.subr.bf16.mxu0 0
    %2813 = vmatpush1.bf16.msra.mxu0 %v2677
    %2814 = vmatprep.subr.bf16.mxu0 0
    %2815 = vmatpush1.bf16.msra.mxu0 %v2678
    %2816 = vmatprep.subr.bf16.mxu0 0
    %2817 = vmatpush1.bf16.msra.mxu0 %v2679
    %2818 = vmatprep.subr.bf16.mxu0 0
    %2819 = vmatpush1.bf16.msra.mxu0 %v2680
    %2820 = vmatprep.subr.bf16.mxu0 0
    %2821 = vmatpush1.bf16.msra.mxu0 %v2681
    %2822 = vmatprep.subr.bf16.mxu0 0
    %2823 = vmatpush1.bf16.msra.mxu0 %v2682
    %2824 = vmatprep.subr.bf16.mxu0 0
    %2825 = vmatpush1.bf16.msra.mxu0 %v2683
    %2826 = vmatprep.subr.bf16.mxu0 0
    %2827 = vmatpush1.bf16.msra.mxu0 %v2684
    %2828 = vmatprep.subr.bf16.mxu0 0
    %2829 = vmatpush1.bf16.msra.mxu0 %v2685
    %2830 = vmatprep.mubr.bf16.mxu0 %v421
    %2831 = vmatmul.mubr.bf16.gmra.mrb[0].mxu0 %v420
    %v2832 = vpop.f32.mrb[0].mxu0
    %v2833 = vadd.f32 0.0, %v2832
    %v2834 = vpop.f32.mrb[0].mxu0
    %v2835 = vpop.f32.mrb[0].mxu0
    %v2836 = vadd.f32 0.0, %v2835
    %v2837 = vpop.f32.mrb[0].mxu0
    %2838 = vmatprep.mubr.bf16.mxu0 %v429
    %2839 = vmatmul.mubr.bf16.gmra.mrb[0].mxu0 %v428
    %v2840 = vpop.f32.mrb[0].mxu0
    %v2841 = vadd.f32 0.0, %v2840
    %v2842 = vpop.f32.mrb[0].mxu0
    %v2843 = vpop.f32.mrb[0].mxu0
    %v2844 = vadd.f32 0.0, %v2843
    %v2845 = vpop.f32.mrb[0].mxu0
    %2846 = vmatprep.mubr.bf16.mxu0 %v437
    %2847 = vmatmul.mubr.bf16.gmra.mrb[0].mxu0 %v436
    %v2848 = vpop.f32.mrb[0].mxu0
    %v2849 = vadd.f32 0.0, %v2848
    %v2850 = vpop.f32.mrb[0].mxu0
    %v2851 = vpop.f32.mrb[0].mxu0
    %v2852 = vadd.f32 0.0, %v2851
    %v2853 = vpop.f32.mrb[0].mxu0
    %2854 = vmatprep.mubr.bf16.mxu0 %v445
    %2855 = vmatmul.mubr.bf16.gmra.mrb[0].mxu0 %v444
    %v2856 = vpop.f32.mrb[0].mxu0
    %v2857 = vadd.f32 0.0, %v2856
    %v2858 = vpop.f32.mrb[0].mxu0
    %v2859 = vpop.f32.mrb[0].mxu0
    %v2860 = vadd.f32 0.0, %v2859
    %v2861 = vpop.f32.mrb[0].mxu0
    %2862 = vmatprep.mubr.bf16.mxu0 %v453
    %2863 = vmatmul.mubr.bf16.gmra.mrb[0].mxu0 %v452
    %v2864 = vpop.f32.mrb[0].mxu0
    %v2865 = vadd.f32 0.0, %v2864
    %v2866 = vpop.f32.mrb[0].mxu0
    %v2867 = vpop.f32.mrb[0].mxu0
    %v2868 = vadd.f32 0.0, %v2867
    %v2869 = vpop.f32.mrb[0].mxu0
    %2870 = vmatprep.mubr.bf16.mxu0 %v461
    %2871 = vmatmul.mubr.bf16.gmra.mrb[0].mxu0 %v460
    %v2872 = vpop.f32.mrb[0].mxu0
    %v2873 = vadd.f32 0.0, %v2872
    %v2874 = vpop.f32.mrb[0].mxu0
    %v2875 = vpop.f32.mrb[0].mxu0
    %v2876 = vadd.f32 0.0, %v2875
    %v2877 = vpop.f32.mrb[0].mxu0
    %2878 = vmatprep.mubr.bf16.mxu0 %v469
    %2879 = vmatmul.mubr.bf16.gmra.mrb[0].mxu0 %v468
    %v2880 = vpop.f32.mrb[0].mxu0
    %v2881 = vadd.f32 0.0, %v2880
    %v2882 = vpop.f32.mrb[0].mxu0
    %v2883 = vpop.f32.mrb[0].mxu0
    %v2884 = vadd.f32 0.0, %v2883
    %v2885 = vpop.f32.mrb[0].mxu0
    %2886 = vmatprep.mubr.bf16.mxu0 %v477
    %2887 = vmatmul.mubr.bf16.gmra.mrb[0].mxu0 %v476
    %v2888 = vpop.f32.mrb[0].mxu0
    %v2889 = vadd.f32 0.0, %v2888
    %v2890 = vpop.f32.mrb[0].mxu0
    %v2891 = vpop.f32.mrb[0].mxu0
    %v2892 = vadd.f32 0.0, %v2891
    %v2893 = vpop.f32.mrb[0].mxu0
    %2894 = vdwg.mxu0
    %2895 = vmatprep.subr.bf16.mxu0 0
    %2896 = vmatpush1.bf16.msra.mxu0 %v2686
    %2897 = vmatprep.subr.bf16.mxu0 0
    %2898 = vmatpush1.bf16.msra.mxu0 %v2687
    %2899 = vmatprep.subr.bf16.mxu0 0
    %2900 = vmatpush1.bf16.msra.mxu0 %v2688
    %2901 = vmatprep.subr.bf16.mxu0 0
    %2902 = vmatpush1.bf16.msra.mxu0 %v2689
    %2903 = vmatprep.subr.bf16.mxu0 0
    %2904 = vmatpush1.bf16.msra.mxu0 %v2690
    %2905 = vmatprep.subr.bf16.mxu0 0
    %2906 = vmatpush1.bf16.msra.mxu0 %v2691
    %2907 = vmatprep.subr.bf16.mxu0 0
    %2908 = vmatpush1.bf16.msra.mxu0 %v2692
    %2909 = vmatprep.subr.bf16.mxu0 0
    %2910 = vmatpush1.bf16.msra.mxu0 %v2693
    %2911 = vmatprep.subr.bf16.mxu0 0
    %2912 = vmatpush1.bf16.msra.mxu0 %v2694
    %2913 = vmatprep.subr.bf16.mxu0 0
    %2914 = vmatpush1.bf16.msra.mxu0 %v2695
    %2915 = vmatprep.subr.bf16.mxu0 0
    %2916 = vmatpush1.bf16.msra.mxu0 %v2696
    %2917 = vmatprep.subr.bf16.mxu0 0
    %2918 = vmatpush1.bf16.msra.mxu0 %v2697
    %2919 = vmatprep.subr.bf16.mxu0 0
    %2920 = vmatpush1.bf16.msra.mxu0 %v2698
    %2921 = vmatprep.subr.bf16.mxu0 0
    %2922 = vmatpush1.bf16.msra.mxu0 %v2699
    %2923 = vmatprep.subr.bf16.mxu0 0
    %2924 = vmatpush1.bf16.msra.mxu0 %v2700
    %2925 = vmatprep.subr.bf16.mxu0 0
    %2926 = vmatpush1.bf16.msra.mxu0 %v2701
    %2927 = vmatprep.mubr.bf16.mxu0 %v423
    %2928 = vmatmul.mubr.bf16.gmra.mrb[0].mxu0 %v422
    %v2929 = vpop.f32.mrb[0].mxu0
    %v2930 = vadd.f32 %v2833, %v2929
    %v2931 = vpop.f32.mrb[0].mxu0
    %v2932 = vpop.f32.mrb[0].mxu0
    %v2933 = vadd.f32 %v2836, %v2932
    %v2934 = vpop.f32.mrb[0].mxu0
    %2935 = vmatprep.mubr.bf16.mxu0 %v431
    %2936 = vmatmul.mubr.bf16.gmra.mrb[0].mxu0 %v430
    %v2937 = vpop.f32.mrb[0].mxu0
    %v2938 = vadd.f32 %v2841, %v2937
    %v2939 = vpop.f32.mrb[0].mxu0
    %v2940 = vpop.f32.mrb[0].mxu0
    %v2941 = vadd.f32 %v2844, %v2940
    %v2942 = vpop.f32.mrb[0].mxu0
    %2943 = vmatprep.mubr.bf16.mxu0 %v439
    %2944 = vmatmul.mubr.bf16.gmra.mrb[0].mxu0 %v438
    %v2945 = vpop.f32.mrb[0].mxu0
    %v2946 = vadd.f32 %v2849, %v2945
    %v2947 = vpop.f32.mrb[0].mxu0
    %v2948 = vpop.f32.mrb[0].mxu0
    %v2949 = vadd.f32 %v2852, %v2948
    %v2950 = vpop.f32.mrb[0].mxu0
    %2951 = vmatprep.mubr.bf16.mxu0 %v447
    %2952 = vmatmul.mubr.bf16.gmra.mrb[0].mxu0 %v446
    %v2953 = vpop.f32.mrb[0].mxu0
    %v2954 = vadd.f32 %v2857, %v2953
    %v2955 = vpop.f32.mrb[0].mxu0
    %v2956 = vpop.f32.mrb[0].mxu0
    %v2957 = vadd.f32 %v2860, %v2956
    %v2958 = vpop.f32.mrb[0].mxu0
    %2959 = vmatprep.mubr.bf16.mxu0 %v455
    %2960 = vmatmul.mubr.bf16.gmra.mrb[0].mxu0 %v454
    %v2961 = vpop.f32.mrb[0].mxu0
    %v2962 = vadd.f32 %v2865, %v2961
    %v2963 = vpop.f32.mrb[0].mxu0
    %v2964 = vpop.f32.mrb[0].mxu0
    %v2965 = vadd.f32 %v2868, %v2964
    %v2966 = vpop.f32.mrb[0].mxu0
    %2967 = vmatprep.mubr.bf16.mxu0 %v463
    %2968 = vmatmul.mubr.bf16.gmra.mrb[0].mxu0 %v462
    %v2969 = vpop.f32.mrb[0].mxu0
    %v2970 = vadd.f32 %v2873, %v2969
    %v2971 = vpop.f32.mrb[0].mxu0
    %v2972 = vpop.f32.mrb[0].mxu0
    %v2973 = vadd.f32 %v2876, %v2972
    %v2974 = vpop.f32.mrb[0].mxu0
    %2975 = vmatprep.mubr.bf16.mxu0 %v471
    %2976 = vmatmul.mubr.bf16.gmra.mrb[0].mxu0 %v470
    %v2977 = vpop.f32.mrb[0].mxu0
    %v2978 = vadd.f32 %v2881, %v2977
    %v2979 = vpop.f32.mrb[0].mxu0
    %v2980 = vpop.f32.mrb[0].mxu0
    %v2981 = vadd.f32 %v2884, %v2980
    %v2982 = vpop.f32.mrb[0].mxu0
    %2983 = vmatprep.mubr.bf16.mxu0 %v479
    %2984 = vmatmul.mubr.bf16.gmra.mrb[0].mxu0 %v478
    %v2985 = vpop.f32.mrb[0].mxu0
    %v2986 = vadd.f32 %v2889, %v2985
    %v2987 = vpop.f32.mrb[0].mxu0
    %v2988 = vpop.f32.mrb[0].mxu0
    %v2989 = vadd.f32 %v2892, %v2988
    %v2990 = vpop.f32.mrb[0].mxu0
    %2991 = vdwg.mxu0
    %2992 = vmatprep.subr.bf16.mxu0 0
    %2993 = vmatpush1.bf16.msra.mxu0 %v2702
    %2994 = vmatprep.subr.bf16.mxu0 0
    %2995 = vmatpush1.bf16.msra.mxu0 %v2703
    %2996 = vmatprep.subr.bf16.mxu0 0
    %2997 = vmatpush1.bf16.msra.mxu0 %v2704
    %2998 = vmatprep.subr.bf16.mxu0 0
    %2999 = vmatpush1.bf16.msra.mxu0 %v2705
    %3000 = vmatprep.subr.bf16.mxu0 0
    %3001 = vmatpush1.bf16.msra.mxu0 %v2706
    %3002 = vmatprep.subr.bf16.mxu0 0
    %3003 = vmatpush1.bf16.msra.mxu0 %v2707
    %3004 = vmatprep.subr.bf16.mxu0 0
    %3005 = vmatpush1.bf16.msra.mxu0 %v2708
    %3006 = vmatprep.subr.bf16.mxu0 0
    %3007 = vmatpush1.bf16.msra.mxu0 %v2709
    %3008 = vmatprep.subr.bf16.mxu0 0
    %3009 = vmatpush1.bf16.msra.mxu0 %v2710
    %3010 = vmatprep.subr.bf16.mxu0 0
    %3011 = vmatpush1.bf16.msra.mxu0 %v2711
    %3012 = vmatprep.subr.bf16.mxu0 0
    %3013 = vmatpush1.bf16.msra.mxu0 %v2712
    %3014 = vmatprep.subr.bf16.mxu0 0
    %3015 = vmatpush1.bf16.msra.mxu0 %v2713
    %3016 = vmatprep.subr.bf16.mxu0 0
    %3017 = vmatpush1.bf16.msra.mxu0 %v2714
    %3018 = vmatprep.subr.bf16.mxu0 0
    %3019 = vmatpush1.bf16.msra.mxu0 %v2715
    %3020 = vmatprep.subr.bf16.mxu0 0
    %3021 = vmatpush1.bf16.msra.mxu0 %v2716
    %3022 = vmatprep.subr.bf16.mxu0 0
    %3023 = vmatpush1.bf16.msra.mxu0 %v2717
    %3024 = vmatprep.mubr.bf16.mxu0 %v425
    %3025 = vmatmul.mubr.bf16.gmra.mrb[0].mxu0 %v424
    %v3026 = vpop.f32.mrb[0].mxu0
    %v3027 = vadd.f32 %v2930, %v3026
    %v3028 = vpop.f32.mrb[0].mxu0
    %v3029 = vpop.f32.mrb[0].mxu0
    %v3030 = vadd.f32 %v2933, %v3029
    %v3031 = vpop.f32.mrb[0].mxu0
    %3032 = vmatprep.mubr.bf16.mxu0 %v433
    %3033 = vmatmul.mubr.bf16.gmra.mrb[0].mxu0 %v432
    %v3034 = vpop.f32.mrb[0].mxu0
    %v3035 = vadd.f32 %v2938, %v3034
    %v3036 = vpop.f32.mrb[0].mxu0
    %v3037 = vpop.f32.mrb[0].mxu0
    %v3038 = vadd.f32 %v2941, %v3037
    %v3039 = vpop.f32.mrb[0].mxu0
    %3040 = vmatprep.mubr.bf16.mxu0 %v441
    %3041 = vmatmul.mubr.bf16.gmra.mrb[0].mxu0 %v440
    %v3042 = vpop.f32.mrb[0].mxu0
    %v3043 = vadd.f32 %v2946, %v3042
    %v3044 = vpop.f32.mrb[0].mxu0
    %v3045 = vpop.f32.mrb[0].mxu0
    %v3046 = vadd.f32 %v2949, %v3045
    %v3047 = vpop.f32.mrb[0].mxu0
    %3048 = vmatprep.mubr.bf16.mxu0 %v449
    %3049 = vmatmul.mubr.bf16.gmra.mrb[0].mxu0 %v448
    %v3050 = vpop.f32.mrb[0].mxu0
    %v3051 = vadd.f32 %v2954, %v3050
    %v3052 = vpop.f32.mrb[0].mxu0
    %v3053 = vpop.f32.mrb[0].mxu0
    %v3054 = vadd.f32 %v2957, %v3053
    %v3055 = vpop.f32.mrb[0].mxu0
    %3056 = vmatprep.mubr.bf16.mxu0 %v457
    %3057 = vmatmul.mubr.bf16.gmra.mrb[0].mxu0 %v456
    %v3058 = vpop.f32.mrb[0].mxu0
    %v3059 = vadd.f32 %v2962, %v3058
    %v3060 = vpop.f32.mrb[0].mxu0
    %v3061 = vpop.f32.mrb[0].mxu0
    %v3062 = vadd.f32 %v2965, %v3061
    %v3063 = vpop.f32.mrb[0].mxu0
    %3064 = vmatprep.mubr.bf16.mxu0 %v465
    %3065 = vmatmul.mubr.bf16.gmra.mrb[0].mxu0 %v464
    %v3066 = vpop.f32.mrb[0].mxu0
    %v3067 = vadd.f32 %v2970, %v3066
    %v3068 = vpop.f32.mrb[0].mxu0
    %v3069 = vpop.f32.mrb[0].mxu0
    %v3070 = vadd.f32 %v2973, %v3069
    %v3071 = vpop.f32.mrb[0].mxu0
    %3072 = vmatprep.mubr.bf16.mxu0 %v473
    %3073 = vmatmul.mubr.bf16.gmra.mrb[0].mxu0 %v472
    %v3074 = vpop.f32.mrb[0].mxu0
    %v3075 = vadd.f32 %v2978, %v3074
    %v3076 = vpop.f32.mrb[0].mxu0
    %v3077 = vpop.f32.mrb[0].mxu0
    %v3078 = vadd.f32 %v2981, %v3077
    %v3079 = vpop.f32.mrb[0].mxu0
    %3080 = vmatprep.mubr.bf16.mxu0 %v481
    %3081 = vmatmul.mubr.bf16.gmra.mrb[0].mxu0 %v480
    %v3082 = vpop.f32.mrb[0].mxu0
    %v3083 = vadd.f32 %v2986, %v3082
    %v3084 = vpop.f32.mrb[0].mxu0
    %v3085 = vpop.f32.mrb[0].mxu0
    %v3086 = vadd.f32 %v2989, %v3085
    %v3087 = vpop.f32.mrb[0].mxu0
    %3088 = vdwg.mxu0
    %3089 = vmatprep.subr.bf16.mxu0 0
    %3090 = vmatpush1.bf16.msra.mxu0 %v2718
    %3091 = vmatprep.subr.bf16.mxu0 0
    %3092 = vmatpush1.bf16.msra.mxu0 %v2719
    %3093 = vmatprep.subr.bf16.mxu0 0
    %3094 = vmatpush1.bf16.msra.mxu0 %v2720
    %3095 = vmatprep.subr.bf16.mxu0 0
    %3096 = vmatpush1.bf16.msra.mxu0 %v2721
    %3097 = vmatprep.subr.bf16.mxu0 0
    %3098 = vmatpush1.bf16.msra.mxu0 %v2722
    %3099 = vmatprep.subr.bf16.mxu0 0
    %3100 = vmatpush1.bf16.msra.mxu0 %v2723
    %3101 = vmatprep.subr.bf16.mxu0 0
    %3102 = vmatpush1.bf16.msra.mxu0 %v2724
    %3103 = vmatprep.subr.bf16.mxu0 0
    %3104 = vmatpush1.bf16.msra.mxu0 %v2725
    %3105 = vmatprep.subr.bf16.mxu0 0
    %3106 = vmatpush1.bf16.msra.mxu0 %v2726
    %3107 = vmatprep.subr.bf16.mxu0 0
    %3108 = vmatpush1.bf16.msra.mxu0 %v2727
    %3109 = vmatprep.subr.bf16.mxu0 0
    %3110 = vmatpush1.bf16.msra.mxu0 %v2728
    %3111 = vmatprep.subr.bf16.mxu0 0
    %3112 = vmatpush1.bf16.msra.mxu0 %v2729
    %3113 = vmatprep.subr.bf16.mxu0 0
    %3114 = vmatpush1.bf16.msra.mxu0 %v2730
    %3115 = vmatprep.subr.bf16.mxu0 0
    %3116 = vmatpush1.bf16.msra.mxu0 %v2731
    %3117 = vmatprep.subr.bf16.mxu0 0
    %3118 = vmatpush1.bf16.msra.mxu0 %v2732
    %3119 = vmatprep.subr.bf16.mxu0 0
    %3120 = vmatpush1.bf16.msra.mxu0 %v2733
    %3121 = vmatprep.mubr.bf16.mxu0 %v427
    %3122 = vmatmul.mubr.bf16.gmra.mrb[0].mxu0 %v426
    %v3123 = vpop.f32.mrb[0].mxu0
    %v3124 = vadd.f32 %v3027, %v3123
    %v3125 = vpop.f32.mrb[0].mxu0
    %v3126 = vpop.f32.mrb[0].mxu0
    %v3127 = vadd.f32 %v3030, %v3126
    %v3128 = vpop.f32.mrb[0].mxu0
    %3129 = vmatprep.mubr.bf16.mxu0 %v435
    %3130 = vmatmul.mubr.bf16.gmra.mrb[0].mxu0 %v434
    %v3131 = vpop.f32.mrb[0].mxu0
    %v3132 = vadd.f32 %v3035, %v3131
    %v3133 = vpop.f32.mrb[0].mxu0
    %v3134 = vpop.f32.mrb[0].mxu0
    %v3135 = vadd.f32 %v3038, %v3134
    %v3136 = vpop.f32.mrb[0].mxu0
    %3137 = vmatprep.mubr.bf16.mxu0 %v443
    %3138 = vmatmul.mubr.bf16.gmra.mrb[0].mxu0 %v442
    %v3139 = vpop.f32.mrb[0].mxu0
    %v3140 = vadd.f32 %v3043, %v3139
    %v3141 = vpop.f32.mrb[0].mxu0
    %v3142 = vpop.f32.mrb[0].mxu0
    %v3143 = vadd.f32 %v3046, %v3142
    %v3144 = vpop.f32.mrb[0].mxu0
    %3145 = vmatprep.mubr.bf16.mxu0 %v451
    %3146 = vmatmul.mubr.bf16.gmra.mrb[0].mxu0 %v450
    %v3147 = vpop.f32.mrb[0].mxu0
    %v3148 = vadd.f32 %v3051, %v3147
    %v3149 = vpop.f32.mrb[0].mxu0
    %v3150 = vpop.f32.mrb[0].mxu0
    %v3151 = vadd.f32 %v3054, %v3150
    %v3152 = vpop.f32.mrb[0].mxu0
    %3153 = vmatprep.mubr.bf16.mxu0 %v459
    %3154 = vmatmul.mubr.bf16.gmra.mrb[0].mxu0 %v458
    %v3155 = vpop.f32.mrb[0].mxu0
    %v3156 = vadd.f32 %v3059, %v3155
    %v3157 = vpop.f32.mrb[0].mxu0
    %v3158 = vpop.f32.mrb[0].mxu0
    %v3159 = vadd.f32 %v3062, %v3158
    %v3160 = vpop.f32.mrb[0].mxu0
    %3161 = vmatprep.mubr.bf16.mxu0 %v467
    %3162 = vmatmul.mubr.bf16.gmra.mrb[0].mxu0 %v466
    %v3163 = vpop.f32.mrb[0].mxu0
    %v3164 = vadd.f32 %v3067, %v3163
    %v3165 = vpop.f32.mrb[0].mxu0
    %v3166 = vpop.f32.mrb[0].mxu0
    %v3167 = vadd.f32 %v3070, %v3166
    %v3168 = vpop.f32.mrb[0].mxu0
    %3169 = vmatprep.mubr.bf16.mxu0 %v475
    %3170 = vmatmul.mubr.bf16.gmra.mrb[0].mxu0 %v474
    %v3171 = vpop.f32.mrb[0].mxu0
    %v3172 = vadd.f32 %v3075, %v3171
    %v3173 = vpop.f32.mrb[0].mxu0
    %v3174 = vpop.f32.mrb[0].mxu0
    %v3175 = vadd.f32 %v3078, %v3174
    %v3176 = vpop.f32.mrb[0].mxu0
    %3177 = vmatprep.mubr.bf16.mxu0 %v483
    %3178 = vmatmul.mubr.bf16.gmra.mrb[0].mxu0 %v482
    %v3179 = vpop.f32.mrb[0].mxu0
    %v3180 = vadd.f32 %v3083, %v3179
    %v3181 = vpop.f32.mrb[0].mxu0
    %v3182 = vpop.f32.mrb[0].mxu0
    %v3183 = vadd.f32 %v3086, %v3182
    %v3184 = vpop.f32.mrb[0].mxu0
    %3185 = vdwg.mxu0
    %v3186 = vadd.f32 %v2223, %v3124
    %v3187 = vadd.f32 %v2226, %v3127
    %v3188 = vadd.f32 %v2231, %v3132
    %v3189 = vadd.f32 %v2234, %v3135
    %v3190 = vadd.f32 %v2239, %v3140
    %v3191 = vadd.f32 %v2242, %v3143
    %v3192 = vadd.f32 %v2247, %v3148
    %v3193 = vadd.f32 %v2250, %v3151
    %v3194 = vadd.f32 %v2255, %v3156
    %v3195 = vadd.f32 %v2258, %v3159
    %v3196 = vadd.f32 %v2263, %v3164
    %v3197 = vadd.f32 %v2266, %v3167
    %v3198 = vadd.f32 %v2271, %v3172
    %v3199 = vadd.f32 %v2274, %v3175
    %v3200 = vadd.f32 %v2279, %v3180
    %v3201 = vadd.f32 %v2282, %v3183
    %3202 = vset.pattern.permute.xlu0 1
    %3203 = vperm.xlu0 %3202, %v76
    %v3204 = vpop.permute.xlu0 %3203
    %3205 = vset.pattern.permute.xlu0 1
    %3206 = vperm.xlu0 %3205, %v78
    %v3207 = vpop.permute.xlu0 %3206
    %3208 = vset.pattern.permute.xlu0 1
    %3209 = vperm.xlu0 %3208, %v80
    %v3210 = vpop.permute.xlu0 %3209
    %3211 = vset.pattern.permute.xlu0 1
    %3212 = vperm.xlu0 %3211, %v82
    %v3213 = vpop.permute.xlu0 %3212
    %3214 = vset.pattern.permute.xlu0 1
    %3215 = vperm.xlu0 %3214, %v84
    %v3216 = vpop.permute.xlu0 %3215
    %3217 = vset.pattern.permute.xlu0 1
    %3218 = vperm.xlu0 %3217, %v86
    %v3219 = vpop.permute.xlu0 %3218
    %3220 = vset.pattern.permute.xlu0 1
    %3221 = vperm.xlu0 %3220, %v88
    %v3222 = vpop.permute.xlu0 %3221
    %3223 = vset.pattern.permute.xlu0 1
    %3224 = vperm.xlu0 %3223, %v90
    %v3225 = vpop.permute.xlu0 %3224
    %3226 = vset.pattern.permute.xlu0 1
    %3227 = vperm.xlu0 %3226, %v92
    %v3228 = vpop.permute.xlu0 %3227
    %3229 = vset.pattern.permute.xlu0 1
    %3230 = vperm.xlu0 %3229, %v94
    %v3231 = vpop.permute.xlu0 %3230
    %3232 = vset.pattern.permute.xlu0 1
    %3233 = vperm.xlu0 %3232, %v96
    %v3234 = vpop.permute.xlu0 %3233
    %3235 = vset.pattern.permute.xlu0 1
    %3236 = vperm.xlu0 %3235, %v98
    %v3237 = vpop.permute.xlu0 %3236
    %3238 = vset.pattern.permute.xlu0 1
    %3239 = vperm.xlu0 %3238, %v100
    %v3240 = vpop.permute.xlu0 %3239
    %3241 = vset.pattern.permute.xlu0 1
    %3242 = vperm.xlu0 %3241, %v102
    %v3243 = vpop.permute.xlu0 %3242
    %3244 = vset.pattern.permute.xlu0 1
    %3245 = vperm.xlu0 %3244, %v104
    %v3246 = vpop.permute.xlu0 %3245
    %3247 = vset.pattern.permute.xlu0 1
    %3248 = vperm.xlu0 %3247, %v106
    %v3249 = vpop.permute.xlu0 %3248
    %vm3250 = vcmp.eq.s32.totalorder %v3204, %v108
    %vm3251 = vcmp.eq.s32.totalorder %v3204, %v109
    %vm3252 = vcmp.eq.s32.totalorder %v3204, %v110
    %vm3253 = vcmp.eq.s32.totalorder %v3204, %v111
    %vm3254 = vcmp.eq.s32.totalorder %v3204, %v112
    %vm3255 = vcmp.eq.s32.totalorder %v3204, %v113
    %vm3256 = vcmp.eq.s32.totalorder %v3204, %v114
    %vm3257 = vcmp.eq.s32.totalorder %v3204, %v115
    %vm3258 = vcmp.eq.s32.totalorder %v3207, %v108
    %vm3259 = vcmp.eq.s32.totalorder %v3207, %v109
    %vm3260 = vcmp.eq.s32.totalorder %v3207, %v110
    %vm3261 = vcmp.eq.s32.totalorder %v3207, %v111
    %vm3262 = vcmp.eq.s32.totalorder %v3207, %v112
    %vm3263 = vcmp.eq.s32.totalorder %v3207, %v113
    %vm3264 = vcmp.eq.s32.totalorder %v3207, %v114
    %vm3265 = vcmp.eq.s32.totalorder %v3207, %v115
    %vm3266 = vcmp.eq.s32.totalorder %v3210, %v108
    %vm3267 = vcmp.eq.s32.totalorder %v3210, %v109
    %vm3268 = vcmp.eq.s32.totalorder %v3210, %v110
    %vm3269 = vcmp.eq.s32.totalorder %v3210, %v111
    %vm3270 = vcmp.eq.s32.totalorder %v3210, %v112
    %vm3271 = vcmp.eq.s32.totalorder %v3210, %v113
    %vm3272 = vcmp.eq.s32.totalorder %v3210, %v114
    %vm3273 = vcmp.eq.s32.totalorder %v3210, %v115
    %vm3274 = vcmp.eq.s32.totalorder %v3213, %v108
    %vm3275 = vcmp.eq.s32.totalorder %v3213, %v109
    %vm3276 = vcmp.eq.s32.totalorder %v3213, %v110
    %vm3277 = vcmp.eq.s32.totalorder %v3213, %v111
    %vm3278 = vcmp.eq.s32.totalorder %v3213, %v112
    %vm3279 = vcmp.eq.s32.totalorder %v3213, %v113
    %vm3280 = vcmp.eq.s32.totalorder %v3213, %v114
    %vm3281 = vcmp.eq.s32.totalorder %v3213, %v115
    %vm3282 = vcmp.eq.s32.totalorder %v3216, %v108
    %vm3283 = vcmp.eq.s32.totalorder %v3216, %v109
    %vm3284 = vcmp.eq.s32.totalorder %v3216, %v110
    %vm3285 = vcmp.eq.s32.totalorder %v3216, %v111
    %vm3286 = vcmp.eq.s32.totalorder %v3216, %v112
    %vm3287 = vcmp.eq.s32.totalorder %v3216, %v113
    %vm3288 = vcmp.eq.s32.totalorder %v3216, %v114
    %vm3289 = vcmp.eq.s32.totalorder %v3216, %v115
    %vm3290 = vcmp.eq.s32.totalorder %v3219, %v108
    %vm3291 = vcmp.eq.s32.totalorder %v3219, %v109
    %vm3292 = vcmp.eq.s32.totalorder %v3219, %v110
    %vm3293 = vcmp.eq.s32.totalorder %v3219, %v111
    %vm3294 = vcmp.eq.s32.totalorder %v3219, %v112
    %vm3295 = vcmp.eq.s32.totalorder %v3219, %v113
    %vm3296 = vcmp.eq.s32.totalorder %v3219, %v114
    %vm3297 = vcmp.eq.s32.totalorder %v3219, %v115
    %vm3298 = vcmp.eq.s32.totalorder %v3222, %v108
    %vm3299 = vcmp.eq.s32.totalorder %v3222, %v109
    %vm3300 = vcmp.eq.s32.totalorder %v3222, %v110
    %vm3301 = vcmp.eq.s32.totalorder %v3222, %v111
    %vm3302 = vcmp.eq.s32.totalorder %v3222, %v112
    %vm3303 = vcmp.eq.s32.totalorder %v3222, %v113
    %vm3304 = vcmp.eq.s32.totalorder %v3222, %v114
    %vm3305 = vcmp.eq.s32.totalorder %v3222, %v115
    %vm3306 = vcmp.eq.s32.totalorder %v3225, %v108
    %vm3307 = vcmp.eq.s32.totalorder %v3225, %v109
    %vm3308 = vcmp.eq.s32.totalorder %v3225, %v110
    %vm3309 = vcmp.eq.s32.totalorder %v3225, %v111
    %vm3310 = vcmp.eq.s32.totalorder %v3225, %v112
    %vm3311 = vcmp.eq.s32.totalorder %v3225, %v113
    %vm3312 = vcmp.eq.s32.totalorder %v3225, %v114
    %vm3313 = vcmp.eq.s32.totalorder %v3225, %v115
    %vm3314 = vcmp.eq.s32.totalorder %v3228, %v108
    %vm3315 = vcmp.eq.s32.totalorder %v3228, %v109
    %vm3316 = vcmp.eq.s32.totalorder %v3228, %v110
    %vm3317 = vcmp.eq.s32.totalorder %v3228, %v111
    %vm3318 = vcmp.eq.s32.totalorder %v3228, %v112
    %vm3319 = vcmp.eq.s32.totalorder %v3228, %v113
    %vm3320 = vcmp.eq.s32.totalorder %v3228, %v114
    %vm3321 = vcmp.eq.s32.totalorder %v3228, %v115
    %vm3322 = vcmp.eq.s32.totalorder %v3231, %v108
    %vm3323 = vcmp.eq.s32.totalorder %v3231, %v109
    %vm3324 = vcmp.eq.s32.totalorder %v3231, %v110
    %vm3325 = vcmp.eq.s32.totalorder %v3231, %v111
    %vm3326 = vcmp.eq.s32.totalorder %v3231, %v112
    %vm3327 = vcmp.eq.s32.totalorder %v3231, %v113
    %vm3328 = vcmp.eq.s32.totalorder %v3231, %v114
    %vm3329 = vcmp.eq.s32.totalorder %v3231, %v115
    %vm3330 = vcmp.eq.s32.totalorder %v3234, %v108
    %vm3331 = vcmp.eq.s32.totalorder %v3234, %v109
    %vm3332 = vcmp.eq.s32.totalorder %v3234, %v110
    %vm3333 = vcmp.eq.s32.totalorder %v3234, %v111
    %vm3334 = vcmp.eq.s32.totalorder %v3234, %v112
    %vm3335 = vcmp.eq.s32.totalorder %v3234, %v113
    %vm3336 = vcmp.eq.s32.totalorder %v3234, %v114
    %vm3337 = vcmp.eq.s32.totalorder %v3234, %v115
    %vm3338 = vcmp.eq.s32.totalorder %v3237, %v108
    %vm3339 = vcmp.eq.s32.totalorder %v3237, %v109
    %vm3340 = vcmp.eq.s32.totalorder %v3237, %v110
    %vm3341 = vcmp.eq.s32.totalorder %v3237, %v111
    %vm3342 = vcmp.eq.s32.totalorder %v3237, %v112
    %vm3343 = vcmp.eq.s32.totalorder %v3237, %v113
    %vm3344 = vcmp.eq.s32.totalorder %v3237, %v114
    %vm3345 = vcmp.eq.s32.totalorder %v3237, %v115
    %vm3346 = vcmp.eq.s32.totalorder %v3240, %v108
    %vm3347 = vcmp.eq.s32.totalorder %v3240, %v109
    %vm3348 = vcmp.eq.s32.totalorder %v3240, %v110
    %vm3349 = vcmp.eq.s32.totalorder %v3240, %v111
    %vm3350 = vcmp.eq.s32.totalorder %v3240, %v112
    %vm3351 = vcmp.eq.s32.totalorder %v3240, %v113
    %vm3352 = vcmp.eq.s32.totalorder %v3240, %v114
    %vm3353 = vcmp.eq.s32.totalorder %v3240, %v115
    %vm3354 = vcmp.eq.s32.totalorder %v3243, %v108
    %vm3355 = vcmp.eq.s32.totalorder %v3243, %v109
    %vm3356 = vcmp.eq.s32.totalorder %v3243, %v110
    %vm3357 = vcmp.eq.s32.totalorder %v3243, %v111
    %vm3358 = vcmp.eq.s32.totalorder %v3243, %v112
    %vm3359 = vcmp.eq.s32.totalorder %v3243, %v113
    %vm3360 = vcmp.eq.s32.totalorder %v3243, %v114
    %vm3361 = vcmp.eq.s32.totalorder %v3243, %v115
    %vm3362 = vcmp.eq.s32.totalorder %v3246, %v108
    %vm3363 = vcmp.eq.s32.totalorder %v3246, %v109
    %vm3364 = vcmp.eq.s32.totalorder %v3246, %v110
    %vm3365 = vcmp.eq.s32.totalorder %v3246, %v111
    %vm3366 = vcmp.eq.s32.totalorder %v3246, %v112
    %vm3367 = vcmp.eq.s32.totalorder %v3246, %v113
    %vm3368 = vcmp.eq.s32.totalorder %v3246, %v114
    %vm3369 = vcmp.eq.s32.totalorder %v3246, %v115
    %vm3370 = vcmp.eq.s32.totalorder %v3249, %v108
    %vm3371 = vcmp.eq.s32.totalorder %v3249, %v109
    %vm3372 = vcmp.eq.s32.totalorder %v3249, %v110
    %vm3373 = vcmp.eq.s32.totalorder %v3249, %v111
    %vm3374 = vcmp.eq.s32.totalorder %v3249, %v112
    %vm3375 = vcmp.eq.s32.totalorder %v3249, %v113
    %vm3376 = vcmp.eq.s32.totalorder %v3249, %v114
    %vm3377 = vcmp.eq.s32.totalorder %v3249, %v115
    %v3378 = vsel %vm3250, 1.0, 0.0
    %v3379 = vsel %vm3251, 1.0, 0.0
    %v3380 = vsel %vm3252, 1.0, 0.0
    %v3381 = vsel %vm3253, 1.0, 0.0
    %v3382 = vsel %vm3254, 1.0, 0.0
    %v3383 = vsel %vm3255, 1.0, 0.0
    %v3384 = vsel %vm3256, 1.0, 0.0
    %v3385 = vsel %vm3257, 1.0, 0.0
    %v3386 = vsel %vm3258, 1.0, 0.0
    %v3387 = vsel %vm3259, 1.0, 0.0
    %v3388 = vsel %vm3260, 1.0, 0.0
    %v3389 = vsel %vm3261, 1.0, 0.0
    %v3390 = vsel %vm3262, 1.0, 0.0
    %v3391 = vsel %vm3263, 1.0, 0.0
    %v3392 = vsel %vm3264, 1.0, 0.0
    %v3393 = vsel %vm3265, 1.0, 0.0
    %v3394 = vsel %vm3266, 1.0, 0.0
    %v3395 = vsel %vm3267, 1.0, 0.0
    %v3396 = vsel %vm3268, 1.0, 0.0
    %v3397 = vsel %vm3269, 1.0, 0.0
    %v3398 = vsel %vm3270, 1.0, 0.0
    %v3399 = vsel %vm3271, 1.0, 0.0
    %v3400 = vsel %vm3272, 1.0, 0.0
    %v3401 = vsel %vm3273, 1.0, 0.0
    %v3402 = vsel %vm3274, 1.0, 0.0
    %v3403 = vsel %vm3275, 1.0, 0.0
    %v3404 = vsel %vm3276, 1.0, 0.0
    %v3405 = vsel %vm3277, 1.0, 0.0
    %v3406 = vsel %vm3278, 1.0, 0.0
    %v3407 = vsel %vm3279, 1.0, 0.0
    %v3408 = vsel %vm3280, 1.0, 0.0
    %v3409 = vsel %vm3281, 1.0, 0.0
    %v3410 = vsel %vm3282, 1.0, 0.0
    %v3411 = vsel %vm3283, 1.0, 0.0
    %v3412 = vsel %vm3284, 1.0, 0.0
    %v3413 = vsel %vm3285, 1.0, 0.0
    %v3414 = vsel %vm3286, 1.0, 0.0
    %v3415 = vsel %vm3287, 1.0, 0.0
    %v3416 = vsel %vm3288, 1.0, 0.0
    %v3417 = vsel %vm3289, 1.0, 0.0
    %v3418 = vsel %vm3290, 1.0, 0.0
    %v3419 = vsel %vm3291, 1.0, 0.0
    %v3420 = vsel %vm3292, 1.0, 0.0
    %v3421 = vsel %vm3293, 1.0, 0.0
    %v3422 = vsel %vm3294, 1.0, 0.0
    %v3423 = vsel %vm3295, 1.0, 0.0
    %v3424 = vsel %vm3296, 1.0, 0.0
    %v3425 = vsel %vm3297, 1.0, 0.0
    %v3426 = vsel %vm3298, 1.0, 0.0
    %v3427 = vsel %vm3299, 1.0, 0.0
    %v3428 = vsel %vm3300, 1.0, 0.0
    %v3429 = vsel %vm3301, 1.0, 0.0
    %v3430 = vsel %vm3302, 1.0, 0.0
    %v3431 = vsel %vm3303, 1.0, 0.0
    %v3432 = vsel %vm3304, 1.0, 0.0
    %v3433 = vsel %vm3305, 1.0, 0.0
    %v3434 = vsel %vm3306, 1.0, 0.0
    %v3435 = vsel %vm3307, 1.0, 0.0
    %v3436 = vsel %vm3308, 1.0, 0.0
    %v3437 = vsel %vm3309, 1.0, 0.0
    %v3438 = vsel %vm3310, 1.0, 0.0
    %v3439 = vsel %vm3311, 1.0, 0.0
    %v3440 = vsel %vm3312, 1.0, 0.0
    %v3441 = vsel %vm3313, 1.0, 0.0
    %v3442 = vsel %vm3314, 1.0, 0.0
    %v3443 = vsel %vm3315, 1.0, 0.0
    %v3444 = vsel %vm3316, 1.0, 0.0
    %v3445 = vsel %vm3317, 1.0, 0.0
    %v3446 = vsel %vm3318, 1.0, 0.0
    %v3447 = vsel %vm3319, 1.0, 0.0
    %v3448 = vsel %vm3320, 1.0, 0.0
    %v3449 = vsel %vm3321, 1.0, 0.0
    %v3450 = vsel %vm3322, 1.0, 0.0
    %v3451 = vsel %vm3323, 1.0, 0.0
    %v3452 = vsel %vm3324, 1.0, 0.0
    %v3453 = vsel %vm3325, 1.0, 0.0
    %v3454 = vsel %vm3326, 1.0, 0.0
    %v3455 = vsel %vm3327, 1.0, 0.0
    %v3456 = vsel %vm3328, 1.0, 0.0
    %v3457 = vsel %vm3329, 1.0, 0.0
    %v3458 = vsel %vm3330, 1.0, 0.0
    %v3459 = vsel %vm3331, 1.0, 0.0
    %v3460 = vsel %vm3332, 1.0, 0.0
    %v3461 = vsel %vm3333, 1.0, 0.0
    %v3462 = vsel %vm3334, 1.0, 0.0
    %v3463 = vsel %vm3335, 1.0, 0.0
    %v3464 = vsel %vm3336, 1.0, 0.0
    %v3465 = vsel %vm3337, 1.0, 0.0
    %v3466 = vsel %vm3338, 1.0, 0.0
    %v3467 = vsel %vm3339, 1.0, 0.0
    %v3468 = vsel %vm3340, 1.0, 0.0
    %v3469 = vsel %vm3341, 1.0, 0.0
    %v3470 = vsel %vm3342, 1.0, 0.0
    %v3471 = vsel %vm3343, 1.0, 0.0
    %v3472 = vsel %vm3344, 1.0, 0.0
    %v3473 = vsel %vm3345, 1.0, 0.0
    %v3474 = vsel %vm3346, 1.0, 0.0
    %v3475 = vsel %vm3347, 1.0, 0.0
    %v3476 = vsel %vm3348, 1.0, 0.0
    %v3477 = vsel %vm3349, 1.0, 0.0
    %v3478 = vsel %vm3350, 1.0, 0.0
    %v3479 = vsel %vm3351, 1.0, 0.0
    %v3480 = vsel %vm3352, 1.0, 0.0
    %v3481 = vsel %vm3353, 1.0, 0.0
    %v3482 = vsel %vm3354, 1.0, 0.0
    %v3483 = vsel %vm3355, 1.0, 0.0
    %v3484 = vsel %vm3356, 1.0, 0.0
    %v3485 = vsel %vm3357, 1.0, 0.0
    %v3486 = vsel %vm3358, 1.0, 0.0
    %v3487 = vsel %vm3359, 1.0, 0.0
    %v3488 = vsel %vm3360, 1.0, 0.0
    %v3489 = vsel %vm3361, 1.0, 0.0
    %v3490 = vsel %vm3362, 1.0, 0.0
    %v3491 = vsel %vm3363, 1.0, 0.0
    %v3492 = vsel %vm3364, 1.0, 0.0
    %v3493 = vsel %vm3365, 1.0, 0.0
    %v3494 = vsel %vm3366, 1.0, 0.0
    %v3495 = vsel %vm3367, 1.0, 0.0
    %v3496 = vsel %vm3368, 1.0, 0.0
    %v3497 = vsel %vm3369, 1.0, 0.0
    %v3498 = vsel %vm3370, 1.0, 0.0
    %v3499 = vsel %vm3371, 1.0, 0.0
    %v3500 = vsel %vm3372, 1.0, 0.0
    %v3501 = vsel %vm3373, 1.0, 0.0
    %v3502 = vsel %vm3374, 1.0, 0.0
    %v3503 = vsel %vm3375, 1.0, 0.0
    %v3504 = vsel %vm3376, 1.0, 0.0
    %v3505 = vsel %vm3377, 1.0, 0.0
    %v3506 = vpack.c.bf16 %v3386, %v3378
    %v3507 = vpack.c.bf16 %v3387, %v3379
    %v3508 = vpack.c.bf16 %v3388, %v3380
    %v3509 = vpack.c.bf16 %v3389, %v3381
    %v3510 = vpack.c.bf16 %v3390, %v3382
    %v3511 = vpack.c.bf16 %v3391, %v3383
    %v3512 = vpack.c.bf16 %v3392, %v3384
    %v3513 = vpack.c.bf16 %v3393, %v3385
    %v3514 = vpack.c.bf16 %v3402, %v3394
    %v3515 = vpack.c.bf16 %v3403, %v3395
    %v3516 = vpack.c.bf16 %v3404, %v3396
    %v3517 = vpack.c.bf16 %v3405, %v3397
    %v3518 = vpack.c.bf16 %v3406, %v3398
    %v3519 = vpack.c.bf16 %v3407, %v3399
    %v3520 = vpack.c.bf16 %v3408, %v3400
    %v3521 = vpack.c.bf16 %v3409, %v3401
    %v3522 = vpack.c.bf16 %v3418, %v3410
    %v3523 = vpack.c.bf16 %v3419, %v3411
    %v3524 = vpack.c.bf16 %v3420, %v3412
    %v3525 = vpack.c.bf16 %v3421, %v3413
    %v3526 = vpack.c.bf16 %v3422, %v3414
    %v3527 = vpack.c.bf16 %v3423, %v3415
    %v3528 = vpack.c.bf16 %v3424, %v3416
    %v3529 = vpack.c.bf16 %v3425, %v3417
    %v3530 = vpack.c.bf16 %v3434, %v3426
    %v3531 = vpack.c.bf16 %v3435, %v3427
    %v3532 = vpack.c.bf16 %v3436, %v3428
    %v3533 = vpack.c.bf16 %v3437, %v3429
    %v3534 = vpack.c.bf16 %v3438, %v3430
    %v3535 = vpack.c.bf16 %v3439, %v3431
    %v3536 = vpack.c.bf16 %v3440, %v3432
    %v3537 = vpack.c.bf16 %v3441, %v3433
    %v3538 = vpack.c.bf16 %v3450, %v3442
    %v3539 = vpack.c.bf16 %v3451, %v3443
    %v3540 = vpack.c.bf16 %v3452, %v3444
    %v3541 = vpack.c.bf16 %v3453, %v3445
    %v3542 = vpack.c.bf16 %v3454, %v3446
    %v3543 = vpack.c.bf16 %v3455, %v3447
    %v3544 = vpack.c.bf16 %v3456, %v3448
    %v3545 = vpack.c.bf16 %v3457, %v3449
    %v3546 = vpack.c.bf16 %v3466, %v3458
    %v3547 = vpack.c.bf16 %v3467, %v3459
    %v3548 = vpack.c.bf16 %v3468, %v3460
    %v3549 = vpack.c.bf16 %v3469, %v3461
    %v3550 = vpack.c.bf16 %v3470, %v3462
    %v3551 = vpack.c.bf16 %v3471, %v3463
    %v3552 = vpack.c.bf16 %v3472, %v3464
    %v3553 = vpack.c.bf16 %v3473, %v3465
    %v3554 = vpack.c.bf16 %v3482, %v3474
    %v3555 = vpack.c.bf16 %v3483, %v3475
    %v3556 = vpack.c.bf16 %v3484, %v3476
    %v3557 = vpack.c.bf16 %v3485, %v3477
    %v3558 = vpack.c.bf16 %v3486, %v3478
    %v3559 = vpack.c.bf16 %v3487, %v3479
    %v3560 = vpack.c.bf16 %v3488, %v3480
    %v3561 = vpack.c.bf16 %v3489, %v3481
    %v3562 = vpack.c.bf16 %v3498, %v3490
    %v3563 = vpack.c.bf16 %v3499, %v3491
    %v3564 = vpack.c.bf16 %v3500, %v3492
    %v3565 = vpack.c.bf16 %v3501, %v3493
    %v3566 = vpack.c.bf16 %v3502, %v3494
    %v3567 = vpack.c.bf16 %v3503, %v3495
    %v3568 = vpack.c.bf16 %v3504, %v3496
    %v3569 = vpack.c.bf16 %v3505, %v3497
    %s3570 = scalar_lea.vmem [#allocation2], 512
    %v3571 = vld [vmem:[%s3570] sm:$0xf]
    %v3572 = vld [vmem:[%s3570 + $0x4] sm:$0xf]
    %v3573 = vld [vmem:[%s3570 + $0x8] sm:$0xf]
    %v3574 = vld [vmem:[%s3570 + $0xc] sm:$0xf]
    %v3575 = vld [vmem:[%s3570 + $0x10] sm:$0xf]
    %v3576 = vld [vmem:[%s3570 + $0x14] sm:$0xf]
    %v3577 = vld [vmem:[%s3570 + $0x18] sm:$0xf]
    %v3578 = vld [vmem:[%s3570 + $0x1c] sm:$0xf]
    %v3579 = vld [vmem:[%s3570 + $0x20] sm:$0xf]
    %v3580 = vld [vmem:[%s3570 + $0x24] sm:$0xf]
    %v3581 = vld [vmem:[%s3570 + $0x28] sm:$0xf]
    %v3582 = vld [vmem:[%s3570 + $0x2c] sm:$0xf]
    %v3583 = vld [vmem:[%s3570 + $0x30] sm:$0xf]
    %v3584 = vld [vmem:[%s3570 + $0x34] sm:$0xf]
    %v3585 = vld [vmem:[%s3570 + $0x38] sm:$0xf]
    %v3586 = vld [vmem:[%s3570 + $0x3c] sm:$0xf]
    %v3587 = vld [vmem:[%s3570 + $0x40] sm:$0xf]
    %v3588 = vld [vmem:[%s3570 + $0x44] sm:$0xf]
    %v3589 = vld [vmem:[%s3570 + $0x48] sm:$0xf]
    %v3590 = vld [vmem:[%s3570 + $0x4c] sm:$0xf]
    %v3591 = vld [vmem:[%s3570 + $0x50] sm:$0xf]
    %v3592 = vld [vmem:[%s3570 + $0x54] sm:$0xf]
    %v3593 = vld [vmem:[%s3570 + $0x58] sm:$0xf]
    %v3594 = vld [vmem:[%s3570 + $0x5c] sm:$0xf]
    %v3595 = vld [vmem:[%s3570 + $0x60] sm:$0xf]
    %v3596 = vld [vmem:[%s3570 + $0x64] sm:$0xf]
    %v3597 = vld [vmem:[%s3570 + $0x68] sm:$0xf]
    %v3598 = vld [vmem:[%s3570 + $0x6c] sm:$0xf]
    %v3599 = vld [vmem:[%s3570 + $0x70] sm:$0xf]
    %v3600 = vld [vmem:[%s3570 + $0x74] sm:$0xf]
    %v3601 = vld [vmem:[%s3570 + $0x78] sm:$0xf]
    %v3602 = vld [vmem:[%s3570 + $0x7c] sm:$0xf]
    %v3603 = vld [vmem:[%s3570 + $0x80] sm:$0xf]
    %v3604 = vld [vmem:[%s3570 + $0x84] sm:$0xf]
    %v3605 = vld [vmem:[%s3570 + $0x88] sm:$0xf]
    %v3606 = vld [vmem:[%s3570 + $0x8c] sm:$0xf]
    %v3607 = vld [vmem:[%s3570 + $0x90] sm:$0xf]
    %v3608 = vld [vmem:[%s3570 + $0x94] sm:$0xf]
    %v3609 = vld [vmem:[%s3570 + $0x98] sm:$0xf]
    %v3610 = vld [vmem:[%s3570 + $0x9c] sm:$0xf]
    %v3611 = vld [vmem:[%s3570 + $0xa0] sm:$0xf]
    %v3612 = vld [vmem:[%s3570 + $0xa4] sm:$0xf]
    %v3613 = vld [vmem:[%s3570 + $0xa8] sm:$0xf]
    %v3614 = vld [vmem:[%s3570 + $0xac] sm:$0xf]
    %v3615 = vld [vmem:[%s3570 + $0xb0] sm:$0xf]
    %v3616 = vld [vmem:[%s3570 + $0xb4] sm:$0xf]
    %v3617 = vld [vmem:[%s3570 + $0xb8] sm:$0xf]
    %v3618 = vld [vmem:[%s3570 + $0xbc] sm:$0xf]
    %v3619 = vld [vmem:[%s3570 + $0xc0] sm:$0xf]
    %v3620 = vld [vmem:[%s3570 + $0xc4] sm:$0xf]
    %v3621 = vld [vmem:[%s3570 + $0xc8] sm:$0xf]
    %v3622 = vld [vmem:[%s3570 + $0xcc] sm:$0xf]
    %v3623 = vld [vmem:[%s3570 + $0xd0] sm:$0xf]
    %v3624 = vld [vmem:[%s3570 + $0xd4] sm:$0xf]
    %v3625 = vld [vmem:[%s3570 + $0xd8] sm:$0xf]
    %v3626 = vld [vmem:[%s3570 + $0xdc] sm:$0xf]
    %v3627 = vld [vmem:[%s3570 + $0xe0] sm:$0xf]
    %v3628 = vld [vmem:[%s3570 + $0xe4] sm:$0xf]
    %v3629 = vld [vmem:[%s3570 + $0xe8] sm:$0xf]
    %v3630 = vld [vmem:[%s3570 + $0xec] sm:$0xf]
    %v3631 = vld [vmem:[%s3570 + $0xf0] sm:$0xf]
    %v3632 = vld [vmem:[%s3570 + $0xf4] sm:$0xf]
    %v3633 = vld [vmem:[%s3570 + $0xf8] sm:$0xf]
    %v3634 = vld [vmem:[%s3570 + $0xfc] sm:$0xf]
    %v3635 = vld [vmem:[%s3570 + $0x100] sm:$0xf]
    %v3636 = vld [vmem:[%s3570 + $0x104] sm:$0xf]
    %v3637 = vld [vmem:[%s3570 + $0x108] sm:$0xf]
    %v3638 = vld [vmem:[%s3570 + $0x10c] sm:$0xf]
    %v3639 = vld [vmem:[%s3570 + $0x110] sm:$0xf]
    %v3640 = vld [vmem:[%s3570 + $0x114] sm:$0xf]
    %v3641 = vld [vmem:[%s3570 + $0x118] sm:$0xf]
    %v3642 = vld [vmem:[%s3570 + $0x11c] sm:$0xf]
    %v3643 = vld [vmem:[%s3570 + $0x120] sm:$0xf]
    %v3644 = vld [vmem:[%s3570 + $0x124] sm:$0xf]
    %v3645 = vld [vmem:[%s3570 + $0x128] sm:$0xf]
    %v3646 = vld [vmem:[%s3570 + $0x12c] sm:$0xf]
    %v3647 = vld [vmem:[%s3570 + $0x130] sm:$0xf]
    %v3648 = vld [vmem:[%s3570 + $0x134] sm:$0xf]
    %v3649 = vld [vmem:[%s3570 + $0x138] sm:$0xf]
    %v3650 = vld [vmem:[%s3570 + $0x13c] sm:$0xf]
    %v3651 = vld [vmem:[%s3570 + $0x140] sm:$0xf]
    %v3652 = vld [vmem:[%s3570 + $0x144] sm:$0xf]
    %v3653 = vld [vmem:[%s3570 + $0x148] sm:$0xf]
    %v3654 = vld [vmem:[%s3570 + $0x14c] sm:$0xf]
    %v3655 = vld [vmem:[%s3570 + $0x150] sm:$0xf]
    %v3656 = vld [vmem:[%s3570 + $0x154] sm:$0xf]
    %v3657 = vld [vmem:[%s3570 + $0x158] sm:$0xf]
    %v3658 = vld [vmem:[%s3570 + $0x15c] sm:$0xf]
    %v3659 = vld [vmem:[%s3570 + $0x160] sm:$0xf]
    %v3660 = vld [vmem:[%s3570 + $0x164] sm:$0xf]
    %v3661 = vld [vmem:[%s3570 + $0x168] sm:$0xf]
    %v3662 = vld [vmem:[%s3570 + $0x16c] sm:$0xf]
    %v3663 = vld [vmem:[%s3570 + $0x170] sm:$0xf]
    %v3664 = vld [vmem:[%s3570 + $0x174] sm:$0xf]
    %v3665 = vld [vmem:[%s3570 + $0x178] sm:$0xf]
    %v3666 = vld [vmem:[%s3570 + $0x17c] sm:$0xf]
    %v3667 = vld [vmem:[%s3570 + $0x180] sm:$0xf]
    %v3668 = vld [vmem:[%s3570 + $0x184] sm:$0xf]
    %v3669 = vld [vmem:[%s3570 + $0x188] sm:$0xf]
    %v3670 = vld [vmem:[%s3570 + $0x18c] sm:$0xf]
    %v3671 = vld [vmem:[%s3570 + $0x190] sm:$0xf]
    %v3672 = vld [vmem:[%s3570 + $0x194] sm:$0xf]
    %v3673 = vld [vmem:[%s3570 + $0x198] sm:$0xf]
    %v3674 = vld [vmem:[%s3570 + $0x19c] sm:$0xf]
    %v3675 = vld [vmem:[%s3570 + $0x1a0] sm:$0xf]
    %v3676 = vld [vmem:[%s3570 + $0x1a4] sm:$0xf]
    %v3677 = vld [vmem:[%s3570 + $0x1a8] sm:$0xf]
    %v3678 = vld [vmem:[%s3570 + $0x1ac] sm:$0xf]
    %v3679 = vld [vmem:[%s3570 + $0x1b0] sm:$0xf]
    %v3680 = vld [vmem:[%s3570 + $0x1b4] sm:$0xf]
    %v3681 = vld [vmem:[%s3570 + $0x1b8] sm:$0xf]
    %v3682 = vld [vmem:[%s3570 + $0x1bc] sm:$0xf]
    %v3683 = vld [vmem:[%s3570 + $0x1c0] sm:$0xf]
    %v3684 = vld [vmem:[%s3570 + $0x1c4] sm:$0xf]
    %v3685 = vld [vmem:[%s3570 + $0x1c8] sm:$0xf]
    %v3686 = vld [vmem:[%s3570 + $0x1cc] sm:$0xf]
    %v3687 = vld [vmem:[%s3570 + $0x1d0] sm:$0xf]
    %v3688 = vld [vmem:[%s3570 + $0x1d4] sm:$0xf]
    %v3689 = vld [vmem:[%s3570 + $0x1d8] sm:$0xf]
    %v3690 = vld [vmem:[%s3570 + $0x1dc] sm:$0xf]
    %v3691 = vld [vmem:[%s3570 + $0x1e0] sm:$0xf]
    %v3692 = vld [vmem:[%s3570 + $0x1e4] sm:$0xf]
    %v3693 = vld [vmem:[%s3570 + $0x1e8] sm:$0xf]
    %v3694 = vld [vmem:[%s3570 + $0x1ec] sm:$0xf]
    %v3695 = vld [vmem:[%s3570 + $0x1f0] sm:$0xf]
    %v3696 = vld [vmem:[%s3570 + $0x1f4] sm:$0xf]
    %v3697 = vld [vmem:[%s3570 + $0x1f8] sm:$0xf]
    %v3698 = vld [vmem:[%s3570 + $0x1fc] sm:$0xf]
    %v3827 = vunpack.c.l.b16 %v3571
    %v3828 = vunpack.c.l.b16 %v3572
    %v3829 = vunpack.c.l.b16 %v3573
    %v3830 = vunpack.c.l.b16 %v3574
    %v3831 = vunpack.c.l.b16 %v3575
    %v3832 = vunpack.c.l.b16 %v3576
    %v3833 = vunpack.c.l.b16 %v3577
    %v3834 = vunpack.c.l.b16 %v3578
    %v3835 = vunpack.c.l.b16 %v3579
    %v3836 = vunpack.c.l.b16 %v3580
    %v3837 = vunpack.c.l.b16 %v3581
    %v3838 = vunpack.c.l.b16 %v3582
    %v3839 = vunpack.c.l.b16 %v3583
    %v3840 = vunpack.c.l.b16 %v3584
    %v3841 = vunpack.c.l.b16 %v3585
    %v3842 = vunpack.c.l.b16 %v3586
    %v3843 = vunpack.c.l.b16 %v3587
    %v3844 = vunpack.c.l.b16 %v3588
    %v3845 = vunpack.c.l.b16 %v3589
    %v3846 = vunpack.c.l.b16 %v3590
    %v3847 = vunpack.c.l.b16 %v3591
    %v3848 = vunpack.c.l.b16 %v3592
    %v3849 = vunpack.c.l.b16 %v3593
    %v3850 = vunpack.c.l.b16 %v3594
    %v3851 = vunpack.c.l.b16 %v3595
    %v3852 = vunpack.c.l.b16 %v3596
    %v3853 = vunpack.c.l.b16 %v3597
    %v3854 = vunpack.c.l.b16 %v3598
    %v3855 = vunpack.c.l.b16 %v3599
    %v3856 = vunpack.c.l.b16 %v3600
    %v3857 = vunpack.c.l.b16 %v3601
    %v3858 = vunpack.c.l.b16 %v3602
    %v3859 = vunpack.c.l.b16 %v3603
    %v3860 = vunpack.c.l.b16 %v3604
    %v3861 = vunpack.c.l.b16 %v3605
    %v3862 = vunpack.c.l.b16 %v3606
    %v3863 = vunpack.c.l.b16 %v3607
    %v3864 = vunpack.c.l.b16 %v3608
    %v3865 = vunpack.c.l.b16 %v3609
    %v3866 = vunpack.c.l.b16 %v3610
    %v3867 = vunpack.c.l.b16 %v3611
    %v3868 = vunpack.c.l.b16 %v3612
    %v3869 = vunpack.c.l.b16 %v3613
    %v3870 = vunpack.c.l.b16 %v3614
    %v3871 = vunpack.c.l.b16 %v3615
    %v3872 = vunpack.c.l.b16 %v3616
    %v3873 = vunpack.c.l.b16 %v3617
    %v3874 = vunpack.c.l.b16 %v3618
    %v3875 = vunpack.c.l.b16 %v3619
    %v3876 = vunpack.c.l.b16 %v3620
    %v3877 = vunpack.c.l.b16 %v3621
    %v3878 = vunpack.c.l.b16 %v3622
    %v3879 = vunpack.c.l.b16 %v3623
    %v3880 = vunpack.c.l.b16 %v3624
    %v3881 = vunpack.c.l.b16 %v3625
    %v3882 = vunpack.c.l.b16 %v3626
    %v3883 = vunpack.c.l.b16 %v3627
    %v3884 = vunpack.c.l.b16 %v3628
    %v3885 = vunpack.c.l.b16 %v3629
    %v3886 = vunpack.c.l.b16 %v3630
    %v3887 = vunpack.c.l.b16 %v3631
    %v3888 = vunpack.c.l.b16 %v3632
    %v3889 = vunpack.c.l.b16 %v3633
    %v3890 = vunpack.c.l.b16 %v3634
    %v3891 = vunpack.c.l.b16 %v3635
    %v3892 = vunpack.c.l.b16 %v3636
    %v3893 = vunpack.c.l.b16 %v3637
    %v3894 = vunpack.c.l.b16 %v3638
    %v3895 = vunpack.c.l.b16 %v3639
    %v3896 = vunpack.c.l.b16 %v3640
    %v3897 = vunpack.c.l.b16 %v3641
    %v3898 = vunpack.c.l.b16 %v3642
    %v3899 = vunpack.c.l.b16 %v3643
    %v3900 = vunpack.c.l.b16 %v3644
    %v3901 = vunpack.c.l.b16 %v3645
    %v3902 = vunpack.c.l.b16 %v3646
    %v3903 = vunpack.c.l.b16 %v3647
    %v3904 = vunpack.c.l.b16 %v3648
    %v3905 = vunpack.c.l.b16 %v3649
    %v3906 = vunpack.c.l.b16 %v3650
    %v3907 = vunpack.c.l.b16 %v3651
    %v3908 = vunpack.c.l.b16 %v3652
    %v3909 = vunpack.c.l.b16 %v3653
    %v3910 = vunpack.c.l.b16 %v3654
    %v3911 = vunpack.c.l.b16 %v3655
    %v3912 = vunpack.c.l.b16 %v3656
    %v3913 = vunpack.c.l.b16 %v3657
    %v3914 = vunpack.c.l.b16 %v3658
    %v3915 = vunpack.c.l.b16 %v3659
    %v3916 = vunpack.c.l.b16 %v3660
    %v3917 = vunpack.c.l.b16 %v3661
    %v3918 = vunpack.c.l.b16 %v3662
    %v3919 = vunpack.c.l.b16 %v3663
    %v3920 = vunpack.c.l.b16 %v3664
    %v3921 = vunpack.c.l.b16 %v3665
    %v3922 = vunpack.c.l.b16 %v3666
    %v3923 = vunpack.c.l.b16 %v3667
    %v3924 = vunpack.c.l.b16 %v3668
    %v3925 = vunpack.c.l.b16 %v3669
    %v3926 = vunpack.c.l.b16 %v3670
    %v3927 = vunpack.c.l.b16 %v3671
    %v3928 = vunpack.c.l.b16 %v3672
    %v3929 = vunpack.c.l.b16 %v3673
    %v3930 = vunpack.c.l.b16 %v3674
    %v3931 = vunpack.c.l.b16 %v3675
    %v3932 = vunpack.c.l.b16 %v3676
    %v3933 = vunpack.c.l.b16 %v3677
    %v3934 = vunpack.c.l.b16 %v3678
    %v3935 = vunpack.c.l.b16 %v3679
    %v3936 = vunpack.c.l.b16 %v3680
    %v3937 = vunpack.c.l.b16 %v3681
    %v3938 = vunpack.c.l.b16 %v3682
    %v3939 = vunpack.c.l.b16 %v3683
    %v3940 = vunpack.c.l.b16 %v3684
    %v3941 = vunpack.c.l.b16 %v3685
    %v3942 = vunpack.c.l.b16 %v3686
    %v3943 = vunpack.c.l.b16 %v3687
    %v3944 = vunpack.c.l.b16 %v3688
    %v3945 = vunpack.c.l.b16 %v3689
    %v3946 = vunpack.c.l.b16 %v3690
    %v3947 = vunpack.c.l.b16 %v3691
    %v3948 = vunpack.c.l.b16 %v3692
    %v3949 = vunpack.c.l.b16 %v3693
    %v3950 = vunpack.c.l.b16 %v3694
    %v3951 = vunpack.c.l.b16 %v3695
    %v3952 = vunpack.c.l.b16 %v3696
    %v3953 = vunpack.c.l.b16 %v3697
    %v3954 = vunpack.c.l.b16 %v3698
    %v3955 = vpack.c.b16 %v3828, %v3827
    %v3956 = vpack.c.b16 %v3830, %v3829
    %v3957 = vpack.c.b16 %v3832, %v3831
    %v3958 = vpack.c.b16 %v3834, %v3833
    %v3959 = vpack.c.b16 %v3836, %v3835
    %v3960 = vpack.c.b16 %v3838, %v3837
    %v3961 = vpack.c.b16 %v3840, %v3839
    %v3962 = vpack.c.b16 %v3842, %v3841
    %v3963 = vpack.c.b16 %v3844, %v3843
    %v3964 = vpack.c.b16 %v3846, %v3845
    %v3965 = vpack.c.b16 %v3848, %v3847
    %v3966 = vpack.c.b16 %v3850, %v3849
    %v3967 = vpack.c.b16 %v3852, %v3851
    %v3968 = vpack.c.b16 %v3854, %v3853
    %v3969 = vpack.c.b16 %v3856, %v3855
    %v3970 = vpack.c.b16 %v3858, %v3857
    %v3971 = vpack.c.b16 %v3860, %v3859
    %v3972 = vpack.c.b16 %v3862, %v3861
    %v3973 = vpack.c.b16 %v3864, %v3863
    %v3974 = vpack.c.b16 %v3866, %v3865
    %v3975 = vpack.c.b16 %v3868, %v3867
    %v3976 = vpack.c.b16 %v3870, %v3869
    %v3977 = vpack.c.b16 %v3872, %v3871
    %v3978 = vpack.c.b16 %v3874, %v3873
    %v3979 = vpack.c.b16 %v3876, %v3875
    %v3980 = vpack.c.b16 %v3878, %v3877
    %v3981 = vpack.c.b16 %v3880, %v3879
    %v3982 = vpack.c.b16 %v3882, %v3881
    %v3983 = vpack.c.b16 %v3884, %v3883
    %v3984 = vpack.c.b16 %v3886, %v3885
    %v3985 = vpack.c.b16 %v3888, %v3887
    %v3986 = vpack.c.b16 %v3890, %v3889
    %v3987 = vpack.c.b16 %v3892, %v3891
    %v3988 = vpack.c.b16 %v3894, %v3893
    %v3989 = vpack.c.b16 %v3896, %v3895
    %v3990 = vpack.c.b16 %v3898, %v3897
    %v3991 = vpack.c.b16 %v3900, %v3899
    %v3992 = vpack.c.b16 %v3902, %v3901
    %v3993 = vpack.c.b16 %v3904, %v3903
    %v3994 = vpack.c.b16 %v3906, %v3905
    %v3995 = vpack.c.b16 %v3908, %v3907
    %v3996 = vpack.c.b16 %v3910, %v3909
    %v3997 = vpack.c.b16 %v3912, %v3911
    %v3998 = vpack.c.b16 %v3914, %v3913
    %v3999 = vpack.c.b16 %v3916, %v3915
    %v4000 = vpack.c.b16 %v3918, %v3917
    %v4001 = vpack.c.b16 %v3920, %v3919
    %v4002 = vpack.c.b16 %v3922, %v3921
    %v4003 = vpack.c.b16 %v3924, %v3923
    %v4004 = vpack.c.b16 %v3926, %v3925
    %v4005 = vpack.c.b16 %v3928, %v3927
    %v4006 = vpack.c.b16 %v3930, %v3929
    %v4007 = vpack.c.b16 %v3932, %v3931
    %v4008 = vpack.c.b16 %v3934, %v3933
    %v4009 = vpack.c.b16 %v3936, %v3935
    %v4010 = vpack.c.b16 %v3938, %v3937
    %v4011 = vpack.c.b16 %v3940, %v3939
    %v4012 = vpack.c.b16 %v3942, %v3941
    %v4013 = vpack.c.b16 %v3944, %v3943
    %v4014 = vpack.c.b16 %v3946, %v3945
    %v4015 = vpack.c.b16 %v3948, %v3947
    %v4016 = vpack.c.b16 %v3950, %v3949
    %v4017 = vpack.c.b16 %v3952, %v3951
    %v4018 = vpack.c.b16 %v3954, %v3953
    %4083 = vmatprep.subr.bf16.mxu0 0
    %4084 = vmatpush1.bf16.msra.mxu0 %v3955
    %4085 = vmatprep.subr.bf16.mxu0 0
    %4086 = vmatpush1.bf16.msra.mxu0 %v3956
    %4087 = vmatprep.subr.bf16.mxu0 0
    %4088 = vmatpush1.bf16.msra.mxu0 %v3957
    %4089 = vmatprep.subr.bf16.mxu0 0
    %4090 = vmatpush1.bf16.msra.mxu0 %v3958
    %4091 = vmatprep.subr.bf16.mxu0 0
    %4092 = vmatpush1.bf16.msra.mxu0 %v3959
    %4093 = vmatprep.subr.bf16.mxu0 0
    %4094 = vmatpush1.bf16.msra.mxu0 %v3960
    %4095 = vmatprep.subr.bf16.mxu0 0
    %4096 = vmatpush1.bf16.msra.mxu0 %v3961
    %4097 = vmatprep.subr.bf16.mxu0 0
    %4098 = vmatpush1.bf16.msra.mxu0 %v3962
    %4099 = vmatprep.subr.bf16.mxu0 0
    %4100 = vmatpush1.bf16.msra.mxu0 %v3963
    %4101 = vmatprep.subr.bf16.mxu0 0
    %4102 = vmatpush1.bf16.msra.mxu0 %v3964
    %4103 = vmatprep.subr.bf16.mxu0 0
    %4104 = vmatpush1.bf16.msra.mxu0 %v3965
    %4105 = vmatprep.subr.bf16.mxu0 0
    %4106 = vmatpush1.bf16.msra.mxu0 %v3966
    %4107 = vmatprep.subr.bf16.mxu0 0
    %4108 = vmatpush1.bf16.msra.mxu0 %v3967
    %4109 = vmatprep.subr.bf16.mxu0 0
    %4110 = vmatpush1.bf16.msra.mxu0 %v3968
    %4111 = vmatprep.subr.bf16.mxu0 0
    %4112 = vmatpush1.bf16.msra.mxu0 %v3969
    %4113 = vmatprep.subr.bf16.mxu0 0
    %4114 = vmatpush1.bf16.msra.mxu0 %v3970
    %4115 = vmatprep.mubr.bf16.mxu0 %v3507
    %4116 = vmatmul.mubr.bf16.gmra.mrb[0].mxu0 %v3506
    %v4117 = vpop.f32.mrb[0].mxu0
    %v4118 = vadd.f32 0.0, %v4117
    %v4119 = vpop.f32.mrb[0].mxu0
    %v4120 = vpop.f32.mrb[0].mxu0
    %v4121 = vadd.f32 0.0, %v4120
    %v4122 = vpop.f32.mrb[0].mxu0
    %4123 = vmatprep.mubr.bf16.mxu0 %v3515
    %4124 = vmatmul.mubr.bf16.gmra.mrb[0].mxu0 %v3514
    %v4125 = vpop.f32.mrb[0].mxu0
    %v4126 = vadd.f32 0.0, %v4125
    %v4127 = vpop.f32.mrb[0].mxu0
    %v4128 = vpop.f32.mrb[0].mxu0
    %v4129 = vadd.f32 0.0, %v4128
    %v4130 = vpop.f32.mrb[0].mxu0
    %4131 = vmatprep.mubr.bf16.mxu0 %v3523
    %4132 = vmatmul.mubr.bf16.gmra.mrb[0].mxu0 %v3522
    %v4133 = vpop.f32.mrb[0].mxu0
    %v4134 = vadd.f32 0.0, %v4133
    %v4135 = vpop.f32.mrb[0].mxu0
    %v4136 = vpop.f32.mrb[0].mxu0
    %v4137 = vadd.f32 0.0, %v4136
    %v4138 = vpop.f32.mrb[0].mxu0
    %4139 = vmatprep.mubr.bf16.mxu0 %v3531
    %4140 = vmatmul.mubr.bf16.gmra.mrb[0].mxu0 %v3530
    %v4141 = vpop.f32.mrb[0].mxu0
    %v4142 = vadd.f32 0.0, %v4141
    %v4143 = vpop.f32.mrb[0].mxu0
    %v4144 = vpop.f32.mrb[0].mxu0
    %v4145 = vadd.f32 0.0, %v4144
    %v4146 = vpop.f32.mrb[0].mxu0
    %4147 = vmatprep.mubr.bf16.mxu0 %v3539
    %4148 = vmatmul.mubr.bf16.gmra.mrb[0].mxu0 %v3538
    %v4149 = vpop.f32.mrb[0].mxu0
    %v4150 = vadd.f32 0.0, %v4149
    %v4151 = vpop.f32.mrb[0].mxu0
    %v4152 = vpop.f32.mrb[0].mxu0
    %v4153 = vadd.f32 0.0, %v4152
    %v4154 = vpop.f32.mrb[0].mxu0
    %4155 = vmatprep.mubr.bf16.mxu0 %v3547
    %4156 = vmatmul.mubr.bf16.gmra.mrb[0].mxu0 %v3546
    %v4157 = vpop.f32.mrb[0].mxu0
    %v4158 = vadd.f32 0.0, %v4157
    %v4159 = vpop.f32.mrb[0].mxu0
    %v4160 = vpop.f32.mrb[0].mxu0
    %v4161 = vadd.f32 0.0, %v4160
    %v4162 = vpop.f32.mrb[0].mxu0
    %4163 = vmatprep.mubr.bf16.mxu0 %v3555
    %4164 = vmatmul.mubr.bf16.gmra.mrb[0].mxu0 %v3554
    %v4165 = vpop.f32.mrb[0].mxu0
    %v4166 = vadd.f32 0.0, %v4165
    %v4167 = vpop.f32.mrb[0].mxu0
    %v4168 = vpop.f32.mrb[0].mxu0
    %v4169 = vadd.f32 0.0, %v4168
    %v4170 = vpop.f32.mrb[0].mxu0
    %4171 = vmatprep.mubr.bf16.mxu0 %v3563
    %4172 = vmatmul.mubr.bf16.gmra.mrb[0].mxu0 %v3562
    %v4173 = vpop.f32.mrb[0].mxu0
    %v4174 = vadd.f32 0.0, %v4173
    %v4175 = vpop.f32.mrb[0].mxu0
    %v4176 = vpop.f32.mrb[0].mxu0
    %v4177 = vadd.f32 0.0, %v4176
    %v4178 = vpop.f32.mrb[0].mxu0
    %4179 = vdwg.mxu0
    %4180 = vmatprep.subr.bf16.mxu0 0
    %4181 = vmatpush1.bf16.msra.mxu0 %v3971
    %4182 = vmatprep.subr.bf16.mxu0 0
    %4183 = vmatpush1.bf16.msra.mxu0 %v3972
    %4184 = vmatprep.subr.bf16.mxu0 0
    %4185 = vmatpush1.bf16.msra.mxu0 %v3973
    %4186 = vmatprep.subr.bf16.mxu0 0
    %4187 = vmatpush1.bf16.msra.mxu0 %v3974
    %4188 = vmatprep.subr.bf16.mxu0 0
    %4189 = vmatpush1.bf16.msra.mxu0 %v3975
    %4190 = vmatprep.subr.bf16.mxu0 0
    %4191 = vmatpush1.bf16.msra.mxu0 %v3976
    %4192 = vmatprep.subr.bf16.mxu0 0
    %4193 = vmatpush1.bf16.msra.mxu0 %v3977
    %4194 = vmatprep.subr.bf16.mxu0 0
    %4195 = vmatpush1.bf16.msra.mxu0 %v3978
    %4196 = vmatprep.subr.bf16.mxu0 0
    %4197 = vmatpush1.bf16.msra.mxu0 %v3979
    %4198 = vmatprep.subr.bf16.mxu0 0
    %4199 = vmatpush1.bf16.msra.mxu0 %v3980
    %4200 = vmatprep.subr.bf16.mxu0 0
    %4201 = vmatpush1.bf16.msra.mxu0 %v3981
    %4202 = vmatprep.subr.bf16.mxu0 0
    %4203 = vmatpush1.bf16.msra.mxu0 %v3982
    %4204 = vmatprep.subr.bf16.mxu0 0
    %4205 = vmatpush1.bf16.msra.mxu0 %v3983
    %4206 = vmatprep.subr.bf16.mxu0 0
    %4207 = vmatpush1.bf16.msra.mxu0 %v3984
    %4208 = vmatprep.subr.bf16.mxu0 0
    %4209 = vmatpush1.bf16.msra.mxu0 %v3985
    %4210 = vmatprep.subr.bf16.mxu0 0
    %4211 = vmatpush1.bf16.msra.mxu0 %v3986
    %4212 = vmatprep.mubr.bf16.mxu0 %v3509
    %4213 = vmatmul.mubr.bf16.gmra.mrb[0].mxu0 %v3508
    %v4214 = vpop.f32.mrb[0].mxu0
    %v4215 = vadd.f32 %v4118, %v4214
    %v4216 = vpop.f32.mrb[0].mxu0
    %v4217 = vpop.f32.mrb[0].mxu0
    %v4218 = vadd.f32 %v4121, %v4217
    %v4219 = vpop.f32.mrb[0].mxu0
    %4220 = vmatprep.mubr.bf16.mxu0 %v3517
    %4221 = vmatmul.mubr.bf16.gmra.mrb[0].mxu0 %v3516
    %v4222 = vpop.f32.mrb[0].mxu0
    %v4223 = vadd.f32 %v4126, %v4222
    %v4224 = vpop.f32.mrb[0].mxu0
    %v4225 = vpop.f32.mrb[0].mxu0
    %v4226 = vadd.f32 %v4129, %v4225
    %v4227 = vpop.f32.mrb[0].mxu0
    %4228 = vmatprep.mubr.bf16.mxu0 %v3525
    %4229 = vmatmul.mubr.bf16.gmra.mrb[0].mxu0 %v3524
    %v4230 = vpop.f32.mrb[0].mxu0
    %v4231 = vadd.f32 %v4134, %v4230
    %v4232 = vpop.f32.mrb[0].mxu0
    %v4233 = vpop.f32.mrb[0].mxu0
    %v4234 = vadd.f32 %v4137, %v4233
    %v4235 = vpop.f32.mrb[0].mxu0
    %4236 = vmatprep.mubr.bf16.mxu0 %v3533
    %4237 = vmatmul.mubr.bf16.gmra.mrb[0].mxu0 %v3532
    %v4238 = vpop.f32.mrb[0].mxu0
    %v4239 = vadd.f32 %v4142, %v4238
    %v4240 = vpop.f32.mrb[0].mxu0
    %v4241 = vpop.f32.mrb[0].mxu0
    %v4242 = vadd.f32 %v4145, %v4241
    %v4243 = vpop.f32.mrb[0].mxu0
    %4244 = vmatprep.mubr.bf16.mxu0 %v3541
    %4245 = vmatmul.mubr.bf16.gmra.mrb[0].mxu0 %v3540
    %v4246 = vpop.f32.mrb[0].mxu0
    %v4247 = vadd.f32 %v4150, %v4246
    %v4248 = vpop.f32.mrb[0].mxu0
    %v4249 = vpop.f32.mrb[0].mxu0
    %v4250 = vadd.f32 %v4153, %v4249
    %v4251 = vpop.f32.mrb[0].mxu0
    %4252 = vmatprep.mubr.bf16.mxu0 %v3549
    %4253 = vmatmul.mubr.bf16.gmra.mrb[0].mxu0 %v3548
    %v4254 = vpop.f32.mrb[0].mxu0
    %v4255 = vadd.f32 %v4158, %v4254
    %v4256 = vpop.f32.mrb[0].mxu0
    %v4257 = vpop.f32.mrb[0].mxu0
    %v4258 = vadd.f32 %v4161, %v4257
    %v4259 = vpop.f32.mrb[0].mxu0
    %4260 = vmatprep.mubr.bf16.mxu0 %v3557
    %4261 = vmatmul.mubr.bf16.gmra.mrb[0].mxu0 %v3556
    %v4262 = vpop.f32.mrb[0].mxu0
    %v4263 = vadd.f32 %v4166, %v4262
    %v4264 = vpop.f32.mrb[0].mxu0
    %v4265 = vpop.f32.mrb[0].mxu0
    %v4266 = vadd.f32 %v4169, %v4265
    %v4267 = vpop.f32.mrb[0].mxu0
    %4268 = vmatprep.mubr.bf16.mxu0 %v3565
    %4269 = vmatmul.mubr.bf16.gmra.mrb[0].mxu0 %v3564
    %v4270 = vpop.f32.mrb[0].mxu0
    %v4271 = vadd.f32 %v4174, %v4270
    %v4272 = vpop.f32.mrb[0].mxu0
    %v4273 = vpop.f32.mrb[0].mxu0
    %v4274 = vadd.f32 %v4177, %v4273
    %v4275 = vpop.f32.mrb[0].mxu0
    %4276 = vdwg.mxu0
    %4277 = vmatprep.subr.bf16.mxu0 0
    %4278 = vmatpush1.bf16.msra.mxu0 %v3987
    %4279 = vmatprep.subr.bf16.mxu0 0
    %4280 = vmatpush1.bf16.msra.mxu0 %v3988
    %4281 = vmatprep.subr.bf16.mxu0 0
    %4282 = vmatpush1.bf16.msra.mxu0 %v3989
    %4283 = vmatprep.subr.bf16.mxu0 0
    %4284 = vmatpush1.bf16.msra.mxu0 %v3990
    %4285 = vmatprep.subr.bf16.mxu0 0
    %4286 = vmatpush1.bf16.msra.mxu0 %v3991
    %4287 = vmatprep.subr.bf16.mxu0 0
    %4288 = vmatpush1.bf16.msra.mxu0 %v3992
    %4289 = vmatprep.subr.bf16.mxu0 0
    %4290 = vmatpush1.bf16.msra.mxu0 %v3993
    %4291 = vmatprep.subr.bf16.mxu0 0
    %4292 = vmatpush1.bf16.msra.mxu0 %v3994
    %4293 = vmatprep.subr.bf16.mxu0 0
    %4294 = vmatpush1.bf16.msra.mxu0 %v3995
    %4295 = vmatprep.subr.bf16.mxu0 0
    %4296 = vmatpush1.bf16.msra.mxu0 %v3996
    %4297 = vmatprep.subr.bf16.mxu0 0
    %4298 = vmatpush1.bf16.msra.mxu0 %v3997
    %4299 = vmatprep.subr.bf16.mxu0 0
    %4300 = vmatpush1.bf16.msra.mxu0 %v3998
    %4301 = vmatprep.subr.bf16.mxu0 0
    %4302 = vmatpush1.bf16.msra.mxu0 %v3999
    %4303 = vmatprep.subr.bf16.mxu0 0
    %4304 = vmatpush1.bf16.msra.mxu0 %v4000
    %4305 = vmatprep.subr.bf16.mxu0 0
    %4306 = vmatpush1.bf16.msra.mxu0 %v4001
    %4307 = vmatprep.subr.bf16.mxu0 0
    %4308 = vmatpush1.bf16.msra.mxu0 %v4002
    %4309 = vmatprep.mubr.bf16.mxu0 %v3511
    %4310 = vmatmul.mubr.bf16.gmra.mrb[0].mxu0 %v3510
    %v4311 = vpop.f32.mrb[0].mxu0
    %v4312 = vadd.f32 %v4215, %v4311
    %v4313 = vpop.f32.mrb[0].mxu0
    %v4314 = vpop.f32.mrb[0].mxu0
    %v4315 = vadd.f32 %v4218, %v4314
    %v4316 = vpop.f32.mrb[0].mxu0
    %4317 = vmatprep.mubr.bf16.mxu0 %v3519
    %4318 = vmatmul.mubr.bf16.gmra.mrb[0].mxu0 %v3518
    %v4319 = vpop.f32.mrb[0].mxu0
    %v4320 = vadd.f32 %v4223, %v4319
    %v4321 = vpop.f32.mrb[0].mxu0
    %v4322 = vpop.f32.mrb[0].mxu0
    %v4323 = vadd.f32 %v4226, %v4322
    %v4324 = vpop.f32.mrb[0].mxu0
    %4325 = vmatprep.mubr.bf16.mxu0 %v3527
    %4326 = vmatmul.mubr.bf16.gmra.mrb[0].mxu0 %v3526
    %v4327 = vpop.f32.mrb[0].mxu0
    %v4328 = vadd.f32 %v4231, %v4327
    %v4329 = vpop.f32.mrb[0].mxu0
    %v4330 = vpop.f32.mrb[0].mxu0
    %v4331 = vadd.f32 %v4234, %v4330
    %v4332 = vpop.f32.mrb[0].mxu0
    %4333 = vmatprep.mubr.bf16.mxu0 %v3535
    %4334 = vmatmul.mubr.bf16.gmra.mrb[0].mxu0 %v3534
    %v4335 = vpop.f32.mrb[0].mxu0
    %v4336 = vadd.f32 %v4239, %v4335
    %v4337 = vpop.f32.mrb[0].mxu0
    %v4338 = vpop.f32.mrb[0].mxu0
    %v4339 = vadd.f32 %v4242, %v4338
    %v4340 = vpop.f32.mrb[0].mxu0
    %4341 = vmatprep.mubr.bf16.mxu0 %v3543
    %4342 = vmatmul.mubr.bf16.gmra.mrb[0].mxu0 %v3542
    %v4343 = vpop.f32.mrb[0].mxu0
    %v4344 = vadd.f32 %v4247, %v4343
    %v4345 = vpop.f32.mrb[0].mxu0
    %v4346 = vpop.f32.mrb[0].mxu0
    %v4347 = vadd.f32 %v4250, %v4346
    %v4348 = vpop.f32.mrb[0].mxu0
    %4349 = vmatprep.mubr.bf16.mxu0 %v3551
    %4350 = vmatmul.mubr.bf16.gmra.mrb[0].mxu0 %v3550
    %v4351 = vpop.f32.mrb[0].mxu0
    %v4352 = vadd.f32 %v4255, %v4351
    %v4353 = vpop.f32.mrb[0].mxu0
    %v4354 = vpop.f32.mrb[0].mxu0
    %v4355 = vadd.f32 %v4258, %v4354
    %v4356 = vpop.f32.mrb[0].mxu0
    %4357 = vmatprep.mubr.bf16.mxu0 %v3559
    %4358 = vmatmul.mubr.bf16.gmra.mrb[0].mxu0 %v3558
    %v4359 = vpop.f32.mrb[0].mxu0
    %v4360 = vadd.f32 %v4263, %v4359
    %v4361 = vpop.f32.mrb[0].mxu0
    %v4362 = vpop.f32.mrb[0].mxu0
    %v4363 = vadd.f32 %v4266, %v4362
    %v4364 = vpop.f32.mrb[0].mxu0
    %4365 = vmatprep.mubr.bf16.mxu0 %v3567
    %4366 = vmatmul.mubr.bf16.gmra.mrb[0].mxu0 %v3566
    %v4367 = vpop.f32.mrb[0].mxu0
    %v4368 = vadd.f32 %v4271, %v4367
    %v4369 = vpop.f32.mrb[0].mxu0
    %v4370 = vpop.f32.mrb[0].mxu0
    %v4371 = vadd.f32 %v4274, %v4370
    %v4372 = vpop.f32.mrb[0].mxu0
    %4373 = vdwg.mxu0
    %4374 = vmatprep.subr.bf16.mxu0 0
    %4375 = vmatpush1.bf16.msra.mxu0 %v4003
    %4376 = vmatprep.subr.bf16.mxu0 0
    %4377 = vmatpush1.bf16.msra.mxu0 %v4004
    %4378 = vmatprep.subr.bf16.mxu0 0
    %4379 = vmatpush1.bf16.msra.mxu0 %v4005
    %4380 = vmatprep.subr.bf16.mxu0 0
    %4381 = vmatpush1.bf16.msra.mxu0 %v4006
    %4382 = vmatprep.subr.bf16.mxu0 0
    %4383 = vmatpush1.bf16.msra.mxu0 %v4007
    %4384 = vmatprep.subr.bf16.mxu0 0
    %4385 = vmatpush1.bf16.msra.mxu0 %v4008
    %4386 = vmatprep.subr.bf16.mxu0 0
    %4387 = vmatpush1.bf16.msra.mxu0 %v4009
    %4388 = vmatprep.subr.bf16.mxu0 0
    %4389 = vmatpush1.bf16.msra.mxu0 %v4010
    %4390 = vmatprep.subr.bf16.mxu0 0
    %4391 = vmatpush1.bf16.msra.mxu0 %v4011
    %4392 = vmatprep.subr.bf16.mxu0 0
    %4393 = vmatpush1.bf16.msra.mxu0 %v4012
    %4394 = vmatprep.subr.bf16.mxu0 0
    %4395 = vmatpush1.bf16.msra.mxu0 %v4013
    %4396 = vmatprep.subr.bf16.mxu0 0
    %4397 = vmatpush1.bf16.msra.mxu0 %v4014
    %4398 = vmatprep.subr.bf16.mxu0 0
    %4399 = vmatpush1.bf16.msra.mxu0 %v4015
    %4400 = vmatprep.subr.bf16.mxu0 0
    %4401 = vmatpush1.bf16.msra.mxu0 %v4016
    %4402 = vmatprep.subr.bf16.mxu0 0
    %4403 = vmatpush1.bf16.msra.mxu0 %v4017
    %4404 = vmatprep.subr.bf16.mxu0 0
    %4405 = vmatpush1.bf16.msra.mxu0 %v4018
    %4406 = vmatprep.mubr.bf16.mxu0 %v3513
    %4407 = vmatmul.mubr.bf16.gmra.mrb[0].mxu0 %v3512
    %v4408 = vpop.f32.mrb[0].mxu0
    %v4409 = vadd.f32 %v4312, %v4408
    %v4410 = vpop.f32.mrb[0].mxu0
    %v4411 = vpop.f32.mrb[0].mxu0
    %v4412 = vadd.f32 %v4315, %v4411
    %v4413 = vpop.f32.mrb[0].mxu0
    %4414 = vmatprep.mubr.bf16.mxu0 %v3521
    %4415 = vmatmul.mubr.bf16.gmra.mrb[0].mxu0 %v3520
    %v4416 = vpop.f32.mrb[0].mxu0
    %v4417 = vadd.f32 %v4320, %v4416
    %v4418 = vpop.f32.mrb[0].mxu0
    %v4419 = vpop.f32.mrb[0].mxu0
    %v4420 = vadd.f32 %v4323, %v4419
    %v4421 = vpop.f32.mrb[0].mxu0
    %4422 = vmatprep.mubr.bf16.mxu0 %v3529
    %4423 = vmatmul.mubr.bf16.gmra.mrb[0].mxu0 %v3528
    %v4424 = vpop.f32.mrb[0].mxu0
    %v4425 = vadd.f32 %v4328, %v4424
    %v4426 = vpop.f32.mrb[0].mxu0
    %v4427 = vpop.f32.mrb[0].mxu0
    %v4428 = vadd.f32 %v4331, %v4427
    %v4429 = vpop.f32.mrb[0].mxu0
    %4430 = vmatprep.mubr.bf16.mxu0 %v3537
    %4431 = vmatmul.mubr.bf16.gmra.mrb[0].mxu0 %v3536
    %v4432 = vpop.f32.mrb[0].mxu0
    %v4433 = vadd.f32 %v4336, %v4432
    %v4434 = vpop.f32.mrb[0].mxu0
    %v4435 = vpop.f32.mrb[0].mxu0
    %v4436 = vadd.f32 %v4339, %v4435
    %v4437 = vpop.f32.mrb[0].mxu0
    %4438 = vmatprep.mubr.bf16.mxu0 %v3545
    %4439 = vmatmul.mubr.bf16.gmra.mrb[0].mxu0 %v3544
    %v4440 = vpop.f32.mrb[0].mxu0
    %v4441 = vadd.f32 %v4344, %v4440
    %v4442 = vpop.f32.mrb[0].mxu0
    %v4443 = vpop.f32.mrb[0].mxu0
    %v4444 = vadd.f32 %v4347, %v4443
    %v4445 = vpop.f32.mrb[0].mxu0
    %4446 = vmatprep.mubr.bf16.mxu0 %v3553
    %4447 = vmatmul.mubr.bf16.gmra.mrb[0].mxu0 %v3552
    %v4448 = vpop.f32.mrb[0].mxu0
    %v4449 = vadd.f32 %v4352, %v4448
    %v4450 = vpop.f32.mrb[0].mxu0
    %v4451 = vpop.f32.mrb[0].mxu0
    %v4452 = vadd.f32 %v4355, %v4451
    %v4453 = vpop.f32.mrb[0].mxu0
    %4454 = vmatprep.mubr.bf16.mxu0 %v3561
    %4455 = vmatmul.mubr.bf16.gmra.mrb[0].mxu0 %v3560
    %v4456 = vpop.f32.mrb[0].mxu0
    %v4457 = vadd.f32 %v4360, %v4456
    %v4458 = vpop.f32.mrb[0].mxu0
    %v4459 = vpop.f32.mrb[0].mxu0
    %v4460 = vadd.f32 %v4363, %v4459
    %v4461 = vpop.f32.mrb[0].mxu0
    %4462 = vmatprep.mubr.bf16.mxu0 %v3569
    %4463 = vmatmul.mubr.bf16.gmra.mrb[0].mxu0 %v3568
    %v4464 = vpop.f32.mrb[0].mxu0
    %v4465 = vadd.f32 %v4368, %v4464
    %v4466 = vpop.f32.mrb[0].mxu0
    %v4467 = vpop.f32.mrb[0].mxu0
    %v4468 = vadd.f32 %v4371, %v4467
    %v4469 = vpop.f32.mrb[0].mxu0
    %4470 = vdwg.mxu0
    %v4471 = vadd.f32 %v3186, %v4409
    %v4472 = vadd.f32 %v3187, %v4412
    %v4473 = vadd.f32 %v3188, %v4417
    %v4474 = vadd.f32 %v3189, %v4420
    %v4475 = vadd.f32 %v3190, %v4425
    %v4476 = vadd.f32 %v3191, %v4428
    %v4477 = vadd.f32 %v3192, %v4433
    %v4478 = vadd.f32 %v3193, %v4436
    %v4479 = vadd.f32 %v3194, %v4441
    %v4480 = vadd.f32 %v3195, %v4444
    %v4481 = vadd.f32 %v3196, %v4449
    %v4482 = vadd.f32 %v3197, %v4452
    %v4483 = vadd.f32 %v3198, %v4457
    %v4484 = vadd.f32 %v3199, %v4460
    %v4485 = vadd.f32 %v3200, %v4465
    %v4486 = vadd.f32 %v3201, %v4468
    %s4487 = scalar_lea.vmem [#allocation2], 2560
    %v4488 = vld [vmem:[%s4487] sm:$0xf]
    %v4489 = vld [vmem:[%s4487 + $0x4] sm:$0xf]
    %v4490 = vld [vmem:[%s4487 + $0x8] sm:$0xf]
    %v4491 = vld [vmem:[%s4487 + $0xc] sm:$0xf]
    %v4492 = vld [vmem:[%s4487 + $0x10] sm:$0xf]
    %v4493 = vld [vmem:[%s4487 + $0x14] sm:$0xf]
    %v4494 = vld [vmem:[%s4487 + $0x18] sm:$0xf]
    %v4495 = vld [vmem:[%s4487 + $0x1c] sm:$0xf]
    %v4496 = vld [vmem:[%s4487 + $0x20] sm:$0xf]
    %v4497 = vld [vmem:[%s4487 + $0x24] sm:$0xf]
    %v4498 = vld [vmem:[%s4487 + $0x28] sm:$0xf]
    %v4499 = vld [vmem:[%s4487 + $0x2c] sm:$0xf]
    %v4500 = vld [vmem:[%s4487 + $0x30] sm:$0xf]
    %v4501 = vld [vmem:[%s4487 + $0x34] sm:$0xf]
    %v4502 = vld [vmem:[%s4487 + $0x38] sm:$0xf]
    %v4503 = vld [vmem:[%s4487 + $0x3c] sm:$0xf]
    %v4504 = vld [vmem:[%s4487 + $0x40] sm:$0xf]
    %v4505 = vld [vmem:[%s4487 + $0x44] sm:$0xf]
    %v4506 = vld [vmem:[%s4487 + $0x48] sm:$0xf]
    %v4507 = vld [vmem:[%s4487 + $0x4c] sm:$0xf]
    %v4508 = vld [vmem:[%s4487 + $0x50] sm:$0xf]
    %v4509 = vld [vmem:[%s4487 + $0x54] sm:$0xf]
    %v4510 = vld [vmem:[%s4487 + $0x58] sm:$0xf]
    %v4511 = vld [vmem:[%s4487 + $0x5c] sm:$0xf]
    %v4512 = vld [vmem:[%s4487 + $0x60] sm:$0xf]
    %v4513 = vld [vmem:[%s4487 + $0x64] sm:$0xf]
    %v4514 = vld [vmem:[%s4487 + $0x68] sm:$0xf]
    %v4515 = vld [vmem:[%s4487 + $0x6c] sm:$0xf]
    %v4516 = vld [vmem:[%s4487 + $0x70] sm:$0xf]
    %v4517 = vld [vmem:[%s4487 + $0x74] sm:$0xf]
    %v4518 = vld [vmem:[%s4487 + $0x78] sm:$0xf]
    %v4519 = vld [vmem:[%s4487 + $0x7c] sm:$0xf]
    %v4520 = vld [vmem:[%s4487 + $0x80] sm:$0xf]
    %v4521 = vld [vmem:[%s4487 + $0x84] sm:$0xf]
    %v4522 = vld [vmem:[%s4487 + $0x88] sm:$0xf]
    %v4523 = vld [vmem:[%s4487 + $0x8c] sm:$0xf]
    %v4524 = vld [vmem:[%s4487 + $0x90] sm:$0xf]
    %v4525 = vld [vmem:[%s4487 + $0x94] sm:$0xf]
    %v4526 = vld [vmem:[%s4487 + $0x98] sm:$0xf]
    %v4527 = vld [vmem:[%s4487 + $0x9c] sm:$0xf]
    %v4528 = vld [vmem:[%s4487 + $0xa0] sm:$0xf]
    %v4529 = vld [vmem:[%s4487 + $0xa4] sm:$0xf]
    %v4530 = vld [vmem:[%s4487 + $0xa8] sm:$0xf]
    %v4531 = vld [vmem:[%s4487 + $0xac] sm:$0xf]
    %v4532 = vld [vmem:[%s4487 + $0xb0] sm:$0xf]
    %v4533 = vld [vmem:[%s4487 + $0xb4] sm:$0xf]
    %v4534 = vld [vmem:[%s4487 + $0xb8] sm:$0xf]
    %v4535 = vld [vmem:[%s4487 + $0xbc] sm:$0xf]
    %v4536 = vld [vmem:[%s4487 + $0xc0] sm:$0xf]
    %v4537 = vld [vmem:[%s4487 + $0xc4] sm:$0xf]
    %v4538 = vld [vmem:[%s4487 + $0xc8] sm:$0xf]
    %v4539 = vld [vmem:[%s4487 + $0xcc] sm:$0xf]
    %v4540 = vld [vmem:[%s4487 + $0xd0] sm:$0xf]
    %v4541 = vld [vmem:[%s4487 + $0xd4] sm:$0xf]
    %v4542 = vld [vmem:[%s4487 + $0xd8] sm:$0xf]
    %v4543 = vld [vmem:[%s4487 + $0xdc] sm:$0xf]
    %v4544 = vld [vmem:[%s4487 + $0xe0] sm:$0xf]
    %v4545 = vld [vmem:[%s4487 + $0xe4] sm:$0xf]
    %v4546 = vld [vmem:[%s4487 + $0xe8] sm:$0xf]
    %v4547 = vld [vmem:[%s4487 + $0xec] sm:$0xf]
    %v4548 = vld [vmem:[%s4487 + $0xf0] sm:$0xf]
    %v4549 = vld [vmem:[%s4487 + $0xf4] sm:$0xf]
    %v4550 = vld [vmem:[%s4487 + $0xf8] sm:$0xf]
    %v4551 = vld [vmem:[%s4487 + $0xfc] sm:$0xf]
    %v4552 = vld [vmem:[%s4487 + $0x100] sm:$0xf]
    %v4553 = vld [vmem:[%s4487 + $0x104] sm:$0xf]
    %v4554 = vld [vmem:[%s4487 + $0x108] sm:$0xf]
    %v4555 = vld [vmem:[%s4487 + $0x10c] sm:$0xf]
    %v4556 = vld [vmem:[%s4487 + $0x110] sm:$0xf]
    %v4557 = vld [vmem:[%s4487 + $0x114] sm:$0xf]
    %v4558 = vld [vmem:[%s4487 + $0x118] sm:$0xf]
    %v4559 = vld [vmem:[%s4487 + $0x11c] sm:$0xf]
    %v4560 = vld [vmem:[%s4487 + $0x120] sm:$0xf]
    %v4561 = vld [vmem:[%s4487 + $0x124] sm:$0xf]
    %v4562 = vld [vmem:[%s4487 + $0x128] sm:$0xf]
    %v4563 = vld [vmem:[%s4487 + $0x12c] sm:$0xf]
    %v4564 = vld [vmem:[%s4487 + $0x130] sm:$0xf]
    %v4565 = vld [vmem:[%s4487 + $0x134] sm:$0xf]
    %v4566 = vld [vmem:[%s4487 + $0x138] sm:$0xf]
    %v4567 = vld [vmem:[%s4487 + $0x13c] sm:$0xf]
    %v4568 = vld [vmem:[%s4487 + $0x140] sm:$0xf]
    %v4569 = vld [vmem:[%s4487 + $0x144] sm:$0xf]
    %v4570 = vld [vmem:[%s4487 + $0x148] sm:$0xf]
    %v4571 = vld [vmem:[%s4487 + $0x14c] sm:$0xf]
    %v4572 = vld [vmem:[%s4487 + $0x150] sm:$0xf]
    %v4573 = vld [vmem:[%s4487 + $0x154] sm:$0xf]
    %v4574 = vld [vmem:[%s4487 + $0x158] sm:$0xf]
    %v4575 = vld [vmem:[%s4487 + $0x15c] sm:$0xf]
    %v4576 = vld [vmem:[%s4487 + $0x160] sm:$0xf]
    %v4577 = vld [vmem:[%s4487 + $0x164] sm:$0xf]
    %v4578 = vld [vmem:[%s4487 + $0x168] sm:$0xf]
    %v4579 = vld [vmem:[%s4487 + $0x16c] sm:$0xf]
    %v4580 = vld [vmem:[%s4487 + $0x170] sm:$0xf]
    %v4581 = vld [vmem:[%s4487 + $0x174] sm:$0xf]
    %v4582 = vld [vmem:[%s4487 + $0x178] sm:$0xf]
    %v4583 = vld [vmem:[%s4487 + $0x17c] sm:$0xf]
    %v4584 = vld [vmem:[%s4487 + $0x180] sm:$0xf]
    %v4585 = vld [vmem:[%s4487 + $0x184] sm:$0xf]
    %v4586 = vld [vmem:[%s4487 + $0x188] sm:$0xf]
    %v4587 = vld [vmem:[%s4487 + $0x18c] sm:$0xf]
    %v4588 = vld [vmem:[%s4487 + $0x190] sm:$0xf]
    %v4589 = vld [vmem:[%s4487 + $0x194] sm:$0xf]
    %v4590 = vld [vmem:[%s4487 + $0x198] sm:$0xf]
    %v4591 = vld [vmem:[%s4487 + $0x19c] sm:$0xf]
    %v4592 = vld [vmem:[%s4487 + $0x1a0] sm:$0xf]
    %v4593 = vld [vmem:[%s4487 + $0x1a4] sm:$0xf]
    %v4594 = vld [vmem:[%s4487 + $0x1a8] sm:$0xf]
    %v4595 = vld [vmem:[%s4487 + $0x1ac] sm:$0xf]
    %v4596 = vld [vmem:[%s4487 + $0x1b0] sm:$0xf]
    %v4597 = vld [vmem:[%s4487 + $0x1b4] sm:$0xf]
    %v4598 = vld [vmem:[%s4487 + $0x1b8] sm:$0xf]
    %v4599 = vld [vmem:[%s4487 + $0x1bc] sm:$0xf]
    %v4600 = vld [vmem:[%s4487 + $0x1c0] sm:$0xf]
    %v4601 = vld [vmem:[%s4487 + $0x1c4] sm:$0xf]
    %v4602 = vld [vmem:[%s4487 + $0x1c8] sm:$0xf]
    %v4603 = vld [vmem:[%s4487 + $0x1cc] sm:$0xf]
    %v4604 = vld [vmem:[%s4487 + $0x1d0] sm:$0xf]
    %v4605 = vld [vmem:[%s4487 + $0x1d4] sm:$0xf]
    %v4606 = vld [vmem:[%s4487 + $0x1d8] sm:$0xf]
    %v4607 = vld [vmem:[%s4487 + $0x1dc] sm:$0xf]
    %v4608 = vld [vmem:[%s4487 + $0x1e0] sm:$0xf]
    %v4609 = vld [vmem:[%s4487 + $0x1e4] sm:$0xf]
    %v4610 = vld [vmem:[%s4487 + $0x1e8] sm:$0xf]
    %v4611 = vld [vmem:[%s4487 + $0x1ec] sm:$0xf]
    %v4612 = vld [vmem:[%s4487 + $0x1f0] sm:$0xf]
    %v4613 = vld [vmem:[%s4487 + $0x1f4] sm:$0xf]
    %v4614 = vld [vmem:[%s4487 + $0x1f8] sm:$0xf]
    %v4615 = vld [vmem:[%s4487 + $0x1fc] sm:$0xf]
    %v4744 = vunpack.c.l.b16 %v4488
    %v4745 = vunpack.c.l.b16 %v4489
    %v4746 = vunpack.c.l.b16 %v4490
    %v4747 = vunpack.c.l.b16 %v4491
    %v4748 = vunpack.c.l.b16 %v4492
    %v4749 = vunpack.c.l.b16 %v4493
    %v4750 = vunpack.c.l.b16 %v4494
    %v4751 = vunpack.c.l.b16 %v4495
    %v4752 = vunpack.c.l.b16 %v4496
    %v4753 = vunpack.c.l.b16 %v4497
    %v4754 = vunpack.c.l.b16 %v4498
    %v4755 = vunpack.c.l.b16 %v4499
    %v4756 = vunpack.c.l.b16 %v4500
    %v4757 = vunpack.c.l.b16 %v4501
    %v4758 = vunpack.c.l.b16 %v4502
    %v4759 = vunpack.c.l.b16 %v4503
    %v4760 = vunpack.c.l.b16 %v4504
    %v4761 = vunpack.c.l.b16 %v4505
    %v4762 = vunpack.c.l.b16 %v4506
    %v4763 = vunpack.c.l.b16 %v4507
    %v4764 = vunpack.c.l.b16 %v4508
    %v4765 = vunpack.c.l.b16 %v4509
    %v4766 = vunpack.c.l.b16 %v4510
    %v4767 = vunpack.c.l.b16 %v4511
    %v4768 = vunpack.c.l.b16 %v4512
    %v4769 = vunpack.c.l.b16 %v4513
    %v4770 = vunpack.c.l.b16 %v4514
    %v4771 = vunpack.c.l.b16 %v4515
    %v4772 = vunpack.c.l.b16 %v4516
    %v4773 = vunpack.c.l.b16 %v4517
    %v4774 = vunpack.c.l.b16 %v4518
    %v4775 = vunpack.c.l.b16 %v4519
    %v4776 = vunpack.c.l.b16 %v4520
    %v4777 = vunpack.c.l.b16 %v4521
    %v4778 = vunpack.c.l.b16 %v4522
    %v4779 = vunpack.c.l.b16 %v4523
    %v4780 = vunpack.c.l.b16 %v4524
    %v4781 = vunpack.c.l.b16 %v4525
    %v4782 = vunpack.c.l.b16 %v4526
    %v4783 = vunpack.c.l.b16 %v4527
    %v4784 = vunpack.c.l.b16 %v4528
    %v4785 = vunpack.c.l.b16 %v4529
    %v4786 = vunpack.c.l.b16 %v4530
    %v4787 = vunpack.c.l.b16 %v4531
    %v4788 = vunpack.c.l.b16 %v4532
    %v4789 = vunpack.c.l.b16 %v4533
    %v4790 = vunpack.c.l.b16 %v4534
    %v4791 = vunpack.c.l.b16 %v4535
    %v4792 = vunpack.c.l.b16 %v4536
    %v4793 = vunpack.c.l.b16 %v4537
    %v4794 = vunpack.c.l.b16 %v4538
    %v4795 = vunpack.c.l.b16 %v4539
    %v4796 = vunpack.c.l.b16 %v4540
    %v4797 = vunpack.c.l.b16 %v4541
    %v4798 = vunpack.c.l.b16 %v4542
    %v4799 = vunpack.c.l.b16 %v4543
    %v4800 = vunpack.c.l.b16 %v4544
    %v4801 = vunpack.c.l.b16 %v4545
    %v4802 = vunpack.c.l.b16 %v4546
    %v4803 = vunpack.c.l.b16 %v4547
    %v4804 = vunpack.c.l.b16 %v4548
    %v4805 = vunpack.c.l.b16 %v4549
    %v4806 = vunpack.c.l.b16 %v4550
    %v4807 = vunpack.c.l.b16 %v4551
    %v4808 = vunpack.c.l.b16 %v4552
    %v4809 = vunpack.c.l.b16 %v4553
    %v4810 = vunpack.c.l.b16 %v4554
    %v4811 = vunpack.c.l.b16 %v4555
    %v4812 = vunpack.c.l.b16 %v4556
    %v4813 = vunpack.c.l.b16 %v4557
    %v4814 = vunpack.c.l.b16 %v4558
    %v4815 = vunpack.c.l.b16 %v4559
    %v4816 = vunpack.c.l.b16 %v4560
    %v4817 = vunpack.c.l.b16 %v4561
    %v4818 = vunpack.c.l.b16 %v4562
    %v4819 = vunpack.c.l.b16 %v4563
    %v4820 = vunpack.c.l.b16 %v4564
    %v4821 = vunpack.c.l.b16 %v4565
    %v4822 = vunpack.c.l.b16 %v4566
    %v4823 = vunpack.c.l.b16 %v4567
    %v4824 = vunpack.c.l.b16 %v4568
    %v4825 = vunpack.c.l.b16 %v4569
    %v4826 = vunpack.c.l.b16 %v4570
    %v4827 = vunpack.c.l.b16 %v4571
    %v4828 = vunpack.c.l.b16 %v4572
    %v4829 = vunpack.c.l.b16 %v4573
    %v4830 = vunpack.c.l.b16 %v4574
    %v4831 = vunpack.c.l.b16 %v4575
    %v4832 = vunpack.c.l.b16 %v4576
    %v4833 = vunpack.c.l.b16 %v4577
    %v4834 = vunpack.c.l.b16 %v4578
    %v4835 = vunpack.c.l.b16 %v4579
    %v4836 = vunpack.c.l.b16 %v4580
    %v4837 = vunpack.c.l.b16 %v4581
    %v4838 = vunpack.c.l.b16 %v4582
    %v4839 = vunpack.c.l.b16 %v4583
    %v4840 = vunpack.c.l.b16 %v4584
    %v4841 = vunpack.c.l.b16 %v4585
    %v4842 = vunpack.c.l.b16 %v4586
    %v4843 = vunpack.c.l.b16 %v4587
    %v4844 = vunpack.c.l.b16 %v4588
    %v4845 = vunpack.c.l.b16 %v4589
    %v4846 = vunpack.c.l.b16 %v4590
    %v4847 = vunpack.c.l.b16 %v4591
    %v4848 = vunpack.c.l.b16 %v4592
    %v4849 = vunpack.c.l.b16 %v4593
    %v4850 = vunpack.c.l.b16 %v4594
    %v4851 = vunpack.c.l.b16 %v4595
    %v4852 = vunpack.c.l.b16 %v4596
    %v4853 = vunpack.c.l.b16 %v4597
    %v4854 = vunpack.c.l.b16 %v4598
    %v4855 = vunpack.c.l.b16 %v4599
    %v4856 = vunpack.c.l.b16 %v4600
    %v4857 = vunpack.c.l.b16 %v4601
    %v4858 = vunpack.c.l.b16 %v4602
    %v4859 = vunpack.c.l.b16 %v4603
    %v4860 = vunpack.c.l.b16 %v4604
    %v4861 = vunpack.c.l.b16 %v4605
    %v4862 = vunpack.c.l.b16 %v4606
    %v4863 = vunpack.c.l.b16 %v4607
    %v4864 = vunpack.c.l.b16 %v4608
    %v4865 = vunpack.c.l.b16 %v4609
    %v4866 = vunpack.c.l.b16 %v4610
    %v4867 = vunpack.c.l.b16 %v4611
    %v4868 = vunpack.c.l.b16 %v4612
    %v4869 = vunpack.c.l.b16 %v4613
    %v4870 = vunpack.c.l.b16 %v4614
    %v4871 = vunpack.c.l.b16 %v4615
    %v4872 = vpack.c.b16 %v4745, %v4744
    %v4873 = vpack.c.b16 %v4747, %v4746
    %v4874 = vpack.c.b16 %v4749, %v4748
    %v4875 = vpack.c.b16 %v4751, %v4750
    %v4876 = vpack.c.b16 %v4753, %v4752
    %v4877 = vpack.c.b16 %v4755, %v4754
    %v4878 = vpack.c.b16 %v4757, %v4756
    %v4879 = vpack.c.b16 %v4759, %v4758
    %v4880 = vpack.c.b16 %v4761, %v4760
    %v4881 = vpack.c.b16 %v4763, %v4762
    %v4882 = vpack.c.b16 %v4765, %v4764
    %v4883 = vpack.c.b16 %v4767, %v4766
    %v4884 = vpack.c.b16 %v4769, %v4768
    %v4885 = vpack.c.b16 %v4771, %v4770
    %v4886 = vpack.c.b16 %v4773, %v4772
    %v4887 = vpack.c.b16 %v4775, %v4774
    %v4888 = vpack.c.b16 %v4777, %v4776
    %v4889 = vpack.c.b16 %v4779, %v4778
    %v4890 = vpack.c.b16 %v4781, %v4780
    %v4891 = vpack.c.b16 %v4783, %v4782
    %v4892 = vpack.c.b16 %v4785, %v4784
    %v4893 = vpack.c.b16 %v4787, %v4786
    %v4894 = vpack.c.b16 %v4789, %v4788
    %v4895 = vpack.c.b16 %v4791, %v4790
    %v4896 = vpack.c.b16 %v4793, %v4792
    %v4897 = vpack.c.b16 %v4795, %v4794
    %v4898 = vpack.c.b16 %v4797, %v4796
    %v4899 = vpack.c.b16 %v4799, %v4798
    %v4900 = vpack.c.b16 %v4801, %v4800
    %v4901 = vpack.c.b16 %v4803, %v4802
    %v4902 = vpack.c.b16 %v4805, %v4804
    %v4903 = vpack.c.b16 %v4807, %v4806
    %v4904 = vpack.c.b16 %v4809, %v4808
    %v4905 = vpack.c.b16 %v4811, %v4810
    %v4906 = vpack.c.b16 %v4813, %v4812
    %v4907 = vpack.c.b16 %v4815, %v4814
    %v4908 = vpack.c.b16 %v4817, %v4816
    %v4909 = vpack.c.b16 %v4819, %v4818
    %v4910 = vpack.c.b16 %v4821, %v4820
    %v4911 = vpack.c.b16 %v4823, %v4822
    %v4912 = vpack.c.b16 %v4825, %v4824
    %v4913 = vpack.c.b16 %v4827, %v4826
    %v4914 = vpack.c.b16 %v4829, %v4828
    %v4915 = vpack.c.b16 %v4831, %v4830
    %v4916 = vpack.c.b16 %v4833, %v4832
    %v4917 = vpack.c.b16 %v4835, %v4834
    %v4918 = vpack.c.b16 %v4837, %v4836
    %v4919 = vpack.c.b16 %v4839, %v4838
    %v4920 = vpack.c.b16 %v4841, %v4840
    %v4921 = vpack.c.b16 %v4843, %v4842
    %v4922 = vpack.c.b16 %v4845, %v4844
    %v4923 = vpack.c.b16 %v4847, %v4846
    %v4924 = vpack.c.b16 %v4849, %v4848
    %v4925 = vpack.c.b16 %v4851, %v4850
    %v4926 = vpack.c.b16 %v4853, %v4852
    %v4927 = vpack.c.b16 %v4855, %v4854
    %v4928 = vpack.c.b16 %v4857, %v4856
    %v4929 = vpack.c.b16 %v4859, %v4858
    %v4930 = vpack.c.b16 %v4861, %v4860
    %v4931 = vpack.c.b16 %v4863, %v4862
    %v4932 = vpack.c.b16 %v4865, %v4864
    %v4933 = vpack.c.b16 %v4867, %v4866
    %v4934 = vpack.c.b16 %v4869, %v4868
    %v4935 = vpack.c.b16 %v4871, %v4870
    %5000 = vmatprep.subr.bf16.mxu0 0
    %5001 = vmatpush1.bf16.msra.mxu0 %v4872
    %5002 = vmatprep.subr.bf16.mxu0 0
    %5003 = vmatpush1.bf16.msra.mxu0 %v4873
    %5004 = vmatprep.subr.bf16.mxu0 0
    %5005 = vmatpush1.bf16.msra.mxu0 %v4874
    %5006 = vmatprep.subr.bf16.mxu0 0
    %5007 = vmatpush1.bf16.msra.mxu0 %v4875
    %5008 = vmatprep.subr.bf16.mxu0 0
    %5009 = vmatpush1.bf16.msra.mxu0 %v4876
    %5010 = vmatprep.subr.bf16.mxu0 0
    %5011 = vmatpush1.bf16.msra.mxu0 %v4877
    %5012 = vmatprep.subr.bf16.mxu0 0
    %5013 = vmatpush1.bf16.msra.mxu0 %v4878
    %5014 = vmatprep.subr.bf16.mxu0 0
    %5015 = vmatpush1.bf16.msra.mxu0 %v4879
    %5016 = vmatprep.subr.bf16.mxu0 0
    %5017 = vmatpush1.bf16.msra.mxu0 %v4880
    %5018 = vmatprep.subr.bf16.mxu0 0
    %5019 = vmatpush1.bf16.msra.mxu0 %v4881
    %5020 = vmatprep.subr.bf16.mxu0 0
    %5021 = vmatpush1.bf16.msra.mxu0 %v4882
    %5022 = vmatprep.subr.bf16.mxu0 0
    %5023 = vmatpush1.bf16.msra.mxu0 %v4883
    %5024 = vmatprep.subr.bf16.mxu0 0
    %5025 = vmatpush1.bf16.msra.mxu0 %v4884
    %5026 = vmatprep.subr.bf16.mxu0 0
    %5027 = vmatpush1.bf16.msra.mxu0 %v4885
    %5028 = vmatprep.subr.bf16.mxu0 0
    %5029 = vmatpush1.bf16.msra.mxu0 %v4886
    %5030 = vmatprep.subr.bf16.mxu0 0
    %5031 = vmatpush1.bf16.msra.mxu0 %v4887
    %5032 = vmatprep.mubr.bf16.mxu0 %v3507
    %5033 = vmatmul.mubr.bf16.gmra.mrb[0].mxu0 %v3506
    %v5034 = vpop.f32.mrb[0].mxu0
    %v5035 = vadd.f32 0.0, %v5034
    %v5036 = vpop.f32.mrb[0].mxu0
    %v5037 = vpop.f32.mrb[0].mxu0
    %v5038 = vadd.f32 0.0, %v5037
    %v5039 = vpop.f32.mrb[0].mxu0
    %5040 = vmatprep.mubr.bf16.mxu0 %v3515
    %5041 = vmatmul.mubr.bf16.gmra.mrb[0].mxu0 %v3514
    %v5042 = vpop.f32.mrb[0].mxu0
    %v5043 = vadd.f32 0.0, %v5042
    %v5044 = vpop.f32.mrb[0].mxu0
    %v5045 = vpop.f32.mrb[0].mxu0
    %v5046 = vadd.f32 0.0, %v5045
    %v5047 = vpop.f32.mrb[0].mxu0
    %5048 = vmatprep.mubr.bf16.mxu0 %v3523
    %5049 = vmatmul.mubr.bf16.gmra.mrb[0].mxu0 %v3522
    %v5050 = vpop.f32.mrb[0].mxu0
    %v5051 = vadd.f32 0.0, %v5050
    %v5052 = vpop.f32.mrb[0].mxu0
    %v5053 = vpop.f32.mrb[0].mxu0
    %v5054 = vadd.f32 0.0, %v5053
    %v5055 = vpop.f32.mrb[0].mxu0
    %5056 = vmatprep.mubr.bf16.mxu0 %v3531
    %5057 = vmatmul.mubr.bf16.gmra.mrb[0].mxu0 %v3530
    %v5058 = vpop.f32.mrb[0].mxu0
    %v5059 = vadd.f32 0.0, %v5058
    %v5060 = vpop.f32.mrb[0].mxu0
    %v5061 = vpop.f32.mrb[0].mxu0
    %v5062 = vadd.f32 0.0, %v5061
    %v5063 = vpop.f32.mrb[0].mxu0
    %5064 = vmatprep.mubr.bf16.mxu0 %v3539
    %5065 = vmatmul.mubr.bf16.gmra.mrb[0].mxu0 %v3538
    %v5066 = vpop.f32.mrb[0].mxu0
    %v5067 = vadd.f32 0.0, %v5066
    %v5068 = vpop.f32.mrb[0].mxu0
    %v5069 = vpop.f32.mrb[0].mxu0
    %v5070 = vadd.f32 0.0, %v5069
    %v5071 = vpop.f32.mrb[0].mxu0
    %5072 = vmatprep.mubr.bf16.mxu0 %v3547
    %5073 = vmatmul.mubr.bf16.gmra.mrb[0].mxu0 %v3546
    %v5074 = vpop.f32.mrb[0].mxu0
    %v5075 = vadd.f32 0.0, %v5074
    %v5076 = vpop.f32.mrb[0].mxu0
    %v5077 = vpop.f32.mrb[0].mxu0
    %v5078 = vadd.f32 0.0, %v5077
    %v5079 = vpop.f32.mrb[0].mxu0
    %5080 = vmatprep.mubr.bf16.mxu0 %v3555
    %5081 = vmatmul.mubr.bf16.gmra.mrb[0].mxu0 %v3554
    %v5082 = vpop.f32.mrb[0].mxu0
    %v5083 = vadd.f32 0.0, %v5082
    %v5084 = vpop.f32.mrb[0].mxu0
    %v5085 = vpop.f32.mrb[0].mxu0
    %v5086 = vadd.f32 0.0, %v5085
    %v5087 = vpop.f32.mrb[0].mxu0
    %5088 = vmatprep.mubr.bf16.mxu0 %v3563
    %5089 = vmatmul.mubr.bf16.gmra.mrb[0].mxu0 %v3562
    %v5090 = vpop.f32.mrb[0].mxu0
    %v5091 = vadd.f32 0.0, %v5090
    %v5092 = vpop.f32.mrb[0].mxu0
    %v5093 = vpop.f32.mrb[0].mxu0
    %v5094 = vadd.f32 0.0, %v5093
    %v5095 = vpop.f32.mrb[0].mxu0
    %5096 = vdwg.mxu0
    %5097 = vmatprep.subr.bf16.mxu0 0
    %5098 = vmatpush1.bf16.msra.mxu0 %v4888
    %5099 = vmatprep.subr.bf16.mxu0 0
    %5100 = vmatpush1.bf16.msra.mxu0 %v4889
    %5101 = vmatprep.subr.bf16.mxu0 0
    %5102 = vmatpush1.bf16.msra.mxu0 %v4890
    %5103 = vmatprep.subr.bf16.mxu0 0
    %5104 = vmatpush1.bf16.msra.mxu0 %v4891
    %5105 = vmatprep.subr.bf16.mxu0 0
    %5106 = vmatpush1.bf16.msra.mxu0 %v4892
    %5107 = vmatprep.subr.bf16.mxu0 0
    %5108 = vmatpush1.bf16.msra.mxu0 %v4893
    %5109 = vmatprep.subr.bf16.mxu0 0
    %5110 = vmatpush1.bf16.msra.mxu0 %v4894
    %5111 = vmatprep.subr.bf16.mxu0 0
    %5112 = vmatpush1.bf16.msra.mxu0 %v4895
    %5113 = vmatprep.subr.bf16.mxu0 0
    %5114 = vmatpush1.bf16.msra.mxu0 %v4896
    %5115 = vmatprep.subr.bf16.mxu0 0
    %5116 = vmatpush1.bf16.msra.mxu0 %v4897
    %5117 = vmatprep.subr.bf16.mxu0 0
    %5118 = vmatpush1.bf16.msra.mxu0 %v4898
    %5119 = vmatprep.subr.bf16.mxu0 0
    %5120 = vmatpush1.bf16.msra.mxu0 %v4899
    %5121 = vmatprep.subr.bf16.mxu0 0
    %5122 = vmatpush1.bf16.msra.mxu0 %v4900
    %5123 = vmatprep.subr.bf16.mxu0 0
    %5124 = vmatpush1.bf16.msra.mxu0 %v4901
    %5125 = vmatprep.subr.bf16.mxu0 0
    %5126 = vmatpush1.bf16.msra.mxu0 %v4902
    %5127 = vmatprep.subr.bf16.mxu0 0
    %5128 = vmatpush1.bf16.msra.mxu0 %v4903
    %5129 = vmatprep.mubr.bf16.mxu0 %v3509
    %5130 = vmatmul.mubr.bf16.gmra.mrb[0].mxu0 %v3508
    %v5131 = vpop.f32.mrb[0].mxu0
    %v5132 = vadd.f32 %v5035, %v5131
    %v5133 = vpop.f32.mrb[0].mxu0
    %v5134 = vpop.f32.mrb[0].mxu0
    %v5135 = vadd.f32 %v5038, %v5134
    %v5136 = vpop.f32.mrb[0].mxu0
    %5137 = vmatprep.mubr.bf16.mxu0 %v3517
    %5138 = vmatmul.mubr.bf16.gmra.mrb[0].mxu0 %v3516
    %v5139 = vpop.f32.mrb[0].mxu0
    %v5140 = vadd.f32 %v5043, %v5139
    %v5141 = vpop.f32.mrb[0].mxu0
    %v5142 = vpop.f32.mrb[0].mxu0
    %v5143 = vadd.f32 %v5046, %v5142
    %v5144 = vpop.f32.mrb[0].mxu0
    %5145 = vmatprep.mubr.bf16.mxu0 %v3525
    %5146 = vmatmul.mubr.bf16.gmra.mrb[0].mxu0 %v3524
    %v5147 = vpop.f32.mrb[0].mxu0
    %v5148 = vadd.f32 %v5051, %v5147
    %v5149 = vpop.f32.mrb[0].mxu0
    %v5150 = vpop.f32.mrb[0].mxu0
    %v5151 = vadd.f32 %v5054, %v5150
    %v5152 = vpop.f32.mrb[0].mxu0
    %5153 = vmatprep.mubr.bf16.mxu0 %v3533
    %5154 = vmatmul.mubr.bf16.gmra.mrb[0].mxu0 %v3532
    %v5155 = vpop.f32.mrb[0].mxu0
    %v5156 = vadd.f32 %v5059, %v5155
    %v5157 = vpop.f32.mrb[0].mxu0
    %v5158 = vpop.f32.mrb[0].mxu0
    %v5159 = vadd.f32 %v5062, %v5158
    %v5160 = vpop.f32.mrb[0].mxu0
    %5161 = vmatprep.mubr.bf16.mxu0 %v3541
    %5162 = vmatmul.mubr.bf16.gmra.mrb[0].mxu0 %v3540
    %v5163 = vpop.f32.mrb[0].mxu0
    %v5164 = vadd.f32 %v5067, %v5163
    %v5165 = vpop.f32.mrb[0].mxu0
    %v5166 = vpop.f32.mrb[0].mxu0
    %v5167 = vadd.f32 %v5070, %v5166
    %v5168 = vpop.f32.mrb[0].mxu0
    %5169 = vmatprep.mubr.bf16.mxu0 %v3549
    %5170 = vmatmul.mubr.bf16.gmra.mrb[0].mxu0 %v3548
    %v5171 = vpop.f32.mrb[0].mxu0
    %v5172 = vadd.f32 %v5075, %v5171
    %v5173 = vpop.f32.mrb[0].mxu0
    %v5174 = vpop.f32.mrb[0].mxu0
    %v5175 = vadd.f32 %v5078, %v5174
    %v5176 = vpop.f32.mrb[0].mxu0
    %5177 = vmatprep.mubr.bf16.mxu0 %v3557
    %5178 = vmatmul.mubr.bf16.gmra.mrb[0].mxu0 %v3556
    %v5179 = vpop.f32.mrb[0].mxu0
    %v5180 = vadd.f32 %v5083, %v5179
    %v5181 = vpop.f32.mrb[0].mxu0
    %v5182 = vpop.f32.mrb[0].mxu0
    %v5183 = vadd.f32 %v5086, %v5182
    %v5184 = vpop.f32.mrb[0].mxu0
    %5185 = vmatprep.mubr.bf16.mxu0 %v3565
    %5186 = vmatmul.mubr.bf16.gmra.mrb[0].mxu0 %v3564
    %v5187 = vpop.f32.mrb[0].mxu0
    %v5188 = vadd.f32 %v5091, %v5187
    %v5189 = vpop.f32.mrb[0].mxu0
    %v5190 = vpop.f32.mrb[0].mxu0
    %v5191 = vadd.f32 %v5094, %v5190
    %v5192 = vpop.f32.mrb[0].mxu0
    %5193 = vdwg.mxu0
    %5194 = vmatprep.subr.bf16.mxu0 0
    %5195 = vmatpush1.bf16.msra.mxu0 %v4904
    %5196 = vmatprep.subr.bf16.mxu0 0
    %5197 = vmatpush1.bf16.msra.mxu0 %v4905
    %5198 = vmatprep.subr.bf16.mxu0 0
    %5199 = vmatpush1.bf16.msra.mxu0 %v4906
    %5200 = vmatprep.subr.bf16.mxu0 0
    %5201 = vmatpush1.bf16.msra.mxu0 %v4907
    %5202 = vmatprep.subr.bf16.mxu0 0
    %5203 = vmatpush1.bf16.msra.mxu0 %v4908
    %5204 = vmatprep.subr.bf16.mxu0 0
    %5205 = vmatpush1.bf16.msra.mxu0 %v4909
    %5206 = vmatprep.subr.bf16.mxu0 0
    %5207 = vmatpush1.bf16.msra.mxu0 %v4910
    %5208 = vmatprep.subr.bf16.mxu0 0
    %5209 = vmatpush1.bf16.msra.mxu0 %v4911
    %5210 = vmatprep.subr.bf16.mxu0 0
    %5211 = vmatpush1.bf16.msra.mxu0 %v4912
    %5212 = vmatprep.subr.bf16.mxu0 0
    %5213 = vmatpush1.bf16.msra.mxu0 %v4913
    %5214 = vmatprep.subr.bf16.mxu0 0
    %5215 = vmatpush1.bf16.msra.mxu0 %v4914
    %5216 = vmatprep.subr.bf16.mxu0 0
    %5217 = vmatpush1.bf16.msra.mxu0 %v4915
    %5218 = vmatprep.subr.bf16.mxu0 0
    %5219 = vmatpush1.bf16.msra.mxu0 %v4916
    %5220 = vmatprep.subr.bf16.mxu0 0
    %5221 = vmatpush1.bf16.msra.mxu0 %v4917
    %5222 = vmatprep.subr.bf16.mxu0 0
    %5223 = vmatpush1.bf16.msra.mxu0 %v4918
    %5224 = vmatprep.subr.bf16.mxu0 0
    %5225 = vmatpush1.bf16.msra.mxu0 %v4919
    %5226 = vmatprep.mubr.bf16.mxu0 %v3511
    %5227 = vmatmul.mubr.bf16.gmra.mrb[0].mxu0 %v3510
    %v5228 = vpop.f32.mrb[0].mxu0
    %v5229 = vadd.f32 %v5132, %v5228
    %v5230 = vpop.f32.mrb[0].mxu0
    %v5231 = vpop.f32.mrb[0].mxu0
    %v5232 = vadd.f32 %v5135, %v5231
    %v5233 = vpop.f32.mrb[0].mxu0
    %5234 = vmatprep.mubr.bf16.mxu0 %v3519
    %5235 = vmatmul.mubr.bf16.gmra.mrb[0].mxu0 %v3518
    %v5236 = vpop.f32.mrb[0].mxu0
    %v5237 = vadd.f32 %v5140, %v5236
    %v5238 = vpop.f32.mrb[0].mxu0
    %v5239 = vpop.f32.mrb[0].mxu0
    %v5240 = vadd.f32 %v5143, %v5239
    %v5241 = vpop.f32.mrb[0].mxu0
    %5242 = vmatprep.mubr.bf16.mxu0 %v3527
    %5243 = vmatmul.mubr.bf16.gmra.mrb[0].mxu0 %v3526
    %v5244 = vpop.f32.mrb[0].mxu0
    %v5245 = vadd.f32 %v5148, %v5244
    %v5246 = vpop.f32.mrb[0].mxu0
    %v5247 = vpop.f32.mrb[0].mxu0
    %v5248 = vadd.f32 %v5151, %v5247
    %v5249 = vpop.f32.mrb[0].mxu0
    %5250 = vmatprep.mubr.bf16.mxu0 %v3535
    %5251 = vmatmul.mubr.bf16.gmra.mrb[0].mxu0 %v3534
    %v5252 = vpop.f32.mrb[0].mxu0
    %v5253 = vadd.f32 %v5156, %v5252
    %v5254 = vpop.f32.mrb[0].mxu0
    %v5255 = vpop.f32.mrb[0].mxu0
    %v5256 = vadd.f32 %v5159, %v5255
    %v5257 = vpop.f32.mrb[0].mxu0
    %5258 = vmatprep.mubr.bf16.mxu0 %v3543
    %5259 = vmatmul.mubr.bf16.gmra.mrb[0].mxu0 %v3542
    %v5260 = vpop.f32.mrb[0].mxu0
    %v5261 = vadd.f32 %v5164, %v5260
    %v5262 = vpop.f32.mrb[0].mxu0
    %v5263 = vpop.f32.mrb[0].mxu0
    %v5264 = vadd.f32 %v5167, %v5263
    %v5265 = vpop.f32.mrb[0].mxu0
    %5266 = vmatprep.mubr.bf16.mxu0 %v3551
    %5267 = vmatmul.mubr.bf16.gmra.mrb[0].mxu0 %v3550
    %v5268 = vpop.f32.mrb[0].mxu0
    %v5269 = vadd.f32 %v5172, %v5268
    %v5270 = vpop.f32.mrb[0].mxu0
    %v5271 = vpop.f32.mrb[0].mxu0
    %v5272 = vadd.f32 %v5175, %v5271
    %v5273 = vpop.f32.mrb[0].mxu0
    %5274 = vmatprep.mubr.bf16.mxu0 %v3559
    %5275 = vmatmul.mubr.bf16.gmra.mrb[0].mxu0 %v3558
    %v5276 = vpop.f32.mrb[0].mxu0
    %v5277 = vadd.f32 %v5180, %v5276
    %v5278 = vpop.f32.mrb[0].mxu0
    %v5279 = vpop.f32.mrb[0].mxu0
    %v5280 = vadd.f32 %v5183, %v5279
    %v5281 = vpop.f32.mrb[0].mxu0
    %5282 = vmatprep.mubr.bf16.mxu0 %v3567
    %5283 = vmatmul.mubr.bf16.gmra.mrb[0].mxu0 %v3566
    %v5284 = vpop.f32.mrb[0].mxu0
    %v5285 = vadd.f32 %v5188, %v5284
    %v5286 = vpop.f32.mrb[0].mxu0
    %v5287 = vpop.f32.mrb[0].mxu0
    %v5288 = vadd.f32 %v5191, %v5287
    %v5289 = vpop.f32.mrb[0].mxu0
    %5290 = vdwg.mxu0
    %5291 = vmatprep.subr.bf16.mxu0 0
    %5292 = vmatpush1.bf16.msra.mxu0 %v4920
    %5293 = vmatprep.subr.bf16.mxu0 0
    %5294 = vmatpush1.bf16.msra.mxu0 %v4921
    %5295 = vmatprep.subr.bf16.mxu0 0
    %5296 = vmatpush1.bf16.msra.mxu0 %v4922
    %5297 = vmatprep.subr.bf16.mxu0 0
    %5298 = vmatpush1.bf16.msra.mxu0 %v4923
    %5299 = vmatprep.subr.bf16.mxu0 0
    %5300 = vmatpush1.bf16.msra.mxu0 %v4924
    %5301 = vmatprep.subr.bf16.mxu0 0
    %5302 = vmatpush1.bf16.msra.mxu0 %v4925
    %5303 = vmatprep.subr.bf16.mxu0 0
    %5304 = vmatpush1.bf16.msra.mxu0 %v4926
    %5305 = vmatprep.subr.bf16.mxu0 0
    %5306 = vmatpush1.bf16.msra.mxu0 %v4927
    %5307 = vmatprep.subr.bf16.mxu0 0
    %5308 = vmatpush1.bf16.msra.mxu0 %v4928
    %5309 = vmatprep.subr.bf16.mxu0 0
    %5310 = vmatpush1.bf16.msra.mxu0 %v4929
    %5311 = vmatprep.subr.bf16.mxu0 0
    %5312 = vmatpush1.bf16.msra.mxu0 %v4930
    %5313 = vmatprep.subr.bf16.mxu0 0
    %5314 = vmatpush1.bf16.msra.mxu0 %v4931
    %5315 = vmatprep.subr.bf16.mxu0 0
    %5316 = vmatpush1.bf16.msra.mxu0 %v4932
    %5317 = vmatprep.subr.bf16.mxu0 0
    %5318 = vmatpush1.bf16.msra.mxu0 %v4933
    %5319 = vmatprep.subr.bf16.mxu0 0
    %5320 = vmatpush1.bf16.msra.mxu0 %v4934
    %5321 = vmatprep.subr.bf16.mxu0 0
    %5322 = vmatpush1.bf16.msra.mxu0 %v4935
    %5323 = vmatprep.mubr.bf16.mxu0 %v3513
    %5324 = vmatmul.mubr.bf16.gmra.mrb[0].mxu0 %v3512
    %v5325 = vpop.f32.mrb[0].mxu0
    %v5326 = vadd.f32 %v5229, %v5325
    %v5327 = vpop.f32.mrb[0].mxu0
    %v5328 = vpop.f32.mrb[0].mxu0
    %v5329 = vadd.f32 %v5232, %v5328
    %v5330 = vpop.f32.mrb[0].mxu0
    %5331 = vmatprep.mubr.bf16.mxu0 %v3521
    %5332 = vmatmul.mubr.bf16.gmra.mrb[0].mxu0 %v3520
    %v5333 = vpop.f32.mrb[0].mxu0
    %v5334 = vadd.f32 %v5237, %v5333
    %v5335 = vpop.f32.mrb[0].mxu0
    %v5336 = vpop.f32.mrb[0].mxu0
    %v5337 = vadd.f32 %v5240, %v5336
    %v5338 = vpop.f32.mrb[0].mxu0
    %5339 = vmatprep.mubr.bf16.mxu0 %v3529
    %5340 = vmatmul.mubr.bf16.gmra.mrb[0].mxu0 %v3528
    %v5341 = vpop.f32.mrb[0].mxu0
    %v5342 = vadd.f32 %v5245, %v5341
    %v5343 = vpop.f32.mrb[0].mxu0
    %v5344 = vpop.f32.mrb[0].mxu0
    %v5345 = vadd.f32 %v5248, %v5344
    %v5346 = vpop.f32.mrb[0].mxu0
    %5347 = vmatprep.mubr.bf16.mxu0 %v3537
    %5348 = vmatmul.mubr.bf16.gmra.mrb[0].mxu0 %v3536
    %v5349 = vpop.f32.mrb[0].mxu0
    %v5350 = vadd.f32 %v5253, %v5349
    %v5351 = vpop.f32.mrb[0].mxu0
    %v5352 = vpop.f32.mrb[0].mxu0
    %v5353 = vadd.f32 %v5256, %v5352
    %v5354 = vpop.f32.mrb[0].mxu0
    %5355 = vmatprep.mubr.bf16.mxu0 %v3545
    %5356 = vmatmul.mubr.bf16.gmra.mrb[0].mxu0 %v3544
    %v5357 = vpop.f32.mrb[0].mxu0
    %v5358 = vadd.f32 %v5261, %v5357
    %v5359 = vpop.f32.mrb[0].mxu0
    %v5360 = vpop.f32.mrb[0].mxu0
    %v5361 = vadd.f32 %v5264, %v5360
    %v5362 = vpop.f32.mrb[0].mxu0
    %5363 = vmatprep.mubr.bf16.mxu0 %v3553
    %5364 = vmatmul.mubr.bf16.gmra.mrb[0].mxu0 %v3552
    %v5365 = vpop.f32.mrb[0].mxu0
    %v5366 = vadd.f32 %v5269, %v5365
    %v5367 = vpop.f32.mrb[0].mxu0
    %v5368 = vpop.f32.mrb[0].mxu0
    %v5369 = vadd.f32 %v5272, %v5368
    %v5370 = vpop.f32.mrb[0].mxu0
    %5371 = vmatprep.mubr.bf16.mxu0 %v3561
    %5372 = vmatmul.mubr.bf16.gmra.mrb[0].mxu0 %v3560
    %v5373 = vpop.f32.mrb[0].mxu0
    %v5374 = vadd.f32 %v5277, %v5373
    %v5375 = vpop.f32.mrb[0].mxu0
    %v5376 = vpop.f32.mrb[0].mxu0
    %v5377 = vadd.f32 %v5280, %v5376
    %v5378 = vpop.f32.mrb[0].mxu0
    %5379 = vmatprep.mubr.bf16.mxu0 %v3569
    %5380 = vmatmul.mubr.bf16.gmra.mrb[0].mxu0 %v3568
    %v5381 = vpop.f32.mrb[0].mxu0
    %v5382 = vadd.f32 %v5285, %v5381
    %v5383 = vpop.f32.mrb[0].mxu0
    %v5384 = vpop.f32.mrb[0].mxu0
    %v5385 = vadd.f32 %v5288, %v5384
    %v5386 = vpop.f32.mrb[0].mxu0
    %5387 = vdwg.mxu0
    %v5388 = vadd.f32 %v4471, %v5326
    %v5389 = vadd.f32 %v4472, %v5329
    %v5390 = vadd.f32 %v4473, %v5334
    %v5391 = vadd.f32 %v4474, %v5337
    %v5392 = vadd.f32 %v4475, %v5342
    %v5393 = vadd.f32 %v4476, %v5345
    %v5394 = vadd.f32 %v4477, %v5350
    %v5395 = vadd.f32 %v4478, %v5353
    %v5396 = vadd.f32 %v4479, %v5358
    %v5397 = vadd.f32 %v4480, %v5361
    %v5398 = vadd.f32 %v4481, %v5366
    %v5399 = vadd.f32 %v4482, %v5369
    %v5400 = vadd.f32 %v4483, %v5374
    %v5401 = vadd.f32 %v4484, %v5377
    %v5402 = vadd.f32 %v4485, %v5382
    %v5403 = vadd.f32 %v4486, %v5385
    %s5404 = scalar_lea.vmem [#allocation2], 4608
    %v5405 = vld [vmem:[%s5404] sm:$0xf]
    %v5406 = vld [vmem:[%s5404 + $0x4] sm:$0xf]
    %v5407 = vld [vmem:[%s5404 + $0x8] sm:$0xf]
    %v5408 = vld [vmem:[%s5404 + $0xc] sm:$0xf]
    %v5409 = vld [vmem:[%s5404 + $0x10] sm:$0xf]
    %v5410 = vld [vmem:[%s5404 + $0x14] sm:$0xf]
    %v5411 = vld [vmem:[%s5404 + $0x18] sm:$0xf]
    %v5412 = vld [vmem:[%s5404 + $0x1c] sm:$0xf]
    %v5413 = vld [vmem:[%s5404 + $0x20] sm:$0xf]
    %v5414 = vld [vmem:[%s5404 + $0x24] sm:$0xf]
    %v5415 = vld [vmem:[%s5404 + $0x28] sm:$0xf]
    %v5416 = vld [vmem:[%s5404 + $0x2c] sm:$0xf]
    %v5417 = vld [vmem:[%s5404 + $0x30] sm:$0xf]
    %v5418 = vld [vmem:[%s5404 + $0x34] sm:$0xf]
    %v5419 = vld [vmem:[%s5404 + $0x38] sm:$0xf]
    %v5420 = vld [vmem:[%s5404 + $0x3c] sm:$0xf]
    %v5421 = vld [vmem:[%s5404 + $0x40] sm:$0xf]
    %v5422 = vld [vmem:[%s5404 + $0x44] sm:$0xf]
    %v5423 = vld [vmem:[%s5404 + $0x48] sm:$0xf]
    %v5424 = vld [vmem:[%s5404 + $0x4c] sm:$0xf]
    %v5425 = vld [vmem:[%s5404 + $0x50] sm:$0xf]
    %v5426 = vld [vmem:[%s5404 + $0x54] sm:$0xf]
    %v5427 = vld [vmem:[%s5404 + $0x58] sm:$0xf]
    %v5428 = vld [vmem:[%s5404 + $0x5c] sm:$0xf]
    %v5429 = vld [vmem:[%s5404 + $0x60] sm:$0xf]
    %v5430 = vld [vmem:[%s5404 + $0x64] sm:$0xf]
    %v5431 = vld [vmem:[%s5404 + $0x68] sm:$0xf]
    %v5432 = vld [vmem:[%s5404 + $0x6c] sm:$0xf]
    %v5433 = vld [vmem:[%s5404 + $0x70] sm:$0xf]
    %v5434 = vld [vmem:[%s5404 + $0x74] sm:$0xf]
    %v5435 = vld [vmem:[%s5404 + $0x78] sm:$0xf]
    %v5436 = vld [vmem:[%s5404 + $0x7c] sm:$0xf]
    %v5437 = vld [vmem:[%s5404 + $0x80] sm:$0xf]
    %v5438 = vld [vmem:[%s5404 + $0x84] sm:$0xf]
    %v5439 = vld [vmem:[%s5404 + $0x88] sm:$0xf]
    %v5440 = vld [vmem:[%s5404 + $0x8c] sm:$0xf]
    %v5441 = vld [vmem:[%s5404 + $0x90] sm:$0xf]
    %v5442 = vld [vmem:[%s5404 + $0x94] sm:$0xf]
    %v5443 = vld [vmem:[%s5404 + $0x98] sm:$0xf]
    %v5444 = vld [vmem:[%s5404 + $0x9c] sm:$0xf]
    %v5445 = vld [vmem:[%s5404 + $0xa0] sm:$0xf]
    %v5446 = vld [vmem:[%s5404 + $0xa4] sm:$0xf]
    %v5447 = vld [vmem:[%s5404 + $0xa8] sm:$0xf]
    %v5448 = vld [vmem:[%s5404 + $0xac] sm:$0xf]
    %v5449 = vld [vmem:[%s5404 + $0xb0] sm:$0xf]
    %v5450 = vld [vmem:[%s5404 + $0xb4] sm:$0xf]
    %v5451 = vld [vmem:[%s5404 + $0xb8] sm:$0xf]
    %v5452 = vld [vmem:[%s5404 + $0xbc] sm:$0xf]
    %v5453 = vld [vmem:[%s5404 + $0xc0] sm:$0xf]
    %v5454 = vld [vmem:[%s5404 + $0xc4] sm:$0xf]
    %v5455 = vld [vmem:[%s5404 + $0xc8] sm:$0xf]
    %v5456 = vld [vmem:[%s5404 + $0xcc] sm:$0xf]
    %v5457 = vld [vmem:[%s5404 + $0xd0] sm:$0xf]
    %v5458 = vld [vmem:[%s5404 + $0xd4] sm:$0xf]
    %v5459 = vld [vmem:[%s5404 + $0xd8] sm:$0xf]
    %v5460 = vld [vmem:[%s5404 + $0xdc] sm:$0xf]
    %v5461 = vld [vmem:[%s5404 + $0xe0] sm:$0xf]
    %v5462 = vld [vmem:[%s5404 + $0xe4] sm:$0xf]
    %v5463 = vld [vmem:[%s5404 + $0xe8] sm:$0xf]
    %v5464 = vld [vmem:[%s5404 + $0xec] sm:$0xf]
    %v5465 = vld [vmem:[%s5404 + $0xf0] sm:$0xf]
    %v5466 = vld [vmem:[%s5404 + $0xf4] sm:$0xf]
    %v5467 = vld [vmem:[%s5404 + $0xf8] sm:$0xf]
    %v5468 = vld [vmem:[%s5404 + $0xfc] sm:$0xf]
    %v5469 = vld [vmem:[%s5404 + $0x100] sm:$0xf]
    %v5470 = vld [vmem:[%s5404 + $0x104] sm:$0xf]
    %v5471 = vld [vmem:[%s5404 + $0x108] sm:$0xf]
    %v5472 = vld [vmem:[%s5404 + $0x10c] sm:$0xf]
    %v5473 = vld [vmem:[%s5404 + $0x110] sm:$0xf]
    %v5474 = vld [vmem:[%s5404 + $0x114] sm:$0xf]
    %v5475 = vld [vmem:[%s5404 + $0x118] sm:$0xf]
    %v5476 = vld [vmem:[%s5404 + $0x11c] sm:$0xf]
    %v5477 = vld [vmem:[%s5404 + $0x120] sm:$0xf]
    %v5478 = vld [vmem:[%s5404 + $0x124] sm:$0xf]
    %v5479 = vld [vmem:[%s5404 + $0x128] sm:$0xf]
    %v5480 = vld [vmem:[%s5404 + $0x12c] sm:$0xf]
    %v5481 = vld [vmem:[%s5404 + $0x130] sm:$0xf]
    %v5482 = vld [vmem:[%s5404 + $0x134] sm:$0xf]
    %v5483 = vld [vmem:[%s5404 + $0x138] sm:$0xf]
    %v5484 = vld [vmem:[%s5404 + $0x13c] sm:$0xf]
    %v5485 = vld [vmem:[%s5404 + $0x140] sm:$0xf]
    %v5486 = vld [vmem:[%s5404 + $0x144] sm:$0xf]
    %v5487 = vld [vmem:[%s5404 + $0x148] sm:$0xf]
    %v5488 = vld [vmem:[%s5404 + $0x14c] sm:$0xf]
    %v5489 = vld [vmem:[%s5404 + $0x150] sm:$0xf]
    %v5490 = vld [vmem:[%s5404 + $0x154] sm:$0xf]
    %v5491 = vld [vmem:[%s5404 + $0x158] sm:$0xf]
    %v5492 = vld [vmem:[%s5404 + $0x15c] sm:$0xf]
    %v5493 = vld [vmem:[%s5404 + $0x160] sm:$0xf]
    %v5494 = vld [vmem:[%s5404 + $0x164] sm:$0xf]
    %v5495 = vld [vmem:[%s5404 + $0x168] sm:$0xf]
    %v5496 = vld [vmem:[%s5404 + $0x16c] sm:$0xf]
    %v5497 = vld [vmem:[%s5404 + $0x170] sm:$0xf]
    %v5498 = vld [vmem:[%s5404 + $0x174] sm:$0xf]
    %v5499 = vld [vmem:[%s5404 + $0x178] sm:$0xf]
    %v5500 = vld [vmem:[%s5404 + $0x17c] sm:$0xf]
    %v5501 = vld [vmem:[%s5404 + $0x180] sm:$0xf]
    %v5502 = vld [vmem:[%s5404 + $0x184] sm:$0xf]
    %v5503 = vld [vmem:[%s5404 + $0x188] sm:$0xf]
    %v5504 = vld [vmem:[%s5404 + $0x18c] sm:$0xf]
    %v5505 = vld [vmem:[%s5404 + $0x190] sm:$0xf]
    %v5506 = vld [vmem:[%s5404 + $0x194] sm:$0xf]
    %v5507 = vld [vmem:[%s5404 + $0x198] sm:$0xf]
    %v5508 = vld [vmem:[%s5404 + $0x19c] sm:$0xf]
    %v5509 = vld [vmem:[%s5404 + $0x1a0] sm:$0xf]
    %v5510 = vld [vmem:[%s5404 + $0x1a4] sm:$0xf]
    %v5511 = vld [vmem:[%s5404 + $0x1a8] sm:$0xf]
    %v5512 = vld [vmem:[%s5404 + $0x1ac] sm:$0xf]
    %v5513 = vld [vmem:[%s5404 + $0x1b0] sm:$0xf]
    %v5514 = vld [vmem:[%s5404 + $0x1b4] sm:$0xf]
    %v5515 = vld [vmem:[%s5404 + $0x1b8] sm:$0xf]
    %v5516 = vld [vmem:[%s5404 + $0x1bc] sm:$0xf]
    %v5517 = vld [vmem:[%s5404 + $0x1c0] sm:$0xf]
    %v5518 = vld [vmem:[%s5404 + $0x1c4] sm:$0xf]
    %v5519 = vld [vmem:[%s5404 + $0x1c8] sm:$0xf]
    %v5520 = vld [vmem:[%s5404 + $0x1cc] sm:$0xf]
    %v5521 = vld [vmem:[%s5404 + $0x1d0] sm:$0xf]
    %v5522 = vld [vmem:[%s5404 + $0x1d4] sm:$0xf]
    %v5523 = vld [vmem:[%s5404 + $0x1d8] sm:$0xf]
    %v5524 = vld [vmem:[%s5404 + $0x1dc] sm:$0xf]
    %v5525 = vld [vmem:[%s5404 + $0x1e0] sm:$0xf]
    %v5526 = vld [vmem:[%s5404 + $0x1e4] sm:$0xf]
    %v5527 = vld [vmem:[%s5404 + $0x1e8] sm:$0xf]
    %v5528 = vld [vmem:[%s5404 + $0x1ec] sm:$0xf]
    %v5529 = vld [vmem:[%s5404 + $0x1f0] sm:$0xf]
    %v5530 = vld [vmem:[%s5404 + $0x1f4] sm:$0xf]
    %v5531 = vld [vmem:[%s5404 + $0x1f8] sm:$0xf]
    %v5532 = vld [vmem:[%s5404 + $0x1fc] sm:$0xf]
    %v5661 = vunpack.c.l.b16 %v5405
    %v5662 = vunpack.c.l.b16 %v5406
    %v5663 = vunpack.c.l.b16 %v5407
    %v5664 = vunpack.c.l.b16 %v5408
    %v5665 = vunpack.c.l.b16 %v5409
    %v5666 = vunpack.c.l.b16 %v5410
    %v5667 = vunpack.c.l.b16 %v5411
    %v5668 = vunpack.c.l.b16 %v5412
    %v5669 = vunpack.c.l.b16 %v5413
    %v5670 = vunpack.c.l.b16 %v5414
    %v5671 = vunpack.c.l.b16 %v5415
    %v5672 = vunpack.c.l.b16 %v5416
    %v5673 = vunpack.c.l.b16 %v5417
    %v5674 = vunpack.c.l.b16 %v5418
    %v5675 = vunpack.c.l.b16 %v5419
    %v5676 = vunpack.c.l.b16 %v5420
    %v5677 = vunpack.c.l.b16 %v5421
    %v5678 = vunpack.c.l.b16 %v5422
    %v5679 = vunpack.c.l.b16 %v5423
    %v5680 = vunpack.c.l.b16 %v5424
    %v5681 = vunpack.c.l.b16 %v5425
    %v5682 = vunpack.c.l.b16 %v5426
    %v5683 = vunpack.c.l.b16 %v5427
    %v5684 = vunpack.c.l.b16 %v5428
    %v5685 = vunpack.c.l.b16 %v5429
    %v5686 = vunpack.c.l.b16 %v5430
    %v5687 = vunpack.c.l.b16 %v5431
    %v5688 = vunpack.c.l.b16 %v5432
    %v5689 = vunpack.c.l.b16 %v5433
    %v5690 = vunpack.c.l.b16 %v5434
    %v5691 = vunpack.c.l.b16 %v5435
    %v5692 = vunpack.c.l.b16 %v5436
    %v5693 = vunpack.c.l.b16 %v5437
    %v5694 = vunpack.c.l.b16 %v5438
    %v5695 = vunpack.c.l.b16 %v5439
    %v5696 = vunpack.c.l.b16 %v5440
    %v5697 = vunpack.c.l.b16 %v5441
    %v5698 = vunpack.c.l.b16 %v5442
    %v5699 = vunpack.c.l.b16 %v5443
    %v5700 = vunpack.c.l.b16 %v5444
    %v5701 = vunpack.c.l.b16 %v5445
    %v5702 = vunpack.c.l.b16 %v5446
    %v5703 = vunpack.c.l.b16 %v5447
    %v5704 = vunpack.c.l.b16 %v5448
    %v5705 = vunpack.c.l.b16 %v5449
    %v5706 = vunpack.c.l.b16 %v5450
    %v5707 = vunpack.c.l.b16 %v5451
    %v5708 = vunpack.c.l.b16 %v5452
    %v5709 = vunpack.c.l.b16 %v5453
    %v5710 = vunpack.c.l.b16 %v5454
    %v5711 = vunpack.c.l.b16 %v5455
    %v5712 = vunpack.c.l.b16 %v5456
    %v5713 = vunpack.c.l.b16 %v5457
    %v5714 = vunpack.c.l.b16 %v5458
    %v5715 = vunpack.c.l.b16 %v5459
    %v5716 = vunpack.c.l.b16 %v5460
    %v5717 = vunpack.c.l.b16 %v5461
    %v5718 = vunpack.c.l.b16 %v5462
    %v5719 = vunpack.c.l.b16 %v5463
    %v5720 = vunpack.c.l.b16 %v5464
    %v5721 = vunpack.c.l.b16 %v5465
    %v5722 = vunpack.c.l.b16 %v5466
    %v5723 = vunpack.c.l.b16 %v5467
    %v5724 = vunpack.c.l.b16 %v5468
    %v5725 = vunpack.c.l.b16 %v5469
    %v5726 = vunpack.c.l.b16 %v5470
    %v5727 = vunpack.c.l.b16 %v5471
    %v5728 = vunpack.c.l.b16 %v5472
    %v5729 = vunpack.c.l.b16 %v5473
    %v5730 = vunpack.c.l.b16 %v5474
    %v5731 = vunpack.c.l.b16 %v5475
    %v5732 = vunpack.c.l.b16 %v5476
    %v5733 = vunpack.c.l.b16 %v5477
    %v5734 = vunpack.c.l.b16 %v5478
    %v5735 = vunpack.c.l.b16 %v5479
    %v5736 = vunpack.c.l.b16 %v5480
    %v5737 = vunpack.c.l.b16 %v5481
    %v5738 = vunpack.c.l.b16 %v5482
    %v5739 = vunpack.c.l.b16 %v5483
    %v5740 = vunpack.c.l.b16 %v5484
    %v5741 = vunpack.c.l.b16 %v5485
    %v5742 = vunpack.c.l.b16 %v5486
    %v5743 = vunpack.c.l.b16 %v5487
    %v5744 = vunpack.c.l.b16 %v5488
    %v5745 = vunpack.c.l.b16 %v5489
    %v5746 = vunpack.c.l.b16 %v5490
    %v5747 = vunpack.c.l.b16 %v5491
    %v5748 = vunpack.c.l.b16 %v5492
    %v5749 = vunpack.c.l.b16 %v5493
    %v5750 = vunpack.c.l.b16 %v5494
    %v5751 = vunpack.c.l.b16 %v5495
    %v5752 = vunpack.c.l.b16 %v5496
    %v5753 = vunpack.c.l.b16 %v5497
    %v5754 = vunpack.c.l.b16 %v5498
    %v5755 = vunpack.c.l.b16 %v5499
    %v5756 = vunpack.c.l.b16 %v5500
    %v5757 = vunpack.c.l.b16 %v5501
    %v5758 = vunpack.c.l.b16 %v5502
    %v5759 = vunpack.c.l.b16 %v5503
    %v5760 = vunpack.c.l.b16 %v5504
    %v5761 = vunpack.c.l.b16 %v5505
    %v5762 = vunpack.c.l.b16 %v5506
    %v5763 = vunpack.c.l.b16 %v5507
    %v5764 = vunpack.c.l.b16 %v5508
    %v5765 = vunpack.c.l.b16 %v5509
    %v5766 = vunpack.c.l.b16 %v5510
    %v5767 = vunpack.c.l.b16 %v5511
    %v5768 = vunpack.c.l.b16 %v5512
    %v5769 = vunpack.c.l.b16 %v5513
    %v5770 = vunpack.c.l.b16 %v5514
    %v5771 = vunpack.c.l.b16 %v5515
    %v5772 = vunpack.c.l.b16 %v5516
    %v5773 = vunpack.c.l.b16 %v5517
    %v5774 = vunpack.c.l.b16 %v5518
    %v5775 = vunpack.c.l.b16 %v5519
    %v5776 = vunpack.c.l.b16 %v5520
    %v5777 = vunpack.c.l.b16 %v5521
    %v5778 = vunpack.c.l.b16 %v5522
    %v5779 = vunpack.c.l.b16 %v5523
    %v5780 = vunpack.c.l.b16 %v5524
    %v5781 = vunpack.c.l.b16 %v5525
    %v5782 = vunpack.c.l.b16 %v5526
    %v5783 = vunpack.c.l.b16 %v5527
    %v5784 = vunpack.c.l.b16 %v5528
    %v5785 = vunpack.c.l.b16 %v5529
    %v5786 = vunpack.c.l.b16 %v5530
    %v5787 = vunpack.c.l.b16 %v5531
    %v5788 = vunpack.c.l.b16 %v5532
    %v5789 = vpack.c.b16 %v5662, %v5661
    %v5790 = vpack.c.b16 %v5664, %v5663
    %v5791 = vpack.c.b16 %v5666, %v5665
    %v5792 = vpack.c.b16 %v5668, %v5667
    %v5793 = vpack.c.b16 %v5670, %v5669
    %v5794 = vpack.c.b16 %v5672, %v5671
    %v5795 = vpack.c.b16 %v5674, %v5673
    %v5796 = vpack.c.b16 %v5676, %v5675
    %v5797 = vpack.c.b16 %v5678, %v5677
    %v5798 = vpack.c.b16 %v5680, %v5679
    %v5799 = vpack.c.b16 %v5682, %v5681
    %v5800 = vpack.c.b16 %v5684, %v5683
    %v5801 = vpack.c.b16 %v5686, %v5685
    %v5802 = vpack.c.b16 %v5688, %v5687
    %v5803 = vpack.c.b16 %v5690, %v5689
    %v5804 = vpack.c.b16 %v5692, %v5691
    %v5805 = vpack.c.b16 %v5694, %v5693
    %v5806 = vpack.c.b16 %v5696, %v5695
    %v5807 = vpack.c.b16 %v5698, %v5697
    %v5808 = vpack.c.b16 %v5700, %v5699
    %v5809 = vpack.c.b16 %v5702, %v5701
    %v5810 = vpack.c.b16 %v5704, %v5703
    %v5811 = vpack.c.b16 %v5706, %v5705
    %v5812 = vpack.c.b16 %v5708, %v5707
    %v5813 = vpack.c.b16 %v5710, %v5709
    %v5814 = vpack.c.b16 %v5712, %v5711
    %v5815 = vpack.c.b16 %v5714, %v5713
    %v5816 = vpack.c.b16 %v5716, %v5715
    %v5817 = vpack.c.b16 %v5718, %v5717
    %v5818 = vpack.c.b16 %v5720, %v5719
    %v5819 = vpack.c.b16 %v5722, %v5721
    %v5820 = vpack.c.b16 %v5724, %v5723
    %v5821 = vpack.c.b16 %v5726, %v5725
    %v5822 = vpack.c.b16 %v5728, %v5727
    %v5823 = vpack.c.b16 %v5730, %v5729
    %v5824 = vpack.c.b16 %v5732, %v5731
    %v5825 = vpack.c.b16 %v5734, %v5733
    %v5826 = vpack.c.b16 %v5736, %v5735
    %v5827 = vpack.c.b16 %v5738, %v5737
    %v5828 = vpack.c.b16 %v5740, %v5739
    %v5829 = vpack.c.b16 %v5742, %v5741
    %v5830 = vpack.c.b16 %v5744, %v5743
    %v5831 = vpack.c.b16 %v5746, %v5745
    %v5832 = vpack.c.b16 %v5748, %v5747
    %v5833 = vpack.c.b16 %v5750, %v5749
    %v5834 = vpack.c.b16 %v5752, %v5751
    %v5835 = vpack.c.b16 %v5754, %v5753
    %v5836 = vpack.c.b16 %v5756, %v5755
    %v5837 = vpack.c.b16 %v5758, %v5757
    %v5838 = vpack.c.b16 %v5760, %v5759
    %v5839 = vpack.c.b16 %v5762, %v5761
    %v5840 = vpack.c.b16 %v5764, %v5763
    %v5841 = vpack.c.b16 %v5766, %v5765
    %v5842 = vpack.c.b16 %v5768, %v5767
    %v5843 = vpack.c.b16 %v5770, %v5769
    %v5844 = vpack.c.b16 %v5772, %v5771
    %v5845 = vpack.c.b16 %v5774, %v5773
    %v5846 = vpack.c.b16 %v5776, %v5775
    %v5847 = vpack.c.b16 %v5778, %v5777
    %v5848 = vpack.c.b16 %v5780, %v5779
    %v5849 = vpack.c.b16 %v5782, %v5781
    %v5850 = vpack.c.b16 %v5784, %v5783
    %v5851 = vpack.c.b16 %v5786, %v5785
    %v5852 = vpack.c.b16 %v5788, %v5787
    %5917 = vmatprep.subr.bf16.mxu0 0
    %5918 = vmatpush1.bf16.msra.mxu0 %v5789
    %5919 = vmatprep.subr.bf16.mxu0 0
    %5920 = vmatpush1.bf16.msra.mxu0 %v5790
    %5921 = vmatprep.subr.bf16.mxu0 0
    %5922 = vmatpush1.bf16.msra.mxu0 %v5791
    %5923 = vmatprep.subr.bf16.mxu0 0
    %5924 = vmatpush1.bf16.msra.mxu0 %v5792
    %5925 = vmatprep.subr.bf16.mxu0 0
    %5926 = vmatpush1.bf16.msra.mxu0 %v5793
    %5927 = vmatprep.subr.bf16.mxu0 0
    %5928 = vmatpush1.bf16.msra.mxu0 %v5794
    %5929 = vmatprep.subr.bf16.mxu0 0
    %5930 = vmatpush1.bf16.msra.mxu0 %v5795
    %5931 = vmatprep.subr.bf16.mxu0 0
    %5932 = vmatpush1.bf16.msra.mxu0 %v5796
    %5933 = vmatprep.subr.bf16.mxu0 0
    %5934 = vmatpush1.bf16.msra.mxu0 %v5797
    %5935 = vmatprep.subr.bf16.mxu0 0
    %5936 = vmatpush1.bf16.msra.mxu0 %v5798
    %5937 = vmatprep.subr.bf16.mxu0 0
    %5938 = vmatpush1.bf16.msra.mxu0 %v5799
    %5939 = vmatprep.subr.bf16.mxu0 0
    %5940 = vmatpush1.bf16.msra.mxu0 %v5800
    %5941 = vmatprep.subr.bf16.mxu0 0
    %5942 = vmatpush1.bf16.msra.mxu0 %v5801
    %5943 = vmatprep.subr.bf16.mxu0 0
    %5944 = vmatpush1.bf16.msra.mxu0 %v5802
    %5945 = vmatprep.subr.bf16.mxu0 0
    %5946 = vmatpush1.bf16.msra.mxu0 %v5803
    %5947 = vmatprep.subr.bf16.mxu0 0
    %5948 = vmatpush1.bf16.msra.mxu0 %v5804
    %5949 = vmatprep.mubr.bf16.mxu0 %v3507
    %5950 = vmatmul.mubr.bf16.gmra.mrb[0].mxu0 %v3506
    %v5951 = vpop.f32.mrb[0].mxu0
    %v5952 = vadd.f32 0.0, %v5951
    %v5953 = vpop.f32.mrb[0].mxu0
    %v5954 = vpop.f32.mrb[0].mxu0
    %v5955 = vadd.f32 0.0, %v5954
    %v5956 = vpop.f32.mrb[0].mxu0
    %5957 = vmatprep.mubr.bf16.mxu0 %v3515
    %5958 = vmatmul.mubr.bf16.gmra.mrb[0].mxu0 %v3514
    %v5959 = vpop.f32.mrb[0].mxu0
    %v5960 = vadd.f32 0.0, %v5959
    %v5961 = vpop.f32.mrb[0].mxu0
    %v5962 = vpop.f32.mrb[0].mxu0
    %v5963 = vadd.f32 0.0, %v5962
    %v5964 = vpop.f32.mrb[0].mxu0
    %5965 = vmatprep.mubr.bf16.mxu0 %v3523
    %5966 = vmatmul.mubr.bf16.gmra.mrb[0].mxu0 %v3522
    %v5967 = vpop.f32.mrb[0].mxu0
    %v5968 = vadd.f32 0.0, %v5967
    %v5969 = vpop.f32.mrb[0].mxu0
    %v5970 = vpop.f32.mrb[0].mxu0
    %v5971 = vadd.f32 0.0, %v5970
    %v5972 = vpop.f32.mrb[0].mxu0
    %5973 = vmatprep.mubr.bf16.mxu0 %v3531
    %5974 = vmatmul.mubr.bf16.gmra.mrb[0].mxu0 %v3530
    %v5975 = vpop.f32.mrb[0].mxu0
    %v5976 = vadd.f32 0.0, %v5975
    %v5977 = vpop.f32.mrb[0].mxu0
    %v5978 = vpop.f32.mrb[0].mxu0
    %v5979 = vadd.f32 0.0, %v5978
    %v5980 = vpop.f32.mrb[0].mxu0
    %5981 = vmatprep.mubr.bf16.mxu0 %v3539
    %5982 = vmatmul.mubr.bf16.gmra.mrb[0].mxu0 %v3538
    %v5983 = vpop.f32.mrb[0].mxu0
    %v5984 = vadd.f32 0.0, %v5983
    %v5985 = vpop.f32.mrb[0].mxu0
    %v5986 = vpop.f32.mrb[0].mxu0
    %v5987 = vadd.f32 0.0, %v5986
    %v5988 = vpop.f32.mrb[0].mxu0
    %5989 = vmatprep.mubr.bf16.mxu0 %v3547
    %5990 = vmatmul.mubr.bf16.gmra.mrb[0].mxu0 %v3546
    %v5991 = vpop.f32.mrb[0].mxu0
    %v5992 = vadd.f32 0.0, %v5991
    %v5993 = vpop.f32.mrb[0].mxu0
    %v5994 = vpop.f32.mrb[0].mxu0
    %v5995 = vadd.f32 0.0, %v5994
    %v5996 = vpop.f32.mrb[0].mxu0
    %5997 = vmatprep.mubr.bf16.mxu0 %v3555
    %5998 = vmatmul.mubr.bf16.gmra.mrb[0].mxu0 %v3554
    %v5999 = vpop.f32.mrb[0].mxu0
    %v6000 = vadd.f32 0.0, %v5999
    %v6001 = vpop.f32.mrb[0].mxu0
    %v6002 = vpop.f32.mrb[0].mxu0
    %v6003 = vadd.f32 0.0, %v6002
    %v6004 = vpop.f32.mrb[0].mxu0
    %6005 = vmatprep.mubr.bf16.mxu0 %v3563
    %6006 = vmatmul.mubr.bf16.gmra.mrb[0].mxu0 %v3562
    %v6007 = vpop.f32.mrb[0].mxu0
    %v6008 = vadd.f32 0.0, %v6007
    %v6009 = vpop.f32.mrb[0].mxu0
    %v6010 = vpop.f32.mrb[0].mxu0
    %v6011 = vadd.f32 0.0, %v6010
    %v6012 = vpop.f32.mrb[0].mxu0
    %6013 = vdwg.mxu0
    %6014 = vmatprep.subr.bf16.mxu0 0
    %6015 = vmatpush1.bf16.msra.mxu0 %v5805
    %6016 = vmatprep.subr.bf16.mxu0 0
    %6017 = vmatpush1.bf16.msra.mxu0 %v5806
    %6018 = vmatprep.subr.bf16.mxu0 0
    %6019 = vmatpush1.bf16.msra.mxu0 %v5807
    %6020 = vmatprep.subr.bf16.mxu0 0
    %6021 = vmatpush1.bf16.msra.mxu0 %v5808
    %6022 = vmatprep.subr.bf16.mxu0 0
    %6023 = vmatpush1.bf16.msra.mxu0 %v5809
    %6024 = vmatprep.subr.bf16.mxu0 0
    %6025 = vmatpush1.bf16.msra.mxu0 %v5810
    %6026 = vmatprep.subr.bf16.mxu0 0
    %6027 = vmatpush1.bf16.msra.mxu0 %v5811
    %6028 = vmatprep.subr.bf16.mxu0 0
    %6029 = vmatpush1.bf16.msra.mxu0 %v5812
    %6030 = vmatprep.subr.bf16.mxu0 0
    %6031 = vmatpush1.bf16.msra.mxu0 %v5813
    %6032 = vmatprep.subr.bf16.mxu0 0
    %6033 = vmatpush1.bf16.msra.mxu0 %v5814
    %6034 = vmatprep.subr.bf16.mxu0 0
    %6035 = vmatpush1.bf16.msra.mxu0 %v5815
    %6036 = vmatprep.subr.bf16.mxu0 0
    %6037 = vmatpush1.bf16.msra.mxu0 %v5816
    %6038 = vmatprep.subr.bf16.mxu0 0
    %6039 = vmatpush1.bf16.msra.mxu0 %v5817
    %6040 = vmatprep.subr.bf16.mxu0 0
    %6041 = vmatpush1.bf16.msra.mxu0 %v5818
    %6042 = vmatprep.subr.bf16.mxu0 0
    %6043 = vmatpush1.bf16.msra.mxu0 %v5819
    %6044 = vmatprep.subr.bf16.mxu0 0
    %6045 = vmatpush1.bf16.msra.mxu0 %v5820
    %6046 = vmatprep.mubr.bf16.mxu0 %v3509
    %6047 = vmatmul.mubr.bf16.gmra.mrb[0].mxu0 %v3508
    %v6048 = vpop.f32.mrb[0].mxu0
    %v6049 = vadd.f32 %v5952, %v6048
    %v6050 = vpop.f32.mrb[0].mxu0
    %v6051 = vpop.f32.mrb[0].mxu0
    %v6052 = vadd.f32 %v5955, %v6051
    %v6053 = vpop.f32.mrb[0].mxu0
    %6054 = vmatprep.mubr.bf16.mxu0 %v3517
    %6055 = vmatmul.mubr.bf16.gmra.mrb[0].mxu0 %v3516
    %v6056 = vpop.f32.mrb[0].mxu0
    %v6057 = vadd.f32 %v5960, %v6056
    %v6058 = vpop.f32.mrb[0].mxu0
    %v6059 = vpop.f32.mrb[0].mxu0
    %v6060 = vadd.f32 %v5963, %v6059
    %v6061 = vpop.f32.mrb[0].mxu0
    %6062 = vmatprep.mubr.bf16.mxu0 %v3525
    %6063 = vmatmul.mubr.bf16.gmra.mrb[0].mxu0 %v3524
    %v6064 = vpop.f32.mrb[0].mxu0
    %v6065 = vadd.f32 %v5968, %v6064
    %v6066 = vpop.f32.mrb[0].mxu0
    %v6067 = vpop.f32.mrb[0].mxu0
    %v6068 = vadd.f32 %v5971, %v6067
    %v6069 = vpop.f32.mrb[0].mxu0
    %6070 = vmatprep.mubr.bf16.mxu0 %v3533
    %6071 = vmatmul.mubr.bf16.gmra.mrb[0].mxu0 %v3532
    %v6072 = vpop.f32.mrb[0].mxu0
    %v6073 = vadd.f32 %v5976, %v6072
    %v6074 = vpop.f32.mrb[0].mxu0
    %v6075 = vpop.f32.mrb[0].mxu0
    %v6076 = vadd.f32 %v5979, %v6075
    %v6077 = vpop.f32.mrb[0].mxu0
    %6078 = vmatprep.mubr.bf16.mxu0 %v3541
    %6079 = vmatmul.mubr.bf16.gmra.mrb[0].mxu0 %v3540
    %v6080 = vpop.f32.mrb[0].mxu0
    %v6081 = vadd.f32 %v5984, %v6080
    %v6082 = vpop.f32.mrb[0].mxu0
    %v6083 = vpop.f32.mrb[0].mxu0
    %v6084 = vadd.f32 %v5987, %v6083
    %v6085 = vpop.f32.mrb[0].mxu0
    %6086 = vmatprep.mubr.bf16.mxu0 %v3549
    %6087 = vmatmul.mubr.bf16.gmra.mrb[0].mxu0 %v3548
    %v6088 = vpop.f32.mrb[0].mxu0
    %v6089 = vadd.f32 %v5992, %v6088
    %v6090 = vpop.f32.mrb[0].mxu0
    %v6091 = vpop.f32.mrb[0].mxu0
    %v6092 = vadd.f32 %v5995, %v6091
    %v6093 = vpop.f32.mrb[0].mxu0
    %6094 = vmatprep.mubr.bf16.mxu0 %v3557
    %6095 = vmatmul.mubr.bf16.gmra.mrb[0].mxu0 %v3556
    %v6096 = vpop.f32.mrb[0].mxu0
    %v6097 = vadd.f32 %v6000, %v6096
    %v6098 = vpop.f32.mrb[0].mxu0
    %v6099 = vpop.f32.mrb[0].mxu0
    %v6100 = vadd.f32 %v6003, %v6099
    %v6101 = vpop.f32.mrb[0].mxu0
    %6102 = vmatprep.mubr.bf16.mxu0 %v3565
    %6103 = vmatmul.mubr.bf16.gmra.mrb[0].mxu0 %v3564
    %v6104 = vpop.f32.mrb[0].mxu0
    %v6105 = vadd.f32 %v6008, %v6104
    %v6106 = vpop.f32.mrb[0].mxu0
    %v6107 = vpop.f32.mrb[0].mxu0
    %v6108 = vadd.f32 %v6011, %v6107
    %v6109 = vpop.f32.mrb[0].mxu0
    %6110 = vdwg.mxu0
    %6111 = vmatprep.subr.bf16.mxu0 0
    %6112 = vmatpush1.bf16.msra.mxu0 %v5821
    %6113 = vmatprep.subr.bf16.mxu0 0
    %6114 = vmatpush1.bf16.msra.mxu0 %v5822
    %6115 = vmatprep.subr.bf16.mxu0 0
    %6116 = vmatpush1.bf16.msra.mxu0 %v5823
    %6117 = vmatprep.subr.bf16.mxu0 0
    %6118 = vmatpush1.bf16.msra.mxu0 %v5824
    %6119 = vmatprep.subr.bf16.mxu0 0
    %6120 = vmatpush1.bf16.msra.mxu0 %v5825
    %6121 = vmatprep.subr.bf16.mxu0 0
    %6122 = vmatpush1.bf16.msra.mxu0 %v5826
    %6123 = vmatprep.subr.bf16.mxu0 0
    %6124 = vmatpush1.bf16.msra.mxu0 %v5827
    %6125 = vmatprep.subr.bf16.mxu0 0
    %6126 = vmatpush1.bf16.msra.mxu0 %v5828
    %6127 = vmatprep.subr.bf16.mxu0 0
    %6128 = vmatpush1.bf16.msra.mxu0 %v5829
    %6129 = vmatprep.subr.bf16.mxu0 0
    %6130 = vmatpush1.bf16.msra.mxu0 %v5830
    %6131 = vmatprep.subr.bf16.mxu0 0
    %6132 = vmatpush1.bf16.msra.mxu0 %v5831
    %6133 = vmatprep.subr.bf16.mxu0 0
    %6134 = vmatpush1.bf16.msra.mxu0 %v5832
    %6135 = vmatprep.subr.bf16.mxu0 0
    %6136 = vmatpush1.bf16.msra.mxu0 %v5833
    %6137 = vmatprep.subr.bf16.mxu0 0
    %6138 = vmatpush1.bf16.msra.mxu0 %v5834
    %6139 = vmatprep.subr.bf16.mxu0 0
    %6140 = vmatpush1.bf16.msra.mxu0 %v5835
    %6141 = vmatprep.subr.bf16.mxu0 0
    %6142 = vmatpush1.bf16.msra.mxu0 %v5836
    %6143 = vmatprep.mubr.bf16.mxu0 %v3511
    %6144 = vmatmul.mubr.bf16.gmra.mrb[0].mxu0 %v3510
    %v6145 = vpop.f32.mrb[0].mxu0
    %v6146 = vadd.f32 %v6049, %v6145
    %v6147 = vpop.f32.mrb[0].mxu0
    %v6148 = vpop.f32.mrb[0].mxu0
    %v6149 = vadd.f32 %v6052, %v6148
    %v6150 = vpop.f32.mrb[0].mxu0
    %6151 = vmatprep.mubr.bf16.mxu0 %v3519
    %6152 = vmatmul.mubr.bf16.gmra.mrb[0].mxu0 %v3518
    %v6153 = vpop.f32.mrb[0].mxu0
    %v6154 = vadd.f32 %v6057, %v6153
    %v6155 = vpop.f32.mrb[0].mxu0
    %v6156 = vpop.f32.mrb[0].mxu0
    %v6157 = vadd.f32 %v6060, %v6156
    %v6158 = vpop.f32.mrb[0].mxu0
    %6159 = vmatprep.mubr.bf16.mxu0 %v3527
    %6160 = vmatmul.mubr.bf16.gmra.mrb[0].mxu0 %v3526
    %v6161 = vpop.f32.mrb[0].mxu0
    %v6162 = vadd.f32 %v6065, %v6161
    %v6163 = vpop.f32.mrb[0].mxu0
    %v6164 = vpop.f32.mrb[0].mxu0
    %v6165 = vadd.f32 %v6068, %v6164
    %v6166 = vpop.f32.mrb[0].mxu0
    %6167 = vmatprep.mubr.bf16.mxu0 %v3535
    %6168 = vmatmul.mubr.bf16.gmra.mrb[0].mxu0 %v3534
    %v6169 = vpop.f32.mrb[0].mxu0
    %v6170 = vadd.f32 %v6073, %v6169
    %v6171 = vpop.f32.mrb[0].mxu0
    %v6172 = vpop.f32.mrb[0].mxu0
    %v6173 = vadd.f32 %v6076, %v6172
    %v6174 = vpop.f32.mrb[0].mxu0
    %6175 = vmatprep.mubr.bf16.mxu0 %v3543
    %6176 = vmatmul.mubr.bf16.gmra.mrb[0].mxu0 %v3542
    %v6177 = vpop.f32.mrb[0].mxu0
    %v6178 = vadd.f32 %v6081, %v6177
    %v6179 = vpop.f32.mrb[0].mxu0
    %v6180 = vpop.f32.mrb[0].mxu0
    %v6181 = vadd.f32 %v6084, %v6180
    %v6182 = vpop.f32.mrb[0].mxu0
    %6183 = vmatprep.mubr.bf16.mxu0 %v3551
    %6184 = vmatmul.mubr.bf16.gmra.mrb[0].mxu0 %v3550
    %v6185 = vpop.f32.mrb[0].mxu0
    %v6186 = vadd.f32 %v6089, %v6185
    %v6187 = vpop.f32.mrb[0].mxu0
    %v6188 = vpop.f32.mrb[0].mxu0
    %v6189 = vadd.f32 %v6092, %v6188
    %v6190 = vpop.f32.mrb[0].mxu0
    %6191 = vmatprep.mubr.bf16.mxu0 %v3559
    %6192 = vmatmul.mubr.bf16.gmra.mrb[0].mxu0 %v3558
    %v6193 = vpop.f32.mrb[0].mxu0
    %v6194 = vadd.f32 %v6097, %v6193
    %v6195 = vpop.f32.mrb[0].mxu0
    %v6196 = vpop.f32.mrb[0].mxu0
    %v6197 = vadd.f32 %v6100, %v6196
    %v6198 = vpop.f32.mrb[0].mxu0
    %6199 = vmatprep.mubr.bf16.mxu0 %v3567
    %6200 = vmatmul.mubr.bf16.gmra.mrb[0].mxu0 %v3566
    %v6201 = vpop.f32.mrb[0].mxu0
    %v6202 = vadd.f32 %v6105, %v6201
    %v6203 = vpop.f32.mrb[0].mxu0
    %v6204 = vpop.f32.mrb[0].mxu0
    %v6205 = vadd.f32 %v6108, %v6204
    %v6206 = vpop.f32.mrb[0].mxu0
    %6207 = vdwg.mxu0
    %6208 = vmatprep.subr.bf16.mxu0 0
    %6209 = vmatpush1.bf16.msra.mxu0 %v5837
    %6210 = vmatprep.subr.bf16.mxu0 0
    %6211 = vmatpush1.bf16.msra.mxu0 %v5838
    %6212 = vmatprep.subr.bf16.mxu0 0
    %6213 = vmatpush1.bf16.msra.mxu0 %v5839
    %6214 = vmatprep.subr.bf16.mxu0 0
    %6215 = vmatpush1.bf16.msra.mxu0 %v5840
    %6216 = vmatprep.subr.bf16.mxu0 0
    %6217 = vmatpush1.bf16.msra.mxu0 %v5841
    %6218 = vmatprep.subr.bf16.mxu0 0
    %6219 = vmatpush1.bf16.msra.mxu0 %v5842
    %6220 = vmatprep.subr.bf16.mxu0 0
    %6221 = vmatpush1.bf16.msra.mxu0 %v5843
    %6222 = vmatprep.subr.bf16.mxu0 0
    %6223 = vmatpush1.bf16.msra.mxu0 %v5844
    %6224 = vmatprep.subr.bf16.mxu0 0
    %6225 = vmatpush1.bf16.msra.mxu0 %v5845
    %6226 = vmatprep.subr.bf16.mxu0 0
    %6227 = vmatpush1.bf16.msra.mxu0 %v5846
    %6228 = vmatprep.subr.bf16.mxu0 0
    %6229 = vmatpush1.bf16.msra.mxu0 %v5847
    %6230 = vmatprep.subr.bf16.mxu0 0
    %6231 = vmatpush1.bf16.msra.mxu0 %v5848
    %6232 = vmatprep.subr.bf16.mxu0 0
    %6233 = vmatpush1.bf16.msra.mxu0 %v5849
    %6234 = vmatprep.subr.bf16.mxu0 0
    %6235 = vmatpush1.bf16.msra.mxu0 %v5850
    %6236 = vmatprep.subr.bf16.mxu0 0
    %6237 = vmatpush1.bf16.msra.mxu0 %v5851
    %6238 = vmatprep.subr.bf16.mxu0 0
    %6239 = vmatpush1.bf16.msra.mxu0 %v5852
    %6240 = vmatprep.mubr.bf16.mxu0 %v3513
    %6241 = vmatmul.mubr.bf16.gmra.mrb[0].mxu0 %v3512
    %v6242 = vpop.f32.mrb[0].mxu0
    %v6243 = vadd.f32 %v6146, %v6242
    %v6244 = vpop.f32.mrb[0].mxu0
    %v6245 = vpop.f32.mrb[0].mxu0
    %v6246 = vadd.f32 %v6149, %v6245
    %v6247 = vpop.f32.mrb[0].mxu0
    %6248 = vmatprep.mubr.bf16.mxu0 %v3521
    %6249 = vmatmul.mubr.bf16.gmra.mrb[0].mxu0 %v3520
    %v6250 = vpop.f32.mrb[0].mxu0
    %v6251 = vadd.f32 %v6154, %v6250
    %v6252 = vpop.f32.mrb[0].mxu0
    %v6253 = vpop.f32.mrb[0].mxu0
    %v6254 = vadd.f32 %v6157, %v6253
    %v6255 = vpop.f32.mrb[0].mxu0
    %6256 = vmatprep.mubr.bf16.mxu0 %v3529
    %6257 = vmatmul.mubr.bf16.gmra.mrb[0].mxu0 %v3528
    %v6258 = vpop.f32.mrb[0].mxu0
    %v6259 = vadd.f32 %v6162, %v6258
    %v6260 = vpop.f32.mrb[0].mxu0
    %v6261 = vpop.f32.mrb[0].mxu0
    %v6262 = vadd.f32 %v6165, %v6261
    %v6263 = vpop.f32.mrb[0].mxu0
    %6264 = vmatprep.mubr.bf16.mxu0 %v3537
    %6265 = vmatmul.mubr.bf16.gmra.mrb[0].mxu0 %v3536
    %v6266 = vpop.f32.mrb[0].mxu0
    %v6267 = vadd.f32 %v6170, %v6266
    %v6268 = vpop.f32.mrb[0].mxu0
    %v6269 = vpop.f32.mrb[0].mxu0
    %v6270 = vadd.f32 %v6173, %v6269
    %v6271 = vpop.f32.mrb[0].mxu0
    %6272 = vmatprep.mubr.bf16.mxu0 %v3545
    %6273 = vmatmul.mubr.bf16.gmra.mrb[0].mxu0 %v3544
    %v6274 = vpop.f32.mrb[0].mxu0
    %v6275 = vadd.f32 %v6178, %v6274
    %v6276 = vpop.f32.mrb[0].mxu0
    %v6277 = vpop.f32.mrb[0].mxu0
    %v6278 = vadd.f32 %v6181, %v6277
    %v6279 = vpop.f32.mrb[0].mxu0
    %6280 = vmatprep.mubr.bf16.mxu0 %v3553
    %6281 = vmatmul.mubr.bf16.gmra.mrb[0].mxu0 %v3552
    %v6282 = vpop.f32.mrb[0].mxu0
    %v6283 = vadd.f32 %v6186, %v6282
    %v6284 = vpop.f32.mrb[0].mxu0
    %v6285 = vpop.f32.mrb[0].mxu0
    %v6286 = vadd.f32 %v6189, %v6285
    %v6287 = vpop.f32.mrb[0].mxu0
    %6288 = vmatprep.mubr.bf16.mxu0 %v3561
    %6289 = vmatmul.mubr.bf16.gmra.mrb[0].mxu0 %v3560
    %v6290 = vpop.f32.mrb[0].mxu0
    %v6291 = vadd.f32 %v6194, %v6290
    %v6292 = vpop.f32.mrb[0].mxu0
    %v6293 = vpop.f32.mrb[0].mxu0
    %v6294 = vadd.f32 %v6197, %v6293
    %v6295 = vpop.f32.mrb[0].mxu0
    %6296 = vmatprep.mubr.bf16.mxu0 %v3569
    %6297 = vmatmul.mubr.bf16.gmra.mrb[0].mxu0 %v3568
    %v6298 = vpop.f32.mrb[0].mxu0
    %v6299 = vadd.f32 %v6202, %v6298
    %v6300 = vpop.f32.mrb[0].mxu0
    %v6301 = vpop.f32.mrb[0].mxu0
    %v6302 = vadd.f32 %v6205, %v6301
    %v6303 = vpop.f32.mrb[0].mxu0
    %6304 = vdwg.mxu0
    %v6305 = vadd.f32 %v5388, %v6243
    %v6306 = vadd.f32 %v5389, %v6246
    %v6307 = vadd.f32 %v5390, %v6251
    %v6308 = vadd.f32 %v5391, %v6254
    %v6309 = vadd.f32 %v5392, %v6259
    %v6310 = vadd.f32 %v5393, %v6262
    %v6311 = vadd.f32 %v5394, %v6267
    %v6312 = vadd.f32 %v5395, %v6270
    %v6313 = vadd.f32 %v5396, %v6275
    %v6314 = vadd.f32 %v5397, %v6278
    %v6315 = vadd.f32 %v5398, %v6283
    %v6316 = vadd.f32 %v5399, %v6286
    %v6317 = vadd.f32 %v5400, %v6291
    %v6318 = vadd.f32 %v5401, %v6294
    %v6319 = vadd.f32 %v5402, %v6299
    %v6320 = vadd.f32 %v5403, %v6302
    %6321 = vset.pattern.permute.xlu0 2
    %6322 = vperm.xlu0 %6321, %v76
    %v6323 = vpop.permute.xlu0 %6322
    %6324 = vset.pattern.permute.xlu0 2
    %6325 = vperm.xlu0 %6324, %v78
    %v6326 = vpop.permute.xlu0 %6325
    %6327 = vset.pattern.permute.xlu0 2
    %6328 = vperm.xlu0 %6327, %v80
    %v6329 = vpop.permute.xlu0 %6328
    %6330 = vset.pattern.permute.xlu0 2
    %6331 = vperm.xlu0 %6330, %v82
    %v6332 = vpop.permute.xlu0 %6331
    %6333 = vset.pattern.permute.xlu0 2
    %6334 = vperm.xlu0 %6333, %v84
    %v6335 = vpop.permute.xlu0 %6334
    %6336 = vset.pattern.permute.xlu0 2
    %6337 = vperm.xlu0 %6336, %v86
    %v6338 = vpop.permute.xlu0 %6337
    %6339 = vset.pattern.permute.xlu0 2
    %6340 = vperm.xlu0 %6339, %v88
    %v6341 = vpop.permute.xlu0 %6340
    %6342 = vset.pattern.permute.xlu0 2
    %6343 = vperm.xlu0 %6342, %v90
    %v6344 = vpop.permute.xlu0 %6343
    %6345 = vset.pattern.permute.xlu0 2
    %6346 = vperm.xlu0 %6345, %v92
    %v6347 = vpop.permute.xlu0 %6346
    %6348 = vset.pattern.permute.xlu0 2
    %6349 = vperm.xlu0 %6348, %v94
    %v6350 = vpop.permute.xlu0 %6349
    %6351 = vset.pattern.permute.xlu0 2
    %6352 = vperm.xlu0 %6351, %v96
    %v6353 = vpop.permute.xlu0 %6352
    %6354 = vset.pattern.permute.xlu0 2
    %6355 = vperm.xlu0 %6354, %v98
    %v6356 = vpop.permute.xlu0 %6355
    %6357 = vset.pattern.permute.xlu0 2
    %6358 = vperm.xlu0 %6357, %v100
    %v6359 = vpop.permute.xlu0 %6358
    %6360 = vset.pattern.permute.xlu0 2
    %6361 = vperm.xlu0 %6360, %v102
    %v6362 = vpop.permute.xlu0 %6361
    %6363 = vset.pattern.permute.xlu0 2
    %6364 = vperm.xlu0 %6363, %v104
    %v6365 = vpop.permute.xlu0 %6364
    %6366 = vset.pattern.permute.xlu0 2
    %6367 = vperm.xlu0 %6366, %v106
    %v6368 = vpop.permute.xlu0 %6367
    %vm6369 = vcmp.eq.s32.totalorder %v6323, %v108
    %vm6370 = vcmp.eq.s32.totalorder %v6323, %v109
    %vm6371 = vcmp.eq.s32.totalorder %v6323, %v110
    %vm6372 = vcmp.eq.s32.totalorder %v6323, %v111
    %vm6373 = vcmp.eq.s32.totalorder %v6323, %v112
    %vm6374 = vcmp.eq.s32.totalorder %v6323, %v113
    %vm6375 = vcmp.eq.s32.totalorder %v6323, %v114
    %vm6376 = vcmp.eq.s32.totalorder %v6323, %v115
    %vm6377 = vcmp.eq.s32.totalorder %v6326, %v108
    %vm6378 = vcmp.eq.s32.totalorder %v6326, %v109
    %vm6379 = vcmp.eq.s32.totalorder %v6326, %v110
    %vm6380 = vcmp.eq.s32.totalorder %v6326, %v111
    %vm6381 = vcmp.eq.s32.totalorder %v6326, %v112
    %vm6382 = vcmp.eq.s32.totalorder %v6326, %v113
    %vm6383 = vcmp.eq.s32.totalorder %v6326, %v114
    %vm6384 = vcmp.eq.s32.totalorder %v6326, %v115
    %vm6385 = vcmp.eq.s32.totalorder %v6329, %v108
    %vm6386 = vcmp.eq.s32.totalorder %v6329, %v109
    %vm6387 = vcmp.eq.s32.totalorder %v6329, %v110
    %vm6388 = vcmp.eq.s32.totalorder %v6329, %v111
    %vm6389 = vcmp.eq.s32.totalorder %v6329, %v112
    %vm6390 = vcmp.eq.s32.totalorder %v6329, %v113
    %vm6391 = vcmp.eq.s32.totalorder %v6329, %v114
    %vm6392 = vcmp.eq.s32.totalorder %v6329, %v115
    %vm6393 = vcmp.eq.s32.totalorder %v6332, %v108
    %vm6394 = vcmp.eq.s32.totalorder %v6332, %v109
    %vm6395 = vcmp.eq.s32.totalorder %v6332, %v110
    %vm6396 = vcmp.eq.s32.totalorder %v6332, %v111
    %vm6397 = vcmp.eq.s32.totalorder %v6332, %v112
    %vm6398 = vcmp.eq.s32.totalorder %v6332, %v113
    %vm6399 = vcmp.eq.s32.totalorder %v6332, %v114
    %vm6400 = vcmp.eq.s32.totalorder %v6332, %v115
    %vm6401 = vcmp.eq.s32.totalorder %v6335, %v108
    %vm6402 = vcmp.eq.s32.totalorder %v6335, %v109
    %vm6403 = vcmp.eq.s32.totalorder %v6335, %v110
    %vm6404 = vcmp.eq.s32.totalorder %v6335, %v111
    %vm6405 = vcmp.eq.s32.totalorder %v6335, %v112
    %vm6406 = vcmp.eq.s32.totalorder %v6335, %v113
    %vm6407 = vcmp.eq.s32.totalorder %v6335, %v114
    %vm6408 = vcmp.eq.s32.totalorder %v6335, %v115
    %vm6409 = vcmp.eq.s32.totalorder %v6338, %v108
    %vm6410 = vcmp.eq.s32.totalorder %v6338, %v109
    %vm6411 = vcmp.eq.s32.totalorder %v6338, %v110
    %vm6412 = vcmp.eq.s32.totalorder %v6338, %v111
    %vm6413 = vcmp.eq.s32.totalorder %v6338, %v112
    %vm6414 = vcmp.eq.s32.totalorder %v6338, %v113
    %vm6415 = vcmp.eq.s32.totalorder %v6338, %v114
    %vm6416 = vcmp.eq.s32.totalorder %v6338, %v115
    %vm6417 = vcmp.eq.s32.totalorder %v6341, %v108
    %vm6418 = vcmp.eq.s32.totalorder %v6341, %v109
    %vm6419 = vcmp.eq.s32.totalorder %v6341, %v110
    %vm6420 = vcmp.eq.s32.totalorder %v6341, %v111
    %vm6421 = vcmp.eq.s32.totalorder %v6341, %v112
    %vm6422 = vcmp.eq.s32.totalorder %v6341, %v113
    %vm6423 = vcmp.eq.s32.totalorder %v6341, %v114
    %vm6424 = vcmp.eq.s32.totalorder %v6341, %v115
    %vm6425 = vcmp.eq.s32.totalorder %v6344, %v108
    %vm6426 = vcmp.eq.s32.totalorder %v6344, %v109
    %vm6427 = vcmp.eq.s32.totalorder %v6344, %v110
    %vm6428 = vcmp.eq.s32.totalorder %v6344, %v111
    %vm6429 = vcmp.eq.s32.totalorder %v6344, %v112
    %vm6430 = vcmp.eq.s32.totalorder %v6344, %v113
    %vm6431 = vcmp.eq.s32.totalorder %v6344, %v114
    %vm6432 = vcmp.eq.s32.totalorder %v6344, %v115
    %vm6433 = vcmp.eq.s32.totalorder %v6347, %v108
    %vm6434 = vcmp.eq.s32.totalorder %v6347, %v109
    %vm6435 = vcmp.eq.s32.totalorder %v6347, %v110
    %vm6436 = vcmp.eq.s32.totalorder %v6347, %v111
    %vm6437 = vcmp.eq.s32.totalorder %v6347, %v112
    %vm6438 = vcmp.eq.s32.totalorder %v6347, %v113
    %vm6439 = vcmp.eq.s32.totalorder %v6347, %v114
    %vm6440 = vcmp.eq.s32.totalorder %v6347, %v115
    %vm6441 = vcmp.eq.s32.totalorder %v6350, %v108
    %vm6442 = vcmp.eq.s32.totalorder %v6350, %v109
    %vm6443 = vcmp.eq.s32.totalorder %v6350, %v110
    %vm6444 = vcmp.eq.s32.totalorder %v6350, %v111
    %vm6445 = vcmp.eq.s32.totalorder %v6350, %v112
    %vm6446 = vcmp.eq.s32.totalorder %v6350, %v113
    %vm6447 = vcmp.eq.s32.totalorder %v6350, %v114
    %vm6448 = vcmp.eq.s32.totalorder %v6350, %v115
    %vm6449 = vcmp.eq.s32.totalorder %v6353, %v108
    %vm6450 = vcmp.eq.s32.totalorder %v6353, %v109
    %vm6451 = vcmp.eq.s32.totalorder %v6353, %v110
    %vm6452 = vcmp.eq.s32.totalorder %v6353, %v111
    %vm6453 = vcmp.eq.s32.totalorder %v6353, %v112
    %vm6454 = vcmp.eq.s32.totalorder %v6353, %v113
    %vm6455 = vcmp.eq.s32.totalorder %v6353, %v114
    %vm6456 = vcmp.eq.s32.totalorder %v6353, %v115
    %vm6457 = vcmp.eq.s32.totalorder %v6356, %v108
    %vm6458 = vcmp.eq.s32.totalorder %v6356, %v109
    %vm6459 = vcmp.eq.s32.totalorder %v6356, %v110
    %vm6460 = vcmp.eq.s32.totalorder %v6356, %v111
    %vm6461 = vcmp.eq.s32.totalorder %v6356, %v112
    %vm6462 = vcmp.eq.s32.totalorder %v6356, %v113
    %vm6463 = vcmp.eq.s32.totalorder %v6356, %v114
    %vm6464 = vcmp.eq.s32.totalorder %v6356, %v115
    %vm6465 = vcmp.eq.s32.totalorder %v6359, %v108
    %vm6466 = vcmp.eq.s32.totalorder %v6359, %v109
    %vm6467 = vcmp.eq.s32.totalorder %v6359, %v110
    %vm6468 = vcmp.eq.s32.totalorder %v6359, %v111
    %vm6469 = vcmp.eq.s32.totalorder %v6359, %v112
    %vm6470 = vcmp.eq.s32.totalorder %v6359, %v113
    %vm6471 = vcmp.eq.s32.totalorder %v6359, %v114
    %vm6472 = vcmp.eq.s32.totalorder %v6359, %v115
    %vm6473 = vcmp.eq.s32.totalorder %v6362, %v108
    %vm6474 = vcmp.eq.s32.totalorder %v6362, %v109
    %vm6475 = vcmp.eq.s32.totalorder %v6362, %v110
    %vm6476 = vcmp.eq.s32.totalorder %v6362, %v111
    %vm6477 = vcmp.eq.s32.totalorder %v6362, %v112
    %vm6478 = vcmp.eq.s32.totalorder %v6362, %v113
    %vm6479 = vcmp.eq.s32.totalorder %v6362, %v114
    %vm6480 = vcmp.eq.s32.totalorder %v6362, %v115
    %vm6481 = vcmp.eq.s32.totalorder %v6365, %v108
    %vm6482 = vcmp.eq.s32.totalorder %v6365, %v109
    %vm6483 = vcmp.eq.s32.totalorder %v6365, %v110
    %vm6484 = vcmp.eq.s32.totalorder %v6365, %v111
    %vm6485 = vcmp.eq.s32.totalorder %v6365, %v112
    %vm6486 = vcmp.eq.s32.totalorder %v6365, %v113
    %vm6487 = vcmp.eq.s32.totalorder %v6365, %v114
    %vm6488 = vcmp.eq.s32.totalorder %v6365, %v115
    %vm6489 = vcmp.eq.s32.totalorder %v6368, %v108
    %vm6490 = vcmp.eq.s32.totalorder %v6368, %v109
    %vm6491 = vcmp.eq.s32.totalorder %v6368, %v110
    %vm6492 = vcmp.eq.s32.totalorder %v6368, %v111
    %vm6493 = vcmp.eq.s32.totalorder %v6368, %v112
    %vm6494 = vcmp.eq.s32.totalorder %v6368, %v113
    %vm6495 = vcmp.eq.s32.totalorder %v6368, %v114
    %vm6496 = vcmp.eq.s32.totalorder %v6368, %v115
    %v6497 = vsel %vm6369, 1.0, 0.0
    %v6498 = vsel %vm6370, 1.0, 0.0
    %v6499 = vsel %vm6371, 1.0, 0.0
    %v6500 = vsel %vm6372, 1.0, 0.0
    %v6501 = vsel %vm6373, 1.0, 0.0
    %v6502 = vsel %vm6374, 1.0, 0.0
    %v6503 = vsel %vm6375, 1.0, 0.0
    %v6504 = vsel %vm6376, 1.0, 0.0
    %v6505 = vsel %vm6377, 1.0, 0.0
    %v6506 = vsel %vm6378, 1.0, 0.0
    %v6507 = vsel %vm6379, 1.0, 0.0
    %v6508 = vsel %vm6380, 1.0, 0.0
    %v6509 = vsel %vm6381, 1.0, 0.0
    %v6510 = vsel %vm6382, 1.0, 0.0
    %v6511 = vsel %vm6383, 1.0, 0.0
    %v6512 = vsel %vm6384, 1.0, 0.0
    %v6513 = vsel %vm6385, 1.0, 0.0
    %v6514 = vsel %vm6386, 1.0, 0.0
    %v6515 = vsel %vm6387, 1.0, 0.0
    %v6516 = vsel %vm6388, 1.0, 0.0
    %v6517 = vsel %vm6389, 1.0, 0.0
    %v6518 = vsel %vm6390, 1.0, 0.0
    %v6519 = vsel %vm6391, 1.0, 0.0
    %v6520 = vsel %vm6392, 1.0, 0.0
    %v6521 = vsel %vm6393, 1.0, 0.0
    %v6522 = vsel %vm6394, 1.0, 0.0
    %v6523 = vsel %vm6395, 1.0, 0.0
    %v6524 = vsel %vm6396, 1.0, 0.0
    %v6525 = vsel %vm6397, 1.0, 0.0
    %v6526 = vsel %vm6398, 1.0, 0.0
    %v6527 = vsel %vm6399, 1.0, 0.0
    %v6528 = vsel %vm6400, 1.0, 0.0
    %v6529 = vsel %vm6401, 1.0, 0.0
    %v6530 = vsel %vm6402, 1.0, 0.0
    %v6531 = vsel %vm6403, 1.0, 0.0
    %v6532 = vsel %vm6404, 1.0, 0.0
    %v6533 = vsel %vm6405, 1.0, 0.0
    %v6534 = vsel %vm6406, 1.0, 0.0
    %v6535 = vsel %vm6407, 1.0, 0.0
    %v6536 = vsel %vm6408, 1.0, 0.0
    %v6537 = vsel %vm6409, 1.0, 0.0
    %v6538 = vsel %vm6410, 1.0, 0.0
    %v6539 = vsel %vm6411, 1.0, 0.0
    %v6540 = vsel %vm6412, 1.0, 0.0
    %v6541 = vsel %vm6413, 1.0, 0.0
    %v6542 = vsel %vm6414, 1.0, 0.0
    %v6543 = vsel %vm6415, 1.0, 0.0
    %v6544 = vsel %vm6416, 1.0, 0.0
    %v6545 = vsel %vm6417, 1.0, 0.0
    %v6546 = vsel %vm6418, 1.0, 0.0
    %v6547 = vsel %vm6419, 1.0, 0.0
    %v6548 = vsel %vm6420, 1.0, 0.0
    %v6549 = vsel %vm6421, 1.0, 0.0
    %v6550 = vsel %vm6422, 1.0, 0.0
    %v6551 = vsel %vm6423, 1.0, 0.0
    %v6552 = vsel %vm6424, 1.0, 0.0
    %v6553 = vsel %vm6425, 1.0, 0.0
    %v6554 = vsel %vm6426, 1.0, 0.0
    %v6555 = vsel %vm6427, 1.0, 0.0
    %v6556 = vsel %vm6428, 1.0, 0.0
    %v6557 = vsel %vm6429, 1.0, 0.0
    %v6558 = vsel %vm6430, 1.0, 0.0
    %v6559 = vsel %vm6431, 1.0, 0.0
    %v6560 = vsel %vm6432, 1.0, 0.0
    %v6561 = vsel %vm6433, 1.0, 0.0
    %v6562 = vsel %vm6434, 1.0, 0.0
    %v6563 = vsel %vm6435, 1.0, 0.0
    %v6564 = vsel %vm6436, 1.0, 0.0
    %v6565 = vsel %vm6437, 1.0, 0.0
    %v6566 = vsel %vm6438, 1.0, 0.0
    %v6567 = vsel %vm6439, 1.0, 0.0
    %v6568 = vsel %vm6440, 1.0, 0.0
    %v6569 = vsel %vm6441, 1.0, 0.0
    %v6570 = vsel %vm6442, 1.0, 0.0
    %v6571 = vsel %vm6443, 1.0, 0.0
    %v6572 = vsel %vm6444, 1.0, 0.0
    %v6573 = vsel %vm6445, 1.0, 0.0
    %v6574 = vsel %vm6446, 1.0, 0.0
    %v6575 = vsel %vm6447, 1.0, 0.0
    %v6576 = vsel %vm6448, 1.0, 0.0
    %v6577 = vsel %vm6449, 1.0, 0.0
    %v6578 = vsel %vm6450, 1.0, 0.0
    %v6579 = vsel %vm6451, 1.0, 0.0
    %v6580 = vsel %vm6452, 1.0, 0.0
    %v6581 = vsel %vm6453, 1.0, 0.0
    %v6582 = vsel %vm6454, 1.0, 0.0
    %v6583 = vsel %vm6455, 1.0, 0.0
    %v6584 = vsel %vm6456, 1.0, 0.0
    %v6585 = vsel %vm6457, 1.0, 0.0
    %v6586 = vsel %vm6458, 1.0, 0.0
    %v6587 = vsel %vm6459, 1.0, 0.0
    %v6588 = vsel %vm6460, 1.0, 0.0
    %v6589 = vsel %vm6461, 1.0, 0.0
    %v6590 = vsel %vm6462, 1.0, 0.0
    %v6591 = vsel %vm6463, 1.0, 0.0
    %v6592 = vsel %vm6464, 1.0, 0.0
    %v6593 = vsel %vm6465, 1.0, 0.0
    %v6594 = vsel %vm6466, 1.0, 0.0
    %v6595 = vsel %vm6467, 1.0, 0.0
    %v6596 = vsel %vm6468, 1.0, 0.0
    %v6597 = vsel %vm6469, 1.0, 0.0
    %v6598 = vsel %vm6470, 1.0, 0.0
    %v6599 = vsel %vm6471, 1.0, 0.0
    %v6600 = vsel %vm6472, 1.0, 0.0
    %v6601 = vsel %vm6473, 1.0, 0.0
    %v6602 = vsel %vm6474, 1.0, 0.0
    %v6603 = vsel %vm6475, 1.0, 0.0
    %v6604 = vsel %vm6476, 1.0, 0.0
    %v6605 = vsel %vm6477, 1.0, 0.0
    %v6606 = vsel %vm6478, 1.0, 0.0
    %v6607 = vsel %vm6479, 1.0, 0.0
    %v6608 = vsel %vm6480, 1.0, 0.0
    %v6609 = vsel %vm6481, 1.0, 0.0
    %v6610 = vsel %vm6482, 1.0, 0.0
    %v6611 = vsel %vm6483, 1.0, 0.0
    %v6612 = vsel %vm6484, 1.0, 0.0
    %v6613 = vsel %vm6485, 1.0, 0.0
    %v6614 = vsel %vm6486, 1.0, 0.0
    %v6615 = vsel %vm6487, 1.0, 0.0
    %v6616 = vsel %vm6488, 1.0, 0.0
    %v6617 = vsel %vm6489, 1.0, 0.0
    %v6618 = vsel %vm6490, 1.0, 0.0
    %v6619 = vsel %vm6491, 1.0, 0.0
    %v6620 = vsel %vm6492, 1.0, 0.0
    %v6621 = vsel %vm6493, 1.0, 0.0
    %v6622 = vsel %vm6494, 1.0, 0.0
    %v6623 = vsel %vm6495, 1.0, 0.0
    %v6624 = vsel %vm6496, 1.0, 0.0
    %v6625 = vpack.c.bf16 %v6505, %v6497
    %v6626 = vpack.c.bf16 %v6506, %v6498
    %v6627 = vpack.c.bf16 %v6507, %v6499
    %v6628 = vpack.c.bf16 %v6508, %v6500
    %v6629 = vpack.c.bf16 %v6509, %v6501
    %v6630 = vpack.c.bf16 %v6510, %v6502
    %v6631 = vpack.c.bf16 %v6511, %v6503
    %v6632 = vpack.c.bf16 %v6512, %v6504
    %v6633 = vpack.c.bf16 %v6521, %v6513
    %v6634 = vpack.c.bf16 %v6522, %v6514
    %v6635 = vpack.c.bf16 %v6523, %v6515
    %v6636 = vpack.c.bf16 %v6524, %v6516
    %v6637 = vpack.c.bf16 %v6525, %v6517
    %v6638 = vpack.c.bf16 %v6526, %v6518
    %v6639 = vpack.c.bf16 %v6527, %v6519
    %v6640 = vpack.c.bf16 %v6528, %v6520
    %v6641 = vpack.c.bf16 %v6537, %v6529
    %v6642 = vpack.c.bf16 %v6538, %v6530
    %v6643 = vpack.c.bf16 %v6539, %v6531
    %v6644 = vpack.c.bf16 %v6540, %v6532
    %v6645 = vpack.c.bf16 %v6541, %v6533
    %v6646 = vpack.c.bf16 %v6542, %v6534
    %v6647 = vpack.c.bf16 %v6543, %v6535
    %v6648 = vpack.c.bf16 %v6544, %v6536
    %v6649 = vpack.c.bf16 %v6553, %v6545
    %v6650 = vpack.c.bf16 %v6554, %v6546
    %v6651 = vpack.c.bf16 %v6555, %v6547
    %v6652 = vpack.c.bf16 %v6556, %v6548
    %v6653 = vpack.c.bf16 %v6557, %v6549
    %v6654 = vpack.c.bf16 %v6558, %v6550
    %v6655 = vpack.c.bf16 %v6559, %v6551
    %v6656 = vpack.c.bf16 %v6560, %v6552
    %v6657 = vpack.c.bf16 %v6569, %v6561
    %v6658 = vpack.c.bf16 %v6570, %v6562
    %v6659 = vpack.c.bf16 %v6571, %v6563
    %v6660 = vpack.c.bf16 %v6572, %v6564
    %v6661 = vpack.c.bf16 %v6573, %v6565
    %v6662 = vpack.c.bf16 %v6574, %v6566
    %v6663 = vpack.c.bf16 %v6575, %v6567
    %v6664 = vpack.c.bf16 %v6576, %v6568
    %v6665 = vpack.c.bf16 %v6585, %v6577
    %v6666 = vpack.c.bf16 %v6586, %v6578
    %v6667 = vpack.c.bf16 %v6587, %v6579
    %v6668 = vpack.c.bf16 %v6588, %v6580
    %v6669 = vpack.c.bf16 %v6589, %v6581
    %v6670 = vpack.c.bf16 %v6590, %v6582
    %v6671 = vpack.c.bf16 %v6591, %v6583
    %v6672 = vpack.c.bf16 %v6592, %v6584
    %v6673 = vpack.c.bf16 %v6601, %v6593
    %v6674 = vpack.c.bf16 %v6602, %v6594
    %v6675 = vpack.c.bf16 %v6603, %v6595
    %v6676 = vpack.c.bf16 %v6604, %v6596
    %v6677 = vpack.c.bf16 %v6605, %v6597
    %v6678 = vpack.c.bf16 %v6606, %v6598
    %v6679 = vpack.c.bf16 %v6607, %v6599
    %v6680 = vpack.c.bf16 %v6608, %v6600
    %v6681 = vpack.c.bf16 %v6617, %v6609
    %v6682 = vpack.c.bf16 %v6618, %v6610
    %v6683 = vpack.c.bf16 %v6619, %v6611
    %v6684 = vpack.c.bf16 %v6620, %v6612
    %v6685 = vpack.c.bf16 %v6621, %v6613
    %v6686 = vpack.c.bf16 %v6622, %v6614
    %v6687 = vpack.c.bf16 %v6623, %v6615
    %v6688 = vpack.c.bf16 %v6624, %v6616
    %s6689 = scalar_lea.vmem [#allocation2], 1024
    %v6690 = vld [vmem:[%s6689] sm:$0xf]
    %v6691 = vld [vmem:[%s6689 + $0x4] sm:$0xf]
    %v6692 = vld [vmem:[%s6689 + $0x8] sm:$0xf]
    %v6693 = vld [vmem:[%s6689 + $0xc] sm:$0xf]
    %v6694 = vld [vmem:[%s6689 + $0x10] sm:$0xf]
    %v6695 = vld [vmem:[%s6689 + $0x14] sm:$0xf]
    %v6696 = vld [vmem:[%s6689 + $0x18] sm:$0xf]
    %v6697 = vld [vmem:[%s6689 + $0x1c] sm:$0xf]
    %v6698 = vld [vmem:[%s6689 + $0x20] sm:$0xf]
    %v6699 = vld [vmem:[%s6689 + $0x24] sm:$0xf]
    %v6700 = vld [vmem:[%s6689 + $0x28] sm:$0xf]
    %v6701 = vld [vmem:[%s6689 + $0x2c] sm:$0xf]
    %v6702 = vld [vmem:[%s6689 + $0x30] sm:$0xf]
    %v6703 = vld [vmem:[%s6689 + $0x34] sm:$0xf]
    %v6704 = vld [vmem:[%s6689 + $0x38] sm:$0xf]
    %v6705 = vld [vmem:[%s6689 + $0x3c] sm:$0xf]
    %v6706 = vld [vmem:[%s6689 + $0x40] sm:$0xf]
    %v6707 = vld [vmem:[%s6689 + $0x44] sm:$0xf]
    %v6708 = vld [vmem:[%s6689 + $0x48] sm:$0xf]
    %v6709 = vld [vmem:[%s6689 + $0x4c] sm:$0xf]
    %v6710 = vld [vmem:[%s6689 + $0x50] sm:$0xf]
    %v6711 = vld [vmem:[%s6689 + $0x54] sm:$0xf]
    %v6712 = vld [vmem:[%s6689 + $0x58] sm:$0xf]
    %v6713 = vld [vmem:[%s6689 + $0x5c] sm:$0xf]
    %v6714 = vld [vmem:[%s6689 + $0x60] sm:$0xf]
    %v6715 = vld [vmem:[%s6689 + $0x64] sm:$0xf]
    %v6716 = vld [vmem:[%s6689 + $0x68] sm:$0xf]
    %v6717 = vld [vmem:[%s6689 + $0x6c] sm:$0xf]
    %v6718 = vld [vmem:[%s6689 + $0x70] sm:$0xf]
    %v6719 = vld [vmem:[%s6689 + $0x74] sm:$0xf]
    %v6720 = vld [vmem:[%s6689 + $0x78] sm:$0xf]
    %v6721 = vld [vmem:[%s6689 + $0x7c] sm:$0xf]
    %v6722 = vld [vmem:[%s6689 + $0x80] sm:$0xf]
    %v6723 = vld [vmem:[%s6689 + $0x84] sm:$0xf]
    %v6724 = vld [vmem:[%s6689 + $0x88] sm:$0xf]
    %v6725 = vld [vmem:[%s6689 + $0x8c] sm:$0xf]
    %v6726 = vld [vmem:[%s6689 + $0x90] sm:$0xf]
    %v6727 = vld [vmem:[%s6689 + $0x94] sm:$0xf]
    %v6728 = vld [vmem:[%s6689 + $0x98] sm:$0xf]
    %v6729 = vld [vmem:[%s6689 + $0x9c] sm:$0xf]
    %v6730 = vld [vmem:[%s6689 + $0xa0] sm:$0xf]
    %v6731 = vld [vmem:[%s6689 + $0xa4] sm:$0xf]
    %v6732 = vld [vmem:[%s6689 + $0xa8] sm:$0xf]
    %v6733 = vld [vmem:[%s6689 + $0xac] sm:$0xf]
    %v6734 = vld [vmem:[%s6689 + $0xb0] sm:$0xf]
    %v6735 = vld [vmem:[%s6689 + $0xb4] sm:$0xf]
    %v6736 = vld [vmem:[%s6689 + $0xb8] sm:$0xf]
    %v6737 = vld [vmem:[%s6689 + $0xbc] sm:$0xf]
    %v6738 = vld [vmem:[%s6689 + $0xc0] sm:$0xf]
    %v6739 = vld [vmem:[%s6689 + $0xc4] sm:$0xf]
    %v6740 = vld [vmem:[%s6689 + $0xc8] sm:$0xf]
    %v6741 = vld [vmem:[%s6689 + $0xcc] sm:$0xf]
    %v6742 = vld [vmem:[%s6689 + $0xd0] sm:$0xf]
    %v6743 = vld [vmem:[%s6689 + $0xd4] sm:$0xf]
    %v6744 = vld [vmem:[%s6689 + $0xd8] sm:$0xf]
    %v6745 = vld [vmem:[%s6689 + $0xdc] sm:$0xf]
    %v6746 = vld [vmem:[%s6689 + $0xe0] sm:$0xf]
    %v6747 = vld [vmem:[%s6689 + $0xe4] sm:$0xf]
    %v6748 = vld [vmem:[%s6689 + $0xe8] sm:$0xf]
    %v6749 = vld [vmem:[%s6689 + $0xec] sm:$0xf]
    %v6750 = vld [vmem:[%s6689 + $0xf0] sm:$0xf]
    %v6751 = vld [vmem:[%s6689 + $0xf4] sm:$0xf]
    %v6752 = vld [vmem:[%s6689 + $0xf8] sm:$0xf]
    %v6753 = vld [vmem:[%s6689 + $0xfc] sm:$0xf]
    %v6754 = vld [vmem:[%s6689 + $0x100] sm:$0xf]
    %v6755 = vld [vmem:[%s6689 + $0x104] sm:$0xf]
    %v6756 = vld [vmem:[%s6689 + $0x108] sm:$0xf]
    %v6757 = vld [vmem:[%s6689 + $0x10c] sm:$0xf]
    %v6758 = vld [vmem:[%s6689 + $0x110] sm:$0xf]
    %v6759 = vld [vmem:[%s6689 + $0x114] sm:$0xf]
    %v6760 = vld [vmem:[%s6689 + $0x118] sm:$0xf]
    %v6761 = vld [vmem:[%s6689 + $0x11c] sm:$0xf]
    %v6762 = vld [vmem:[%s6689 + $0x120] sm:$0xf]
    %v6763 = vld [vmem:[%s6689 + $0x124] sm:$0xf]
    %v6764 = vld [vmem:[%s6689 + $0x128] sm:$0xf]
    %v6765 = vld [vmem:[%s6689 + $0x12c] sm:$0xf]
    %v6766 = vld [vmem:[%s6689 + $0x130] sm:$0xf]
    %v6767 = vld [vmem:[%s6689 + $0x134] sm:$0xf]
    %v6768 = vld [vmem:[%s6689 + $0x138] sm:$0xf]
    %v6769 = vld [vmem:[%s6689 + $0x13c] sm:$0xf]
    %v6770 = vld [vmem:[%s6689 + $0x140] sm:$0xf]
    %v6771 = vld [vmem:[%s6689 + $0x144] sm:$0xf]
    %v6772 = vld [vmem:[%s6689 + $0x148] sm:$0xf]
    %v6773 = vld [vmem:[%s6689 + $0x14c] sm:$0xf]
    %v6774 = vld [vmem:[%s6689 + $0x150] sm:$0xf]
    %v6775 = vld [vmem:[%s6689 + $0x154] sm:$0xf]
    %v6776 = vld [vmem:[%s6689 + $0x158] sm:$0xf]
    %v6777 = vld [vmem:[%s6689 + $0x15c] sm:$0xf]
    %v6778 = vld [vmem:[%s6689 + $0x160] sm:$0xf]
    %v6779 = vld [vmem:[%s6689 + $0x164] sm:$0xf]
    %v6780 = vld [vmem:[%s6689 + $0x168] sm:$0xf]
    %v6781 = vld [vmem:[%s6689 + $0x16c] sm:$0xf]
    %v6782 = vld [vmem:[%s6689 + $0x170] sm:$0xf]
    %v6783 = vld [vmem:[%s6689 + $0x174] sm:$0xf]
    %v6784 = vld [vmem:[%s6689 + $0x178] sm:$0xf]
    %v6785 = vld [vmem:[%s6689 + $0x17c] sm:$0xf]
    %v6786 = vld [vmem:[%s6689 + $0x180] sm:$0xf]
    %v6787 = vld [vmem:[%s6689 + $0x184] sm:$0xf]
    %v6788 = vld [vmem:[%s6689 + $0x188] sm:$0xf]
    %v6789 = vld [vmem:[%s6689 + $0x18c] sm:$0xf]
    %v6790 = vld [vmem:[%s6689 + $0x190] sm:$0xf]
    %v6791 = vld [vmem:[%s6689 + $0x194] sm:$0xf]
    %v6792 = vld [vmem:[%s6689 + $0x198] sm:$0xf]
    %v6793 = vld [vmem:[%s6689 + $0x19c] sm:$0xf]
    %v6794 = vld [vmem:[%s6689 + $0x1a0] sm:$0xf]
    %v6795 = vld [vmem:[%s6689 + $0x1a4] sm:$0xf]
    %v6796 = vld [vmem:[%s6689 + $0x1a8] sm:$0xf]
    %v6797 = vld [vmem:[%s6689 + $0x1ac] sm:$0xf]
    %v6798 = vld [vmem:[%s6689 + $0x1b0] sm:$0xf]
    %v6799 = vld [vmem:[%s6689 + $0x1b4] sm:$0xf]
    %v6800 = vld [vmem:[%s6689 + $0x1b8] sm:$0xf]
    %v6801 = vld [vmem:[%s6689 + $0x1bc] sm:$0xf]
    %v6802 = vld [vmem:[%s6689 + $0x1c0] sm:$0xf]
    %v6803 = vld [vmem:[%s6689 + $0x1c4] sm:$0xf]
    %v6804 = vld [vmem:[%s6689 + $0x1c8] sm:$0xf]
    %v6805 = vld [vmem:[%s6689 + $0x1cc] sm:$0xf]
    %v6806 = vld [vmem:[%s6689 + $0x1d0] sm:$0xf]
    %v6807 = vld [vmem:[%s6689 + $0x1d4] sm:$0xf]
    %v6808 = vld [vmem:[%s6689 + $0x1d8] sm:$0xf]
    %v6809 = vld [vmem:[%s6689 + $0x1dc] sm:$0xf]
    %v6810 = vld [vmem:[%s6689 + $0x1e0] sm:$0xf]
    %v6811 = vld [vmem:[%s6689 + $0x1e4] sm:$0xf]
    %v6812 = vld [vmem:[%s6689 + $0x1e8] sm:$0xf]
    %v6813 = vld [vmem:[%s6689 + $0x1ec] sm:$0xf]
    %v6814 = vld [vmem:[%s6689 + $0x1f0] sm:$0xf]
    %v6815 = vld [vmem:[%s6689 + $0x1f4] sm:$0xf]
    %v6816 = vld [vmem:[%s6689 + $0x1f8] sm:$0xf]
    %v6817 = vld [vmem:[%s6689 + $0x1fc] sm:$0xf]
    %v6946 = vunpack.c.l.b16 %v6690
    %v6947 = vunpack.c.l.b16 %v6691
    %v6948 = vunpack.c.l.b16 %v6692
    %v6949 = vunpack.c.l.b16 %v6693
    %v6950 = vunpack.c.l.b16 %v6694
    %v6951 = vunpack.c.l.b16 %v6695
    %v6952 = vunpack.c.l.b16 %v6696
    %v6953 = vunpack.c.l.b16 %v6697
    %v6954 = vunpack.c.l.b16 %v6698
    %v6955 = vunpack.c.l.b16 %v6699
    %v6956 = vunpack.c.l.b16 %v6700
    %v6957 = vunpack.c.l.b16 %v6701
    %v6958 = vunpack.c.l.b16 %v6702
    %v6959 = vunpack.c.l.b16 %v6703
    %v6960 = vunpack.c.l.b16 %v6704
    %v6961 = vunpack.c.l.b16 %v6705
    %v6962 = vunpack.c.l.b16 %v6706
    %v6963 = vunpack.c.l.b16 %v6707
    %v6964 = vunpack.c.l.b16 %v6708
    %v6965 = vunpack.c.l.b16 %v6709
    %v6966 = vunpack.c.l.b16 %v6710
    %v6967 = vunpack.c.l.b16 %v6711
    %v6968 = vunpack.c.l.b16 %v6712
    %v6969 = vunpack.c.l.b16 %v6713
    %v6970 = vunpack.c.l.b16 %v6714
    %v6971 = vunpack.c.l.b16 %v6715
    %v6972 = vunpack.c.l.b16 %v6716
    %v6973 = vunpack.c.l.b16 %v6717
    %v6974 = vunpack.c.l.b16 %v6718
    %v6975 = vunpack.c.l.b16 %v6719
    %v6976 = vunpack.c.l.b16 %v6720
    %v6977 = vunpack.c.l.b16 %v6721
    %v6978 = vunpack.c.l.b16 %v6722
    %v6979 = vunpack.c.l.b16 %v6723
    %v6980 = vunpack.c.l.b16 %v6724
    %v6981 = vunpack.c.l.b16 %v6725
    %v6982 = vunpack.c.l.b16 %v6726
    %v6983 = vunpack.c.l.b16 %v6727
    %v6984 = vunpack.c.l.b16 %v6728
    %v6985 = vunpack.c.l.b16 %v6729
    %v6986 = vunpack.c.l.b16 %v6730
    %v6987 = vunpack.c.l.b16 %v6731
    %v6988 = vunpack.c.l.b16 %v6732
    %v6989 = vunpack.c.l.b16 %v6733
    %v6990 = vunpack.c.l.b16 %v6734
    %v6991 = vunpack.c.l.b16 %v6735
    %v6992 = vunpack.c.l.b16 %v6736
    %v6993 = vunpack.c.l.b16 %v6737
    %v6994 = vunpack.c.l.b16 %v6738
    %v6995 = vunpack.c.l.b16 %v6739
    %v6996 = vunpack.c.l.b16 %v6740
    %v6997 = vunpack.c.l.b16 %v6741
    %v6998 = vunpack.c.l.b16 %v6742
    %v6999 = vunpack.c.l.b16 %v6743
    %v7000 = vunpack.c.l.b16 %v6744
    %v7001 = vunpack.c.l.b16 %v6745
    %v7002 = vunpack.c.l.b16 %v6746
    %v7003 = vunpack.c.l.b16 %v6747
    %v7004 = vunpack.c.l.b16 %v6748
    %v7005 = vunpack.c.l.b16 %v6749
    %v7006 = vunpack.c.l.b16 %v6750
    %v7007 = vunpack.c.l.b16 %v6751
    %v7008 = vunpack.c.l.b16 %v6752
    %v7009 = vunpack.c.l.b16 %v6753
    %v7010 = vunpack.c.l.b16 %v6754
    %v7011 = vunpack.c.l.b16 %v6755
    %v7012 = vunpack.c.l.b16 %v6756
    %v7013 = vunpack.c.l.b16 %v6757
    %v7014 = vunpack.c.l.b16 %v6758
    %v7015 = vunpack.c.l.b16 %v6759
    %v7016 = vunpack.c.l.b16 %v6760
    %v7017 = vunpack.c.l.b16 %v6761
    %v7018 = vunpack.c.l.b16 %v6762
    %v7019 = vunpack.c.l.b16 %v6763
    %v7020 = vunpack.c.l.b16 %v6764
    %v7021 = vunpack.c.l.b16 %v6765
    %v7022 = vunpack.c.l.b16 %v6766
    %v7023 = vunpack.c.l.b16 %v6767
    %v7024 = vunpack.c.l.b16 %v6768
    %v7025 = vunpack.c.l.b16 %v6769
    %v7026 = vunpack.c.l.b16 %v6770
    %v7027 = vunpack.c.l.b16 %v6771
    %v7028 = vunpack.c.l.b16 %v6772
    %v7029 = vunpack.c.l.b16 %v6773
    %v7030 = vunpack.c.l.b16 %v6774
    %v7031 = vunpack.c.l.b16 %v6775
    %v7032 = vunpack.c.l.b16 %v6776
    %v7033 = vunpack.c.l.b16 %v6777
    %v7034 = vunpack.c.l.b16 %v6778
    %v7035 = vunpack.c.l.b16 %v6779
    %v7036 = vunpack.c.l.b16 %v6780
    %v7037 = vunpack.c.l.b16 %v6781
    %v7038 = vunpack.c.l.b16 %v6782
    %v7039 = vunpack.c.l.b16 %v6783
    %v7040 = vunpack.c.l.b16 %v6784
    %v7041 = vunpack.c.l.b16 %v6785
    %v7042 = vunpack.c.l.b16 %v6786
    %v7043 = vunpack.c.l.b16 %v6787
    %v7044 = vunpack.c.l.b16 %v6788
    %v7045 = vunpack.c.l.b16 %v6789
    %v7046 = vunpack.c.l.b16 %v6790
    %v7047 = vunpack.c.l.b16 %v6791
    %v7048 = vunpack.c.l.b16 %v6792
    %v7049 = vunpack.c.l.b16 %v6793
    %v7050 = vunpack.c.l.b16 %v6794
    %v7051 = vunpack.c.l.b16 %v6795
    %v7052 = vunpack.c.l.b16 %v6796
    %v7053 = vunpack.c.l.b16 %v6797
    %v7054 = vunpack.c.l.b16 %v6798
    %v7055 = vunpack.c.l.b16 %v6799
    %v7056 = vunpack.c.l.b16 %v6800
    %v7057 = vunpack.c.l.b16 %v6801
    %v7058 = vunpack.c.l.b16 %v6802
    %v7059 = vunpack.c.l.b16 %v6803
    %v7060 = vunpack.c.l.b16 %v6804
    %v7061 = vunpack.c.l.b16 %v6805
    %v7062 = vunpack.c.l.b16 %v6806
    %v7063 = vunpack.c.l.b16 %v6807
    %v7064 = vunpack.c.l.b16 %v6808
    %v7065 = vunpack.c.l.b16 %v6809
    %v7066 = vunpack.c.l.b16 %v6810
    %v7067 = vunpack.c.l.b16 %v6811
    %v7068 = vunpack.c.l.b16 %v6812
    %v7069 = vunpack.c.l.b16 %v6813
    %v7070 = vunpack.c.l.b16 %v6814
    %v7071 = vunpack.c.l.b16 %v6815
    %v7072 = vunpack.c.l.b16 %v6816
    %v7073 = vunpack.c.l.b16 %v6817
    %v7074 = vpack.c.b16 %v6947, %v6946
    %v7075 = vpack.c.b16 %v6949, %v6948
    %v7076 = vpack.c.b16 %v6951, %v6950
    %v7077 = vpack.c.b16 %v6953, %v6952
    %v7078 = vpack.c.b16 %v6955, %v6954
    %v7079 = vpack.c.b16 %v6957, %v6956
    %v7080 = vpack.c.b16 %v6959, %v6958
    %v7081 = vpack.c.b16 %v6961, %v6960
    %v7082 = vpack.c.b16 %v6963, %v6962
    %v7083 = vpack.c.b16 %v6965, %v6964
    %v7084 = vpack.c.b16 %v6967, %v6966
    %v7085 = vpack.c.b16 %v6969, %v6968
    %v7086 = vpack.c.b16 %v6971, %v6970
    %v7087 = vpack.c.b16 %v6973, %v6972
    %v7088 = vpack.c.b16 %v6975, %v6974
    %v7089 = vpack.c.b16 %v6977, %v6976
    %v7090 = vpack.c.b16 %v6979, %v6978
    %v7091 = vpack.c.b16 %v6981, %v6980
    %v7092 = vpack.c.b16 %v6983, %v6982
    %v7093 = vpack.c.b16 %v6985, %v6984
    %v7094 = vpack.c.b16 %v6987, %v6986
    %v7095 = vpack.c.b16 %v6989, %v6988
    %v7096 = vpack.c.b16 %v6991, %v6990
    %v7097 = vpack.c.b16 %v6993, %v6992
    %v7098 = vpack.c.b16 %v6995, %v6994
    %v7099 = vpack.c.b16 %v6997, %v6996
    %v7100 = vpack.c.b16 %v6999, %v6998
    %v7101 = vpack.c.b16 %v7001, %v7000
    %v7102 = vpack.c.b16 %v7003, %v7002
    %v7103 = vpack.c.b16 %v7005, %v7004
    %v7104 = vpack.c.b16 %v7007, %v7006
    %v7105 = vpack.c.b16 %v7009, %v7008
    %v7106 = vpack.c.b16 %v7011, %v7010
    %v7107 = vpack.c.b16 %v7013, %v7012
    %v7108 = vpack.c.b16 %v7015, %v7014
    %v7109 = vpack.c.b16 %v7017, %v7016
    %v7110 = vpack.c.b16 %v7019, %v7018
    %v7111 = vpack.c.b16 %v7021, %v7020
    %v7112 = vpack.c.b16 %v7023, %v7022
    %v7113 = vpack.c.b16 %v7025, %v7024
    %v7114 = vpack.c.b16 %v7027, %v7026
    %v7115 = vpack.c.b16 %v7029, %v7028
    %v7116 = vpack.c.b16 %v7031, %v7030
    %v7117 = vpack.c.b16 %v7033, %v7032
    %v7118 = vpack.c.b16 %v7035, %v7034
    %v7119 = vpack.c.b16 %v7037, %v7036
    %v7120 = vpack.c.b16 %v7039, %v7038
    %v7121 = vpack.c.b16 %v7041, %v7040
    %v7122 = vpack.c.b16 %v7043, %v7042
    %v7123 = vpack.c.b16 %v7045, %v7044
    %v7124 = vpack.c.b16 %v7047, %v7046
    %v7125 = vpack.c.b16 %v7049, %v7048
    %v7126 = vpack.c.b16 %v7051, %v7050
    %v7127 = vpack.c.b16 %v7053, %v7052
    %v7128 = vpack.c.b16 %v7055, %v7054
    %v7129 = vpack.c.b16 %v7057, %v7056
    %v7130 = vpack.c.b16 %v7059, %v7058
    %v7131 = vpack.c.b16 %v7061, %v7060
    %v7132 = vpack.c.b16 %v7063, %v7062
    %v7133 = vpack.c.b16 %v7065, %v7064
    %v7134 = vpack.c.b16 %v7067, %v7066
    %v7135 = vpack.c.b16 %v7069, %v7068
    %v7136 = vpack.c.b16 %v7071, %v7070
    %v7137 = vpack.c.b16 %v7073, %v7072
    %7202 = vmatprep.subr.bf16.mxu0 0
    %7203 = vmatpush1.bf16.msra.mxu0 %v7074
    %7204 = vmatprep.subr.bf16.mxu0 0
    %7205 = vmatpush1.bf16.msra.mxu0 %v7075
    %7206 = vmatprep.subr.bf16.mxu0 0
    %7207 = vmatpush1.bf16.msra.mxu0 %v7076
    %7208 = vmatprep.subr.bf16.mxu0 0
    %7209 = vmatpush1.bf16.msra.mxu0 %v7077
    %7210 = vmatprep.subr.bf16.mxu0 0
    %7211 = vmatpush1.bf16.msra.mxu0 %v7078
    %7212 = vmatprep.subr.bf16.mxu0 0
    %7213 = vmatpush1.bf16.msra.mxu0 %v7079
    %7214 = vmatprep.subr.bf16.mxu0 0
    %7215 = vmatpush1.bf16.msra.mxu0 %v7080
    %7216 = vmatprep.subr.bf16.mxu0 0
    %7217 = vmatpush1.bf16.msra.mxu0 %v7081
    %7218 = vmatprep.subr.bf16.mxu0 0
    %7219 = vmatpush1.bf16.msra.mxu0 %v7082
    %7220 = vmatprep.subr.bf16.mxu0 0
    %7221 = vmatpush1.bf16.msra.mxu0 %v7083
    %7222 = vmatprep.subr.bf16.mxu0 0
    %7223 = vmatpush1.bf16.msra.mxu0 %v7084
    %7224 = vmatprep.subr.bf16.mxu0 0
    %7225 = vmatpush1.bf16.msra.mxu0 %v7085
    %7226 = vmatprep.subr.bf16.mxu0 0
    %7227 = vmatpush1.bf16.msra.mxu0 %v7086
    %7228 = vmatprep.subr.bf16.mxu0 0
    %7229 = vmatpush1.bf16.msra.mxu0 %v7087
    %7230 = vmatprep.subr.bf16.mxu0 0
    %7231 = vmatpush1.bf16.msra.mxu0 %v7088
    %7232 = vmatprep.subr.bf16.mxu0 0
    %7233 = vmatpush1.bf16.msra.mxu0 %v7089
    %7234 = vmatprep.mubr.bf16.mxu0 %v6626
    %7235 = vmatmul.mubr.bf16.gmra.mrb[0].mxu0 %v6625
    %v7236 = vpop.f32.mrb[0].mxu0
    %v7237 = vadd.f32 0.0, %v7236
    %v7238 = vpop.f32.mrb[0].mxu0
    %v7239 = vpop.f32.mrb[0].mxu0
    %v7240 = vadd.f32 0.0, %v7239
    %v7241 = vpop.f32.mrb[0].mxu0
    %7242 = vmatprep.mubr.bf16.mxu0 %v6634
    %7243 = vmatmul.mubr.bf16.gmra.mrb[0].mxu0 %v6633
    %v7244 = vpop.f32.mrb[0].mxu0
    %v7245 = vadd.f32 0.0, %v7244
    %v7246 = vpop.f32.mrb[0].mxu0
    %v7247 = vpop.f32.mrb[0].mxu0
    %v7248 = vadd.f32 0.0, %v7247
    %v7249 = vpop.f32.mrb[0].mxu0
    %7250 = vmatprep.mubr.bf16.mxu0 %v6642
    %7251 = vmatmul.mubr.bf16.gmra.mrb[0].mxu0 %v6641
    %v7252 = vpop.f32.mrb[0].mxu0
    %v7253 = vadd.f32 0.0, %v7252
    %v7254 = vpop.f32.mrb[0].mxu0
    %v7255 = vpop.f32.mrb[0].mxu0
    %v7256 = vadd.f32 0.0, %v7255
    %v7257 = vpop.f32.mrb[0].mxu0
    %7258 = vmatprep.mubr.bf16.mxu0 %v6650
    %7259 = vmatmul.mubr.bf16.gmra.mrb[0].mxu0 %v6649
    %v7260 = vpop.f32.mrb[0].mxu0
    %v7261 = vadd.f32 0.0, %v7260
    %v7262 = vpop.f32.mrb[0].mxu0
    %v7263 = vpop.f32.mrb[0].mxu0
    %v7264 = vadd.f32 0.0, %v7263
    %v7265 = vpop.f32.mrb[0].mxu0
    %7266 = vmatprep.mubr.bf16.mxu0 %v6658
    %7267 = vmatmul.mubr.bf16.gmra.mrb[0].mxu0 %v6657
    %v7268 = vpop.f32.mrb[0].mxu0
    %v7269 = vadd.f32 0.0, %v7268
    %v7270 = vpop.f32.mrb[0].mxu0
    %v7271 = vpop.f32.mrb[0].mxu0
    %v7272 = vadd.f32 0.0, %v7271
    %v7273 = vpop.f32.mrb[0].mxu0
    %7274 = vmatprep.mubr.bf16.mxu0 %v6666
    %7275 = vmatmul.mubr.bf16.gmra.mrb[0].mxu0 %v6665
    %v7276 = vpop.f32.mrb[0].mxu0
    %v7277 = vadd.f32 0.0, %v7276
    %v7278 = vpop.f32.mrb[0].mxu0
    %v7279 = vpop.f32.mrb[0].mxu0
    %v7280 = vadd.f32 0.0, %v7279
    %v7281 = vpop.f32.mrb[0].mxu0
    %7282 = vmatprep.mubr.bf16.mxu0 %v6674
    %7283 = vmatmul.mubr.bf16.gmra.mrb[0].mxu0 %v6673
    %v7284 = vpop.f32.mrb[0].mxu0
    %v7285 = vadd.f32 0.0, %v7284
    %v7286 = vpop.f32.mrb[0].mxu0
    %v7287 = vpop.f32.mrb[0].mxu0
    %v7288 = vadd.f32 0.0, %v7287
    %v7289 = vpop.f32.mrb[0].mxu0
    %7290 = vmatprep.mubr.bf16.mxu0 %v6682
    %7291 = vmatmul.mubr.bf16.gmra.mrb[0].mxu0 %v6681
    %v7292 = vpop.f32.mrb[0].mxu0
    %v7293 = vadd.f32 0.0, %v7292
    %v7294 = vpop.f32.mrb[0].mxu0
    %v7295 = vpop.f32.mrb[0].mxu0
    %v7296 = vadd.f32 0.0, %v7295
    %v7297 = vpop.f32.mrb[0].mxu0
    %7298 = vdwg.mxu0
    %7299 = vmatprep.subr.bf16.mxu0 0
    %7300 = vmatpush1.bf16.msra.mxu0 %v7090
    %7301 = vmatprep.subr.bf16.mxu0 0
    %7302 = vmatpush1.bf16.msra.mxu0 %v7091
    %7303 = vmatprep.subr.bf16.mxu0 0
    %7304 = vmatpush1.bf16.msra.mxu0 %v7092
    %7305 = vmatprep.subr.bf16.mxu0 0
    %7306 = vmatpush1.bf16.msra.mxu0 %v7093
    %7307 = vmatprep.subr.bf16.mxu0 0
    %7308 = vmatpush1.bf16.msra.mxu0 %v7094
    %7309 = vmatprep.subr.bf16.mxu0 0
    %7310 = vmatpush1.bf16.msra.mxu0 %v7095
    %7311 = vmatprep.subr.bf16.mxu0 0
    %7312 = vmatpush1.bf16.msra.mxu0 %v7096
    %7313 = vmatprep.subr.bf16.mxu0 0
    %7314 = vmatpush1.bf16.msra.mxu0 %v7097
    %7315 = vmatprep.subr.bf16.mxu0 0
    %7316 = vmatpush1.bf16.msra.mxu0 %v7098
    %7317 = vmatprep.subr.bf16.mxu0 0
    %7318 = vmatpush1.bf16.msra.mxu0 %v7099
    %7319 = vmatprep.subr.bf16.mxu0 0
    %7320 = vmatpush1.bf16.msra.mxu0 %v7100
    %7321 = vmatprep.subr.bf16.mxu0 0
    %7322 = vmatpush1.bf16.msra.mxu0 %v7101
    %7323 = vmatprep.subr.bf16.mxu0 0
    %7324 = vmatpush1.bf16.msra.mxu0 %v7102
    %7325 = vmatprep.subr.bf16.mxu0 0
    %7326 = vmatpush1.bf16.msra.mxu0 %v7103
    %7327 = vmatprep.subr.bf16.mxu0 0
    %7328 = vmatpush1.bf16.msra.mxu0 %v7104
    %7329 = vmatprep.subr.bf16.mxu0 0
    %7330 = vmatpush1.bf16.msra.mxu0 %v7105
    %7331 = vmatprep.mubr.bf16.mxu0 %v6628
    %7332 = vmatmul.mubr.bf16.gmra.mrb[0].mxu0 %v6627
    %v7333 = vpop.f32.mrb[0].mxu0
    %v7334 = vadd.f32 %v7237, %v7333
    %v7335 = vpop.f32.mrb[0].mxu0
    %v7336 = vpop.f32.mrb[0].mxu0
    %v7337 = vadd.f32 %v7240, %v7336
    %v7338 = vpop.f32.mrb[0].mxu0
    %7339 = vmatprep.mubr.bf16.mxu0 %v6636
    %7340 = vmatmul.mubr.bf16.gmra.mrb[0].mxu0 %v6635
    %v7341 = vpop.f32.mrb[0].mxu0
    %v7342 = vadd.f32 %v7245, %v7341
    %v7343 = vpop.f32.mrb[0].mxu0
    %v7344 = vpop.f32.mrb[0].mxu0
    %v7345 = vadd.f32 %v7248, %v7344
    %v7346 = vpop.f32.mrb[0].mxu0
    %7347 = vmatprep.mubr.bf16.mxu0 %v6644
    %7348 = vmatmul.mubr.bf16.gmra.mrb[0].mxu0 %v6643
    %v7349 = vpop.f32.mrb[0].mxu0
    %v7350 = vadd.f32 %v7253, %v7349
    %v7351 = vpop.f32.mrb[0].mxu0
    %v7352 = vpop.f32.mrb[0].mxu0
    %v7353 = vadd.f32 %v7256, %v7352
    %v7354 = vpop.f32.mrb[0].mxu0
    %7355 = vmatprep.mubr.bf16.mxu0 %v6652
    %7356 = vmatmul.mubr.bf16.gmra.mrb[0].mxu0 %v6651
    %v7357 = vpop.f32.mrb[0].mxu0
    %v7358 = vadd.f32 %v7261, %v7357
    %v7359 = vpop.f32.mrb[0].mxu0
    %v7360 = vpop.f32.mrb[0].mxu0
    %v7361 = vadd.f32 %v7264, %v7360
    %v7362 = vpop.f32.mrb[0].mxu0
    %7363 = vmatprep.mubr.bf16.mxu0 %v6660
    %7364 = vmatmul.mubr.bf16.gmra.mrb[0].mxu0 %v6659
    %v7365 = vpop.f32.mrb[0].mxu0
    %v7366 = vadd.f32 %v7269, %v7365
    %v7367 = vpop.f32.mrb[0].mxu0
    %v7368 = vpop.f32.mrb[0].mxu0
    %v7369 = vadd.f32 %v7272, %v7368
    %v7370 = vpop.f32.mrb[0].mxu0
    %7371 = vmatprep.mubr.bf16.mxu0 %v6668
    %7372 = vmatmul.mubr.bf16.gmra.mrb[0].mxu0 %v6667
    %v7373 = vpop.f32.mrb[0].mxu0
    %v7374 = vadd.f32 %v7277, %v7373
    %v7375 = vpop.f32.mrb[0].mxu0
    %v7376 = vpop.f32.mrb[0].mxu0
    %v7377 = vadd.f32 %v7280, %v7376
    %v7378 = vpop.f32.mrb[0].mxu0
    %7379 = vmatprep.mubr.bf16.mxu0 %v6676
    %7380 = vmatmul.mubr.bf16.gmra.mrb[0].mxu0 %v6675
    %v7381 = vpop.f32.mrb[0].mxu0
    %v7382 = vadd.f32 %v7285, %v7381
    %v7383 = vpop.f32.mrb[0].mxu0
    %v7384 = vpop.f32.mrb[0].mxu0
    %v7385 = vadd.f32 %v7288, %v7384
    %v7386 = vpop.f32.mrb[0].mxu0
    %7387 = vmatprep.mubr.bf16.mxu0 %v6684
    %7388 = vmatmul.mubr.bf16.gmra.mrb[0].mxu0 %v6683
    %v7389 = vpop.f32.mrb[0].mxu0
    %v7390 = vadd.f32 %v7293, %v7389
    %v7391 = vpop.f32.mrb[0].mxu0
    %v7392 = vpop.f32.mrb[0].mxu0
    %v7393 = vadd.f32 %v7296, %v7392
    %v7394 = vpop.f32.mrb[0].mxu0
    %7395 = vdwg.mxu0
    %7396 = vmatprep.subr.bf16.mxu0 0
    %7397 = vmatpush1.bf16.msra.mxu0 %v7106
    %7398 = vmatprep.subr.bf16.mxu0 0
    %7399 = vmatpush1.bf16.msra.mxu0 %v7107
    %7400 = vmatprep.subr.bf16.mxu0 0
    %7401 = vmatpush1.bf16.msra.mxu0 %v7108
    %7402 = vmatprep.subr.bf16.mxu0 0
    %7403 = vmatpush1.bf16.msra.mxu0 %v7109
    %7404 = vmatprep.subr.bf16.mxu0 0
    %7405 = vmatpush1.bf16.msra.mxu0 %v7110
    %7406 = vmatprep.subr.bf16.mxu0 0
    %7407 = vmatpush1.bf16.msra.mxu0 %v7111
    %7408 = vmatprep.subr.bf16.mxu0 0
    %7409 = vmatpush1.bf16.msra.mxu0 %v7112
    %7410 = vmatprep.subr.bf16.mxu0 0
    %7411 = vmatpush1.bf16.msra.mxu0 %v7113
    %7412 = vmatprep.subr.bf16.mxu0 0
    %7413 = vmatpush1.bf16.msra.mxu0 %v7114
    %7414 = vmatprep.subr.bf16.mxu0 0
    %7415 = vmatpush1.bf16.msra.mxu0 %v7115
    %7416 = vmatprep.subr.bf16.mxu0 0
    %7417 = vmatpush1.bf16.msra.mxu0 %v7116
    %7418 = vmatprep.subr.bf16.mxu0 0
    %7419 = vmatpush1.bf16.msra.mxu0 %v7117
    %7420 = vmatprep.subr.bf16.mxu0 0
    %7421 = vmatpush1.bf16.msra.mxu0 %v7118
    %7422 = vmatprep.subr.bf16.mxu0 0
    %7423 = vmatpush1.bf16.msra.mxu0 %v7119
    %7424 = vmatprep.subr.bf16.mxu0 0
    %7425 = vmatpush1.bf16.msra.mxu0 %v7120
    %7426 = vmatprep.subr.bf16.mxu0 0
    %7427 = vmatpush1.bf16.msra.mxu0 %v7121
    %7428 = vmatprep.mubr.bf16.mxu0 %v6630
    %7429 = vmatmul.mubr.bf16.gmra.mrb[0].mxu0 %v6629
    %v7430 = vpop.f32.mrb[0].mxu0
    %v7431 = vadd.f32 %v7334, %v7430
    %v7432 = vpop.f32.mrb[0].mxu0
    %v7433 = vpop.f32.mrb[0].mxu0
    %v7434 = vadd.f32 %v7337, %v7433
    %v7435 = vpop.f32.mrb[0].mxu0
    %7436 = vmatprep.mubr.bf16.mxu0 %v6638
    %7437 = vmatmul.mubr.bf16.gmra.mrb[0].mxu0 %v6637
    %v7438 = vpop.f32.mrb[0].mxu0
    %v7439 = vadd.f32 %v7342, %v7438
    %v7440 = vpop.f32.mrb[0].mxu0
    %v7441 = vpop.f32.mrb[0].mxu0
    %v7442 = vadd.f32 %v7345, %v7441
    %v7443 = vpop.f32.mrb[0].mxu0
    %7444 = vmatprep.mubr.bf16.mxu0 %v6646
    %7445 = vmatmul.mubr.bf16.gmra.mrb[0].mxu0 %v6645
    %v7446 = vpop.f32.mrb[0].mxu0
    %v7447 = vadd.f32 %v7350, %v7446
    %v7448 = vpop.f32.mrb[0].mxu0
    %v7449 = vpop.f32.mrb[0].mxu0
    %v7450 = vadd.f32 %v7353, %v7449
    %v7451 = vpop.f32.mrb[0].mxu0
    %7452 = vmatprep.mubr.bf16.mxu0 %v6654
    %7453 = vmatmul.mubr.bf16.gmra.mrb[0].mxu0 %v6653
    %v7454 = vpop.f32.mrb[0].mxu0
    %v7455 = vadd.f32 %v7358, %v7454
    %v7456 = vpop.f32.mrb[0].mxu0
    %v7457 = vpop.f32.mrb[0].mxu0
    %v7458 = vadd.f32 %v7361, %v7457
    %v7459 = vpop.f32.mrb[0].mxu0
    %7460 = vmatprep.mubr.bf16.mxu0 %v6662
    %7461 = vmatmul.mubr.bf16.gmra.mrb[0].mxu0 %v6661
    %v7462 = vpop.f32.mrb[0].mxu0
    %v7463 = vadd.f32 %v7366, %v7462
    %v7464 = vpop.f32.mrb[0].mxu0
    %v7465 = vpop.f32.mrb[0].mxu0
    %v7466 = vadd.f32 %v7369, %v7465
    %v7467 = vpop.f32.mrb[0].mxu0
    %7468 = vmatprep.mubr.bf16.mxu0 %v6670
    %7469 = vmatmul.mubr.bf16.gmra.mrb[0].mxu0 %v6669
    %v7470 = vpop.f32.mrb[0].mxu0
    %v7471 = vadd.f32 %v7374, %v7470
    %v7472 = vpop.f32.mrb[0].mxu0
    %v7473 = vpop.f32.mrb[0].mxu0
    %v7474 = vadd.f32 %v7377, %v7473
    %v7475 = vpop.f32.mrb[0].mxu0
    %7476 = vmatprep.mubr.bf16.mxu0 %v6678
    %7477 = vmatmul.mubr.bf16.gmra.mrb[0].mxu0 %v6677
    %v7478 = vpop.f32.mrb[0].mxu0
    %v7479 = vadd.f32 %v7382, %v7478
    %v7480 = vpop.f32.mrb[0].mxu0
    %v7481 = vpop.f32.mrb[0].mxu0
    %v7482 = vadd.f32 %v7385, %v7481
    %v7483 = vpop.f32.mrb[0].mxu0
    %7484 = vmatprep.mubr.bf16.mxu0 %v6686
    %7485 = vmatmul.mubr.bf16.gmra.mrb[0].mxu0 %v6685
    %v7486 = vpop.f32.mrb[0].mxu0
    %v7487 = vadd.f32 %v7390, %v7486
    %v7488 = vpop.f32.mrb[0].mxu0
    %v7489 = vpop.f32.mrb[0].mxu0
    %v7490 = vadd.f32 %v7393, %v7489
    %v7491 = vpop.f32.mrb[0].mxu0
    %7492 = vdwg.mxu0
    %7493 = vmatprep.subr.bf16.mxu0 0
    %7494 = vmatpush1.bf16.msra.mxu0 %v7122
    %7495 = vmatprep.subr.bf16.mxu0 0
    %7496 = vmatpush1.bf16.msra.mxu0 %v7123
    %7497 = vmatprep.subr.bf16.mxu0 0
    %7498 = vmatpush1.bf16.msra.mxu0 %v7124
    %7499 = vmatprep.subr.bf16.mxu0 0
    %7500 = vmatpush1.bf16.msra.mxu0 %v7125
    %7501 = vmatprep.subr.bf16.mxu0 0
    %7502 = vmatpush1.bf16.msra.mxu0 %v7126
    %7503 = vmatprep.subr.bf16.mxu0 0
    %7504 = vmatpush1.bf16.msra.mxu0 %v7127
    %7505 = vmatprep.subr.bf16.mxu0 0
    %7506 = vmatpush1.bf16.msra.mxu0 %v7128
    %7507 = vmatprep.subr.bf16.mxu0 0
    %7508 = vmatpush1.bf16.msra.mxu0 %v7129
    %7509 = vmatprep.subr.bf16.mxu0 0
    %7510 = vmatpush1.bf16.msra.mxu0 %v7130
    %7511 = vmatprep.subr.bf16.mxu0 0
    %7512 = vmatpush1.bf16.msra.mxu0 %v7131
    %7513 = vmatprep.subr.bf16.mxu0 0
    %7514 = vmatpush1.bf16.msra.mxu0 %v7132
    %7515 = vmatprep.subr.bf16.mxu0 0
    %7516 = vmatpush1.bf16.msra.mxu0 %v7133
    %7517 = vmatprep.subr.bf16.mxu0 0
    %7518 = vmatpush1.bf16.msra.mxu0 %v7134
    %7519 = vmatprep.subr.bf16.mxu0 0
    %7520 = vmatpush1.bf16.msra.mxu0 %v7135
    %7521 = vmatprep.subr.bf16.mxu0 0
    %7522 = vmatpush1.bf16.msra.mxu0 %v7136
    %7523 = vmatprep.subr.bf16.mxu0 0
    %7524 = vmatpush1.bf16.msra.mxu0 %v7137
    %7525 = vmatprep.mubr.bf16.mxu0 %v6632
    %7526 = vmatmul.mubr.bf16.gmra.mrb[0].mxu0 %v6631
    %v7527 = vpop.f32.mrb[0].mxu0
    %v7528 = vadd.f32 %v7431, %v7527
    %v7529 = vpop.f32.mrb[0].mxu0
    %v7530 = vpop.f32.mrb[0].mxu0
    %v7531 = vadd.f32 %v7434, %v7530
    %v7532 = vpop.f32.mrb[0].mxu0
    %7533 = vmatprep.mubr.bf16.mxu0 %v6640
    %7534 = vmatmul.mubr.bf16.gmra.mrb[0].mxu0 %v6639
    %v7535 = vpop.f32.mrb[0].mxu0
    %v7536 = vadd.f32 %v7439, %v7535
    %v7537 = vpop.f32.mrb[0].mxu0
    %v7538 = vpop.f32.mrb[0].mxu0
    %v7539 = vadd.f32 %v7442, %v7538
    %v7540 = vpop.f32.mrb[0].mxu0
    %7541 = vmatprep.mubr.bf16.mxu0 %v6648
    %7542 = vmatmul.mubr.bf16.gmra.mrb[0].mxu0 %v6647
    %v7543 = vpop.f32.mrb[0].mxu0
    %v7544 = vadd.f32 %v7447, %v7543
    %v7545 = vpop.f32.mrb[0].mxu0
    %v7546 = vpop.f32.mrb[0].mxu0
    %v7547 = vadd.f32 %v7450, %v7546
    %v7548 = vpop.f32.mrb[0].mxu0
    %7549 = vmatprep.mubr.bf16.mxu0 %v6656
    %7550 = vmatmul.mubr.bf16.gmra.mrb[0].mxu0 %v6655
    %v7551 = vpop.f32.mrb[0].mxu0
    %v7552 = vadd.f32 %v7455, %v7551
    %v7553 = vpop.f32.mrb[0].mxu0
    %v7554 = vpop.f32.mrb[0].mxu0
    %v7555 = vadd.f32 %v7458, %v7554
    %v7556 = vpop.f32.mrb[0].mxu0
    %7557 = vmatprep.mubr.bf16.mxu0 %v6664
    %7558 = vmatmul.mubr.bf16.gmra.mrb[0].mxu0 %v6663
    %v7559 = vpop.f32.mrb[0].mxu0
    %v7560 = vadd.f32 %v7463, %v7559
    %v7561 = vpop.f32.mrb[0].mxu0
    %v7562 = vpop.f32.mrb[0].mxu0
    %v7563 = vadd.f32 %v7466, %v7562
    %v7564 = vpop.f32.mrb[0].mxu0
    %7565 = vmatprep.mubr.bf16.mxu0 %v6672
    %7566 = vmatmul.mubr.bf16.gmra.mrb[0].mxu0 %v6671
    %v7567 = vpop.f32.mrb[0].mxu0
    %v7568 = vadd.f32 %v7471, %v7567
    %v7569 = vpop.f32.mrb[0].mxu0
    %v7570 = vpop.f32.mrb[0].mxu0
    %v7571 = vadd.f32 %v7474, %v7570
    %v7572 = vpop.f32.mrb[0].mxu0
    %7573 = vmatprep.mubr.bf16.mxu0 %v6680
    %7574 = vmatmul.mubr.bf16.gmra.mrb[0].mxu0 %v6679
    %v7575 = vpop.f32.mrb[0].mxu0
    %v7576 = vadd.f32 %v7479, %v7575
    %v7577 = vpop.f32.mrb[0].mxu0
    %v7578 = vpop.f32.mrb[0].mxu0
    %v7579 = vadd.f32 %v7482, %v7578
    %v7580 = vpop.f32.mrb[0].mxu0
    %7581 = vmatprep.mubr.bf16.mxu0 %v6688
    %7582 = vmatmul.mubr.bf16.gmra.mrb[0].mxu0 %v6687
    %v7583 = vpop.f32.mrb[0].mxu0
    %v7584 = vadd.f32 %v7487, %v7583
    %v7585 = vpop.f32.mrb[0].mxu0
    %v7586 = vpop.f32.mrb[0].mxu0
    %v7587 = vadd.f32 %v7490, %v7586
    %v7588 = vpop.f32.mrb[0].mxu0
    %7589 = vdwg.mxu0
    %v7590 = vadd.f32 %v6305, %v7528
    %v7591 = vadd.f32 %v6306, %v7531
    %v7592 = vadd.f32 %v6307, %v7536
    %v7593 = vadd.f32 %v6308, %v7539
    %v7594 = vadd.f32 %v6309, %v7544
    %v7595 = vadd.f32 %v6310, %v7547
    %v7596 = vadd.f32 %v6311, %v7552
    %v7597 = vadd.f32 %v6312, %v7555
    %v7598 = vadd.f32 %v6313, %v7560
    %v7599 = vadd.f32 %v6314, %v7563
    %v7600 = vadd.f32 %v6315, %v7568
    %v7601 = vadd.f32 %v6316, %v7571
    %v7602 = vadd.f32 %v6317, %v7576
    %v7603 = vadd.f32 %v6318, %v7579
    %v7604 = vadd.f32 %v6319, %v7584
    %v7605 = vadd.f32 %v6320, %v7587
    %s7606 = scalar_lea.vmem [#allocation2], 3072
    %v7607 = vld [vmem:[%s7606] sm:$0xf]
    %v7608 = vld [vmem:[%s7606 + $0x4] sm:$0xf]
    %v7609 = vld [vmem:[%s7606 + $0x8] sm:$0xf]
    %v7610 = vld [vmem:[%s7606 + $0xc] sm:$0xf]
    %v7611 = vld [vmem:[%s7606 + $0x10] sm:$0xf]
    %v7612 = vld [vmem:[%s7606 + $0x14] sm:$0xf]
    %v7613 = vld [vmem:[%s7606 + $0x18] sm:$0xf]
    %v7614 = vld [vmem:[%s7606 + $0x1c] sm:$0xf]
    %v7615 = vld [vmem:[%s7606 + $0x20] sm:$0xf]
    %v7616 = vld [vmem:[%s7606 + $0x24] sm:$0xf]
    %v7617 = vld [vmem:[%s7606 + $0x28] sm:$0xf]
    %v7618 = vld [vmem:[%s7606 + $0x2c] sm:$0xf]
    %v7619 = vld [vmem:[%s7606 + $0x30] sm:$0xf]
    %v7620 = vld [vmem:[%s7606 + $0x34] sm:$0xf]
    %v7621 = vld [vmem:[%s7606 + $0x38] sm:$0xf]
    %v7622 = vld [vmem:[%s7606 + $0x3c] sm:$0xf]
    %v7623 = vld [vmem:[%s7606 + $0x40] sm:$0xf]
    %v7624 = vld [vmem:[%s7606 + $0x44] sm:$0xf]
    %v7625 = vld [vmem:[%s7606 + $0x48] sm:$0xf]
    %v7626 = vld [vmem:[%s7606 + $0x4c] sm:$0xf]
    %v7627 = vld [vmem:[%s7606 + $0x50] sm:$0xf]
    %v7628 = vld [vmem:[%s7606 + $0x54] sm:$0xf]
    %v7629 = vld [vmem:[%s7606 + $0x58] sm:$0xf]
    %v7630 = vld [vmem:[%s7606 + $0x5c] sm:$0xf]
    %v7631 = vld [vmem:[%s7606 + $0x60] sm:$0xf]
    %v7632 = vld [vmem:[%s7606 + $0x64] sm:$0xf]
    %v7633 = vld [vmem:[%s7606 + $0x68] sm:$0xf]
    %v7634 = vld [vmem:[%s7606 + $0x6c] sm:$0xf]
    %v7635 = vld [vmem:[%s7606 + $0x70] sm:$0xf]
    %v7636 = vld [vmem:[%s7606 + $0x74] sm:$0xf]
    %v7637 = vld [vmem:[%s7606 + $0x78] sm:$0xf]
    %v7638 = vld [vmem:[%s7606 + $0x7c] sm:$0xf]
    %v7639 = vld [vmem:[%s7606 + $0x80] sm:$0xf]
    %v7640 = vld [vmem:[%s7606 + $0x84] sm:$0xf]
    %v7641 = vld [vmem:[%s7606 + $0x88] sm:$0xf]
    %v7642 = vld [vmem:[%s7606 + $0x8c] sm:$0xf]
    %v7643 = vld [vmem:[%s7606 + $0x90] sm:$0xf]
    %v7644 = vld [vmem:[%s7606 + $0x94] sm:$0xf]
    %v7645 = vld [vmem:[%s7606 + $0x98] sm:$0xf]
    %v7646 = vld [vmem:[%s7606 + $0x9c] sm:$0xf]
    %v7647 = vld [vmem:[%s7606 + $0xa0] sm:$0xf]
    %v7648 = vld [vmem:[%s7606 + $0xa4] sm:$0xf]
    %v7649 = vld [vmem:[%s7606 + $0xa8] sm:$0xf]
    %v7650 = vld [vmem:[%s7606 + $0xac] sm:$0xf]
    %v7651 = vld [vmem:[%s7606 + $0xb0] sm:$0xf]
    %v7652 = vld [vmem:[%s7606 + $0xb4] sm:$0xf]
    %v7653 = vld [vmem:[%s7606 + $0xb8] sm:$0xf]
    %v7654 = vld [vmem:[%s7606 + $0xbc] sm:$0xf]
    %v7655 = vld [vmem:[%s7606 + $0xc0] sm:$0xf]
    %v7656 = vld [vmem:[%s7606 + $0xc4] sm:$0xf]
    %v7657 = vld [vmem:[%s7606 + $0xc8] sm:$0xf]
    %v7658 = vld [vmem:[%s7606 + $0xcc] sm:$0xf]
    %v7659 = vld [vmem:[%s7606 + $0xd0] sm:$0xf]
    %v7660 = vld [vmem:[%s7606 + $0xd4] sm:$0xf]
    %v7661 = vld [vmem:[%s7606 + $0xd8] sm:$0xf]
    %v7662 = vld [vmem:[%s7606 + $0xdc] sm:$0xf]
    %v7663 = vld [vmem:[%s7606 + $0xe0] sm:$0xf]
    %v7664 = vld [vmem:[%s7606 + $0xe4] sm:$0xf]
    %v7665 = vld [vmem:[%s7606 + $0xe8] sm:$0xf]
    %v7666 = vld [vmem:[%s7606 + $0xec] sm:$0xf]
    %v7667 = vld [vmem:[%s7606 + $0xf0] sm:$0xf]
    %v7668 = vld [vmem:[%s7606 + $0xf4] sm:$0xf]
    %v7669 = vld [vmem:[%s7606 + $0xf8] sm:$0xf]
    %v7670 = vld [vmem:[%s7606 + $0xfc] sm:$0xf]
    %v7671 = vld [vmem:[%s7606 + $0x100] sm:$0xf]
    %v7672 = vld [vmem:[%s7606 + $0x104] sm:$0xf]
    %v7673 = vld [vmem:[%s7606 + $0x108] sm:$0xf]
    %v7674 = vld [vmem:[%s7606 + $0x10c] sm:$0xf]
    %v7675 = vld [vmem:[%s7606 + $0x110] sm:$0xf]
    %v7676 = vld [vmem:[%s7606 + $0x114] sm:$0xf]
    %v7677 = vld [vmem:[%s7606 + $0x118] sm:$0xf]
    %v7678 = vld [vmem:[%s7606 + $0x11c] sm:$0xf]
    %v7679 = vld [vmem:[%s7606 + $0x120] sm:$0xf]
    %v7680 = vld [vmem:[%s7606 + $0x124] sm:$0xf]
    %v7681 = vld [vmem:[%s7606 + $0x128] sm:$0xf]
    %v7682 = vld [vmem:[%s7606 + $0x12c] sm:$0xf]
    %v7683 = vld [vmem:[%s7606 + $0x130] sm:$0xf]
    %v7684 = vld [vmem:[%s7606 + $0x134] sm:$0xf]
    %v7685 = vld [vmem:[%s7606 + $0x138] sm:$0xf]
    %v7686 = vld [vmem:[%s7606 + $0x13c] sm:$0xf]
    %v7687 = vld [vmem:[%s7606 + $0x140] sm:$0xf]
    %v7688 = vld [vmem:[%s7606 + $0x144] sm:$0xf]
    %v7689 = vld [vmem:[%s7606 + $0x148] sm:$0xf]
    %v7690 = vld [vmem:[%s7606 + $0x14c] sm:$0xf]
    %v7691 = vld [vmem:[%s7606 + $0x150] sm:$0xf]
    %v7692 = vld [vmem:[%s7606 + $0x154] sm:$0xf]
    %v7693 = vld [vmem:[%s7606 + $0x158] sm:$0xf]
    %v7694 = vld [vmem:[%s7606 + $0x15c] sm:$0xf]
    %v7695 = vld [vmem:[%s7606 + $0x160] sm:$0xf]
    %v7696 = vld [vmem:[%s7606 + $0x164] sm:$0xf]
    %v7697 = vld [vmem:[%s7606 + $0x168] sm:$0xf]
    %v7698 = vld [vmem:[%s7606 + $0x16c] sm:$0xf]
    %v7699 = vld [vmem:[%s7606 + $0x170] sm:$0xf]
    %v7700 = vld [vmem:[%s7606 + $0x174] sm:$0xf]
    %v7701 = vld [vmem:[%s7606 + $0x178] sm:$0xf]
    %v7702 = vld [vmem:[%s7606 + $0x17c] sm:$0xf]
    %v7703 = vld [vmem:[%s7606 + $0x180] sm:$0xf]
    %v7704 = vld [vmem:[%s7606 + $0x184] sm:$0xf]
    %v7705 = vld [vmem:[%s7606 + $0x188] sm:$0xf]
    %v7706 = vld [vmem:[%s7606 + $0x18c] sm:$0xf]
    %v7707 = vld [vmem:[%s7606 + $0x190] sm:$0xf]
    %v7708 = vld [vmem:[%s7606 + $0x194] sm:$0xf]
    %v7709 = vld [vmem:[%s7606 + $0x198] sm:$0xf]
    %v7710 = vld [vmem:[%s7606 + $0x19c] sm:$0xf]
    %v7711 = vld [vmem:[%s7606 + $0x1a0] sm:$0xf]
    %v7712 = vld [vmem:[%s7606 + $0x1a4] sm:$0xf]
    %v7713 = vld [vmem:[%s7606 + $0x1a8] sm:$0xf]
    %v7714 = vld [vmem:[%s7606 + $0x1ac] sm:$0xf]
    %v7715 = vld [vmem:[%s7606 + $0x1b0] sm:$0xf]
    %v7716 = vld [vmem:[%s7606 + $0x1b4] sm:$0xf]
    %v7717 = vld [vmem:[%s7606 + $0x1b8] sm:$0xf]
    %v7718 = vld [vmem:[%s7606 + $0x1bc] sm:$0xf]
    %v7719 = vld [vmem:[%s7606 + $0x1c0] sm:$0xf]
    %v7720 = vld [vmem:[%s7606 + $0x1c4] sm:$0xf]
    %v7721 = vld [vmem:[%s7606 + $0x1c8] sm:$0xf]
    %v7722 = vld [vmem:[%s7606 + $0x1cc] sm:$0xf]
    %v7723 = vld [vmem:[%s7606 + $0x1d0] sm:$0xf]
    %v7724 = vld [vmem:[%s7606 + $0x1d4] sm:$0xf]
    %v7725 = vld [vmem:[%s7606 + $0x1d8] sm:$0xf]
    %v7726 = vld [vmem:[%s7606 + $0x1dc] sm:$0xf]
    %v7727 = vld [vmem:[%s7606 + $0x1e0] sm:$0xf]
    %v7728 = vld [vmem:[%s7606 + $0x1e4] sm:$0xf]
    %v7729 = vld [vmem:[%s7606 + $0x1e8] sm:$0xf]
    %v7730 = vld [vmem:[%s7606 + $0x1ec] sm:$0xf]
    %v7731 = vld [vmem:[%s7606 + $0x1f0] sm:$0xf]
    %v7732 = vld [vmem:[%s7606 + $0x1f4] sm:$0xf]
    %v7733 = vld [vmem:[%s7606 + $0x1f8] sm:$0xf]
    %v7734 = vld [vmem:[%s7606 + $0x1fc] sm:$0xf]
    %v7863 = vunpack.c.l.b16 %v7607
    %v7864 = vunpack.c.l.b16 %v7608
    %v7865 = vunpack.c.l.b16 %v7609
    %v7866 = vunpack.c.l.b16 %v7610
    %v7867 = vunpack.c.l.b16 %v7611
    %v7868 = vunpack.c.l.b16 %v7612
    %v7869 = vunpack.c.l.b16 %v7613
    %v7870 = vunpack.c.l.b16 %v7614
    %v7871 = vunpack.c.l.b16 %v7615
    %v7872 = vunpack.c.l.b16 %v7616
    %v7873 = vunpack.c.l.b16 %v7617
    %v7874 = vunpack.c.l.b16 %v7618
    %v7875 = vunpack.c.l.b16 %v7619
    %v7876 = vunpack.c.l.b16 %v7620
    %v7877 = vunpack.c.l.b16 %v7621
    %v7878 = vunpack.c.l.b16 %v7622
    %v7879 = vunpack.c.l.b16 %v7623
    %v7880 = vunpack.c.l.b16 %v7624
    %v7881 = vunpack.c.l.b16 %v7625
    %v7882 = vunpack.c.l.b16 %v7626
    %v7883 = vunpack.c.l.b16 %v7627
    %v7884 = vunpack.c.l.b16 %v7628
    %v7885 = vunpack.c.l.b16 %v7629
    %v7886 = vunpack.c.l.b16 %v7630
    %v7887 = vunpack.c.l.b16 %v7631
    %v7888 = vunpack.c.l.b16 %v7632
    %v7889 = vunpack.c.l.b16 %v7633
    %v7890 = vunpack.c.l.b16 %v7634
    %v7891 = vunpack.c.l.b16 %v7635
    %v7892 = vunpack.c.l.b16 %v7636
    %v7893 = vunpack.c.l.b16 %v7637
    %v7894 = vunpack.c.l.b16 %v7638
    %v7895 = vunpack.c.l.b16 %v7639
    %v7896 = vunpack.c.l.b16 %v7640
    %v7897 = vunpack.c.l.b16 %v7641
    %v7898 = vunpack.c.l.b16 %v7642
    %v7899 = vunpack.c.l.b16 %v7643
    %v7900 = vunpack.c.l.b16 %v7644
    %v7901 = vunpack.c.l.b16 %v7645
    %v7902 = vunpack.c.l.b16 %v7646
    %v7903 = vunpack.c.l.b16 %v7647
    %v7904 = vunpack.c.l.b16 %v7648
    %v7905 = vunpack.c.l.b16 %v7649
    %v7906 = vunpack.c.l.b16 %v7650
    %v7907 = vunpack.c.l.b16 %v7651
    %v7908 = vunpack.c.l.b16 %v7652
    %v7909 = vunpack.c.l.b16 %v7653
    %v7910 = vunpack.c.l.b16 %v7654
    %v7911 = vunpack.c.l.b16 %v7655
    %v7912 = vunpack.c.l.b16 %v7656
    %v7913 = vunpack.c.l.b16 %v7657
    %v7914 = vunpack.c.l.b16 %v7658
    %v7915 = vunpack.c.l.b16 %v7659
    %v7916 = vunpack.c.l.b16 %v7660
    %v7917 = vunpack.c.l.b16 %v7661
    %v7918 = vunpack.c.l.b16 %v7662
    %v7919 = vunpack.c.l.b16 %v7663
    %v7920 = vunpack.c.l.b16 %v7664
    %v7921 = vunpack.c.l.b16 %v7665
    %v7922 = vunpack.c.l.b16 %v7666
    %v7923 = vunpack.c.l.b16 %v7667
    %v7924 = vunpack.c.l.b16 %v7668
    %v7925 = vunpack.c.l.b16 %v7669
    %v7926 = vunpack.c.l.b16 %v7670
    %v7927 = vunpack.c.l.b16 %v7671
    %v7928 = vunpack.c.l.b16 %v7672
    %v7929 = vunpack.c.l.b16 %v7673
    %v7930 = vunpack.c.l.b16 %v7674
    %v7931 = vunpack.c.l.b16 %v7675
    %v7932 = vunpack.c.l.b16 %v7676
    %v7933 = vunpack.c.l.b16 %v7677
    %v7934 = vunpack.c.l.b16 %v7678
    %v7935 = vunpack.c.l.b16 %v7679
    %v7936 = vunpack.c.l.b16 %v7680
    %v7937 = vunpack.c.l.b16 %v7681
    %v7938 = vunpack.c.l.b16 %v7682
    %v7939 = vunpack.c.l.b16 %v7683
    %v7940 = vunpack.c.l.b16 %v7684
    %v7941 = vunpack.c.l.b16 %v7685
    %v7942 = vunpack.c.l.b16 %v7686
    %v7943 = vunpack.c.l.b16 %v7687
    %v7944 = vunpack.c.l.b16 %v7688
    %v7945 = vunpack.c.l.b16 %v7689
    %v7946 = vunpack.c.l.b16 %v7690
    %v7947 = vunpack.c.l.b16 %v7691
    %v7948 = vunpack.c.l.b16 %v7692
    %v7949 = vunpack.c.l.b16 %v7693
    %v7950 = vunpack.c.l.b16 %v7694
    %v7951 = vunpack.c.l.b16 %v7695
    %v7952 = vunpack.c.l.b16 %v7696
    %v7953 = vunpack.c.l.b16 %v7697
    %v7954 = vunpack.c.l.b16 %v7698
    %v7955 = vunpack.c.l.b16 %v7699
    %v7956 = vunpack.c.l.b16 %v7700
    %v7957 = vunpack.c.l.b16 %v7701
    %v7958 = vunpack.c.l.b16 %v7702
    %v7959 = vunpack.c.l.b16 %v7703
    %v7960 = vunpack.c.l.b16 %v7704
    %v7961 = vunpack.c.l.b16 %v7705
    %v7962 = vunpack.c.l.b16 %v7706
    %v7963 = vunpack.c.l.b16 %v7707
    %v7964 = vunpack.c.l.b16 %v7708
    %v7965 = vunpack.c.l.b16 %v7709
    %v7966 = vunpack.c.l.b16 %v7710
    %v7967 = vunpack.c.l.b16 %v7711
    %v7968 = vunpack.c.l.b16 %v7712
    %v7969 = vunpack.c.l.b16 %v7713
    %v7970 = vunpack.c.l.b16 %v7714
    %v7971 = vunpack.c.l.b16 %v7715
    %v7972 = vunpack.c.l.b16 %v7716
    %v7973 = vunpack.c.l.b16 %v7717
    %v7974 = vunpack.c.l.b16 %v7718
    %v7975 = vunpack.c.l.b16 %v7719
    %v7976 = vunpack.c.l.b16 %v7720
    %v7977 = vunpack.c.l.b16 %v7721
    %v7978 = vunpack.c.l.b16 %v7722
    %v7979 = vunpack.c.l.b16 %v7723
    %v7980 = vunpack.c.l.b16 %v7724
    %v7981 = vunpack.c.l.b16 %v7725
    %v7982 = vunpack.c.l.b16 %v7726
    %v7983 = vunpack.c.l.b16 %v7727
    %v7984 = vunpack.c.l.b16 %v7728
    %v7985 = vunpack.c.l.b16 %v7729
    %v7986 = vunpack.c.l.b16 %v7730
    %v7987 = vunpack.c.l.b16 %v7731
    %v7988 = vunpack.c.l.b16 %v7732
    %v7989 = vunpack.c.l.b16 %v7733
    %v7990 = vunpack.c.l.b16 %v7734
    %v7991 = vpack.c.b16 %v7864, %v7863
    %v7992 = vpack.c.b16 %v7866, %v7865
    %v7993 = vpack.c.b16 %v7868, %v7867
    %v7994 = vpack.c.b16 %v7870, %v7869
    %v7995 = vpack.c.b16 %v7872, %v7871
    %v7996 = vpack.c.b16 %v7874, %v7873
    %v7997 = vpack.c.b16 %v7876, %v7875
    %v7998 = vpack.c.b16 %v7878, %v7877
    %v7999 = vpack.c.b16 %v7880, %v7879
    %v8000 = vpack.c.b16 %v7882, %v7881
    %v8001 = vpack.c.b16 %v7884, %v7883
    %v8002 = vpack.c.b16 %v7886, %v7885
    %v8003 = vpack.c.b16 %v7888, %v7887
    %v8004 = vpack.c.b16 %v7890, %v7889
    %v8005 = vpack.c.b16 %v7892, %v7891
    %v8006 = vpack.c.b16 %v7894, %v7893
    %v8007 = vpack.c.b16 %v7896, %v7895
    %v8008 = vpack.c.b16 %v7898, %v7897
    %v8009 = vpack.c.b16 %v7900, %v7899
    %v8010 = vpack.c.b16 %v7902, %v7901
    %v8011 = vpack.c.b16 %v7904, %v7903
    %v8012 = vpack.c.b16 %v7906, %v7905
    %v8013 = vpack.c.b16 %v7908, %v7907
    %v8014 = vpack.c.b16 %v7910, %v7909
    %v8015 = vpack.c.b16 %v7912, %v7911
    %v8016 = vpack.c.b16 %v7914, %v7913
    %v8017 = vpack.c.b16 %v7916, %v7915
    %v8018 = vpack.c.b16 %v7918, %v7917
    %v8019 = vpack.c.b16 %v7920, %v7919
    %v8020 = vpack.c.b16 %v7922, %v7921
    %v8021 = vpack.c.b16 %v7924, %v7923
    %v8022 = vpack.c.b16 %v7926, %v7925
    %v8023 = vpack.c.b16 %v7928, %v7927
    %v8024 = vpack.c.b16 %v7930, %v7929
    %v8025 = vpack.c.b16 %v7932, %v7931
    %v8026 = vpack.c.b16 %v7934, %v7933
    %v8027 = vpack.c.b16 %v7936, %v7935
    %v8028 = vpack.c.b16 %v7938, %v7937
    %v8029 = vpack.c.b16 %v7940, %v7939
    %v8030 = vpack.c.b16 %v7942, %v7941
    %v8031 = vpack.c.b16 %v7944, %v7943
    %v8032 = vpack.c.b16 %v7946, %v7945
    %v8033 = vpack.c.b16 %v7948, %v7947
    %v8034 = vpack.c.b16 %v7950, %v7949
    %v8035 = vpack.c.b16 %v7952, %v7951
    %v8036 = vpack.c.b16 %v7954, %v7953
    %v8037 = vpack.c.b16 %v7956, %v7955
    %v8038 = vpack.c.b16 %v7958, %v7957
    %v8039 = vpack.c.b16 %v7960, %v7959
    %v8040 = vpack.c.b16 %v7962, %v7961
    %v8041 = vpack.c.b16 %v7964, %v7963
    %v8042 = vpack.c.b16 %v7966, %v7965
    %v8043 = vpack.c.b16 %v7968, %v7967
    %v8044 = vpack.c.b16 %v7970, %v7969
    %v8045 = vpack.c.b16 %v7972, %v7971
    %v8046 = vpack.c.b16 %v7974, %v7973
    %v8047 = vpack.c.b16 %v7976, %v7975
    %v8048 = vpack.c.b16 %v7978, %v7977
    %v8049 = vpack.c.b16 %v7980, %v7979
    %v8050 = vpack.c.b16 %v7982, %v7981
    %v8051 = vpack.c.b16 %v7984, %v7983
    %v8052 = vpack.c.b16 %v7986, %v7985
    %v8053 = vpack.c.b16 %v7988, %v7987
    %v8054 = vpack.c.b16 %v7990, %v7989
    %8119 = vmatprep.subr.bf16.mxu0 0
    %8120 = vmatpush1.bf16.msra.mxu0 %v7991
    %8121 = vmatprep.subr.bf16.mxu0 0
    %8122 = vmatpush1.bf16.msra.mxu0 %v7992
    %8123 = vmatprep.subr.bf16.mxu0 0
    %8124 = vmatpush1.bf16.msra.mxu0 %v7993
    %8125 = vmatprep.subr.bf16.mxu0 0
    %8126 = vmatpush1.bf16.msra.mxu0 %v7994
    %8127 = vmatprep.subr.bf16.mxu0 0
    %8128 = vmatpush1.bf16.msra.mxu0 %v7995
    %8129 = vmatprep.subr.bf16.mxu0 0
    %8130 = vmatpush1.bf16.msra.mxu0 %v7996
    %8131 = vmatprep.subr.bf16.mxu0 0
    %8132 = vmatpush1.bf16.msra.mxu0 %v7997
    %8133 = vmatprep.subr.bf16.mxu0 0
    %8134 = vmatpush1.bf16.msra.mxu0 %v7998
    %8135 = vmatprep.subr.bf16.mxu0 0
    %8136 = vmatpush1.bf16.msra.mxu0 %v7999
    %8137 = vmatprep.subr.bf16.mxu0 0
    %8138 = vmatpush1.bf16.msra.mxu0 %v8000
    %8139 = vmatprep.subr.bf16.mxu0 0
    %8140 = vmatpush1.bf16.msra.mxu0 %v8001
    %8141 = vmatprep.subr.bf16.mxu0 0
    %8142 = vmatpush1.bf16.msra.mxu0 %v8002
    %8143 = vmatprep.subr.bf16.mxu0 0
    %8144 = vmatpush1.bf16.msra.mxu0 %v8003
    %8145 = vmatprep.subr.bf16.mxu0 0
    %8146 = vmatpush1.bf16.msra.mxu0 %v8004
    %8147 = vmatprep.subr.bf16.mxu0 0
    %8148 = vmatpush1.bf16.msra.mxu0 %v8005
    %8149 = vmatprep.subr.bf16.mxu0 0
    %8150 = vmatpush1.bf16.msra.mxu0 %v8006
    %8151 = vmatprep.mubr.bf16.mxu0 %v6626
    %8152 = vmatmul.mubr.bf16.gmra.mrb[0].mxu0 %v6625
    %v8153 = vpop.f32.mrb[0].mxu0
    %v8154 = vadd.f32 0.0, %v8153
    %v8155 = vpop.f32.mrb[0].mxu0
    %v8156 = vpop.f32.mrb[0].mxu0
    %v8157 = vadd.f32 0.0, %v8156
    %v8158 = vpop.f32.mrb[0].mxu0
    %8159 = vmatprep.mubr.bf16.mxu0 %v6634
    %8160 = vmatmul.mubr.bf16.gmra.mrb[0].mxu0 %v6633
    %v8161 = vpop.f32.mrb[0].mxu0
    %v8162 = vadd.f32 0.0, %v8161
    %v8163 = vpop.f32.mrb[0].mxu0
    %v8164 = vpop.f32.mrb[0].mxu0
    %v8165 = vadd.f32 0.0, %v8164
    %v8166 = vpop.f32.mrb[0].mxu0
    %8167 = vmatprep.mubr.bf16.mxu0 %v6642
    %8168 = vmatmul.mubr.bf16.gmra.mrb[0].mxu0 %v6641
    %v8169 = vpop.f32.mrb[0].mxu0
    %v8170 = vadd.f32 0.0, %v8169
    %v8171 = vpop.f32.mrb[0].mxu0
    %v8172 = vpop.f32.mrb[0].mxu0
    %v8173 = vadd.f32 0.0, %v8172
    %v8174 = vpop.f32.mrb[0].mxu0
    %8175 = vmatprep.mubr.bf16.mxu0 %v6650
    %8176 = vmatmul.mubr.bf16.gmra.mrb[0].mxu0 %v6649
    %v8177 = vpop.f32.mrb[0].mxu0
    %v8178 = vadd.f32 0.0, %v8177
    %v8179 = vpop.f32.mrb[0].mxu0
    %v8180 = vpop.f32.mrb[0].mxu0
    %v8181 = vadd.f32 0.0, %v8180
    %v8182 = vpop.f32.mrb[0].mxu0
    %8183 = vmatprep.mubr.bf16.mxu0 %v6658
    %8184 = vmatmul.mubr.bf16.gmra.mrb[0].mxu0 %v6657
    %v8185 = vpop.f32.mrb[0].mxu0
    %v8186 = vadd.f32 0.0, %v8185
    %v8187 = vpop.f32.mrb[0].mxu0
    %v8188 = vpop.f32.mrb[0].mxu0
    %v8189 = vadd.f32 0.0, %v8188
    %v8190 = vpop.f32.mrb[0].mxu0
    %8191 = vmatprep.mubr.bf16.mxu0 %v6666
    %8192 = vmatmul.mubr.bf16.gmra.mrb[0].mxu0 %v6665
    %v8193 = vpop.f32.mrb[0].mxu0
    %v8194 = vadd.f32 0.0, %v8193
    %v8195 = vpop.f32.mrb[0].mxu0
    %v8196 = vpop.f32.mrb[0].mxu0
    %v8197 = vadd.f32 0.0, %v8196
    %v8198 = vpop.f32.mrb[0].mxu0
    %8199 = vmatprep.mubr.bf16.mxu0 %v6674
    %8200 = vmatmul.mubr.bf16.gmra.mrb[0].mxu0 %v6673
    %v8201 = vpop.f32.mrb[0].mxu0
    %v8202 = vadd.f32 0.0, %v8201
    %v8203 = vpop.f32.mrb[0].mxu0
    %v8204 = vpop.f32.mrb[0].mxu0
    %v8205 = vadd.f32 0.0, %v8204
    %v8206 = vpop.f32.mrb[0].mxu0
    %8207 = vmatprep.mubr.bf16.mxu0 %v6682
    %8208 = vmatmul.mubr.bf16.gmra.mrb[0].mxu0 %v6681
    %v8209 = vpop.f32.mrb[0].mxu0
    %v8210 = vadd.f32 0.0, %v8209
    %v8211 = vpop.f32.mrb[0].mxu0
    %v8212 = vpop.f32.mrb[0].mxu0
    %v8213 = vadd.f32 0.0, %v8212
    %v8214 = vpop.f32.mrb[0].mxu0
    %8215 = vdwg.mxu0
    %8216 = vmatprep.subr.bf16.mxu0 0
    %8217 = vmatpush1.bf16.msra.mxu0 %v8007
    %8218 = vmatprep.subr.bf16.mxu0 0
    %8219 = vmatpush1.bf16.msra.mxu0 %v8008
    %8220 = vmatprep.subr.bf16.mxu0 0
    %8221 = vmatpush1.bf16.msra.mxu0 %v8009
    %8222 = vmatprep.subr.bf16.mxu0 0
    %8223 = vmatpush1.bf16.msra.mxu0 %v8010
    %8224 = vmatprep.subr.bf16.mxu0 0
    %8225 = vmatpush1.bf16.msra.mxu0 %v8011
    %8226 = vmatprep.subr.bf16.mxu0 0
    %8227 = vmatpush1.bf16.msra.mxu0 %v8012
    %8228 = vmatprep.subr.bf16.mxu0 0
    %8229 = vmatpush1.bf16.msra.mxu0 %v8013
    %8230 = vmatprep.subr.bf16.mxu0 0
    %8231 = vmatpush1.bf16.msra.mxu0 %v8014
    %8232 = vmatprep.subr.bf16.mxu0 0
    %8233 = vmatpush1.bf16.msra.mxu0 %v8015
    %8234 = vmatprep.subr.bf16.mxu0 0
    %8235 = vmatpush1.bf16.msra.mxu0 %v8016
    %8236 = vmatprep.subr.bf16.mxu0 0
    %8237 = vmatpush1.bf16.msra.mxu0 %v8017
    %8238 = vmatprep.subr.bf16.mxu0 0
    %8239 = vmatpush1.bf16.msra.mxu0 %v8018
    %8240 = vmatprep.subr.bf16.mxu0 0
    %8241 = vmatpush1.bf16.msra.mxu0 %v8019
    %8242 = vmatprep.subr.bf16.mxu0 0
    %8243 = vmatpush1.bf16.msra.mxu0 %v8020
    %8244 = vmatprep.subr.bf16.mxu0 0
    %8245 = vmatpush1.bf16.msra.mxu0 %v8021
    %8246 = vmatprep.subr.bf16.mxu0 0
    %8247 = vmatpush1.bf16.msra.mxu0 %v8022
    %8248 = vmatprep.mubr.bf16.mxu0 %v6628
    %8249 = vmatmul.mubr.bf16.gmra.mrb[0].mxu0 %v6627
    %v8250 = vpop.f32.mrb[0].mxu0
    %v8251 = vadd.f32 %v8154, %v8250
    %v8252 = vpop.f32.mrb[0].mxu0
    %v8253 = vpop.f32.mrb[0].mxu0
    %v8254 = vadd.f32 %v8157, %v8253
    %v8255 = vpop.f32.mrb[0].mxu0
    %8256 = vmatprep.mubr.bf16.mxu0 %v6636
    %8257 = vmatmul.mubr.bf16.gmra.mrb[0].mxu0 %v6635
    %v8258 = vpop.f32.mrb[0].mxu0
    %v8259 = vadd.f32 %v8162, %v8258
    %v8260 = vpop.f32.mrb[0].mxu0
    %v8261 = vpop.f32.mrb[0].mxu0
    %v8262 = vadd.f32 %v8165, %v8261
    %v8263 = vpop.f32.mrb[0].mxu0
    %8264 = vmatprep.mubr.bf16.mxu0 %v6644
    %8265 = vmatmul.mubr.bf16.gmra.mrb[0].mxu0 %v6643
    %v8266 = vpop.f32.mrb[0].mxu0
    %v8267 = vadd.f32 %v8170, %v8266
    %v8268 = vpop.f32.mrb[0].mxu0
    %v8269 = vpop.f32.mrb[0].mxu0
    %v8270 = vadd.f32 %v8173, %v8269
    %v8271 = vpop.f32.mrb[0].mxu0
    %8272 = vmatprep.mubr.bf16.mxu0 %v6652
    %8273 = vmatmul.mubr.bf16.gmra.mrb[0].mxu0 %v6651
    %v8274 = vpop.f32.mrb[0].mxu0
    %v8275 = vadd.f32 %v8178, %v8274
    %v8276 = vpop.f32.mrb[0].mxu0
    %v8277 = vpop.f32.mrb[0].mxu0
    %v8278 = vadd.f32 %v8181, %v8277
    %v8279 = vpop.f32.mrb[0].mxu0
    %8280 = vmatprep.mubr.bf16.mxu0 %v6660
    %8281 = vmatmul.mubr.bf16.gmra.mrb[0].mxu0 %v6659
    %v8282 = vpop.f32.mrb[0].mxu0
    %v8283 = vadd.f32 %v8186, %v8282
    %v8284 = vpop.f32.mrb[0].mxu0
    %v8285 = vpop.f32.mrb[0].mxu0
    %v8286 = vadd.f32 %v8189, %v8285
    %v8287 = vpop.f32.mrb[0].mxu0
    %8288 = vmatprep.mubr.bf16.mxu0 %v6668
    %8289 = vmatmul.mubr.bf16.gmra.mrb[0].mxu0 %v6667
    %v8290 = vpop.f32.mrb[0].mxu0
    %v8291 = vadd.f32 %v8194, %v8290
    %v8292 = vpop.f32.mrb[0].mxu0
    %v8293 = vpop.f32.mrb[0].mxu0
    %v8294 = vadd.f32 %v8197, %v8293
    %v8295 = vpop.f32.mrb[0].mxu0
    %8296 = vmatprep.mubr.bf16.mxu0 %v6676
    %8297 = vmatmul.mubr.bf16.gmra.mrb[0].mxu0 %v6675
    %v8298 = vpop.f32.mrb[0].mxu0
    %v8299 = vadd.f32 %v8202, %v8298
    %v8300 = vpop.f32.mrb[0].mxu0
    %v8301 = vpop.f32.mrb[0].mxu0
    %v8302 = vadd.f32 %v8205, %v8301
    %v8303 = vpop.f32.mrb[0].mxu0
    %8304 = vmatprep.mubr.bf16.mxu0 %v6684
    %8305 = vmatmul.mubr.bf16.gmra.mrb[0].mxu0 %v6683
    %v8306 = vpop.f32.mrb[0].mxu0
    %v8307 = vadd.f32 %v8210, %v8306
    %v8308 = vpop.f32.mrb[0].mxu0
    %v8309 = vpop.f32.mrb[0].mxu0
    %v8310 = vadd.f32 %v8213, %v8309
    %v8311 = vpop.f32.mrb[0].mxu0
    %8312 = vdwg.mxu0
    %8313 = vmatprep.subr.bf16.mxu0 0
    %8314 = vmatpush1.bf16.msra.mxu0 %v8023
    %8315 = vmatprep.subr.bf16.mxu0 0
    %8316 = vmatpush1.bf16.msra.mxu0 %v8024
    %8317 = vmatprep.subr.bf16.mxu0 0
    %8318 = vmatpush1.bf16.msra.mxu0 %v8025
    %8319 = vmatprep.subr.bf16.mxu0 0
    %8320 = vmatpush1.bf16.msra.mxu0 %v8026
    %8321 = vmatprep.subr.bf16.mxu0 0
    %8322 = vmatpush1.bf16.msra.mxu0 %v8027
    %8323 = vmatprep.subr.bf16.mxu0 0
    %8324 = vmatpush1.bf16.msra.mxu0 %v8028
    %8325 = vmatprep.subr.bf16.mxu0 0
    %8326 = vmatpush1.bf16.msra.mxu0 %v8029
    %8327 = vmatprep.subr.bf16.mxu0 0
    %8328 = vmatpush1.bf16.msra.mxu0 %v8030
    %8329 = vmatprep.subr.bf16.mxu0 0
    %8330 = vmatpush1.bf16.msra.mxu0 %v8031
    %8331 = vmatprep.subr.bf16.mxu0 0
    %8332 = vmatpush1.bf16.msra.mxu0 %v8032
    %8333 = vmatprep.subr.bf16.mxu0 0
    %8334 = vmatpush1.bf16.msra.mxu0 %v8033
    %8335 = vmatprep.subr.bf16.mxu0 0
    %8336 = vmatpush1.bf16.msra.mxu0 %v8034
    %8337 = vmatprep.subr.bf16.mxu0 0
    %8338 = vmatpush1.bf16.msra.mxu0 %v8035
    %8339 = vmatprep.subr.bf16.mxu0 0
    %8340 = vmatpush1.bf16.msra.mxu0 %v8036
    %8341 = vmatprep.subr.bf16.mxu0 0
    %8342 = vmatpush1.bf16.msra.mxu0 %v8037
    %8343 = vmatprep.subr.bf16.mxu0 0
    %8344 = vmatpush1.bf16.msra.mxu0 %v8038
    %8345 = vmatprep.mubr.bf16.mxu0 %v6630
    %8346 = vmatmul.mubr.bf16.gmra.mrb[0].mxu0 %v6629
    %v8347 = vpop.f32.mrb[0].mxu0
    %v8348 = vadd.f32 %v8251, %v8347
    %v8349 = vpop.f32.mrb[0].mxu0
    %v8350 = vpop.f32.mrb[0].mxu0
    %v8351 = vadd.f32 %v8254, %v8350
    %v8352 = vpop.f32.mrb[0].mxu0
    %8353 = vmatprep.mubr.bf16.mxu0 %v6638
    %8354 = vmatmul.mubr.bf16.gmra.mrb[0].mxu0 %v6637
    %v8355 = vpop.f32.mrb[0].mxu0
    %v8356 = vadd.f32 %v8259, %v8355
    %v8357 = vpop.f32.mrb[0].mxu0
    %v8358 = vpop.f32.mrb[0].mxu0
    %v8359 = vadd.f32 %v8262, %v8358
    %v8360 = vpop.f32.mrb[0].mxu0
    %8361 = vmatprep.mubr.bf16.mxu0 %v6646
    %8362 = vmatmul.mubr.bf16.gmra.mrb[0].mxu0 %v6645
    %v8363 = vpop.f32.mrb[0].mxu0
    %v8364 = vadd.f32 %v8267, %v8363
    %v8365 = vpop.f32.mrb[0].mxu0
    %v8366 = vpop.f32.mrb[0].mxu0
    %v8367 = vadd.f32 %v8270, %v8366
    %v8368 = vpop.f32.mrb[0].mxu0
    %8369 = vmatprep.mubr.bf16.mxu0 %v6654
    %8370 = vmatmul.mubr.bf16.gmra.mrb[0].mxu0 %v6653
    %v8371 = vpop.f32.mrb[0].mxu0
    %v8372 = vadd.f32 %v8275, %v8371
    %v8373 = vpop.f32.mrb[0].mxu0
    %v8374 = vpop.f32.mrb[0].mxu0
    %v8375 = vadd.f32 %v8278, %v8374
    %v8376 = vpop.f32.mrb[0].mxu0
    %8377 = vmatprep.mubr.bf16.mxu0 %v6662
    %8378 = vmatmul.mubr.bf16.gmra.mrb[0].mxu0 %v6661
    %v8379 = vpop.f32.mrb[0].mxu0
    %v8380 = vadd.f32 %v8283, %v8379
    %v8381 = vpop.f32.mrb[0].mxu0
    %v8382 = vpop.f32.mrb[0].mxu0
    %v8383 = vadd.f32 %v8286, %v8382
    %v8384 = vpop.f32.mrb[0].mxu0
    %8385 = vmatprep.mubr.bf16.mxu0 %v6670
    %8386 = vmatmul.mubr.bf16.gmra.mrb[0].mxu0 %v6669
    %v8387 = vpop.f32.mrb[0].mxu0
    %v8388 = vadd.f32 %v8291, %v8387
    %v8389 = vpop.f32.mrb[0].mxu0
    %v8390 = vpop.f32.mrb[0].mxu0
    %v8391 = vadd.f32 %v8294, %v8390
    %v8392 = vpop.f32.mrb[0].mxu0
    %8393 = vmatprep.mubr.bf16.mxu0 %v6678
    %8394 = vmatmul.mubr.bf16.gmra.mrb[0].mxu0 %v6677
    %v8395 = vpop.f32.mrb[0].mxu0
    %v8396 = vadd.f32 %v8299, %v8395
    %v8397 = vpop.f32.mrb[0].mxu0
    %v8398 = vpop.f32.mrb[0].mxu0
    %v8399 = vadd.f32 %v8302, %v8398
    %v8400 = vpop.f32.mrb[0].mxu0
    %8401 = vmatprep.mubr.bf16.mxu0 %v6686
    %8402 = vmatmul.mubr.bf16.gmra.mrb[0].mxu0 %v6685
    %v8403 = vpop.f32.mrb[0].mxu0
    %v8404 = vadd.f32 %v8307, %v8403
    %v8405 = vpop.f32.mrb[0].mxu0
    %v8406 = vpop.f32.mrb[0].mxu0
    %v8407 = vadd.f32 %v8310, %v8406
    %v8408 = vpop.f32.mrb[0].mxu0
    %8409 = vdwg.mxu0
    %8410 = vmatprep.subr.bf16.mxu0 0
    %8411 = vmatpush1.bf16.msra.mxu0 %v8039
    %8412 = vmatprep.subr.bf16.mxu0 0
    %8413 = vmatpush1.bf16.msra.mxu0 %v8040
    %8414 = vmatprep.subr.bf16.mxu0 0
    %8415 = vmatpush1.bf16.msra.mxu0 %v8041
    %8416 = vmatprep.subr.bf16.mxu0 0
    %8417 = vmatpush1.bf16.msra.mxu0 %v8042
    %8418 = vmatprep.subr.bf16.mxu0 0
    %8419 = vmatpush1.bf16.msra.mxu0 %v8043
    %8420 = vmatprep.subr.bf16.mxu0 0
    %8421 = vmatpush1.bf16.msra.mxu0 %v8044
    %8422 = vmatprep.subr.bf16.mxu0 0
    %8423 = vmatpush1.bf16.msra.mxu0 %v8045
    %8424 = vmatprep.subr.bf16.mxu0 0
    %8425 = vmatpush1.bf16.msra.mxu0 %v8046
    %8426 = vmatprep.subr.bf16.mxu0 0
    %8427 = vmatpush1.bf16.msra.mxu0 %v8047
    %8428 = vmatprep.subr.bf16.mxu0 0
    %8429 = vmatpush1.bf16.msra.mxu0 %v8048
    %8430 = vmatprep.subr.bf16.mxu0 0
    %8431 = vmatpush1.bf16.msra.mxu0 %v8049
    %8432 = vmatprep.subr.bf16.mxu0 0
    %8433 = vmatpush1.bf16.msra.mxu0 %v8050
    %8434 = vmatprep.subr.bf16.mxu0 0
    %8435 = vmatpush1.bf16.msra.mxu0 %v8051
    %8436 = vmatprep.subr.bf16.mxu0 0
    %8437 = vmatpush1.bf16.msra.mxu0 %v8052
    %8438 = vmatprep.subr.bf16.mxu0 0
    %8439 = vmatpush1.bf16.msra.mxu0 %v8053
    %8440 = vmatprep.subr.bf16.mxu0 0
    %8441 = vmatpush1.bf16.msra.mxu0 %v8054
    %8442 = vmatprep.mubr.bf16.mxu0 %v6632
    %8443 = vmatmul.mubr.bf16.gmra.mrb[0].mxu0 %v6631
    %v8444 = vpop.f32.mrb[0].mxu0
    %v8445 = vadd.f32 %v8348, %v8444
    %v8446 = vpop.f32.mrb[0].mxu0
    %v8447 = vpop.f32.mrb[0].mxu0
    %v8448 = vadd.f32 %v8351, %v8447
    %v8449 = vpop.f32.mrb[0].mxu0
    %8450 = vmatprep.mubr.bf16.mxu0 %v6640
    %8451 = vmatmul.mubr.bf16.gmra.mrb[0].mxu0 %v6639
    %v8452 = vpop.f32.mrb[0].mxu0
    %v8453 = vadd.f32 %v8356, %v8452
    %v8454 = vpop.f32.mrb[0].mxu0
    %v8455 = vpop.f32.mrb[0].mxu0
    %v8456 = vadd.f32 %v8359, %v8455
    %v8457 = vpop.f32.mrb[0].mxu0
    %8458 = vmatprep.mubr.bf16.mxu0 %v6648
    %8459 = vmatmul.mubr.bf16.gmra.mrb[0].mxu0 %v6647
    %v8460 = vpop.f32.mrb[0].mxu0
    %v8461 = vadd.f32 %v8364, %v8460
    %v8462 = vpop.f32.mrb[0].mxu0
    %v8463 = vpop.f32.mrb[0].mxu0
    %v8464 = vadd.f32 %v8367, %v8463
    %v8465 = vpop.f32.mrb[0].mxu0
    %8466 = vmatprep.mubr.bf16.mxu0 %v6656
    %8467 = vmatmul.mubr.bf16.gmra.mrb[0].mxu0 %v6655
    %v8468 = vpop.f32.mrb[0].mxu0
    %v8469 = vadd.f32 %v8372, %v8468
    %v8470 = vpop.f32.mrb[0].mxu0
    %v8471 = vpop.f32.mrb[0].mxu0
    %v8472 = vadd.f32 %v8375, %v8471
    %v8473 = vpop.f32.mrb[0].mxu0
    %8474 = vmatprep.mubr.bf16.mxu0 %v6664
    %8475 = vmatmul.mubr.bf16.gmra.mrb[0].mxu0 %v6663
    %v8476 = vpop.f32.mrb[0].mxu0
    %v8477 = vadd.f32 %v8380, %v8476
    %v8478 = vpop.f32.mrb[0].mxu0
    %v8479 = vpop.f32.mrb[0].mxu0
    %v8480 = vadd.f32 %v8383, %v8479
    %v8481 = vpop.f32.mrb[0].mxu0
    %8482 = vmatprep.mubr.bf16.mxu0 %v6672
    %8483 = vmatmul.mubr.bf16.gmra.mrb[0].mxu0 %v6671
    %v8484 = vpop.f32.mrb[0].mxu0
    %v8485 = vadd.f32 %v8388, %v8484
    %v8486 = vpop.f32.mrb[0].mxu0
    %v8487 = vpop.f32.mrb[0].mxu0
    %v8488 = vadd.f32 %v8391, %v8487
    %v8489 = vpop.f32.mrb[0].mxu0
    %8490 = vmatprep.mubr.bf16.mxu0 %v6680
    %8491 = vmatmul.mubr.bf16.gmra.mrb[0].mxu0 %v6679
    %v8492 = vpop.f32.mrb[0].mxu0
    %v8493 = vadd.f32 %v8396, %v8492
    %v8494 = vpop.f32.mrb[0].mxu0
    %v8495 = vpop.f32.mrb[0].mxu0
    %v8496 = vadd.f32 %v8399, %v8495
    %v8497 = vpop.f32.mrb[0].mxu0
    %8498 = vmatprep.mubr.bf16.mxu0 %v6688
    %8499 = vmatmul.mubr.bf16.gmra.mrb[0].mxu0 %v6687
    %v8500 = vpop.f32.mrb[0].mxu0
    %v8501 = vadd.f32 %v8404, %v8500
    %v8502 = vpop.f32.mrb[0].mxu0
    %v8503 = vpop.f32.mrb[0].mxu0
    %v8504 = vadd.f32 %v8407, %v8503
    %v8505 = vpop.f32.mrb[0].mxu0
    %8506 = vdwg.mxu0
    %v8507 = vadd.f32 %v7590, %v8445
    %v8508 = vadd.f32 %v7591, %v8448
    %v8509 = vadd.f32 %v7592, %v8453
    %v8510 = vadd.f32 %v7593, %v8456
    %v8511 = vadd.f32 %v7594, %v8461
    %v8512 = vadd.f32 %v7595, %v8464
    %v8513 = vadd.f32 %v7596, %v8469
    %v8514 = vadd.f32 %v7597, %v8472
    %v8515 = vadd.f32 %v7598, %v8477
    %v8516 = vadd.f32 %v7599, %v8480
    %v8517 = vadd.f32 %v7600, %v8485
    %v8518 = vadd.f32 %v7601, %v8488
    %v8519 = vadd.f32 %v7602, %v8493
    %v8520 = vadd.f32 %v7603, %v8496
    %v8521 = vadd.f32 %v7604, %v8501
    %v8522 = vadd.f32 %v7605, %v8504
    %s8523 = scalar_lea.vmem [#allocation2], 5120
    %v8524 = vld [vmem:[%s8523] sm:$0xf]
    %v8525 = vld [vmem:[%s8523 + $0x4] sm:$0xf]
    %v8526 = vld [vmem:[%s8523 + $0x8] sm:$0xf]
    %v8527 = vld [vmem:[%s8523 + $0xc] sm:$0xf]
    %v8528 = vld [vmem:[%s8523 + $0x10] sm:$0xf]
    %v8529 = vld [vmem:[%s8523 + $0x14] sm:$0xf]
    %v8530 = vld [vmem:[%s8523 + $0x18] sm:$0xf]
    %v8531 = vld [vmem:[%s8523 + $0x1c] sm:$0xf]
    %v8532 = vld [vmem:[%s8523 + $0x20] sm:$0xf]
    %v8533 = vld [vmem:[%s8523 + $0x24] sm:$0xf]
    %v8534 = vld [vmem:[%s8523 + $0x28] sm:$0xf]
    %v8535 = vld [vmem:[%s8523 + $0x2c] sm:$0xf]
    %v8536 = vld [vmem:[%s8523 + $0x30] sm:$0xf]
    %v8537 = vld [vmem:[%s8523 + $0x34] sm:$0xf]
    %v8538 = vld [vmem:[%s8523 + $0x38] sm:$0xf]
    %v8539 = vld [vmem:[%s8523 + $0x3c] sm:$0xf]
    %v8540 = vld [vmem:[%s8523 + $0x40] sm:$0xf]
    %v8541 = vld [vmem:[%s8523 + $0x44] sm:$0xf]
    %v8542 = vld [vmem:[%s8523 + $0x48] sm:$0xf]
    %v8543 = vld [vmem:[%s8523 + $0x4c] sm:$0xf]
    %v8544 = vld [vmem:[%s8523 + $0x50] sm:$0xf]
    %v8545 = vld [vmem:[%s8523 + $0x54] sm:$0xf]
    %v8546 = vld [vmem:[%s8523 + $0x58] sm:$0xf]
    %v8547 = vld [vmem:[%s8523 + $0x5c] sm:$0xf]
    %v8548 = vld [vmem:[%s8523 + $0x60] sm:$0xf]
    %v8549 = vld [vmem:[%s8523 + $0x64] sm:$0xf]
    %v8550 = vld [vmem:[%s8523 + $0x68] sm:$0xf]
    %v8551 = vld [vmem:[%s8523 + $0x6c] sm:$0xf]
    %v8552 = vld [vmem:[%s8523 + $0x70] sm:$0xf]
    %v8553 = vld [vmem:[%s8523 + $0x74] sm:$0xf]
    %v8554 = vld [vmem:[%s8523 + $0x78] sm:$0xf]
    %v8555 = vld [vmem:[%s8523 + $0x7c] sm:$0xf]
    %v8556 = vld [vmem:[%s8523 + $0x80] sm:$0xf]
    %v8557 = vld [vmem:[%s8523 + $0x84] sm:$0xf]
    %v8558 = vld [vmem:[%s8523 + $0x88] sm:$0xf]
    %v8559 = vld [vmem:[%s8523 + $0x8c] sm:$0xf]
    %v8560 = vld [vmem:[%s8523 + $0x90] sm:$0xf]
    %v8561 = vld [vmem:[%s8523 + $0x94] sm:$0xf]
    %v8562 = vld [vmem:[%s8523 + $0x98] sm:$0xf]
    %v8563 = vld [vmem:[%s8523 + $0x9c] sm:$0xf]
    %v8564 = vld [vmem:[%s8523 + $0xa0] sm:$0xf]
    %v8565 = vld [vmem:[%s8523 + $0xa4] sm:$0xf]
    %v8566 = vld [vmem:[%s8523 + $0xa8] sm:$0xf]
    %v8567 = vld [vmem:[%s8523 + $0xac] sm:$0xf]
    %v8568 = vld [vmem:[%s8523 + $0xb0] sm:$0xf]
    %v8569 = vld [vmem:[%s8523 + $0xb4] sm:$0xf]
    %v8570 = vld [vmem:[%s8523 + $0xb8] sm:$0xf]
    %v8571 = vld [vmem:[%s8523 + $0xbc] sm:$0xf]
    %v8572 = vld [vmem:[%s8523 + $0xc0] sm:$0xf]
    %v8573 = vld [vmem:[%s8523 + $0xc4] sm:$0xf]
    %v8574 = vld [vmem:[%s8523 + $0xc8] sm:$0xf]
    %v8575 = vld [vmem:[%s8523 + $0xcc] sm:$0xf]
    %v8576 = vld [vmem:[%s8523 + $0xd0] sm:$0xf]
    %v8577 = vld [vmem:[%s8523 + $0xd4] sm:$0xf]
    %v8578 = vld [vmem:[%s8523 + $0xd8] sm:$0xf]
    %v8579 = vld [vmem:[%s8523 + $0xdc] sm:$0xf]
    %v8580 = vld [vmem:[%s8523 + $0xe0] sm:$0xf]
    %v8581 = vld [vmem:[%s8523 + $0xe4] sm:$0xf]
    %v8582 = vld [vmem:[%s8523 + $0xe8] sm:$0xf]
    %v8583 = vld [vmem:[%s8523 + $0xec] sm:$0xf]
    %v8584 = vld [vmem:[%s8523 + $0xf0] sm:$0xf]
    %v8585 = vld [vmem:[%s8523 + $0xf4] sm:$0xf]
    %v8586 = vld [vmem:[%s8523 + $0xf8] sm:$0xf]
    %v8587 = vld [vmem:[%s8523 + $0xfc] sm:$0xf]
    %v8588 = vld [vmem:[%s8523 + $0x100] sm:$0xf]
    %v8589 = vld [vmem:[%s8523 + $0x104] sm:$0xf]
    %v8590 = vld [vmem:[%s8523 + $0x108] sm:$0xf]
    %v8591 = vld [vmem:[%s8523 + $0x10c] sm:$0xf]
    %v8592 = vld [vmem:[%s8523 + $0x110] sm:$0xf]
    %v8593 = vld [vmem:[%s8523 + $0x114] sm:$0xf]
    %v8594 = vld [vmem:[%s8523 + $0x118] sm:$0xf]
    %v8595 = vld [vmem:[%s8523 + $0x11c] sm:$0xf]
    %v8596 = vld [vmem:[%s8523 + $0x120] sm:$0xf]
    %v8597 = vld [vmem:[%s8523 + $0x124] sm:$0xf]
    %v8598 = vld [vmem:[%s8523 + $0x128] sm:$0xf]
    %v8599 = vld [vmem:[%s8523 + $0x12c] sm:$0xf]
    %v8600 = vld [vmem:[%s8523 + $0x130] sm:$0xf]
    %v8601 = vld [vmem:[%s8523 + $0x134] sm:$0xf]
    %v8602 = vld [vmem:[%s8523 + $0x138] sm:$0xf]
    %v8603 = vld [vmem:[%s8523 + $0x13c] sm:$0xf]
    %v8604 = vld [vmem:[%s8523 + $0x140] sm:$0xf]
    %v8605 = vld [vmem:[%s8523 + $0x144] sm:$0xf]
    %v8606 = vld [vmem:[%s8523 + $0x148] sm:$0xf]
    %v8607 = vld [vmem:[%s8523 + $0x14c] sm:$0xf]
    %v8608 = vld [vmem:[%s8523 + $0x150] sm:$0xf]
    %v8609 = vld [vmem:[%s8523 + $0x154] sm:$0xf]
    %v8610 = vld [vmem:[%s8523 + $0x158] sm:$0xf]
    %v8611 = vld [vmem:[%s8523 + $0x15c] sm:$0xf]
    %v8612 = vld [vmem:[%s8523 + $0x160] sm:$0xf]
    %v8613 = vld [vmem:[%s8523 + $0x164] sm:$0xf]
    %v8614 = vld [vmem:[%s8523 + $0x168] sm:$0xf]
    %v8615 = vld [vmem:[%s8523 + $0x16c] sm:$0xf]
    %v8616 = vld [vmem:[%s8523 + $0x170] sm:$0xf]
    %v8617 = vld [vmem:[%s8523 + $0x174] sm:$0xf]
    %v8618 = vld [vmem:[%s8523 + $0x178] sm:$0xf]
    %v8619 = vld [vmem:[%s8523 + $0x17c] sm:$0xf]
    %v8620 = vld [vmem:[%s8523 + $0x180] sm:$0xf]
    %v8621 = vld [vmem:[%s8523 + $0x184] sm:$0xf]
    %v8622 = vld [vmem:[%s8523 + $0x188] sm:$0xf]
    %v8623 = vld [vmem:[%s8523 + $0x18c] sm:$0xf]
    %v8624 = vld [vmem:[%s8523 + $0x190] sm:$0xf]
    %v8625 = vld [vmem:[%s8523 + $0x194] sm:$0xf]
    %v8626 = vld [vmem:[%s8523 + $0x198] sm:$0xf]
    %v8627 = vld [vmem:[%s8523 + $0x19c] sm:$0xf]
    %v8628 = vld [vmem:[%s8523 + $0x1a0] sm:$0xf]
    %v8629 = vld [vmem:[%s8523 + $0x1a4] sm:$0xf]
    %v8630 = vld [vmem:[%s8523 + $0x1a8] sm:$0xf]
    %v8631 = vld [vmem:[%s8523 + $0x1ac] sm:$0xf]
    %v8632 = vld [vmem:[%s8523 + $0x1b0] sm:$0xf]
    %v8633 = vld [vmem:[%s8523 + $0x1b4] sm:$0xf]
    %v8634 = vld [vmem:[%s8523 + $0x1b8] sm:$0xf]
    %v8635 = vld [vmem:[%s8523 + $0x1bc] sm:$0xf]
    %v8636 = vld [vmem:[%s8523 + $0x1c0] sm:$0xf]
    %v8637 = vld [vmem:[%s8523 + $0x1c4] sm:$0xf]
    %v8638 = vld [vmem:[%s8523 + $0x1c8] sm:$0xf]
    %v8639 = vld [vmem:[%s8523 + $0x1cc] sm:$0xf]
    %v8640 = vld [vmem:[%s8523 + $0x1d0] sm:$0xf]
    %v8641 = vld [vmem:[%s8523 + $0x1d4] sm:$0xf]
    %v8642 = vld [vmem:[%s8523 + $0x1d8] sm:$0xf]
    %v8643 = vld [vmem:[%s8523 + $0x1dc] sm:$0xf]
    %v8644 = vld [vmem:[%s8523 + $0x1e0] sm:$0xf]
    %v8645 = vld [vmem:[%s8523 + $0x1e4] sm:$0xf]
    %v8646 = vld [vmem:[%s8523 + $0x1e8] sm:$0xf]
    %v8647 = vld [vmem:[%s8523 + $0x1ec] sm:$0xf]
    %v8648 = vld [vmem:[%s8523 + $0x1f0] sm:$0xf]
    %v8649 = vld [vmem:[%s8523 + $0x1f4] sm:$0xf]
    %v8650 = vld [vmem:[%s8523 + $0x1f8] sm:$0xf]
    %v8651 = vld [vmem:[%s8523 + $0x1fc] sm:$0xf]
    %v8780 = vunpack.c.l.b16 %v8524
    %v8781 = vunpack.c.l.b16 %v8525
    %v8782 = vunpack.c.l.b16 %v8526
    %v8783 = vunpack.c.l.b16 %v8527
    %v8784 = vunpack.c.l.b16 %v8528
    %v8785 = vunpack.c.l.b16 %v8529
    %v8786 = vunpack.c.l.b16 %v8530
    %v8787 = vunpack.c.l.b16 %v8531
    %v8788 = vunpack.c.l.b16 %v8532
    %v8789 = vunpack.c.l.b16 %v8533
    %v8790 = vunpack.c.l.b16 %v8534
    %v8791 = vunpack.c.l.b16 %v8535
    %v8792 = vunpack.c.l.b16 %v8536
    %v8793 = vunpack.c.l.b16 %v8537
    %v8794 = vunpack.c.l.b16 %v8538
    %v8795 = vunpack.c.l.b16 %v8539
    %v8796 = vunpack.c.l.b16 %v8540
    %v8797 = vunpack.c.l.b16 %v8541
    %v8798 = vunpack.c.l.b16 %v8542
    %v8799 = vunpack.c.l.b16 %v8543
    %v8800 = vunpack.c.l.b16 %v8544
    %v8801 = vunpack.c.l.b16 %v8545
    %v8802 = vunpack.c.l.b16 %v8546
    %v8803 = vunpack.c.l.b16 %v8547
    %v8804 = vunpack.c.l.b16 %v8548
    %v8805 = vunpack.c.l.b16 %v8549
    %v8806 = vunpack.c.l.b16 %v8550
    %v8807 = vunpack.c.l.b16 %v8551
    %v8808 = vunpack.c.l.b16 %v8552
    %v8809 = vunpack.c.l.b16 %v8553
    %v8810 = vunpack.c.l.b16 %v8554
    %v8811 = vunpack.c.l.b16 %v8555
    %v8812 = vunpack.c.l.b16 %v8556
    %v8813 = vunpack.c.l.b16 %v8557
    %v8814 = vunpack.c.l.b16 %v8558
    %v8815 = vunpack.c.l.b16 %v8559
    %v8816 = vunpack.c.l.b16 %v8560
    %v8817 = vunpack.c.l.b16 %v8561
    %v8818 = vunpack.c.l.b16 %v8562
    %v8819 = vunpack.c.l.b16 %v8563
    %v8820 = vunpack.c.l.b16 %v8564
    %v8821 = vunpack.c.l.b16 %v8565
    %v8822 = vunpack.c.l.b16 %v8566
    %v8823 = vunpack.c.l.b16 %v8567
    %v8824 = vunpack.c.l.b16 %v8568
    %v8825 = vunpack.c.l.b16 %v8569
    %v8826 = vunpack.c.l.b16 %v8570
    %v8827 = vunpack.c.l.b16 %v8571
    %v8828 = vunpack.c.l.b16 %v8572
    %v8829 = vunpack.c.l.b16 %v8573
    %v8830 = vunpack.c.l.b16 %v8574
    %v8831 = vunpack.c.l.b16 %v8575
    %v8832 = vunpack.c.l.b16 %v8576
    %v8833 = vunpack.c.l.b16 %v8577
    %v8834 = vunpack.c.l.b16 %v8578
    %v8835 = vunpack.c.l.b16 %v8579
    %v8836 = vunpack.c.l.b16 %v8580
    %v8837 = vunpack.c.l.b16 %v8581
    %v8838 = vunpack.c.l.b16 %v8582
    %v8839 = vunpack.c.l.b16 %v8583
    %v8840 = vunpack.c.l.b16 %v8584
    %v8841 = vunpack.c.l.b16 %v8585
    %v8842 = vunpack.c.l.b16 %v8586
    %v8843 = vunpack.c.l.b16 %v8587
    %v8844 = vunpack.c.l.b16 %v8588
    %v8845 = vunpack.c.l.b16 %v8589
    %v8846 = vunpack.c.l.b16 %v8590
    %v8847 = vunpack.c.l.b16 %v8591
    %v8848 = vunpack.c.l.b16 %v8592
    %v8849 = vunpack.c.l.b16 %v8593
    %v8850 = vunpack.c.l.b16 %v8594
    %v8851 = vunpack.c.l.b16 %v8595
    %v8852 = vunpack.c.l.b16 %v8596
    %v8853 = vunpack.c.l.b16 %v8597
    %v8854 = vunpack.c.l.b16 %v8598
    %v8855 = vunpack.c.l.b16 %v8599
    %v8856 = vunpack.c.l.b16 %v8600
    %v8857 = vunpack.c.l.b16 %v8601
    %v8858 = vunpack.c.l.b16 %v8602
    %v8859 = vunpack.c.l.b16 %v8603
    %v8860 = vunpack.c.l.b16 %v8604
    %v8861 = vunpack.c.l.b16 %v8605
    %v8862 = vunpack.c.l.b16 %v8606
    %v8863 = vunpack.c.l.b16 %v8607
    %v8864 = vunpack.c.l.b16 %v8608
    %v8865 = vunpack.c.l.b16 %v8609
    %v8866 = vunpack.c.l.b16 %v8610
    %v8867 = vunpack.c.l.b16 %v8611
    %v8868 = vunpack.c.l.b16 %v8612
    %v8869 = vunpack.c.l.b16 %v8613
    %v8870 = vunpack.c.l.b16 %v8614
    %v8871 = vunpack.c.l.b16 %v8615
    %v8872 = vunpack.c.l.b16 %v8616
    %v8873 = vunpack.c.l.b16 %v8617
    %v8874 = vunpack.c.l.b16 %v8618
    %v8875 = vunpack.c.l.b16 %v8619
    %v8876 = vunpack.c.l.b16 %v8620
    %v8877 = vunpack.c.l.b16 %v8621
    %v8878 = vunpack.c.l.b16 %v8622
    %v8879 = vunpack.c.l.b16 %v8623
    %v8880 = vunpack.c.l.b16 %v8624
    %v8881 = vunpack.c.l.b16 %v8625
    %v8882 = vunpack.c.l.b16 %v8626
    %v8883 = vunpack.c.l.b16 %v8627
    %v8884 = vunpack.c.l.b16 %v8628
    %v8885 = vunpack.c.l.b16 %v8629
    %v8886 = vunpack.c.l.b16 %v8630
    %v8887 = vunpack.c.l.b16 %v8631
    %v8888 = vunpack.c.l.b16 %v8632
    %v8889 = vunpack.c.l.b16 %v8633
    %v8890 = vunpack.c.l.b16 %v8634
    %v8891 = vunpack.c.l.b16 %v8635
    %v8892 = vunpack.c.l.b16 %v8636
    %v8893 = vunpack.c.l.b16 %v8637
    %v8894 = vunpack.c.l.b16 %v8638
    %v8895 = vunpack.c.l.b16 %v8639
    %v8896 = vunpack.c.l.b16 %v8640
    %v8897 = vunpack.c.l.b16 %v8641
    %v8898 = vunpack.c.l.b16 %v8642
    %v8899 = vunpack.c.l.b16 %v8643
    %v8900 = vunpack.c.l.b16 %v8644
    %v8901 = vunpack.c.l.b16 %v8645
    %v8902 = vunpack.c.l.b16 %v8646
    %v8903 = vunpack.c.l.b16 %v8647
    %v8904 = vunpack.c.l.b16 %v8648
    %v8905 = vunpack.c.l.b16 %v8649
    %v8906 = vunpack.c.l.b16 %v8650
    %v8907 = vunpack.c.l.b16 %v8651
    %v8908 = vpack.c.b16 %v8781, %v8780
    %v8909 = vpack.c.b16 %v8783, %v8782
    %v8910 = vpack.c.b16 %v8785, %v8784
    %v8911 = vpack.c.b16 %v8787, %v8786
    %v8912 = vpack.c.b16 %v8789, %v8788
    %v8913 = vpack.c.b16 %v8791, %v8790
    %v8914 = vpack.c.b16 %v8793, %v8792
    %v8915 = vpack.c.b16 %v8795, %v8794
    %v8916 = vpack.c.b16 %v8797, %v8796
    %v8917 = vpack.c.b16 %v8799, %v8798
    %v8918 = vpack.c.b16 %v8801, %v8800
    %v8919 = vpack.c.b16 %v8803, %v8802
    %v8920 = vpack.c.b16 %v8805, %v8804
    %v8921 = vpack.c.b16 %v8807, %v8806
    %v8922 = vpack.c.b16 %v8809, %v8808
    %v8923 = vpack.c.b16 %v8811, %v8810
    %v8924 = vpack.c.b16 %v8813, %v8812
    %v8925 = vpack.c.b16 %v8815, %v8814
    %v8926 = vpack.c.b16 %v8817, %v8816
    %v8927 = vpack.c.b16 %v8819, %v8818
    %v8928 = vpack.c.b16 %v8821, %v8820
    %v8929 = vpack.c.b16 %v8823, %v8822
    %v8930 = vpack.c.b16 %v8825, %v8824
    %v8931 = vpack.c.b16 %v8827, %v8826
    %v8932 = vpack.c.b16 %v8829, %v8828
    %v8933 = vpack.c.b16 %v8831, %v8830
    %v8934 = vpack.c.b16 %v8833, %v8832
    %v8935 = vpack.c.b16 %v8835, %v8834
    %v8936 = vpack.c.b16 %v8837, %v8836
    %v8937 = vpack.c.b16 %v8839, %v8838
    %v8938 = vpack.c.b16 %v8841, %v8840
    %v8939 = vpack.c.b16 %v8843, %v8842
    %v8940 = vpack.c.b16 %v8845, %v8844
    %v8941 = vpack.c.b16 %v8847, %v8846
    %v8942 = vpack.c.b16 %v8849, %v8848
    %v8943 = vpack.c.b16 %v8851, %v8850
    %v8944 = vpack.c.b16 %v8853, %v8852
    %v8945 = vpack.c.b16 %v8855, %v8854
    %v8946 = vpack.c.b16 %v8857, %v8856
    %v8947 = vpack.c.b16 %v8859, %v8858
    %v8948 = vpack.c.b16 %v8861, %v8860
    %v8949 = vpack.c.b16 %v8863, %v8862
    %v8950 = vpack.c.b16 %v8865, %v8864
    %v8951 = vpack.c.b16 %v8867, %v8866
    %v8952 = vpack.c.b16 %v8869, %v8868
    %v8953 = vpack.c.b16 %v8871, %v8870
    %v8954 = vpack.c.b16 %v8873, %v8872
    %v8955 = vpack.c.b16 %v8875, %v8874
    %v8956 = vpack.c.b16 %v8877, %v8876
    %v8957 = vpack.c.b16 %v8879, %v8878
    %v8958 = vpack.c.b16 %v8881, %v8880
    %v8959 = vpack.c.b16 %v8883, %v8882
    %v8960 = vpack.c.b16 %v8885, %v8884
    %v8961 = vpack.c.b16 %v8887, %v8886
    %v8962 = vpack.c.b16 %v8889, %v8888
    %v8963 = vpack.c.b16 %v8891, %v8890
    %v8964 = vpack.c.b16 %v8893, %v8892
    %v8965 = vpack.c.b16 %v8895, %v8894
    %v8966 = vpack.c.b16 %v8897, %v8896
    %v8967 = vpack.c.b16 %v8899, %v8898
    %v8968 = vpack.c.b16 %v8901, %v8900
    %v8969 = vpack.c.b16 %v8903, %v8902
    %v8970 = vpack.c.b16 %v8905, %v8904
    %v8971 = vpack.c.b16 %v8907, %v8906
    %9036 = vmatprep.subr.bf16.mxu0 0
    %9037 = vmatpush1.bf16.msra.mxu0 %v8908
    %9038 = vmatprep.subr.bf16.mxu0 0
    %9039 = vmatpush1.bf16.msra.mxu0 %v8909
    %9040 = vmatprep.subr.bf16.mxu0 0
    %9041 = vmatpush1.bf16.msra.mxu0 %v8910
    %9042 = vmatprep.subr.bf16.mxu0 0
    %9043 = vmatpush1.bf16.msra.mxu0 %v8911
    %9044 = vmatprep.subr.bf16.mxu0 0
    %9045 = vmatpush1.bf16.msra.mxu0 %v8912
    %9046 = vmatprep.subr.bf16.mxu0 0
    %9047 = vmatpush1.bf16.msra.mxu0 %v8913
    %9048 = vmatprep.subr.bf16.mxu0 0
    %9049 = vmatpush1.bf16.msra.mxu0 %v8914
    %9050 = vmatprep.subr.bf16.mxu0 0
    %9051 = vmatpush1.bf16.msra.mxu0 %v8915
    %9052 = vmatprep.subr.bf16.mxu0 0
    %9053 = vmatpush1.bf16.msra.mxu0 %v8916
    %9054 = vmatprep.subr.bf16.mxu0 0
    %9055 = vmatpush1.bf16.msra.mxu0 %v8917
    %9056 = vmatprep.subr.bf16.mxu0 0
    %9057 = vmatpush1.bf16.msra.mxu0 %v8918
    %9058 = vmatprep.subr.bf16.mxu0 0
    %9059 = vmatpush1.bf16.msra.mxu0 %v8919
    %9060 = vmatprep.subr.bf16.mxu0 0
    %9061 = vmatpush1.bf16.msra.mxu0 %v8920
    %9062 = vmatprep.subr.bf16.mxu0 0
    %9063 = vmatpush1.bf16.msra.mxu0 %v8921
    %9064 = vmatprep.subr.bf16.mxu0 0
    %9065 = vmatpush1.bf16.msra.mxu0 %v8922
    %9066 = vmatprep.subr.bf16.mxu0 0
    %9067 = vmatpush1.bf16.msra.mxu0 %v8923
    %9068 = vmatprep.mubr.bf16.mxu0 %v6626
    %9069 = vmatmul.mubr.bf16.gmra.mrb[0].mxu0 %v6625
    %v9070 = vpop.f32.mrb[0].mxu0
    %v9071 = vadd.f32 0.0, %v9070
    %v9072 = vpop.f32.mrb[0].mxu0
    %v9073 = vpop.f32.mrb[0].mxu0
    %v9074 = vadd.f32 0.0, %v9073
    %v9075 = vpop.f32.mrb[0].mxu0
    %9076 = vmatprep.mubr.bf16.mxu0 %v6634
    %9077 = vmatmul.mubr.bf16.gmra.mrb[0].mxu0 %v6633
    %v9078 = vpop.f32.mrb[0].mxu0
    %v9079 = vadd.f32 0.0, %v9078
    %v9080 = vpop.f32.mrb[0].mxu0
    %v9081 = vpop.f32.mrb[0].mxu0
    %v9082 = vadd.f32 0.0, %v9081
    %v9083 = vpop.f32.mrb[0].mxu0
    %9084 = vmatprep.mubr.bf16.mxu0 %v6642
    %9085 = vmatmul.mubr.bf16.gmra.mrb[0].mxu0 %v6641
    %v9086 = vpop.f32.mrb[0].mxu0
    %v9087 = vadd.f32 0.0, %v9086
    %v9088 = vpop.f32.mrb[0].mxu0
    %v9089 = vpop.f32.mrb[0].mxu0
    %v9090 = vadd.f32 0.0, %v9089
    %v9091 = vpop.f32.mrb[0].mxu0
    %9092 = vmatprep.mubr.bf16.mxu0 %v6650
    %9093 = vmatmul.mubr.bf16.gmra.mrb[0].mxu0 %v6649
    %v9094 = vpop.f32.mrb[0].mxu0
    %v9095 = vadd.f32 0.0, %v9094
    %v9096 = vpop.f32.mrb[0].mxu0
    %v9097 = vpop.f32.mrb[0].mxu0
    %v9098 = vadd.f32 0.0, %v9097
    %v9099 = vpop.f32.mrb[0].mxu0
    %9100 = vmatprep.mubr.bf16.mxu0 %v6658
    %9101 = vmatmul.mubr.bf16.gmra.mrb[0].mxu0 %v6657
    %v9102 = vpop.f32.mrb[0].mxu0
    %v9103 = vadd.f32 0.0, %v9102
    %v9104 = vpop.f32.mrb[0].mxu0
    %v9105 = vpop.f32.mrb[0].mxu0
    %v9106 = vadd.f32 0.0, %v9105
    %v9107 = vpop.f32.mrb[0].mxu0
    %9108 = vmatprep.mubr.bf16.mxu0 %v6666
    %9109 = vmatmul.mubr.bf16.gmra.mrb[0].mxu0 %v6665
    %v9110 = vpop.f32.mrb[0].mxu0
    %v9111 = vadd.f32 0.0, %v9110
    %v9112 = vpop.f32.mrb[0].mxu0
    %v9113 = vpop.f32.mrb[0].mxu0
    %v9114 = vadd.f32 0.0, %v9113
    %v9115 = vpop.f32.mrb[0].mxu0
    %9116 = vmatprep.mubr.bf16.mxu0 %v6674
    %9117 = vmatmul.mubr.bf16.gmra.mrb[0].mxu0 %v6673
    %v9118 = vpop.f32.mrb[0].mxu0
    %v9119 = vadd.f32 0.0, %v9118
    %v9120 = vpop.f32.mrb[0].mxu0
    %v9121 = vpop.f32.mrb[0].mxu0
    %v9122 = vadd.f32 0.0, %v9121
    %v9123 = vpop.f32.mrb[0].mxu0
    %9124 = vmatprep.mubr.bf16.mxu0 %v6682
    %9125 = vmatmul.mubr.bf16.gmra.mrb[0].mxu0 %v6681
    %v9126 = vpop.f32.mrb[0].mxu0
    %v9127 = vadd.f32 0.0, %v9126
    %v9128 = vpop.f32.mrb[0].mxu0
    %v9129 = vpop.f32.mrb[0].mxu0
    %v9130 = vadd.f32 0.0, %v9129
    %v9131 = vpop.f32.mrb[0].mxu0
    %9132 = vdwg.mxu0
    %9133 = vmatprep.subr.bf16.mxu0 0
    %9134 = vmatpush1.bf16.msra.mxu0 %v8924
    %9135 = vmatprep.subr.bf16.mxu0 0
    %9136 = vmatpush1.bf16.msra.mxu0 %v8925
    %9137 = vmatprep.subr.bf16.mxu0 0
    %9138 = vmatpush1.bf16.msra.mxu0 %v8926
    %9139 = vmatprep.subr.bf16.mxu0 0
    %9140 = vmatpush1.bf16.msra.mxu0 %v8927
    %9141 = vmatprep.subr.bf16.mxu0 0
    %9142 = vmatpush1.bf16.msra.mxu0 %v8928
    %9143 = vmatprep.subr.bf16.mxu0 0
    %9144 = vmatpush1.bf16.msra.mxu0 %v8929
    %9145 = vmatprep.subr.bf16.mxu0 0
    %9146 = vmatpush1.bf16.msra.mxu0 %v8930
    %9147 = vmatprep.subr.bf16.mxu0 0
    %9148 = vmatpush1.bf16.msra.mxu0 %v8931
    %9149 = vmatprep.subr.bf16.mxu0 0
    %9150 = vmatpush1.bf16.msra.mxu0 %v8932
    %9151 = vmatprep.subr.bf16.mxu0 0
    %9152 = vmatpush1.bf16.msra.mxu0 %v8933
    %9153 = vmatprep.subr.bf16.mxu0 0
    %9154 = vmatpush1.bf16.msra.mxu0 %v8934
    %9155 = vmatprep.subr.bf16.mxu0 0
    %9156 = vmatpush1.bf16.msra.mxu0 %v8935
    %9157 = vmatprep.subr.bf16.mxu0 0
    %9158 = vmatpush1.bf16.msra.mxu0 %v8936
    %9159 = vmatprep.subr.bf16.mxu0 0
    %9160 = vmatpush1.bf16.msra.mxu0 %v8937
    %9161 = vmatprep.subr.bf16.mxu0 0
    %9162 = vmatpush1.bf16.msra.mxu0 %v8938
    %9163 = vmatprep.subr.bf16.mxu0 0
    %9164 = vmatpush1.bf16.msra.mxu0 %v8939
    %9165 = vmatprep.mubr.bf16.mxu0 %v6628
    %9166 = vmatmul.mubr.bf16.gmra.mrb[0].mxu0 %v6627
    %v9167 = vpop.f32.mrb[0].mxu0
    %v9168 = vadd.f32 %v9071, %v9167
    %v9169 = vpop.f32.mrb[0].mxu0
    %v9170 = vpop.f32.mrb[0].mxu0
    %v9171 = vadd.f32 %v9074, %v9170
    %v9172 = vpop.f32.mrb[0].mxu0
    %9173 = vmatprep.mubr.bf16.mxu0 %v6636
    %9174 = vmatmul.mubr.bf16.gmra.mrb[0].mxu0 %v6635
    %v9175 = vpop.f32.mrb[0].mxu0
    %v9176 = vadd.f32 %v9079, %v9175
    %v9177 = vpop.f32.mrb[0].mxu0
    %v9178 = vpop.f32.mrb[0].mxu0
    %v9179 = vadd.f32 %v9082, %v9178
    %v9180 = vpop.f32.mrb[0].mxu0
    %9181 = vmatprep.mubr.bf16.mxu0 %v6644
    %9182 = vmatmul.mubr.bf16.gmra.mrb[0].mxu0 %v6643
    %v9183 = vpop.f32.mrb[0].mxu0
    %v9184 = vadd.f32 %v9087, %v9183
    %v9185 = vpop.f32.mrb[0].mxu0
    %v9186 = vpop.f32.mrb[0].mxu0
    %v9187 = vadd.f32 %v9090, %v9186
    %v9188 = vpop.f32.mrb[0].mxu0
    %9189 = vmatprep.mubr.bf16.mxu0 %v6652
    %9190 = vmatmul.mubr.bf16.gmra.mrb[0].mxu0 %v6651
    %v9191 = vpop.f32.mrb[0].mxu0
    %v9192 = vadd.f32 %v9095, %v9191
    %v9193 = vpop.f32.mrb[0].mxu0
    %v9194 = vpop.f32.mrb[0].mxu0
    %v9195 = vadd.f32 %v9098, %v9194
    %v9196 = vpop.f32.mrb[0].mxu0
    %9197 = vmatprep.mubr.bf16.mxu0 %v6660
    %9198 = vmatmul.mubr.bf16.gmra.mrb[0].mxu0 %v6659
    %v9199 = vpop.f32.mrb[0].mxu0
    %v9200 = vadd.f32 %v9103, %v9199
    %v9201 = vpop.f32.mrb[0].mxu0
    %v9202 = vpop.f32.mrb[0].mxu0
    %v9203 = vadd.f32 %v9106, %v9202
    %v9204 = vpop.f32.mrb[0].mxu0
    %9205 = vmatprep.mubr.bf16.mxu0 %v6668
    %9206 = vmatmul.mubr.bf16.gmra.mrb[0].mxu0 %v6667
    %v9207 = vpop.f32.mrb[0].mxu0
    %v9208 = vadd.f32 %v9111, %v9207
    %v9209 = vpop.f32.mrb[0].mxu0
    %v9210 = vpop.f32.mrb[0].mxu0
    %v9211 = vadd.f32 %v9114, %v9210
    %v9212 = vpop.f32.mrb[0].mxu0
    %9213 = vmatprep.mubr.bf16.mxu0 %v6676
    %9214 = vmatmul.mubr.bf16.gmra.mrb[0].mxu0 %v6675
    %v9215 = vpop.f32.mrb[0].mxu0
    %v9216 = vadd.f32 %v9119, %v9215
    %v9217 = vpop.f32.mrb[0].mxu0
    %v9218 = vpop.f32.mrb[0].mxu0
    %v9219 = vadd.f32 %v9122, %v9218
    %v9220 = vpop.f32.mrb[0].mxu0
    %9221 = vmatprep.mubr.bf16.mxu0 %v6684
    %9222 = vmatmul.mubr.bf16.gmra.mrb[0].mxu0 %v6683
    %v9223 = vpop.f32.mrb[0].mxu0
    %v9224 = vadd.f32 %v9127, %v9223
    %v9225 = vpop.f32.mrb[0].mxu0
    %v9226 = vpop.f32.mrb[0].mxu0
    %v9227 = vadd.f32 %v9130, %v9226
    %v9228 = vpop.f32.mrb[0].mxu0
    %9229 = vdwg.mxu0
    %9230 = vmatprep.subr.bf16.mxu0 0
    %9231 = vmatpush1.bf16.msra.mxu0 %v8940
    %9232 = vmatprep.subr.bf16.mxu0 0
    %9233 = vmatpush1.bf16.msra.mxu0 %v8941
    %9234 = vmatprep.subr.bf16.mxu0 0
    %9235 = vmatpush1.bf16.msra.mxu0 %v8942
    %9236 = vmatprep.subr.bf16.mxu0 0
    %9237 = vmatpush1.bf16.msra.mxu0 %v8943
    %9238 = vmatprep.subr.bf16.mxu0 0
    %9239 = vmatpush1.bf16.msra.mxu0 %v8944
    %9240 = vmatprep.subr.bf16.mxu0 0
    %9241 = vmatpush1.bf16.msra.mxu0 %v8945
    %9242 = vmatprep.subr.bf16.mxu0 0
    %9243 = vmatpush1.bf16.msra.mxu0 %v8946
    %9244 = vmatprep.subr.bf16.mxu0 0
    %9245 = vmatpush1.bf16.msra.mxu0 %v8947
    %9246 = vmatprep.subr.bf16.mxu0 0
    %9247 = vmatpush1.bf16.msra.mxu0 %v8948
    %9248 = vmatprep.subr.bf16.mxu0 0
    %9249 = vmatpush1.bf16.msra.mxu0 %v8949
    %9250 = vmatprep.subr.bf16.mxu0 0
    %9251 = vmatpush1.bf16.msra.mxu0 %v8950
    %9252 = vmatprep.subr.bf16.mxu0 0
    %9253 = vmatpush1.bf16.msra.mxu0 %v8951
    %9254 = vmatprep.subr.bf16.mxu0 0
    %9255 = vmatpush1.bf16.msra.mxu0 %v8952
    %9256 = vmatprep.subr.bf16.mxu0 0
    %9257 = vmatpush1.bf16.msra.mxu0 %v8953
    %9258 = vmatprep.subr.bf16.mxu0 0
    %9259 = vmatpush1.bf16.msra.mxu0 %v8954
    %9260 = vmatprep.subr.bf16.mxu0 0
    %9261 = vmatpush1.bf16.msra.mxu0 %v8955
    %9262 = vmatprep.mubr.bf16.mxu0 %v6630
    %9263 = vmatmul.mubr.bf16.gmra.mrb[0].mxu0 %v6629
    %v9264 = vpop.f32.mrb[0].mxu0
    %v9265 = vadd.f32 %v9168, %v9264
    %v9266 = vpop.f32.mrb[0].mxu0
    %v9267 = vpop.f32.mrb[0].mxu0
    %v9268 = vadd.f32 %v9171, %v9267
    %v9269 = vpop.f32.mrb[0].mxu0
    %9270 = vmatprep.mubr.bf16.mxu0 %v6638
    %9271 = vmatmul.mubr.bf16.gmra.mrb[0].mxu0 %v6637
    %v9272 = vpop.f32.mrb[0].mxu0
    %v9273 = vadd.f32 %v9176, %v9272
    %v9274 = vpop.f32.mrb[0].mxu0
    %v9275 = vpop.f32.mrb[0].mxu0
    %v9276 = vadd.f32 %v9179, %v9275
    %v9277 = vpop.f32.mrb[0].mxu0
    %9278 = vmatprep.mubr.bf16.mxu0 %v6646
    %9279 = vmatmul.mubr.bf16.gmra.mrb[0].mxu0 %v6645
    %v9280 = vpop.f32.mrb[0].mxu0
    %v9281 = vadd.f32 %v9184, %v9280
    %v9282 = vpop.f32.mrb[0].mxu0
    %v9283 = vpop.f32.mrb[0].mxu0
    %v9284 = vadd.f32 %v9187, %v9283
    %v9285 = vpop.f32.mrb[0].mxu0
    %9286 = vmatprep.mubr.bf16.mxu0 %v6654
    %9287 = vmatmul.mubr.bf16.gmra.mrb[0].mxu0 %v6653
    %v9288 = vpop.f32.mrb[0].mxu0
    %v9289 = vadd.f32 %v9192, %v9288
    %v9290 = vpop.f32.mrb[0].mxu0
    %v9291 = vpop.f32.mrb[0].mxu0
    %v9292 = vadd.f32 %v9195, %v9291
    %v9293 = vpop.f32.mrb[0].mxu0
    %9294 = vmatprep.mubr.bf16.mxu0 %v6662
    %9295 = vmatmul.mubr.bf16.gmra.mrb[0].mxu0 %v6661
    %v9296 = vpop.f32.mrb[0].mxu0
    %v9297 = vadd.f32 %v9200, %v9296
    %v9298 = vpop.f32.mrb[0].mxu0
    %v9299 = vpop.f32.mrb[0].mxu0
    %v9300 = vadd.f32 %v9203, %v9299
    %v9301 = vpop.f32.mrb[0].mxu0
    %9302 = vmatprep.mubr.bf16.mxu0 %v6670
    %9303 = vmatmul.mubr.bf16.gmra.mrb[0].mxu0 %v6669
    %v9304 = vpop.f32.mrb[0].mxu0
    %v9305 = vadd.f32 %v9208, %v9304
    %v9306 = vpop.f32.mrb[0].mxu0
    %v9307 = vpop.f32.mrb[0].mxu0
    %v9308 = vadd.f32 %v9211, %v9307
    %v9309 = vpop.f32.mrb[0].mxu0
    %9310 = vmatprep.mubr.bf16.mxu0 %v6678
    %9311 = vmatmul.mubr.bf16.gmra.mrb[0].mxu0 %v6677
    %v9312 = vpop.f32.mrb[0].mxu0
    %v9313 = vadd.f32 %v9216, %v9312
    %v9314 = vpop.f32.mrb[0].mxu0
    %v9315 = vpop.f32.mrb[0].mxu0
    %v9316 = vadd.f32 %v9219, %v9315
    %v9317 = vpop.f32.mrb[0].mxu0
    %9318 = vmatprep.mubr.bf16.mxu0 %v6686
    %9319 = vmatmul.mubr.bf16.gmra.mrb[0].mxu0 %v6685
    %v9320 = vpop.f32.mrb[0].mxu0
    %v9321 = vadd.f32 %v9224, %v9320
    %v9322 = vpop.f32.mrb[0].mxu0
    %v9323 = vpop.f32.mrb[0].mxu0
    %v9324 = vadd.f32 %v9227, %v9323
    %v9325 = vpop.f32.mrb[0].mxu0
    %9326 = vdwg.mxu0
    %9327 = vmatprep.subr.bf16.mxu0 0
    %9328 = vmatpush1.bf16.msra.mxu0 %v8956
    %9329 = vmatprep.subr.bf16.mxu0 0
    %9330 = vmatpush1.bf16.msra.mxu0 %v8957
    %9331 = vmatprep.subr.bf16.mxu0 0
    %9332 = vmatpush1.bf16.msra.mxu0 %v8958
    %9333 = vmatprep.subr.bf16.mxu0 0
    %9334 = vmatpush1.bf16.msra.mxu0 %v8959
    %9335 = vmatprep.subr.bf16.mxu0 0
    %9336 = vmatpush1.bf16.msra.mxu0 %v8960
    %9337 = vmatprep.subr.bf16.mxu0 0
    %9338 = vmatpush1.bf16.msra.mxu0 %v8961
    %9339 = vmatprep.subr.bf16.mxu0 0
    %9340 = vmatpush1.bf16.msra.mxu0 %v8962
    %9341 = vmatprep.subr.bf16.mxu0 0
    %9342 = vmatpush1.bf16.msra.mxu0 %v8963
    %9343 = vmatprep.subr.bf16.mxu0 0
    %9344 = vmatpush1.bf16.msra.mxu0 %v8964
    %9345 = vmatprep.subr.bf16.mxu0 0
    %9346 = vmatpush1.bf16.msra.mxu0 %v8965
    %9347 = vmatprep.subr.bf16.mxu0 0
    %9348 = vmatpush1.bf16.msra.mxu0 %v8966
    %9349 = vmatprep.subr.bf16.mxu0 0
    %9350 = vmatpush1.bf16.msra.mxu0 %v8967
    %9351 = vmatprep.subr.bf16.mxu0 0
    %9352 = vmatpush1.bf16.msra.mxu0 %v8968
    %9353 = vmatprep.subr.bf16.mxu0 0
    %9354 = vmatpush1.bf16.msra.mxu0 %v8969
    %9355 = vmatprep.subr.bf16.mxu0 0
    %9356 = vmatpush1.bf16.msra.mxu0 %v8970
    %9357 = vmatprep.subr.bf16.mxu0 0
    %9358 = vmatpush1.bf16.msra.mxu0 %v8971
    %9359 = vmatprep.mubr.bf16.mxu0 %v6632
    %9360 = vmatmul.mubr.bf16.gmra.mrb[0].mxu0 %v6631
    %v9361 = vpop.f32.mrb[0].mxu0
    %v9362 = vadd.f32 %v9265, %v9361
    %v9363 = vpop.f32.mrb[0].mxu0
    %v9364 = vpop.f32.mrb[0].mxu0
    %v9365 = vadd.f32 %v9268, %v9364
    %v9366 = vpop.f32.mrb[0].mxu0
    %9367 = vmatprep.mubr.bf16.mxu0 %v6640
    %9368 = vmatmul.mubr.bf16.gmra.mrb[0].mxu0 %v6639
    %v9369 = vpop.f32.mrb[0].mxu0
    %v9370 = vadd.f32 %v9273, %v9369
    %v9371 = vpop.f32.mrb[0].mxu0
    %v9372 = vpop.f32.mrb[0].mxu0
    %v9373 = vadd.f32 %v9276, %v9372
    %v9374 = vpop.f32.mrb[0].mxu0
    %9375 = vmatprep.mubr.bf16.mxu0 %v6648
    %9376 = vmatmul.mubr.bf16.gmra.mrb[0].mxu0 %v6647
    %v9377 = vpop.f32.mrb[0].mxu0
    %v9378 = vadd.f32 %v9281, %v9377
    %v9379 = vpop.f32.mrb[0].mxu0
    %v9380 = vpop.f32.mrb[0].mxu0
    %v9381 = vadd.f32 %v9284, %v9380
    %v9382 = vpop.f32.mrb[0].mxu0
    %9383 = vmatprep.mubr.bf16.mxu0 %v6656
    %9384 = vmatmul.mubr.bf16.gmra.mrb[0].mxu0 %v6655
    %v9385 = vpop.f32.mrb[0].mxu0
    %v9386 = vadd.f32 %v9289, %v9385
    %v9387 = vpop.f32.mrb[0].mxu0
    %v9388 = vpop.f32.mrb[0].mxu0
    %v9389 = vadd.f32 %v9292, %v9388
    %v9390 = vpop.f32.mrb[0].mxu0
    %9391 = vmatprep.mubr.bf16.mxu0 %v6664
    %9392 = vmatmul.mubr.bf16.gmra.mrb[0].mxu0 %v6663
    %v9393 = vpop.f32.mrb[0].mxu0
    %v9394 = vadd.f32 %v9297, %v9393
    %v9395 = vpop.f32.mrb[0].mxu0
    %v9396 = vpop.f32.mrb[0].mxu0
    %v9397 = vadd.f32 %v9300, %v9396
    %v9398 = vpop.f32.mrb[0].mxu0
    %9399 = vmatprep.mubr.bf16.mxu0 %v6672
    %9400 = vmatmul.mubr.bf16.gmra.mrb[0].mxu0 %v6671
    %v9401 = vpop.f32.mrb[0].mxu0
    %v9402 = vadd.f32 %v9305, %v9401
    %v9403 = vpop.f32.mrb[0].mxu0
    %v9404 = vpop.f32.mrb[0].mxu0
    %v9405 = vadd.f32 %v9308, %v9404
    %v9406 = vpop.f32.mrb[0].mxu0
    %9407 = vmatprep.mubr.bf16.mxu0 %v6680
    %9408 = vmatmul.mubr.bf16.gmra.mrb[0].mxu0 %v6679
    %v9409 = vpop.f32.mrb[0].mxu0
    %v9410 = vadd.f32 %v9313, %v9409
    %v9411 = vpop.f32.mrb[0].mxu0
    %v9412 = vpop.f32.mrb[0].mxu0
    %v9413 = vadd.f32 %v9316, %v9412
    %v9414 = vpop.f32.mrb[0].mxu0
    %9415 = vmatprep.mubr.bf16.mxu0 %v6688
    %9416 = vmatmul.mubr.bf16.gmra.mrb[0].mxu0 %v6687
    %v9417 = vpop.f32.mrb[0].mxu0
    %v9418 = vadd.f32 %v9321, %v9417
    %v9419 = vpop.f32.mrb[0].mxu0
    %v9420 = vpop.f32.mrb[0].mxu0
    %v9421 = vadd.f32 %v9324, %v9420
    %v9422 = vpop.f32.mrb[0].mxu0
    %9423 = vdwg.mxu0
    %v9424 = vadd.f32 %v8507, %v9362
    %v9425 = vadd.f32 %v8508, %v9365
    %v9426 = vadd.f32 %v8509, %v9370
    %v9427 = vadd.f32 %v8510, %v9373
    %v9428 = vadd.f32 %v8511, %v9378
    %v9429 = vadd.f32 %v8512, %v9381
    %v9430 = vadd.f32 %v8513, %v9386
    %v9431 = vadd.f32 %v8514, %v9389
    %v9432 = vadd.f32 %v8515, %v9394
    %v9433 = vadd.f32 %v8516, %v9397
    %v9434 = vadd.f32 %v8517, %v9402
    %v9435 = vadd.f32 %v8518, %v9405
    %v9436 = vadd.f32 %v8519, %v9410
    %v9437 = vadd.f32 %v8520, %v9413
    %v9438 = vadd.f32 %v8521, %v9418
    %v9439 = vadd.f32 %v8522, %v9421
    %9440 = vset.pattern.permute.xlu0 3
    %9441 = vperm.xlu0 %9440, %v76
    %v9442 = vpop.permute.xlu0 %9441
    %9443 = vset.pattern.permute.xlu0 3
    %9444 = vperm.xlu0 %9443, %v78
    %v9445 = vpop.permute.xlu0 %9444
    %9446 = vset.pattern.permute.xlu0 3
    %9447 = vperm.xlu0 %9446, %v80
    %v9448 = vpop.permute.xlu0 %9447
    %9449 = vset.pattern.permute.xlu0 3
    %9450 = vperm.xlu0 %9449, %v82
    %v9451 = vpop.permute.xlu0 %9450
    %9452 = vset.pattern.permute.xlu0 3
    %9453 = vperm.xlu0 %9452, %v84
    %v9454 = vpop.permute.xlu0 %9453
    %9455 = vset.pattern.permute.xlu0 3
    %9456 = vperm.xlu0 %9455, %v86
    %v9457 = vpop.permute.xlu0 %9456
    %9458 = vset.pattern.permute.xlu0 3
    %9459 = vperm.xlu0 %9458, %v88
    %v9460 = vpop.permute.xlu0 %9459
    %9461 = vset.pattern.permute.xlu0 3
    %9462 = vperm.xlu0 %9461, %v90
    %v9463 = vpop.permute.xlu0 %9462
    %9464 = vset.pattern.permute.xlu0 3
    %9465 = vperm.xlu0 %9464, %v92
    %v9466 = vpop.permute.xlu0 %9465
    %9467 = vset.pattern.permute.xlu0 3
    %9468 = vperm.xlu0 %9467, %v94
    %v9469 = vpop.permute.xlu0 %9468
    %9470 = vset.pattern.permute.xlu0 3
    %9471 = vperm.xlu0 %9470, %v96
    %v9472 = vpop.permute.xlu0 %9471
    %9473 = vset.pattern.permute.xlu0 3
    %9474 = vperm.xlu0 %9473, %v98
    %v9475 = vpop.permute.xlu0 %9474
    %9476 = vset.pattern.permute.xlu0 3
    %9477 = vperm.xlu0 %9476, %v100
    %v9478 = vpop.permute.xlu0 %9477
    %9479 = vset.pattern.permute.xlu0 3
    %9480 = vperm.xlu0 %9479, %v102
    %v9481 = vpop.permute.xlu0 %9480
    %9482 = vset.pattern.permute.xlu0 3
    %9483 = vperm.xlu0 %9482, %v104
    %v9484 = vpop.permute.xlu0 %9483
    %9485 = vset.pattern.permute.xlu0 3
    %9486 = vperm.xlu0 %9485, %v106
    %v9487 = vpop.permute.xlu0 %9486
    %vm9488 = vcmp.eq.s32.totalorder %v9442, %v108
    %vm9489 = vcmp.eq.s32.totalorder %v9442, %v109
    %vm9490 = vcmp.eq.s32.totalorder %v9442, %v110
    %vm9491 = vcmp.eq.s32.totalorder %v9442, %v111
    %vm9492 = vcmp.eq.s32.totalorder %v9442, %v112
    %vm9493 = vcmp.eq.s32.totalorder %v9442, %v113
    %vm9494 = vcmp.eq.s32.totalorder %v9442, %v114
    %vm9495 = vcmp.eq.s32.totalorder %v9442, %v115
    %vm9496 = vcmp.eq.s32.totalorder %v9445, %v108
    %vm9497 = vcmp.eq.s32.totalorder %v9445, %v109
    %vm9498 = vcmp.eq.s32.totalorder %v9445, %v110
    %vm9499 = vcmp.eq.s32.totalorder %v9445, %v111
    %vm9500 = vcmp.eq.s32.totalorder %v9445, %v112
    %vm9501 = vcmp.eq.s32.totalorder %v9445, %v113
    %vm9502 = vcmp.eq.s32.totalorder %v9445, %v114
    %vm9503 = vcmp.eq.s32.totalorder %v9445, %v115
    %vm9504 = vcmp.eq.s32.totalorder %v9448, %v108
    %vm9505 = vcmp.eq.s32.totalorder %v9448, %v109
    %vm9506 = vcmp.eq.s32.totalorder %v9448, %v110
    %vm9507 = vcmp.eq.s32.totalorder %v9448, %v111
    %vm9508 = vcmp.eq.s32.totalorder %v9448, %v112
    %vm9509 = vcmp.eq.s32.totalorder %v9448, %v113
    %vm9510 = vcmp.eq.s32.totalorder %v9448, %v114
    %vm9511 = vcmp.eq.s32.totalorder %v9448, %v115
    %vm9512 = vcmp.eq.s32.totalorder %v9451, %v108
    %vm9513 = vcmp.eq.s32.totalorder %v9451, %v109
    %vm9514 = vcmp.eq.s32.totalorder %v9451, %v110
    %vm9515 = vcmp.eq.s32.totalorder %v9451, %v111
    %vm9516 = vcmp.eq.s32.totalorder %v9451, %v112
    %vm9517 = vcmp.eq.s32.totalorder %v9451, %v113
    %vm9518 = vcmp.eq.s32.totalorder %v9451, %v114
    %vm9519 = vcmp.eq.s32.totalorder %v9451, %v115
    %vm9520 = vcmp.eq.s32.totalorder %v9454, %v108
    %vm9521 = vcmp.eq.s32.totalorder %v9454, %v109
    %vm9522 = vcmp.eq.s32.totalorder %v9454, %v110
    %vm9523 = vcmp.eq.s32.totalorder %v9454, %v111
    %vm9524 = vcmp.eq.s32.totalorder %v9454, %v112
    %vm9525 = vcmp.eq.s32.totalorder %v9454, %v113
    %vm9526 = vcmp.eq.s32.totalorder %v9454, %v114
    %vm9527 = vcmp.eq.s32.totalorder %v9454, %v115
    %vm9528 = vcmp.eq.s32.totalorder %v9457, %v108
    %vm9529 = vcmp.eq.s32.totalorder %v9457, %v109
    %vm9530 = vcmp.eq.s32.totalorder %v9457, %v110
    %vm9531 = vcmp.eq.s32.totalorder %v9457, %v111
    %vm9532 = vcmp.eq.s32.totalorder %v9457, %v112
    %vm9533 = vcmp.eq.s32.totalorder %v9457, %v113
    %vm9534 = vcmp.eq.s32.totalorder %v9457, %v114
    %vm9535 = vcmp.eq.s32.totalorder %v9457, %v115
    %vm9536 = vcmp.eq.s32.totalorder %v9460, %v108
    %vm9537 = vcmp.eq.s32.totalorder %v9460, %v109
    %vm9538 = vcmp.eq.s32.totalorder %v9460, %v110
    %vm9539 = vcmp.eq.s32.totalorder %v9460, %v111
    %vm9540 = vcmp.eq.s32.totalorder %v9460, %v112
    %vm9541 = vcmp.eq.s32.totalorder %v9460, %v113
    %vm9542 = vcmp.eq.s32.totalorder %v9460, %v114
    %vm9543 = vcmp.eq.s32.totalorder %v9460, %v115
    %vm9544 = vcmp.eq.s32.totalorder %v9463, %v108
    %vm9545 = vcmp.eq.s32.totalorder %v9463, %v109
    %vm9546 = vcmp.eq.s32.totalorder %v9463, %v110
    %vm9547 = vcmp.eq.s32.totalorder %v9463, %v111
    %vm9548 = vcmp.eq.s32.totalorder %v9463, %v112
    %vm9549 = vcmp.eq.s32.totalorder %v9463, %v113
    %vm9550 = vcmp.eq.s32.totalorder %v9463, %v114
    %vm9551 = vcmp.eq.s32.totalorder %v9463, %v115
    %vm9552 = vcmp.eq.s32.totalorder %v9466, %v108
    %vm9553 = vcmp.eq.s32.totalorder %v9466, %v109
    %vm9554 = vcmp.eq.s32.totalorder %v9466, %v110
    %vm9555 = vcmp.eq.s32.totalorder %v9466, %v111
    %vm9556 = vcmp.eq.s32.totalorder %v9466, %v112
    %vm9557 = vcmp.eq.s32.totalorder %v9466, %v113
    %vm9558 = vcmp.eq.s32.totalorder %v9466, %v114
    %vm9559 = vcmp.eq.s32.totalorder %v9466, %v115
    %vm9560 = vcmp.eq.s32.totalorder %v9469, %v108
    %vm9561 = vcmp.eq.s32.totalorder %v9469, %v109
    %vm9562 = vcmp.eq.s32.totalorder %v9469, %v110
    %vm9563 = vcmp.eq.s32.totalorder %v9469, %v111
    %vm9564 = vcmp.eq.s32.totalorder %v9469, %v112
    %vm9565 = vcmp.eq.s32.totalorder %v9469, %v113
    %vm9566 = vcmp.eq.s32.totalorder %v9469, %v114
    %vm9567 = vcmp.eq.s32.totalorder %v9469, %v115
    %vm9568 = vcmp.eq.s32.totalorder %v9472, %v108
    %vm9569 = vcmp.eq.s32.totalorder %v9472, %v109
    %vm9570 = vcmp.eq.s32.totalorder %v9472, %v110
    %vm9571 = vcmp.eq.s32.totalorder %v9472, %v111
    %vm9572 = vcmp.eq.s32.totalorder %v9472, %v112
    %vm9573 = vcmp.eq.s32.totalorder %v9472, %v113
    %vm9574 = vcmp.eq.s32.totalorder %v9472, %v114
    %vm9575 = vcmp.eq.s32.totalorder %v9472, %v115
    %vm9576 = vcmp.eq.s32.totalorder %v9475, %v108
    %vm9577 = vcmp.eq.s32.totalorder %v9475, %v109
    %vm9578 = vcmp.eq.s32.totalorder %v9475, %v110
    %vm9579 = vcmp.eq.s32.totalorder %v9475, %v111
    %vm9580 = vcmp.eq.s32.totalorder %v9475, %v112
    %vm9581 = vcmp.eq.s32.totalorder %v9475, %v113
    %vm9582 = vcmp.eq.s32.totalorder %v9475, %v114
    %vm9583 = vcmp.eq.s32.totalorder %v9475, %v115
    %vm9584 = vcmp.eq.s32.totalorder %v9478, %v108
    %vm9585 = vcmp.eq.s32.totalorder %v9478, %v109
    %vm9586 = vcmp.eq.s32.totalorder %v9478, %v110
    %vm9587 = vcmp.eq.s32.totalorder %v9478, %v111
    %vm9588 = vcmp.eq.s32.totalorder %v9478, %v112
    %vm9589 = vcmp.eq.s32.totalorder %v9478, %v113
    %vm9590 = vcmp.eq.s32.totalorder %v9478, %v114
    %vm9591 = vcmp.eq.s32.totalorder %v9478, %v115
    %vm9592 = vcmp.eq.s32.totalorder %v9481, %v108
    %vm9593 = vcmp.eq.s32.totalorder %v9481, %v109
    %vm9594 = vcmp.eq.s32.totalorder %v9481, %v110
    %vm9595 = vcmp.eq.s32.totalorder %v9481, %v111
    %vm9596 = vcmp.eq.s32.totalorder %v9481, %v112
    %vm9597 = vcmp.eq.s32.totalorder %v9481, %v113
    %vm9598 = vcmp.eq.s32.totalorder %v9481, %v114
    %vm9599 = vcmp.eq.s32.totalorder %v9481, %v115
    %vm9600 = vcmp.eq.s32.totalorder %v9484, %v108
    %vm9601 = vcmp.eq.s32.totalorder %v9484, %v109
    %vm9602 = vcmp.eq.s32.totalorder %v9484, %v110
    %vm9603 = vcmp.eq.s32.totalorder %v9484, %v111
    %vm9604 = vcmp.eq.s32.totalorder %v9484, %v112
    %vm9605 = vcmp.eq.s32.totalorder %v9484, %v113
    %vm9606 = vcmp.eq.s32.totalorder %v9484, %v114
    %vm9607 = vcmp.eq.s32.totalorder %v9484, %v115
    %vm9608 = vcmp.eq.s32.totalorder %v9487, %v108
    %vm9609 = vcmp.eq.s32.totalorder %v9487, %v109
    %vm9610 = vcmp.eq.s32.totalorder %v9487, %v110
    %vm9611 = vcmp.eq.s32.totalorder %v9487, %v111
    %vm9612 = vcmp.eq.s32.totalorder %v9487, %v112
    %vm9613 = vcmp.eq.s32.totalorder %v9487, %v113
    %vm9614 = vcmp.eq.s32.totalorder %v9487, %v114
    %vm9615 = vcmp.eq.s32.totalorder %v9487, %v115
    %v9616 = vsel %vm9488, 1.0, 0.0
    %v9617 = vsel %vm9489, 1.0, 0.0
    %v9618 = vsel %vm9490, 1.0, 0.0
    %v9619 = vsel %vm9491, 1.0, 0.0
    %v9620 = vsel %vm9492, 1.0, 0.0
    %v9621 = vsel %vm9493, 1.0, 0.0
    %v9622 = vsel %vm9494, 1.0, 0.0
    %v9623 = vsel %vm9495, 1.0, 0.0
    %v9624 = vsel %vm9496, 1.0, 0.0
    %v9625 = vsel %vm9497, 1.0, 0.0
    %v9626 = vsel %vm9498, 1.0, 0.0
    %v9627 = vsel %vm9499, 1.0, 0.0
    %v9628 = vsel %vm9500, 1.0, 0.0
    %v9629 = vsel %vm9501, 1.0, 0.0
    %v9630 = vsel %vm9502, 1.0, 0.0
    %v9631 = vsel %vm9503, 1.0, 0.0
    %v9632 = vsel %vm9504, 1.0, 0.0
    %v9633 = vsel %vm9505, 1.0, 0.0
    %v9634 = vsel %vm9506, 1.0, 0.0
    %v9635 = vsel %vm9507, 1.0, 0.0
    %v9636 = vsel %vm9508, 1.0, 0.0
    %v9637 = vsel %vm9509, 1.0, 0.0
    %v9638 = vsel %vm9510, 1.0, 0.0
    %v9639 = vsel %vm9511, 1.0, 0.0
    %v9640 = vsel %vm9512, 1.0, 0.0
    %v9641 = vsel %vm9513, 1.0, 0.0
    %v9642 = vsel %vm9514, 1.0, 0.0
    %v9643 = vsel %vm9515, 1.0, 0.0
    %v9644 = vsel %vm9516, 1.0, 0.0
    %v9645 = vsel %vm9517, 1.0, 0.0
    %v9646 = vsel %vm9518, 1.0, 0.0
    %v9647 = vsel %vm9519, 1.0, 0.0
    %v9648 = vsel %vm9520, 1.0, 0.0
    %v9649 = vsel %vm9521, 1.0, 0.0
    %v9650 = vsel %vm9522, 1.0, 0.0
    %v9651 = vsel %vm9523, 1.0, 0.0
    %v9652 = vsel %vm9524, 1.0, 0.0
    %v9653 = vsel %vm9525, 1.0, 0.0
    %v9654 = vsel %vm9526, 1.0, 0.0
    %v9655 = vsel %vm9527, 1.0, 0.0
    %v9656 = vsel %vm9528, 1.0, 0.0
    %v9657 = vsel %vm9529, 1.0, 0.0
    %v9658 = vsel %vm9530, 1.0, 0.0
    %v9659 = vsel %vm9531, 1.0, 0.0
    %v9660 = vsel %vm9532, 1.0, 0.0
    %v9661 = vsel %vm9533, 1.0, 0.0
    %v9662 = vsel %vm9534, 1.0, 0.0
    %v9663 = vsel %vm9535, 1.0, 0.0
    %v9664 = vsel %vm9536, 1.0, 0.0
    %v9665 = vsel %vm9537, 1.0, 0.0
    %v9666 = vsel %vm9538, 1.0, 0.0
    %v9667 = vsel %vm9539, 1.0, 0.0
    %v9668 = vsel %vm9540, 1.0, 0.0
    %v9669 = vsel %vm9541, 1.0, 0.0
    %v9670 = vsel %vm9542, 1.0, 0.0
    %v9671 = vsel %vm9543, 1.0, 0.0
    %v9672 = vsel %vm9544, 1.0, 0.0
    %v9673 = vsel %vm9545, 1.0, 0.0
    %v9674 = vsel %vm9546, 1.0, 0.0
    %v9675 = vsel %vm9547, 1.0, 0.0
    %v9676 = vsel %vm9548, 1.0, 0.0
    %v9677 = vsel %vm9549, 1.0, 0.0
    %v9678 = vsel %vm9550, 1.0, 0.0
    %v9679 = vsel %vm9551, 1.0, 0.0
    %v9680 = vsel %vm9552, 1.0, 0.0
    %v9681 = vsel %vm9553, 1.0, 0.0
    %v9682 = vsel %vm9554, 1.0, 0.0
    %v9683 = vsel %vm9555, 1.0, 0.0
    %v9684 = vsel %vm9556, 1.0, 0.0
    %v9685 = vsel %vm9557, 1.0, 0.0
    %v9686 = vsel %vm9558, 1.0, 0.0
    %v9687 = vsel %vm9559, 1.0, 0.0
    %v9688 = vsel %vm9560, 1.0, 0.0
    %v9689 = vsel %vm9561, 1.0, 0.0
    %v9690 = vsel %vm9562, 1.0, 0.0
    %v9691 = vsel %vm9563, 1.0, 0.0
    %v9692 = vsel %vm9564, 1.0, 0.0
    %v9693 = vsel %vm9565, 1.0, 0.0
    %v9694 = vsel %vm9566, 1.0, 0.0
    %v9695 = vsel %vm9567, 1.0, 0.0
    %v9696 = vsel %vm9568, 1.0, 0.0
    %v9697 = vsel %vm9569, 1.0, 0.0
    %v9698 = vsel %vm9570, 1.0, 0.0
    %v9699 = vsel %vm9571, 1.0, 0.0
    %v9700 = vsel %vm9572, 1.0, 0.0
    %v9701 = vsel %vm9573, 1.0, 0.0
    %v9702 = vsel %vm9574, 1.0, 0.0
    %v9703 = vsel %vm9575, 1.0, 0.0
    %v9704 = vsel %vm9576, 1.0, 0.0
    %v9705 = vsel %vm9577, 1.0, 0.0
    %v9706 = vsel %vm9578, 1.0, 0.0
    %v9707 = vsel %vm9579, 1.0, 0.0
    %v9708 = vsel %vm9580, 1.0, 0.0
    %v9709 = vsel %vm9581, 1.0, 0.0
    %v9710 = vsel %vm9582, 1.0, 0.0
    %v9711 = vsel %vm9583, 1.0, 0.0
    %v9712 = vsel %vm9584, 1.0, 0.0
    %v9713 = vsel %vm9585, 1.0, 0.0
    %v9714 = vsel %vm9586, 1.0, 0.0
    %v9715 = vsel %vm9587, 1.0, 0.0
    %v9716 = vsel %vm9588, 1.0, 0.0
    %v9717 = vsel %vm9589, 1.0, 0.0
    %v9718 = vsel %vm9590, 1.0, 0.0
    %v9719 = vsel %vm9591, 1.0, 0.0
    %v9720 = vsel %vm9592, 1.0, 0.0
    %v9721 = vsel %vm9593, 1.0, 0.0
    %v9722 = vsel %vm9594, 1.0, 0.0
    %v9723 = vsel %vm9595, 1.0, 0.0
    %v9724 = vsel %vm9596, 1.0, 0.0
    %v9725 = vsel %vm9597, 1.0, 0.0
    %v9726 = vsel %vm9598, 1.0, 0.0
    %v9727 = vsel %vm9599, 1.0, 0.0
    %v9728 = vsel %vm9600, 1.0, 0.0
    %v9729 = vsel %vm9601, 1.0, 0.0
    %v9730 = vsel %vm9602, 1.0, 0.0
    %v9731 = vsel %vm9603, 1.0, 0.0
    %v9732 = vsel %vm9604, 1.0, 0.0
    %v9733 = vsel %vm9605, 1.0, 0.0
    %v9734 = vsel %vm9606, 1.0, 0.0
    %v9735 = vsel %vm9607, 1.0, 0.0
    %v9736 = vsel %vm9608, 1.0, 0.0
    %v9737 = vsel %vm9609, 1.0, 0.0
    %v9738 = vsel %vm9610, 1.0, 0.0
    %v9739 = vsel %vm9611, 1.0, 0.0
    %v9740 = vsel %vm9612, 1.0, 0.0
    %v9741 = vsel %vm9613, 1.0, 0.0
    %v9742 = vsel %vm9614, 1.0, 0.0
    %v9743 = vsel %vm9615, 1.0, 0.0
    %v9744 = vpack.c.bf16 %v9624, %v9616
    %v9745 = vpack.c.bf16 %v9625, %v9617
    %v9746 = vpack.c.bf16 %v9626, %v9618
    %v9747 = vpack.c.bf16 %v9627, %v9619
    %v9748 = vpack.c.bf16 %v9628, %v9620
    %v9749 = vpack.c.bf16 %v9629, %v9621
    %v9750 = vpack.c.bf16 %v9630, %v9622
    %v9751 = vpack.c.bf16 %v9631, %v9623
    %v9752 = vpack.c.bf16 %v9640, %v9632
    %v9753 = vpack.c.bf16 %v9641, %v9633
    %v9754 = vpack.c.bf16 %v9642, %v9634
    %v9755 = vpack.c.bf16 %v9643, %v9635
    %v9756 = vpack.c.bf16 %v9644, %v9636
    %v9757 = vpack.c.bf16 %v9645, %v9637
    %v9758 = vpack.c.bf16 %v9646, %v9638
    %v9759 = vpack.c.bf16 %v9647, %v9639
    %v9760 = vpack.c.bf16 %v9656, %v9648
    %v9761 = vpack.c.bf16 %v9657, %v9649
    %v9762 = vpack.c.bf16 %v9658, %v9650
    %v9763 = vpack.c.bf16 %v9659, %v9651
    %v9764 = vpack.c.bf16 %v9660, %v9652
    %v9765 = vpack.c.bf16 %v9661, %v9653
    %v9766 = vpack.c.bf16 %v9662, %v9654
    %v9767 = vpack.c.bf16 %v9663, %v9655
    %v9768 = vpack.c.bf16 %v9672, %v9664
    %v9769 = vpack.c.bf16 %v9673, %v9665
    %v9770 = vpack.c.bf16 %v9674, %v9666
    %v9771 = vpack.c.bf16 %v9675, %v9667
    %v9772 = vpack.c.bf16 %v9676, %v9668
    %v9773 = vpack.c.bf16 %v9677, %v9669
    %v9774 = vpack.c.bf16 %v9678, %v9670
    %v9775 = vpack.c.bf16 %v9679, %v9671
    %v9776 = vpack.c.bf16 %v9688, %v9680
    %v9777 = vpack.c.bf16 %v9689, %v9681
    %v9778 = vpack.c.bf16 %v9690, %v9682
    %v9779 = vpack.c.bf16 %v9691, %v9683
    %v9780 = vpack.c.bf16 %v9692, %v9684
    %v9781 = vpack.c.bf16 %v9693, %v9685
    %v9782 = vpack.c.bf16 %v9694, %v9686
    %v9783 = vpack.c.bf16 %v9695, %v9687
    %v9784 = vpack.c.bf16 %v9704, %v9696
    %v9785 = vpack.c.bf16 %v9705, %v9697
    %v9786 = vpack.c.bf16 %v9706, %v9698
    %v9787 = vpack.c.bf16 %v9707, %v9699
    %v9788 = vpack.c.bf16 %v9708, %v9700
    %v9789 = vpack.c.bf16 %v9709, %v9701
    %v9790 = vpack.c.bf16 %v9710, %v9702
    %v9791 = vpack.c.bf16 %v9711, %v9703
    %v9792 = vpack.c.bf16 %v9720, %v9712
    %v9793 = vpack.c.bf16 %v9721, %v9713
    %v9794 = vpack.c.bf16 %v9722, %v9714
    %v9795 = vpack.c.bf16 %v9723, %v9715
    %v9796 = vpack.c.bf16 %v9724, %v9716
    %v9797 = vpack.c.bf16 %v9725, %v9717
    %v9798 = vpack.c.bf16 %v9726, %v9718
    %v9799 = vpack.c.bf16 %v9727, %v9719
    %v9800 = vpack.c.bf16 %v9736, %v9728
    %v9801 = vpack.c.bf16 %v9737, %v9729
    %v9802 = vpack.c.bf16 %v9738, %v9730
    %v9803 = vpack.c.bf16 %v9739, %v9731
    %v9804 = vpack.c.bf16 %v9740, %v9732
    %v9805 = vpack.c.bf16 %v9741, %v9733
    %v9806 = vpack.c.bf16 %v9742, %v9734
    %v9807 = vpack.c.bf16 %v9743, %v9735
    %s9808 = scalar_lea.vmem [#allocation2], 1536
    %v9809 = vld [vmem:[%s9808] sm:$0xf]
    %v9810 = vld [vmem:[%s9808 + $0x4] sm:$0xf]
    %v9811 = vld [vmem:[%s9808 + $0x8] sm:$0xf]
    %v9812 = vld [vmem:[%s9808 + $0xc] sm:$0xf]
    %v9813 = vld [vmem:[%s9808 + $0x10] sm:$0xf]
    %v9814 = vld [vmem:[%s9808 + $0x14] sm:$0xf]
    %v9815 = vld [vmem:[%s9808 + $0x18] sm:$0xf]
    %v9816 = vld [vmem:[%s9808 + $0x1c] sm:$0xf]
    %v9817 = vld [vmem:[%s9808 + $0x20] sm:$0xf]
    %v9818 = vld [vmem:[%s9808 + $0x24] sm:$0xf]
    %v9819 = vld [vmem:[%s9808 + $0x28] sm:$0xf]
    %v9820 = vld [vmem:[%s9808 + $0x2c] sm:$0xf]
    %v9821 = vld [vmem:[%s9808 + $0x30] sm:$0xf]
    %v9822 = vld [vmem:[%s9808 + $0x34] sm:$0xf]
    %v9823 = vld [vmem:[%s9808 + $0x38] sm:$0xf]
    %v9824 = vld [vmem:[%s9808 + $0x3c] sm:$0xf]
    %v9825 = vld [vmem:[%s9808 + $0x40] sm:$0xf]
    %v9826 = vld [vmem:[%s9808 + $0x44] sm:$0xf]
    %v9827 = vld [vmem:[%s9808 + $0x48] sm:$0xf]
    %v9828 = vld [vmem:[%s9808 + $0x4c] sm:$0xf]
    %v9829 = vld [vmem:[%s9808 + $0x50] sm:$0xf]
    %v9830 = vld [vmem:[%s9808 + $0x54] sm:$0xf]
    %v9831 = vld [vmem:[%s9808 + $0x58] sm:$0xf]
    %v9832 = vld [vmem:[%s9808 + $0x5c] sm:$0xf]
    %v9833 = vld [vmem:[%s9808 + $0x60] sm:$0xf]
    %v9834 = vld [vmem:[%s9808 + $0x64] sm:$0xf]
    %v9835 = vld [vmem:[%s9808 + $0x68] sm:$0xf]
    %v9836 = vld [vmem:[%s9808 + $0x6c] sm:$0xf]
    %v9837 = vld [vmem:[%s9808 + $0x70] sm:$0xf]
    %v9838 = vld [vmem:[%s9808 + $0x74] sm:$0xf]
    %v9839 = vld [vmem:[%s9808 + $0x78] sm:$0xf]
    %v9840 = vld [vmem:[%s9808 + $0x7c] sm:$0xf]
    %v9841 = vld [vmem:[%s9808 + $0x80] sm:$0xf]
    %v9842 = vld [vmem:[%s9808 + $0x84] sm:$0xf]
    %v9843 = vld [vmem:[%s9808 + $0x88] sm:$0xf]
    %v9844 = vld [vmem:[%s9808 + $0x8c] sm:$0xf]
    %v9845 = vld [vmem:[%s9808 + $0x90] sm:$0xf]
    %v9846 = vld [vmem:[%s9808 + $0x94] sm:$0xf]
    %v9847 = vld [vmem:[%s9808 + $0x98] sm:$0xf]
    %v9848 = vld [vmem:[%s9808 + $0x9c] sm:$0xf]
    %v9849 = vld [vmem:[%s9808 + $0xa0] sm:$0xf]
    %v9850 = vld [vmem:[%s9808 + $0xa4] sm:$0xf]
    %v9851 = vld [vmem:[%s9808 + $0xa8] sm:$0xf]
    %v9852 = vld [vmem:[%s9808 + $0xac] sm:$0xf]
    %v9853 = vld [vmem:[%s9808 + $0xb0] sm:$0xf]
    %v9854 = vld [vmem:[%s9808 + $0xb4] sm:$0xf]
    %v9855 = vld [vmem:[%s9808 + $0xb8] sm:$0xf]
    %v9856 = vld [vmem:[%s9808 + $0xbc] sm:$0xf]
    %v9857 = vld [vmem:[%s9808 + $0xc0] sm:$0xf]
    %v9858 = vld [vmem:[%s9808 + $0xc4] sm:$0xf]
    %v9859 = vld [vmem:[%s9808 + $0xc8] sm:$0xf]
    %v9860 = vld [vmem:[%s9808 + $0xcc] sm:$0xf]
    %v9861 = vld [vmem:[%s9808 + $0xd0] sm:$0xf]
    %v9862 = vld [vmem:[%s9808 + $0xd4] sm:$0xf]
    %v9863 = vld [vmem:[%s9808 + $0xd8] sm:$0xf]
    %v9864 = vld [vmem:[%s9808 + $0xdc] sm:$0xf]
    %v9865 = vld [vmem:[%s9808 + $0xe0] sm:$0xf]
    %v9866 = vld [vmem:[%s9808 + $0xe4] sm:$0xf]
    %v9867 = vld [vmem:[%s9808 + $0xe8] sm:$0xf]
    %v9868 = vld [vmem:[%s9808 + $0xec] sm:$0xf]
    %v9869 = vld [vmem:[%s9808 + $0xf0] sm:$0xf]
    %v9870 = vld [vmem:[%s9808 + $0xf4] sm:$0xf]
    %v9871 = vld [vmem:[%s9808 + $0xf8] sm:$0xf]
    %v9872 = vld [vmem:[%s9808 + $0xfc] sm:$0xf]
    %v9873 = vld [vmem:[%s9808 + $0x100] sm:$0xf]
    %v9874 = vld [vmem:[%s9808 + $0x104] sm:$0xf]
    %v9875 = vld [vmem:[%s9808 + $0x108] sm:$0xf]
    %v9876 = vld [vmem:[%s9808 + $0x10c] sm:$0xf]
    %v9877 = vld [vmem:[%s9808 + $0x110] sm:$0xf]
    %v9878 = vld [vmem:[%s9808 + $0x114] sm:$0xf]
    %v9879 = vld [vmem:[%s9808 + $0x118] sm:$0xf]
    %v9880 = vld [vmem:[%s9808 + $0x11c] sm:$0xf]
    %v9881 = vld [vmem:[%s9808 + $0x120] sm:$0xf]
    %v9882 = vld [vmem:[%s9808 + $0x124] sm:$0xf]
    %v9883 = vld [vmem:[%s9808 + $0x128] sm:$0xf]
    %v9884 = vld [vmem:[%s9808 + $0x12c] sm:$0xf]
    %v9885 = vld [vmem:[%s9808 + $0x130] sm:$0xf]
    %v9886 = vld [vmem:[%s9808 + $0x134] sm:$0xf]
    %v9887 = vld [vmem:[%s9808 + $0x138] sm:$0xf]
    %v9888 = vld [vmem:[%s9808 + $0x13c] sm:$0xf]
    %v9889 = vld [vmem:[%s9808 + $0x140] sm:$0xf]
    %v9890 = vld [vmem:[%s9808 + $0x144] sm:$0xf]
    %v9891 = vld [vmem:[%s9808 + $0x148] sm:$0xf]
    %v9892 = vld [vmem:[%s9808 + $0x14c] sm:$0xf]
    %v9893 = vld [vmem:[%s9808 + $0x150] sm:$0xf]
    %v9894 = vld [vmem:[%s9808 + $0x154] sm:$0xf]
    %v9895 = vld [vmem:[%s9808 + $0x158] sm:$0xf]
    %v9896 = vld [vmem:[%s9808 + $0x15c] sm:$0xf]
    %v9897 = vld [vmem:[%s9808 + $0x160] sm:$0xf]
    %v9898 = vld [vmem:[%s9808 + $0x164] sm:$0xf]
    %v9899 = vld [vmem:[%s9808 + $0x168] sm:$0xf]
    %v9900 = vld [vmem:[%s9808 + $0x16c] sm:$0xf]
    %v9901 = vld [vmem:[%s9808 + $0x170] sm:$0xf]
    %v9902 = vld [vmem:[%s9808 + $0x174] sm:$0xf]
    %v9903 = vld [vmem:[%s9808 + $0x178] sm:$0xf]
    %v9904 = vld [vmem:[%s9808 + $0x17c] sm:$0xf]
    %v9905 = vld [vmem:[%s9808 + $0x180] sm:$0xf]
    %v9906 = vld [vmem:[%s9808 + $0x184] sm:$0xf]
    %v9907 = vld [vmem:[%s9808 + $0x188] sm:$0xf]
    %v9908 = vld [vmem:[%s9808 + $0x18c] sm:$0xf]
    %v9909 = vld [vmem:[%s9808 + $0x190] sm:$0xf]
    %v9910 = vld [vmem:[%s9808 + $0x194] sm:$0xf]
    %v9911 = vld [vmem:[%s9808 + $0x198] sm:$0xf]
    %v9912 = vld [vmem:[%s9808 + $0x19c] sm:$0xf]
    %v9913 = vld [vmem:[%s9808 + $0x1a0] sm:$0xf]
    %v9914 = vld [vmem:[%s9808 + $0x1a4] sm:$0xf]
    %v9915 = vld [vmem:[%s9808 + $0x1a8] sm:$0xf]
    %v9916 = vld [vmem:[%s9808 + $0x1ac] sm:$0xf]
    %v9917 = vld [vmem:[%s9808 + $0x1b0] sm:$0xf]
    %v9918 = vld [vmem:[%s9808 + $0x1b4] sm:$0xf]
    %v9919 = vld [vmem:[%s9808 + $0x1b8] sm:$0xf]
    %v9920 = vld [vmem:[%s9808 + $0x1bc] sm:$0xf]
    %v9921 = vld [vmem:[%s9808 + $0x1c0] sm:$0xf]
    %v9922 = vld [vmem:[%s9808 + $0x1c4] sm:$0xf]
    %v9923 = vld [vmem:[%s9808 + $0x1c8] sm:$0xf]
    %v9924 = vld [vmem:[%s9808 + $0x1cc] sm:$0xf]
    %v9925 = vld [vmem:[%s9808 + $0x1d0] sm:$0xf]
    %v9926 = vld [vmem:[%s9808 + $0x1d4] sm:$0xf]
    %v9927 = vld [vmem:[%s9808 + $0x1d8] sm:$0xf]
    %v9928 = vld [vmem:[%s9808 + $0x1dc] sm:$0xf]
    %v9929 = vld [vmem:[%s9808 + $0x1e0] sm:$0xf]
    %v9930 = vld [vmem:[%s9808 + $0x1e4] sm:$0xf]
    %v9931 = vld [vmem:[%s9808 + $0x1e8] sm:$0xf]
    %v9932 = vld [vmem:[%s9808 + $0x1ec] sm:$0xf]
    %v9933 = vld [vmem:[%s9808 + $0x1f0] sm:$0xf]
    %v9934 = vld [vmem:[%s9808 + $0x1f4] sm:$0xf]
    %v9935 = vld [vmem:[%s9808 + $0x1f8] sm:$0xf]
    %v9936 = vld [vmem:[%s9808 + $0x1fc] sm:$0xf]
    %v10065 = vunpack.c.l.b16 %v9809
    %v10066 = vunpack.c.l.b16 %v9810
    %v10067 = vunpack.c.l.b16 %v9811
    %v10068 = vunpack.c.l.b16 %v9812
    %v10069 = vunpack.c.l.b16 %v9813
    %v10070 = vunpack.c.l.b16 %v9814
    %v10071 = vunpack.c.l.b16 %v9815
    %v10072 = vunpack.c.l.b16 %v9816
    %v10073 = vunpack.c.l.b16 %v9817
    %v10074 = vunpack.c.l.b16 %v9818
    %v10075 = vunpack.c.l.b16 %v9819
    %v10076 = vunpack.c.l.b16 %v9820
    %v10077 = vunpack.c.l.b16 %v9821
    %v10078 = vunpack.c.l.b16 %v9822
    %v10079 = vunpack.c.l.b16 %v9823
    %v10080 = vunpack.c.l.b16 %v9824
    %v10081 = vunpack.c.l.b16 %v9825
    %v10082 = vunpack.c.l.b16 %v9826
    %v10083 = vunpack.c.l.b16 %v9827
    %v10084 = vunpack.c.l.b16 %v9828
    %v10085 = vunpack.c.l.b16 %v9829
    %v10086 = vunpack.c.l.b16 %v9830
    %v10087 = vunpack.c.l.b16 %v9831
    %v10088 = vunpack.c.l.b16 %v9832
    %v10089 = vunpack.c.l.b16 %v9833
    %v10090 = vunpack.c.l.b16 %v9834
    %v10091 = vunpack.c.l.b16 %v9835
    %v10092 = vunpack.c.l.b16 %v9836
    %v10093 = vunpack.c.l.b16 %v9837
    %v10094 = vunpack.c.l.b16 %v9838
    %v10095 = vunpack.c.l.b16 %v9839
    %v10096 = vunpack.c.l.b16 %v9840
    %v10097 = vunpack.c.l.b16 %v9841
    %v10098 = vunpack.c.l.b16 %v9842
    %v10099 = vunpack.c.l.b16 %v9843
    %v10100 = vunpack.c.l.b16 %v9844
    %v10101 = vunpack.c.l.b16 %v9845
    %v10102 = vunpack.c.l.b16 %v9846
    %v10103 = vunpack.c.l.b16 %v9847
    %v10104 = vunpack.c.l.b16 %v9848
    %v10105 = vunpack.c.l.b16 %v9849
    %v10106 = vunpack.c.l.b16 %v9850
    %v10107 = vunpack.c.l.b16 %v9851
    %v10108 = vunpack.c.l.b16 %v9852
    %v10109 = vunpack.c.l.b16 %v9853
    %v10110 = vunpack.c.l.b16 %v9854
    %v10111 = vunpack.c.l.b16 %v9855
    %v10112 = vunpack.c.l.b16 %v9856
    %v10113 = vunpack.c.l.b16 %v9857
    %v10114 = vunpack.c.l.b16 %v9858
    %v10115 = vunpack.c.l.b16 %v9859
    %v10116 = vunpack.c.l.b16 %v9860
    %v10117 = vunpack.c.l.b16 %v9861
    %v10118 = vunpack.c.l.b16 %v9862
    %v10119 = vunpack.c.l.b16 %v9863
    %v10120 = vunpack.c.l.b16 %v9864
    %v10121 = vunpack.c.l.b16 %v9865
    %v10122 = vunpack.c.l.b16 %v9866
    %v10123 = vunpack.c.l.b16 %v9867
    %v10124 = vunpack.c.l.b16 %v9868
    %v10125 = vunpack.c.l.b16 %v9869
    %v10126 = vunpack.c.l.b16 %v9870
    %v10127 = vunpack.c.l.b16 %v9871
    %v10128 = vunpack.c.l.b16 %v9872
    %v10129 = vunpack.c.l.b16 %v9873
    %v10130 = vunpack.c.l.b16 %v9874
    %v10131 = vunpack.c.l.b16 %v9875
    %v10132 = vunpack.c.l.b16 %v9876
    %v10133 = vunpack.c.l.b16 %v9877
    %v10134 = vunpack.c.l.b16 %v9878
    %v10135 = vunpack.c.l.b16 %v9879
    %v10136 = vunpack.c.l.b16 %v9880
    %v10137 = vunpack.c.l.b16 %v9881
    %v10138 = vunpack.c.l.b16 %v9882
    %v10139 = vunpack.c.l.b16 %v9883
    %v10140 = vunpack.c.l.b16 %v9884
    %v10141 = vunpack.c.l.b16 %v9885
    %v10142 = vunpack.c.l.b16 %v9886
    %v10143 = vunpack.c.l.b16 %v9887
    %v10144 = vunpack.c.l.b16 %v9888
    %v10145 = vunpack.c.l.b16 %v9889
    %v10146 = vunpack.c.l.b16 %v9890
    %v10147 = vunpack.c.l.b16 %v9891
    %v10148 = vunpack.c.l.b16 %v9892
    %v10149 = vunpack.c.l.b16 %v9893
    %v10150 = vunpack.c.l.b16 %v9894
    %v10151 = vunpack.c.l.b16 %v9895
    %v10152 = vunpack.c.l.b16 %v9896
    %v10153 = vunpack.c.l.b16 %v9897
    %v10154 = vunpack.c.l.b16 %v9898
    %v10155 = vunpack.c.l.b16 %v9899
    %v10156 = vunpack.c.l.b16 %v9900
    %v10157 = vunpack.c.l.b16 %v9901
    %v10158 = vunpack.c.l.b16 %v9902
    %v10159 = vunpack.c.l.b16 %v9903
    %v10160 = vunpack.c.l.b16 %v9904
    %v10161 = vunpack.c.l.b16 %v9905
    %v10162 = vunpack.c.l.b16 %v9906
    %v10163 = vunpack.c.l.b16 %v9907
    %v10164 = vunpack.c.l.b16 %v9908
    %v10165 = vunpack.c.l.b16 %v9909
    %v10166 = vunpack.c.l.b16 %v9910
    %v10167 = vunpack.c.l.b16 %v9911
    %v10168 = vunpack.c.l.b16 %v9912
    %v10169 = vunpack.c.l.b16 %v9913
    %v10170 = vunpack.c.l.b16 %v9914
    %v10171 = vunpack.c.l.b16 %v9915
    %v10172 = vunpack.c.l.b16 %v9916
    %v10173 = vunpack.c.l.b16 %v9917
    %v10174 = vunpack.c.l.b16 %v9918
    %v10175 = vunpack.c.l.b16 %v9919
    %v10176 = vunpack.c.l.b16 %v9920
    %v10177 = vunpack.c.l.b16 %v9921
    %v10178 = vunpack.c.l.b16 %v9922
    %v10179 = vunpack.c.l.b16 %v9923
    %v10180 = vunpack.c.l.b16 %v9924
    %v10181 = vunpack.c.l.b16 %v9925
    %v10182 = vunpack.c.l.b16 %v9926
    %v10183 = vunpack.c.l.b16 %v9927
    %v10184 = vunpack.c.l.b16 %v9928
    %v10185 = vunpack.c.l.b16 %v9929
    %v10186 = vunpack.c.l.b16 %v9930
    %v10187 = vunpack.c.l.b16 %v9931
    %v10188 = vunpack.c.l.b16 %v9932
    %v10189 = vunpack.c.l.b16 %v9933
    %v10190 = vunpack.c.l.b16 %v9934
    %v10191 = vunpack.c.l.b16 %v9935
    %v10192 = vunpack.c.l.b16 %v9936
    %v10193 = vpack.c.b16 %v10066, %v10065
    %v10194 = vpack.c.b16 %v10068, %v10067
    %v10195 = vpack.c.b16 %v10070, %v10069
    %v10196 = vpack.c.b16 %v10072, %v10071
    %v10197 = vpack.c.b16 %v10074, %v10073
    %v10198 = vpack.c.b16 %v10076, %v10075
    %v10199 = vpack.c.b16 %v10078, %v10077
    %v10200 = vpack.c.b16 %v10080, %v10079
    %v10201 = vpack.c.b16 %v10082, %v10081
    %v10202 = vpack.c.b16 %v10084, %v10083
    %v10203 = vpack.c.b16 %v10086, %v10085
    %v10204 = vpack.c.b16 %v10088, %v10087
    %v10205 = vpack.c.b16 %v10090, %v10089
    %v10206 = vpack.c.b16 %v10092, %v10091
    %v10207 = vpack.c.b16 %v10094, %v10093
    %v10208 = vpack.c.b16 %v10096, %v10095
    %v10209 = vpack.c.b16 %v10098, %v10097
    %v10210 = vpack.c.b16 %v10100, %v10099
    %v10211 = vpack.c.b16 %v10102, %v10101
    %v10212 = vpack.c.b16 %v10104, %v10103
    %v10213 = vpack.c.b16 %v10106, %v10105
    %v10214 = vpack.c.b16 %v10108, %v10107
    %v10215 = vpack.c.b16 %v10110, %v10109
    %v10216 = vpack.c.b16 %v10112, %v10111
    %v10217 = vpack.c.b16 %v10114, %v10113
    %v10218 = vpack.c.b16 %v10116, %v10115
    %v10219 = vpack.c.b16 %v10118, %v10117
    %v10220 = vpack.c.b16 %v10120, %v10119
    %v10221 = vpack.c.b16 %v10122, %v10121
    %v10222 = vpack.c.b16 %v10124, %v10123
    %v10223 = vpack.c.b16 %v10126, %v10125
    %v10224 = vpack.c.b16 %v10128, %v10127
    %v10225 = vpack.c.b16 %v10130, %v10129
    %v10226 = vpack.c.b16 %v10132, %v10131
    %v10227 = vpack.c.b16 %v10134, %v10133
    %v10228 = vpack.c.b16 %v10136, %v10135
    %v10229 = vpack.c.b16 %v10138, %v10137
    %v10230 = vpack.c.b16 %v10140, %v10139
    %v10231 = vpack.c.b16 %v10142, %v10141
    %v10232 = vpack.c.b16 %v10144, %v10143
    %v10233 = vpack.c.b16 %v10146, %v10145
    %v10234 = vpack.c.b16 %v10148, %v10147
    %v10235 = vpack.c.b16 %v10150, %v10149
    %v10236 = vpack.c.b16 %v10152, %v10151
    %v10237 = vpack.c.b16 %v10154, %v10153
    %v10238 = vpack.c.b16 %v10156, %v10155
    %v10239 = vpack.c.b16 %v10158, %v10157
    %v10240 = vpack.c.b16 %v10160, %v10159
    %v10241 = vpack.c.b16 %v10162, %v10161
    %v10242 = vpack.c.b16 %v10164, %v10163
    %v10243 = vpack.c.b16 %v10166, %v10165
    %v10244 = vpack.c.b16 %v10168, %v10167
    %v10245 = vpack.c.b16 %v10170, %v10169
    %v10246 = vpack.c.b16 %v10172, %v10171
    %v10247 = vpack.c.b16 %v10174, %v10173
    %v10248 = vpack.c.b16 %v10176, %v10175
    %v10249 = vpack.c.b16 %v10178, %v10177
    %v10250 = vpack.c.b16 %v10180, %v10179
    %v10251 = vpack.c.b16 %v10182, %v10181
    %v10252 = vpack.c.b16 %v10184, %v10183
    %v10253 = vpack.c.b16 %v10186, %v10185
    %v10254 = vpack.c.b16 %v10188, %v10187
    %v10255 = vpack.c.b16 %v10190, %v10189
    %v10256 = vpack.c.b16 %v10192, %v10191
    %10321 = vmatprep.subr.bf16.mxu0 0
    %10322 = vmatpush1.bf16.msra.mxu0 %v10193
    %10323 = vmatprep.subr.bf16.mxu0 0
    %10324 = vmatpush1.bf16.msra.mxu0 %v10194
    %10325 = vmatprep.subr.bf16.mxu0 0
    %10326 = vmatpush1.bf16.msra.mxu0 %v10195
    %10327 = vmatprep.subr.bf16.mxu0 0
    %10328 = vmatpush1.bf16.msra.mxu0 %v10196
    %10329 = vmatprep.subr.bf16.mxu0 0
    %10330 = vmatpush1.bf16.msra.mxu0 %v10197
    %10331 = vmatprep.subr.bf16.mxu0 0
    %10332 = vmatpush1.bf16.msra.mxu0 %v10198
    %10333 = vmatprep.subr.bf16.mxu0 0
    %10334 = vmatpush1.bf16.msra.mxu0 %v10199
    %10335 = vmatprep.subr.bf16.mxu0 0
    %10336 = vmatpush1.bf16.msra.mxu0 %v10200
    %10337 = vmatprep.subr.bf16.mxu0 0
    %10338 = vmatpush1.bf16.msra.mxu0 %v10201
    %10339 = vmatprep.subr.bf16.mxu0 0
    %10340 = vmatpush1.bf16.msra.mxu0 %v10202
    %10341 = vmatprep.subr.bf16.mxu0 0
    %10342 = vmatpush1.bf16.msra.mxu0 %v10203
    %10343 = vmatprep.subr.bf16.mxu0 0
    %10344 = vmatpush1.bf16.msra.mxu0 %v10204
    %10345 = vmatprep.subr.bf16.mxu0 0
    %10346 = vmatpush1.bf16.msra.mxu0 %v10205
    %10347 = vmatprep.subr.bf16.mxu0 0
    %10348 = vmatpush1.bf16.msra.mxu0 %v10206
    %10349 = vmatprep.subr.bf16.mxu0 0
    %10350 = vmatpush1.bf16.msra.mxu0 %v10207
    %10351 = vmatprep.subr.bf16.mxu0 0
    %10352 = vmatpush1.bf16.msra.mxu0 %v10208
    %10353 = vmatprep.mubr.bf16.mxu0 %v9745
    %10354 = vmatmul.mubr.bf16.gmra.mrb[0].mxu0 %v9744
    %v10355 = vpop.f32.mrb[0].mxu0
    %v10356 = vadd.f32 0.0, %v10355
    %v10357 = vpop.f32.mrb[0].mxu0
    %v10358 = vpop.f32.mrb[0].mxu0
    %v10359 = vadd.f32 0.0, %v10358
    %v10360 = vpop.f32.mrb[0].mxu0
    %10361 = vmatprep.mubr.bf16.mxu0 %v9753
    %10362 = vmatmul.mubr.bf16.gmra.mrb[0].mxu0 %v9752
    %v10363 = vpop.f32.mrb[0].mxu0
    %v10364 = vadd.f32 0.0, %v10363
    %v10365 = vpop.f32.mrb[0].mxu0
    %v10366 = vpop.f32.mrb[0].mxu0
    %v10367 = vadd.f32 0.0, %v10366
    %v10368 = vpop.f32.mrb[0].mxu0
    %10369 = vmatprep.mubr.bf16.mxu0 %v9761
    %10370 = vmatmul.mubr.bf16.gmra.mrb[0].mxu0 %v9760
    %v10371 = vpop.f32.mrb[0].mxu0
    %v10372 = vadd.f32 0.0, %v10371
    %v10373 = vpop.f32.mrb[0].mxu0
    %v10374 = vpop.f32.mrb[0].mxu0
    %v10375 = vadd.f32 0.0, %v10374
    %v10376 = vpop.f32.mrb[0].mxu0
    %10377 = vmatprep.mubr.bf16.mxu0 %v9769
    %10378 = vmatmul.mubr.bf16.gmra.mrb[0].mxu0 %v9768
    %v10379 = vpop.f32.mrb[0].mxu0
    %v10380 = vadd.f32 0.0, %v10379
    %v10381 = vpop.f32.mrb[0].mxu0
    %v10382 = vpop.f32.mrb[0].mxu0
    %v10383 = vadd.f32 0.0, %v10382
    %v10384 = vpop.f32.mrb[0].mxu0
    %10385 = vmatprep.mubr.bf16.mxu0 %v9777
    %10386 = vmatmul.mubr.bf16.gmra.mrb[0].mxu0 %v9776
    %v10387 = vpop.f32.mrb[0].mxu0
    %v10388 = vadd.f32 0.0, %v10387
    %v10389 = vpop.f32.mrb[0].mxu0
    %v10390 = vpop.f32.mrb[0].mxu0
    %v10391 = vadd.f32 0.0, %v10390
    %v10392 = vpop.f32.mrb[0].mxu0
    %10393 = vmatprep.mubr.bf16.mxu0 %v9785
    %10394 = vmatmul.mubr.bf16.gmra.mrb[0].mxu0 %v9784
    %v10395 = vpop.f32.mrb[0].mxu0
    %v10396 = vadd.f32 0.0, %v10395
    %v10397 = vpop.f32.mrb[0].mxu0
    %v10398 = vpop.f32.mrb[0].mxu0
    %v10399 = vadd.f32 0.0, %v10398
    %v10400 = vpop.f32.mrb[0].mxu0
    %10401 = vmatprep.mubr.bf16.mxu0 %v9793
    %10402 = vmatmul.mubr.bf16.gmra.mrb[0].mxu0 %v9792
    %v10403 = vpop.f32.mrb[0].mxu0
    %v10404 = vadd.f32 0.0, %v10403
    %v10405 = vpop.f32.mrb[0].mxu0
    %v10406 = vpop.f32.mrb[0].mxu0
    %v10407 = vadd.f32 0.0, %v10406
    %v10408 = vpop.f32.mrb[0].mxu0
    %10409 = vmatprep.mubr.bf16.mxu0 %v9801
    %10410 = vmatmul.mubr.bf16.gmra.mrb[0].mxu0 %v9800
    %v10411 = vpop.f32.mrb[0].mxu0
    %v10412 = vadd.f32 0.0, %v10411
    %v10413 = vpop.f32.mrb[0].mxu0
    %v10414 = vpop.f32.mrb[0].mxu0
    %v10415 = vadd.f32 0.0, %v10414
    %v10416 = vpop.f32.mrb[0].mxu0
    %10417 = vdwg.mxu0
    %10418 = vmatprep.subr.bf16.mxu0 0
    %10419 = vmatpush1.bf16.msra.mxu0 %v10209
    %10420 = vmatprep.subr.bf16.mxu0 0
    %10421 = vmatpush1.bf16.msra.mxu0 %v10210
    %10422 = vmatprep.subr.bf16.mxu0 0
    %10423 = vmatpush1.bf16.msra.mxu0 %v10211
    %10424 = vmatprep.subr.bf16.mxu0 0
    %10425 = vmatpush1.bf16.msra.mxu0 %v10212
    %10426 = vmatprep.subr.bf16.mxu0 0
    %10427 = vmatpush1.bf16.msra.mxu0 %v10213
    %10428 = vmatprep.subr.bf16.mxu0 0
    %10429 = vmatpush1.bf16.msra.mxu0 %v10214
    %10430 = vmatprep.subr.bf16.mxu0 0
    %10431 = vmatpush1.bf16.msra.mxu0 %v10215
    %10432 = vmatprep.subr.bf16.mxu0 0
    %10433 = vmatpush1.bf16.msra.mxu0 %v10216
    %10434 = vmatprep.subr.bf16.mxu0 0
    %10435 = vmatpush1.bf16.msra.mxu0 %v10217
    %10436 = vmatprep.subr.bf16.mxu0 0
    %10437 = vmatpush1.bf16.msra.mxu0 %v10218
    %10438 = vmatprep.subr.bf16.mxu0 0
    %10439 = vmatpush1.bf16.msra.mxu0 %v10219
    %10440 = vmatprep.subr.bf16.mxu0 0
    %10441 = vmatpush1.bf16.msra.mxu0 %v10220
    %10442 = vmatprep.subr.bf16.mxu0 0
    %10443 = vmatpush1.bf16.msra.mxu0 %v10221
    %10444 = vmatprep.subr.bf16.mxu0 0
    %10445 = vmatpush1.bf16.msra.mxu0 %v10222
    %10446 = vmatprep.subr.bf16.mxu0 0
    %10447 = vmatpush1.bf16.msra.mxu0 %v10223
    %10448 = vmatprep.subr.bf16.mxu0 0
    %10449 = vmatpush1.bf16.msra.mxu0 %v10224
    %10450 = vmatprep.mubr.bf16.mxu0 %v9747
    %10451 = vmatmul.mubr.bf16.gmra.mrb[0].mxu0 %v9746
    %v10452 = vpop.f32.mrb[0].mxu0
    %v10453 = vadd.f32 %v10356, %v10452
    %v10454 = vpop.f32.mrb[0].mxu0
    %v10455 = vpop.f32.mrb[0].mxu0
    %v10456 = vadd.f32 %v10359, %v10455
    %v10457 = vpop.f32.mrb[0].mxu0
    %10458 = vmatprep.mubr.bf16.mxu0 %v9755
    %10459 = vmatmul.mubr.bf16.gmra.mrb[0].mxu0 %v9754
    %v10460 = vpop.f32.mrb[0].mxu0
    %v10461 = vadd.f32 %v10364, %v10460
    %v10462 = vpop.f32.mrb[0].mxu0
    %v10463 = vpop.f32.mrb[0].mxu0
    %v10464 = vadd.f32 %v10367, %v10463
    %v10465 = vpop.f32.mrb[0].mxu0
    %10466 = vmatprep.mubr.bf16.mxu0 %v9763
    %10467 = vmatmul.mubr.bf16.gmra.mrb[0].mxu0 %v9762
    %v10468 = vpop.f32.mrb[0].mxu0
    %v10469 = vadd.f32 %v10372, %v10468
    %v10470 = vpop.f32.mrb[0].mxu0
    %v10471 = vpop.f32.mrb[0].mxu0
    %v10472 = vadd.f32 %v10375, %v10471
    %v10473 = vpop.f32.mrb[0].mxu0
    %10474 = vmatprep.mubr.bf16.mxu0 %v9771
    %10475 = vmatmul.mubr.bf16.gmra.mrb[0].mxu0 %v9770
    %v10476 = vpop.f32.mrb[0].mxu0
    %v10477 = vadd.f32 %v10380, %v10476
    %v10478 = vpop.f32.mrb[0].mxu0
    %v10479 = vpop.f32.mrb[0].mxu0
    %v10480 = vadd.f32 %v10383, %v10479
    %v10481 = vpop.f32.mrb[0].mxu0
    %10482 = vmatprep.mubr.bf16.mxu0 %v9779
    %10483 = vmatmul.mubr.bf16.gmra.mrb[0].mxu0 %v9778
    %v10484 = vpop.f32.mrb[0].mxu0
    %v10485 = vadd.f32 %v10388, %v10484
    %v10486 = vpop.f32.mrb[0].mxu0
    %v10487 = vpop.f32.mrb[0].mxu0
    %v10488 = vadd.f32 %v10391, %v10487
    %v10489 = vpop.f32.mrb[0].mxu0
    %10490 = vmatprep.mubr.bf16.mxu0 %v9787
    %10491 = vmatmul.mubr.bf16.gmra.mrb[0].mxu0 %v9786
    %v10492 = vpop.f32.mrb[0].mxu0
    %v10493 = vadd.f32 %v10396, %v10492
    %v10494 = vpop.f32.mrb[0].mxu0
    %v10495 = vpop.f32.mrb[0].mxu0
    %v10496 = vadd.f32 %v10399, %v10495
    %v10497 = vpop.f32.mrb[0].mxu0
    %10498 = vmatprep.mubr.bf16.mxu0 %v9795
    %10499 = vmatmul.mubr.bf16.gmra.mrb[0].mxu0 %v9794
    %v10500 = vpop.f32.mrb[0].mxu0
    %v10501 = vadd.f32 %v10404, %v10500
    %v10502 = vpop.f32.mrb[0].mxu0
    %v10503 = vpop.f32.mrb[0].mxu0
    %v10504 = vadd.f32 %v10407, %v10503
    %v10505 = vpop.f32.mrb[0].mxu0
    %10506 = vmatprep.mubr.bf16.mxu0 %v9803
    %10507 = vmatmul.mubr.bf16.gmra.mrb[0].mxu0 %v9802
    %v10508 = vpop.f32.mrb[0].mxu0
    %v10509 = vadd.f32 %v10412, %v10508
    %v10510 = vpop.f32.mrb[0].mxu0
    %v10511 = vpop.f32.mrb[0].mxu0
    %v10512 = vadd.f32 %v10415, %v10511
    %v10513 = vpop.f32.mrb[0].mxu0
    %10514 = vdwg.mxu0
    %10515 = vmatprep.subr.bf16.mxu0 0
    %10516 = vmatpush1.bf16.msra.mxu0 %v10225
    %10517 = vmatprep.subr.bf16.mxu0 0
    %10518 = vmatpush1.bf16.msra.mxu0 %v10226
    %10519 = vmatprep.subr.bf16.mxu0 0
    %10520 = vmatpush1.bf16.msra.mxu0 %v10227
    %10521 = vmatprep.subr.bf16.mxu0 0
    %10522 = vmatpush1.bf16.msra.mxu0 %v10228
    %10523 = vmatprep.subr.bf16.mxu0 0
    %10524 = vmatpush1.bf16.msra.mxu0 %v10229
    %10525 = vmatprep.subr.bf16.mxu0 0
    %10526 = vmatpush1.bf16.msra.mxu0 %v10230
    %10527 = vmatprep.subr.bf16.mxu0 0
    %10528 = vmatpush1.bf16.msra.mxu0 %v10231
    %10529 = vmatprep.subr.bf16.mxu0 0
    %10530 = vmatpush1.bf16.msra.mxu0 %v10232
    %10531 = vmatprep.subr.bf16.mxu0 0
    %10532 = vmatpush1.bf16.msra.mxu0 %v10233
    %10533 = vmatprep.subr.bf16.mxu0 0
    %10534 = vmatpush1.bf16.msra.mxu0 %v10234
    %10535 = vmatprep.subr.bf16.mxu0 0
    %10536 = vmatpush1.bf16.msra.mxu0 %v10235
    %10537 = vmatprep.subr.bf16.mxu0 0
    %10538 = vmatpush1.bf16.msra.mxu0 %v10236
    %10539 = vmatprep.subr.bf16.mxu0 0
    %10540 = vmatpush1.bf16.msra.mxu0 %v10237
    %10541 = vmatprep.subr.bf16.mxu0 0
    %10542 = vmatpush1.bf16.msra.mxu0 %v10238
    %10543 = vmatprep.subr.bf16.mxu0 0
    %10544 = vmatpush1.bf16.msra.mxu0 %v10239
    %10545 = vmatprep.subr.bf16.mxu0 0
    %10546 = vmatpush1.bf16.msra.mxu0 %v10240
    %10547 = vmatprep.mubr.bf16.mxu0 %v9749
    %10548 = vmatmul.mubr.bf16.gmra.mrb[0].mxu0 %v9748
    %v10549 = vpop.f32.mrb[0].mxu0
    %v10550 = vadd.f32 %v10453, %v10549
    %v10551 = vpop.f32.mrb[0].mxu0
    %v10552 = vpop.f32.mrb[0].mxu0
    %v10553 = vadd.f32 %v10456, %v10552
    %v10554 = vpop.f32.mrb[0].mxu0
    %10555 = vmatprep.mubr.bf16.mxu0 %v9757
    %10556 = vmatmul.mubr.bf16.gmra.mrb[0].mxu0 %v9756
    %v10557 = vpop.f32.mrb[0].mxu0
    %v10558 = vadd.f32 %v10461, %v10557
    %v10559 = vpop.f32.mrb[0].mxu0
    %v10560 = vpop.f32.mrb[0].mxu0
    %v10561 = vadd.f32 %v10464, %v10560
    %v10562 = vpop.f32.mrb[0].mxu0
    %10563 = vmatprep.mubr.bf16.mxu0 %v9765
    %10564 = vmatmul.mubr.bf16.gmra.mrb[0].mxu0 %v9764
    %v10565 = vpop.f32.mrb[0].mxu0
    %v10566 = vadd.f32 %v10469, %v10565
    %v10567 = vpop.f32.mrb[0].mxu0
    %v10568 = vpop.f32.mrb[0].mxu0
    %v10569 = vadd.f32 %v10472, %v10568
    %v10570 = vpop.f32.mrb[0].mxu0
    %10571 = vmatprep.mubr.bf16.mxu0 %v9773
    %10572 = vmatmul.mubr.bf16.gmra.mrb[0].mxu0 %v9772
    %v10573 = vpop.f32.mrb[0].mxu0
    %v10574 = vadd.f32 %v10477, %v10573
    %v10575 = vpop.f32.mrb[0].mxu0
    %v10576 = vpop.f32.mrb[0].mxu0
    %v10577 = vadd.f32 %v10480, %v10576
    %v10578 = vpop.f32.mrb[0].mxu0
    %10579 = vmatprep.mubr.bf16.mxu0 %v9781
    %10580 = vmatmul.mubr.bf16.gmra.mrb[0].mxu0 %v9780
    %v10581 = vpop.f32.mrb[0].mxu0
    %v10582 = vadd.f32 %v10485, %v10581
    %v10583 = vpop.f32.mrb[0].mxu0
    %v10584 = vpop.f32.mrb[0].mxu0
    %v10585 = vadd.f32 %v10488, %v10584
    %v10586 = vpop.f32.mrb[0].mxu0
    %10587 = vmatprep.mubr.bf16.mxu0 %v9789
    %10588 = vmatmul.mubr.bf16.gmra.mrb[0].mxu0 %v9788
    %v10589 = vpop.f32.mrb[0].mxu0
    %v10590 = vadd.f32 %v10493, %v10589
    %v10591 = vpop.f32.mrb[0].mxu0
    %v10592 = vpop.f32.mrb[0].mxu0
    %v10593 = vadd.f32 %v10496, %v10592
    %v10594 = vpop.f32.mrb[0].mxu0
    %10595 = vmatprep.mubr.bf16.mxu0 %v9797
    %10596 = vmatmul.mubr.bf16.gmra.mrb[0].mxu0 %v9796
    %v10597 = vpop.f32.mrb[0].mxu0
    %v10598 = vadd.f32 %v10501, %v10597
    %v10599 = vpop.f32.mrb[0].mxu0
    %v10600 = vpop.f32.mrb[0].mxu0
    %v10601 = vadd.f32 %v10504, %v10600
    %v10602 = vpop.f32.mrb[0].mxu0
    %10603 = vmatprep.mubr.bf16.mxu0 %v9805
    %10604 = vmatmul.mubr.bf16.gmra.mrb[0].mxu0 %v9804
    %v10605 = vpop.f32.mrb[0].mxu0
    %v10606 = vadd.f32 %v10509, %v10605
    %v10607 = vpop.f32.mrb[0].mxu0
    %v10608 = vpop.f32.mrb[0].mxu0
    %v10609 = vadd.f32 %v10512, %v10608
    %v10610 = vpop.f32.mrb[0].mxu0
    %10611 = vdwg.mxu0
    %10612 = vmatprep.subr.bf16.mxu0 0
    %10613 = vmatpush1.bf16.msra.mxu0 %v10241
    %10614 = vmatprep.subr.bf16.mxu0 0
    %10615 = vmatpush1.bf16.msra.mxu0 %v10242
    %10616 = vmatprep.subr.bf16.mxu0 0
    %10617 = vmatpush1.bf16.msra.mxu0 %v10243
    %10618 = vmatprep.subr.bf16.mxu0 0
    %10619 = vmatpush1.bf16.msra.mxu0 %v10244
    %10620 = vmatprep.subr.bf16.mxu0 0
    %10621 = vmatpush1.bf16.msra.mxu0 %v10245
    %10622 = vmatprep.subr.bf16.mxu0 0
    %10623 = vmatpush1.bf16.msra.mxu0 %v10246
    %10624 = vmatprep.subr.bf16.mxu0 0
    %10625 = vmatpush1.bf16.msra.mxu0 %v10247
    %10626 = vmatprep.subr.bf16.mxu0 0
    %10627 = vmatpush1.bf16.msra.mxu0 %v10248
    %10628 = vmatprep.subr.bf16.mxu0 0
    %10629 = vmatpush1.bf16.msra.mxu0 %v10249
    %10630 = vmatprep.subr.bf16.mxu0 0
    %10631 = vmatpush1.bf16.msra.mxu0 %v10250
    %10632 = vmatprep.subr.bf16.mxu0 0
    %10633 = vmatpush1.bf16.msra.mxu0 %v10251
    %10634 = vmatprep.subr.bf16.mxu0 0
    %10635 = vmatpush1.bf16.msra.mxu0 %v10252
    %10636 = vmatprep.subr.bf16.mxu0 0
    %10637 = vmatpush1.bf16.msra.mxu0 %v10253
    %10638 = vmatprep.subr.bf16.mxu0 0
    %10639 = vmatpush1.bf16.msra.mxu0 %v10254
    %10640 = vmatprep.subr.bf16.mxu0 0
    %10641 = vmatpush1.bf16.msra.mxu0 %v10255
    %10642 = vmatprep.subr.bf16.mxu0 0
    %10643 = vmatpush1.bf16.msra.mxu0 %v10256
    %10644 = vmatprep.mubr.bf16.mxu0 %v9751
    %10645 = vmatmul.mubr.bf16.gmra.mrb[0].mxu0 %v9750
    %v10646 = vpop.f32.mrb[0].mxu0
    %v10647 = vadd.f32 %v10550, %v10646
    %v10648 = vpop.f32.mrb[0].mxu0
    %v10649 = vpop.f32.mrb[0].mxu0
    %v10650 = vadd.f32 %v10553, %v10649
    %v10651 = vpop.f32.mrb[0].mxu0
    %10652 = vmatprep.mubr.bf16.mxu0 %v9759
    %10653 = vmatmul.mubr.bf16.gmra.mrb[0].mxu0 %v9758
    %v10654 = vpop.f32.mrb[0].mxu0
    %v10655 = vadd.f32 %v10558, %v10654
    %v10656 = vpop.f32.mrb[0].mxu0
    %v10657 = vpop.f32.mrb[0].mxu0
    %v10658 = vadd.f32 %v10561, %v10657
    %v10659 = vpop.f32.mrb[0].mxu0
    %10660 = vmatprep.mubr.bf16.mxu0 %v9767
    %10661 = vmatmul.mubr.bf16.gmra.mrb[0].mxu0 %v9766
    %v10662 = vpop.f32.mrb[0].mxu0
    %v10663 = vadd.f32 %v10566, %v10662
    %v10664 = vpop.f32.mrb[0].mxu0
    %v10665 = vpop.f32.mrb[0].mxu0
    %v10666 = vadd.f32 %v10569, %v10665
    %v10667 = vpop.f32.mrb[0].mxu0
    %10668 = vmatprep.mubr.bf16.mxu0 %v9775
    %10669 = vmatmul.mubr.bf16.gmra.mrb[0].mxu0 %v9774
    %v10670 = vpop.f32.mrb[0].mxu0
    %v10671 = vadd.f32 %v10574, %v10670
    %v10672 = vpop.f32.mrb[0].mxu0
    %v10673 = vpop.f32.mrb[0].mxu0
    %v10674 = vadd.f32 %v10577, %v10673
    %v10675 = vpop.f32.mrb[0].mxu0
    %10676 = vmatprep.mubr.bf16.mxu0 %v9783
    %10677 = vmatmul.mubr.bf16.gmra.mrb[0].mxu0 %v9782
    %v10678 = vpop.f32.mrb[0].mxu0
    %v10679 = vadd.f32 %v10582, %v10678
    %v10680 = vpop.f32.mrb[0].mxu0
    %v10681 = vpop.f32.mrb[0].mxu0
    %v10682 = vadd.f32 %v10585, %v10681
    %v10683 = vpop.f32.mrb[0].mxu0
    %10684 = vmatprep.mubr.bf16.mxu0 %v9791
    %10685 = vmatmul.mubr.bf16.gmra.mrb[0].mxu0 %v9790
    %v10686 = vpop.f32.mrb[0].mxu0
    %v10687 = vadd.f32 %v10590, %v10686
    %v10688 = vpop.f32.mrb[0].mxu0
    %v10689 = vpop.f32.mrb[0].mxu0
    %v10690 = vadd.f32 %v10593, %v10689
    %v10691 = vpop.f32.mrb[0].mxu0
    %10692 = vmatprep.mubr.bf16.mxu0 %v9799
    %10693 = vmatmul.mubr.bf16.gmra.mrb[0].mxu0 %v9798
    %v10694 = vpop.f32.mrb[0].mxu0
    %v10695 = vadd.f32 %v10598, %v10694
    %v10696 = vpop.f32.mrb[0].mxu0
    %v10697 = vpop.f32.mrb[0].mxu0
    %v10698 = vadd.f32 %v10601, %v10697
    %v10699 = vpop.f32.mrb[0].mxu0
    %10700 = vmatprep.mubr.bf16.mxu0 %v9807
    %10701 = vmatmul.mubr.bf16.gmra.mrb[0].mxu0 %v9806
    %v10702 = vpop.f32.mrb[0].mxu0
    %v10703 = vadd.f32 %v10606, %v10702
    %v10704 = vpop.f32.mrb[0].mxu0
    %v10705 = vpop.f32.mrb[0].mxu0
    %v10706 = vadd.f32 %v10609, %v10705
    %v10707 = vpop.f32.mrb[0].mxu0
    %10708 = vdwg.mxu0
    %v10709 = vadd.f32 %v9424, %v10647
    %v10710 = vadd.f32 %v9425, %v10650
    %v10711 = vadd.f32 %v9426, %v10655
    %v10712 = vadd.f32 %v9427, %v10658
    %v10713 = vadd.f32 %v9428, %v10663
    %v10714 = vadd.f32 %v9429, %v10666
    %v10715 = vadd.f32 %v9430, %v10671
    %v10716 = vadd.f32 %v9431, %v10674
    %v10717 = vadd.f32 %v9432, %v10679
    %v10718 = vadd.f32 %v9433, %v10682
    %v10719 = vadd.f32 %v9434, %v10687
    %v10720 = vadd.f32 %v9435, %v10690
    %v10721 = vadd.f32 %v9436, %v10695
    %v10722 = vadd.f32 %v9437, %v10698
    %v10723 = vadd.f32 %v9438, %v10703
    %v10724 = vadd.f32 %v9439, %v10706
    %s10725 = scalar_lea.vmem [#allocation2], 3584
    %v10726 = vld [vmem:[%s10725] sm:$0xf]
    %v10727 = vld [vmem:[%s10725 + $0x4] sm:$0xf]
    %v10728 = vld [vmem:[%s10725 + $0x8] sm:$0xf]
    %v10729 = vld [vmem:[%s10725 + $0xc] sm:$0xf]
    %v10730 = vld [vmem:[%s10725 + $0x10] sm:$0xf]
    %v10731 = vld [vmem:[%s10725 + $0x14] sm:$0xf]
    %v10732 = vld [vmem:[%s10725 + $0x18] sm:$0xf]
    %v10733 = vld [vmem:[%s10725 + $0x1c] sm:$0xf]
    %v10734 = vld [vmem:[%s10725 + $0x20] sm:$0xf]
    %v10735 = vld [vmem:[%s10725 + $0x24] sm:$0xf]
    %v10736 = vld [vmem:[%s10725 + $0x28] sm:$0xf]
    %v10737 = vld [vmem:[%s10725 + $0x2c] sm:$0xf]
    %v10738 = vld [vmem:[%s10725 + $0x30] sm:$0xf]
    %v10739 = vld [vmem:[%s10725 + $0x34] sm:$0xf]
    %v10740 = vld [vmem:[%s10725 + $0x38] sm:$0xf]
    %v10741 = vld [vmem:[%s10725 + $0x3c] sm:$0xf]
    %v10742 = vld [vmem:[%s10725 + $0x40] sm:$0xf]
    %v10743 = vld [vmem:[%s10725 + $0x44] sm:$0xf]
    %v10744 = vld [vmem:[%s10725 + $0x48] sm:$0xf]
    %v10745 = vld [vmem:[%s10725 + $0x4c] sm:$0xf]
    %v10746 = vld [vmem:[%s10725 + $0x50] sm:$0xf]
    %v10747 = vld [vmem:[%s10725 + $0x54] sm:$0xf]
    %v10748 = vld [vmem:[%s10725 + $0x58] sm:$0xf]
    %v10749 = vld [vmem:[%s10725 + $0x5c] sm:$0xf]
    %v10750 = vld [vmem:[%s10725 + $0x60] sm:$0xf]
    %v10751 = vld [vmem:[%s10725 + $0x64] sm:$0xf]
    %v10752 = vld [vmem:[%s10725 + $0x68] sm:$0xf]
    %v10753 = vld [vmem:[%s10725 + $0x6c] sm:$0xf]
    %v10754 = vld [vmem:[%s10725 + $0x70] sm:$0xf]
    %v10755 = vld [vmem:[%s10725 + $0x74] sm:$0xf]
    %v10756 = vld [vmem:[%s10725 + $0x78] sm:$0xf]
    %v10757 = vld [vmem:[%s10725 + $0x7c] sm:$0xf]
    %v10758 = vld [vmem:[%s10725 + $0x80] sm:$0xf]
    %v10759 = vld [vmem:[%s10725 + $0x84] sm:$0xf]
    %v10760 = vld [vmem:[%s10725 + $0x88] sm:$0xf]
    %v10761 = vld [vmem:[%s10725 + $0x8c] sm:$0xf]
    %v10762 = vld [vmem:[%s10725 + $0x90] sm:$0xf]
    %v10763 = vld [vmem:[%s10725 + $0x94] sm:$0xf]
    %v10764 = vld [vmem:[%s10725 + $0x98] sm:$0xf]
    %v10765 = vld [vmem:[%s10725 + $0x9c] sm:$0xf]
    %v10766 = vld [vmem:[%s10725 + $0xa0] sm:$0xf]
    %v10767 = vld [vmem:[%s10725 + $0xa4] sm:$0xf]
    %v10768 = vld [vmem:[%s10725 + $0xa8] sm:$0xf]
    %v10769 = vld [vmem:[%s10725 + $0xac] sm:$0xf]
    %v10770 = vld [vmem:[%s10725 + $0xb0] sm:$0xf]
    %v10771 = vld [vmem:[%s10725 + $0xb4] sm:$0xf]
    %v10772 = vld [vmem:[%s10725 + $0xb8] sm:$0xf]
    %v10773 = vld [vmem:[%s10725 + $0xbc] sm:$0xf]
    %v10774 = vld [vmem:[%s10725 + $0xc0] sm:$0xf]
    %v10775 = vld [vmem:[%s10725 + $0xc4] sm:$0xf]
    %v10776 = vld [vmem:[%s10725 + $0xc8] sm:$0xf]
    %v10777 = vld [vmem:[%s10725 + $0xcc] sm:$0xf]
    %v10778 = vld [vmem:[%s10725 + $0xd0] sm:$0xf]
    %v10779 = vld [vmem:[%s10725 + $0xd4] sm:$0xf]
    %v10780 = vld [vmem:[%s10725 + $0xd8] sm:$0xf]
    %v10781 = vld [vmem:[%s10725 + $0xdc] sm:$0xf]
    %v10782 = vld [vmem:[%s10725 + $0xe0] sm:$0xf]
    %v10783 = vld [vmem:[%s10725 + $0xe4] sm:$0xf]
    %v10784 = vld [vmem:[%s10725 + $0xe8] sm:$0xf]
    %v10785 = vld [vmem:[%s10725 + $0xec] sm:$0xf]
    %v10786 = vld [vmem:[%s10725 + $0xf0] sm:$0xf]
    %v10787 = vld [vmem:[%s10725 + $0xf4] sm:$0xf]
    %v10788 = vld [vmem:[%s10725 + $0xf8] sm:$0xf]
    %v10789 = vld [vmem:[%s10725 + $0xfc] sm:$0xf]
    %v10790 = vld [vmem:[%s10725 + $0x100] sm:$0xf]
    %v10791 = vld [vmem:[%s10725 + $0x104] sm:$0xf]
    %v10792 = vld [vmem:[%s10725 + $0x108] sm:$0xf]
    %v10793 = vld [vmem:[%s10725 + $0x10c] sm:$0xf]
    %v10794 = vld [vmem:[%s10725 + $0x110] sm:$0xf]
    %v10795 = vld [vmem:[%s10725 + $0x114] sm:$0xf]
    %v10796 = vld [vmem:[%s10725 + $0x118] sm:$0xf]
    %v10797 = vld [vmem:[%s10725 + $0x11c] sm:$0xf]
    %v10798 = vld [vmem:[%s10725 + $0x120] sm:$0xf]
    %v10799 = vld [vmem:[%s10725 + $0x124] sm:$0xf]
    %v10800 = vld [vmem:[%s10725 + $0x128] sm:$0xf]
    %v10801 = vld [vmem:[%s10725 + $0x12c] sm:$0xf]
    %v10802 = vld [vmem:[%s10725 + $0x130] sm:$0xf]
    %v10803 = vld [vmem:[%s10725 + $0x134] sm:$0xf]
    %v10804 = vld [vmem:[%s10725 + $0x138] sm:$0xf]
    %v10805 = vld [vmem:[%s10725 + $0x13c] sm:$0xf]
    %v10806 = vld [vmem:[%s10725 + $0x140] sm:$0xf]
    %v10807 = vld [vmem:[%s10725 + $0x144] sm:$0xf]
    %v10808 = vld [vmem:[%s10725 + $0x148] sm:$0xf]
    %v10809 = vld [vmem:[%s10725 + $0x14c] sm:$0xf]
    %v10810 = vld [vmem:[%s10725 + $0x150] sm:$0xf]
    %v10811 = vld [vmem:[%s10725 + $0x154] sm:$0xf]
    %v10812 = vld [vmem:[%s10725 + $0x158] sm:$0xf]
    %v10813 = vld [vmem:[%s10725 + $0x15c] sm:$0xf]
    %v10814 = vld [vmem:[%s10725 + $0x160] sm:$0xf]
    %v10815 = vld [vmem:[%s10725 + $0x164] sm:$0xf]
    %v10816 = vld [vmem:[%s10725 + $0x168] sm:$0xf]
    %v10817 = vld [vmem:[%s10725 + $0x16c] sm:$0xf]
    %v10818 = vld [vmem:[%s10725 + $0x170] sm:$0xf]
    %v10819 = vld [vmem:[%s10725 + $0x174] sm:$0xf]
    %v10820 = vld [vmem:[%s10725 + $0x178] sm:$0xf]
    %v10821 = vld [vmem:[%s10725 + $0x17c] sm:$0xf]
    %v10822 = vld [vmem:[%s10725 + $0x180] sm:$0xf]
    %v10823 = vld [vmem:[%s10725 + $0x184] sm:$0xf]
    %v10824 = vld [vmem:[%s10725 + $0x188] sm:$0xf]
    %v10825 = vld [vmem:[%s10725 + $0x18c] sm:$0xf]
    %v10826 = vld [vmem:[%s10725 + $0x190] sm:$0xf]
    %v10827 = vld [vmem:[%s10725 + $0x194] sm:$0xf]
    %v10828 = vld [vmem:[%s10725 + $0x198] sm:$0xf]
    %v10829 = vld [vmem:[%s10725 + $0x19c] sm:$0xf]
    %v10830 = vld [vmem:[%s10725 + $0x1a0] sm:$0xf]
    %v10831 = vld [vmem:[%s10725 + $0x1a4] sm:$0xf]
    %v10832 = vld [vmem:[%s10725 + $0x1a8] sm:$0xf]
    %v10833 = vld [vmem:[%s10725 + $0x1ac] sm:$0xf]
    %v10834 = vld [vmem:[%s10725 + $0x1b0] sm:$0xf]
    %v10835 = vld [vmem:[%s10725 + $0x1b4] sm:$0xf]
    %v10836 = vld [vmem:[%s10725 + $0x1b8] sm:$0xf]
    %v10837 = vld [vmem:[%s10725 + $0x1bc] sm:$0xf]
    %v10838 = vld [vmem:[%s10725 + $0x1c0] sm:$0xf]
    %v10839 = vld [vmem:[%s10725 + $0x1c4] sm:$0xf]
    %v10840 = vld [vmem:[%s10725 + $0x1c8] sm:$0xf]
    %v10841 = vld [vmem:[%s10725 + $0x1cc] sm:$0xf]
    %v10842 = vld [vmem:[%s10725 + $0x1d0] sm:$0xf]
    %v10843 = vld [vmem:[%s10725 + $0x1d4] sm:$0xf]
    %v10844 = vld [vmem:[%s10725 + $0x1d8] sm:$0xf]
    %v10845 = vld [vmem:[%s10725 + $0x1dc] sm:$0xf]
    %v10846 = vld [vmem:[%s10725 + $0x1e0] sm:$0xf]
    %v10847 = vld [vmem:[%s10725 + $0x1e4] sm:$0xf]
    %v10848 = vld [vmem:[%s10725 + $0x1e8] sm:$0xf]
    %v10849 = vld [vmem:[%s10725 + $0x1ec] sm:$0xf]
    %v10850 = vld [vmem:[%s10725 + $0x1f0] sm:$0xf]
    %v10851 = vld [vmem:[%s10725 + $0x1f4] sm:$0xf]
    %v10852 = vld [vmem:[%s10725 + $0x1f8] sm:$0xf]
    %v10853 = vld [vmem:[%s10725 + $0x1fc] sm:$0xf]
    %v10982 = vunpack.c.l.b16 %v10726
    %v10983 = vunpack.c.l.b16 %v10727
    %v10984 = vunpack.c.l.b16 %v10728
    %v10985 = vunpack.c.l.b16 %v10729
    %v10986 = vunpack.c.l.b16 %v10730
    %v10987 = vunpack.c.l.b16 %v10731
    %v10988 = vunpack.c.l.b16 %v10732
    %v10989 = vunpack.c.l.b16 %v10733
    %v10990 = vunpack.c.l.b16 %v10734
    %v10991 = vunpack.c.l.b16 %v10735
    %v10992 = vunpack.c.l.b16 %v10736
    %v10993 = vunpack.c.l.b16 %v10737
    %v10994 = vunpack.c.l.b16 %v10738
    %v10995 = vunpack.c.l.b16 %v10739
    %v10996 = vunpack.c.l.b16 %v10740
    %v10997 = vunpack.c.l.b16 %v10741
    %v10998 = vunpack.c.l.b16 %v10742
    %v10999 = vunpack.c.l.b16 %v10743
    %v11000 = vunpack.c.l.b16 %v10744
    %v11001 = vunpack.c.l.b16 %v10745
    %v11002 = vunpack.c.l.b16 %v10746
    %v11003 = vunpack.c.l.b16 %v10747
    %v11004 = vunpack.c.l.b16 %v10748
    %v11005 = vunpack.c.l.b16 %v10749
    %v11006 = vunpack.c.l.b16 %v10750
    %v11007 = vunpack.c.l.b16 %v10751
    %v11008 = vunpack.c.l.b16 %v10752
    %v11009 = vunpack.c.l.b16 %v10753
    %v11010 = vunpack.c.l.b16 %v10754
    %v11011 = vunpack.c.l.b16 %v10755
    %v11012 = vunpack.c.l.b16 %v10756
    %v11013 = vunpack.c.l.b16 %v10757
    %v11014 = vunpack.c.l.b16 %v10758
    %v11015 = vunpack.c.l.b16 %v10759
    %v11016 = vunpack.c.l.b16 %v10760
    %v11017 = vunpack.c.l.b16 %v10761
    %v11018 = vunpack.c.l.b16 %v10762
    %v11019 = vunpack.c.l.b16 %v10763
    %v11020 = vunpack.c.l.b16 %v10764
    %v11021 = vunpack.c.l.b16 %v10765
    %v11022 = vunpack.c.l.b16 %v10766
    %v11023 = vunpack.c.l.b16 %v10767
    %v11024 = vunpack.c.l.b16 %v10768
    %v11025 = vunpack.c.l.b16 %v10769
    %v11026 = vunpack.c.l.b16 %v10770
    %v11027 = vunpack.c.l.b16 %v10771
    %v11028 = vunpack.c.l.b16 %v10772
    %v11029 = vunpack.c.l.b16 %v10773
    %v11030 = vunpack.c.l.b16 %v10774
    %v11031 = vunpack.c.l.b16 %v10775
    %v11032 = vunpack.c.l.b16 %v10776
    %v11033 = vunpack.c.l.b16 %v10777
    %v11034 = vunpack.c.l.b16 %v10778
    %v11035 = vunpack.c.l.b16 %v10779
    %v11036 = vunpack.c.l.b16 %v10780
    %v11037 = vunpack.c.l.b16 %v10781
    %v11038 = vunpack.c.l.b16 %v10782
    %v11039 = vunpack.c.l.b16 %v10783
    %v11040 = vunpack.c.l.b16 %v10784
    %v11041 = vunpack.c.l.b16 %v10785
    %v11042 = vunpack.c.l.b16 %v10786
    %v11043 = vunpack.c.l.b16 %v10787
    %v11044 = vunpack.c.l.b16 %v10788
    %v11045 = vunpack.c.l.b16 %v10789
    %v11046 = vunpack.c.l.b16 %v10790
    %v11047 = vunpack.c.l.b16 %v10791
    %v11048 = vunpack.c.l.b16 %v10792
    %v11049 = vunpack.c.l.b16 %v10793
    %v11050 = vunpack.c.l.b16 %v10794
    %v11051 = vunpack.c.l.b16 %v10795
    %v11052 = vunpack.c.l.b16 %v10796
    %v11053 = vunpack.c.l.b16 %v10797
    %v11054 = vunpack.c.l.b16 %v10798
    %v11055 = vunpack.c.l.b16 %v10799
    %v11056 = vunpack.c.l.b16 %v10800
    %v11057 = vunpack.c.l.b16 %v10801
    %v11058 = vunpack.c.l.b16 %v10802
    %v11059 = vunpack.c.l.b16 %v10803
    %v11060 = vunpack.c.l.b16 %v10804
    %v11061 = vunpack.c.l.b16 %v10805
    %v11062 = vunpack.c.l.b16 %v10806
    %v11063 = vunpack.c.l.b16 %v10807
    %v11064 = vunpack.c.l.b16 %v10808
    %v11065 = vunpack.c.l.b16 %v10809
    %v11066 = vunpack.c.l.b16 %v10810
    %v11067 = vunpack.c.l.b16 %v10811
    %v11068 = vunpack.c.l.b16 %v10812
    %v11069 = vunpack.c.l.b16 %v10813
    %v11070 = vunpack.c.l.b16 %v10814
    %v11071 = vunpack.c.l.b16 %v10815
    %v11072 = vunpack.c.l.b16 %v10816
    %v11073 = vunpack.c.l.b16 %v10817
    %v11074 = vunpack.c.l.b16 %v10818
    %v11075 = vunpack.c.l.b16 %v10819
    %v11076 = vunpack.c.l.b16 %v10820
    %v11077 = vunpack.c.l.b16 %v10821
    %v11078 = vunpack.c.l.b16 %v10822
    %v11079 = vunpack.c.l.b16 %v10823
    %v11080 = vunpack.c.l.b16 %v10824
    %v11081 = vunpack.c.l.b16 %v10825
    %v11082 = vunpack.c.l.b16 %v10826
    %v11083 = vunpack.c.l.b16 %v10827
    %v11084 = vunpack.c.l.b16 %v10828
    %v11085 = vunpack.c.l.b16 %v10829
    %v11086 = vunpack.c.l.b16 %v10830
    %v11087 = vunpack.c.l.b16 %v10831
    %v11088 = vunpack.c.l.b16 %v10832
    %v11089 = vunpack.c.l.b16 %v10833
    %v11090 = vunpack.c.l.b16 %v10834
    %v11091 = vunpack.c.l.b16 %v10835
    %v11092 = vunpack.c.l.b16 %v10836
    %v11093 = vunpack.c.l.b16 %v10837
    %v11094 = vunpack.c.l.b16 %v10838
    %v11095 = vunpack.c.l.b16 %v10839
    %v11096 = vunpack.c.l.b16 %v10840
    %v11097 = vunpack.c.l.b16 %v10841
    %v11098 = vunpack.c.l.b16 %v10842
    %v11099 = vunpack.c.l.b16 %v10843
    %v11100 = vunpack.c.l.b16 %v10844
    %v11101 = vunpack.c.l.b16 %v10845
    %v11102 = vunpack.c.l.b16 %v10846
    %v11103 = vunpack.c.l.b16 %v10847
    %v11104 = vunpack.c.l.b16 %v10848
    %v11105 = vunpack.c.l.b16 %v10849
    %v11106 = vunpack.c.l.b16 %v10850
    %v11107 = vunpack.c.l.b16 %v10851
    %v11108 = vunpack.c.l.b16 %v10852
    %v11109 = vunpack.c.l.b16 %v10853
    %v11110 = vpack.c.b16 %v10983, %v10982
    %v11111 = vpack.c.b16 %v10985, %v10984
    %v11112 = vpack.c.b16 %v10987, %v10986
    %v11113 = vpack.c.b16 %v10989, %v10988
    %v11114 = vpack.c.b16 %v10991, %v10990
    %v11115 = vpack.c.b16 %v10993, %v10992
    %v11116 = vpack.c.b16 %v10995, %v10994
    %v11117 = vpack.c.b16 %v10997, %v10996
    %v11118 = vpack.c.b16 %v10999, %v10998
    %v11119 = vpack.c.b16 %v11001, %v11000
    %v11120 = vpack.c.b16 %v11003, %v11002
    %v11121 = vpack.c.b16 %v11005, %v11004
    %v11122 = vpack.c.b16 %v11007, %v11006
    %v11123 = vpack.c.b16 %v11009, %v11008
    %v11124 = vpack.c.b16 %v11011, %v11010
    %v11125 = vpack.c.b16 %v11013, %v11012
    %v11126 = vpack.c.b16 %v11015, %v11014
    %v11127 = vpack.c.b16 %v11017, %v11016
    %v11128 = vpack.c.b16 %v11019, %v11018
    %v11129 = vpack.c.b16 %v11021, %v11020
    %v11130 = vpack.c.b16 %v11023, %v11022
    %v11131 = vpack.c.b16 %v11025, %v11024
    %v11132 = vpack.c.b16 %v11027, %v11026
    %v11133 = vpack.c.b16 %v11029, %v11028
    %v11134 = vpack.c.b16 %v11031, %v11030
    %v11135 = vpack.c.b16 %v11033, %v11032
    %v11136 = vpack.c.b16 %v11035, %v11034
    %v11137 = vpack.c.b16 %v11037, %v11036
    %v11138 = vpack.c.b16 %v11039, %v11038
    %v11139 = vpack.c.b16 %v11041, %v11040
    %v11140 = vpack.c.b16 %v11043, %v11042
    %v11141 = vpack.c.b16 %v11045, %v11044
    %v11142 = vpack.c.b16 %v11047, %v11046
    %v11143 = vpack.c.b16 %v11049, %v11048
    %v11144 = vpack.c.b16 %v11051, %v11050
    %v11145 = vpack.c.b16 %v11053, %v11052
    %v11146 = vpack.c.b16 %v11055, %v11054
    %v11147 = vpack.c.b16 %v11057, %v11056
    %v11148 = vpack.c.b16 %v11059, %v11058
    %v11149 = vpack.c.b16 %v11061, %v11060
    %v11150 = vpack.c.b16 %v11063, %v11062
    %v11151 = vpack.c.b16 %v11065, %v11064
    %v11152 = vpack.c.b16 %v11067, %v11066
    %v11153 = vpack.c.b16 %v11069, %v11068
    %v11154 = vpack.c.b16 %v11071, %v11070
    %v11155 = vpack.c.b16 %v11073, %v11072
    %v11156 = vpack.c.b16 %v11075, %v11074
    %v11157 = vpack.c.b16 %v11077, %v11076
    %v11158 = vpack.c.b16 %v11079, %v11078
    %v11159 = vpack.c.b16 %v11081, %v11080
    %v11160 = vpack.c.b16 %v11083, %v11082
    %v11161 = vpack.c.b16 %v11085, %v11084
    %v11162 = vpack.c.b16 %v11087, %v11086
    %v11163 = vpack.c.b16 %v11089, %v11088
    %v11164 = vpack.c.b16 %v11091, %v11090
    %v11165 = vpack.c.b16 %v11093, %v11092
    %v11166 = vpack.c.b16 %v11095, %v11094
    %v11167 = vpack.c.b16 %v11097, %v11096
    %v11168 = vpack.c.b16 %v11099, %v11098
    %v11169 = vpack.c.b16 %v11101, %v11100
    %v11170 = vpack.c.b16 %v11103, %v11102
    %v11171 = vpack.c.b16 %v11105, %v11104
    %v11172 = vpack.c.b16 %v11107, %v11106
    %v11173 = vpack.c.b16 %v11109, %v11108
    %11238 = vmatprep.subr.bf16.mxu0 0
    %11239 = vmatpush1.bf16.msra.mxu0 %v11110
    %11240 = vmatprep.subr.bf16.mxu0 0
    %11241 = vmatpush1.bf16.msra.mxu0 %v11111
    %11242 = vmatprep.subr.bf16.mxu0 0
    %11243 = vmatpush1.bf16.msra.mxu0 %v11112
    %11244 = vmatprep.subr.bf16.mxu0 0
    %11245 = vmatpush1.bf16.msra.mxu0 %v11113
    %11246 = vmatprep.subr.bf16.mxu0 0
    %11247 = vmatpush1.bf16.msra.mxu0 %v11114
    %11248 = vmatprep.subr.bf16.mxu0 0
    %11249 = vmatpush1.bf16.msra.mxu0 %v11115
    %11250 = vmatprep.subr.bf16.mxu0 0
    %11251 = vmatpush1.bf16.msra.mxu0 %v11116
    %11252 = vmatprep.subr.bf16.mxu0 0
    %11253 = vmatpush1.bf16.msra.mxu0 %v11117
    %11254 = vmatprep.subr.bf16.mxu0 0
    %11255 = vmatpush1.bf16.msra.mxu0 %v11118
    %11256 = vmatprep.subr.bf16.mxu0 0
    %11257 = vmatpush1.bf16.msra.mxu0 %v11119
    %11258 = vmatprep.subr.bf16.mxu0 0
    %11259 = vmatpush1.bf16.msra.mxu0 %v11120
    %11260 = vmatprep.subr.bf16.mxu0 0
    %11261 = vmatpush1.bf16.msra.mxu0 %v11121
    %11262 = vmatprep.subr.bf16.mxu0 0
    %11263 = vmatpush1.bf16.msra.mxu0 %v11122
    %11264 = vmatprep.subr.bf16.mxu0 0
    %11265 = vmatpush1.bf16.msra.mxu0 %v11123
    %11266 = vmatprep.subr.bf16.mxu0 0
    %11267 = vmatpush1.bf16.msra.mxu0 %v11124
    %11268 = vmatprep.subr.bf16.mxu0 0
    %11269 = vmatpush1.bf16.msra.mxu0 %v11125
    %11270 = vmatprep.mubr.bf16.mxu0 %v9745
    %11271 = vmatmul.mubr.bf16.gmra.mrb[0].mxu0 %v9744
    %v11272 = vpop.f32.mrb[0].mxu0
    %v11273 = vadd.f32 0.0, %v11272
    %v11274 = vpop.f32.mrb[0].mxu0
    %v11275 = vpop.f32.mrb[0].mxu0
    %v11276 = vadd.f32 0.0, %v11275
    %v11277 = vpop.f32.mrb[0].mxu0
    %11278 = vmatprep.mubr.bf16.mxu0 %v9753
    %11279 = vmatmul.mubr.bf16.gmra.mrb[0].mxu0 %v9752
    %v11280 = vpop.f32.mrb[0].mxu0
    %v11281 = vadd.f32 0.0, %v11280
    %v11282 = vpop.f32.mrb[0].mxu0
    %v11283 = vpop.f32.mrb[0].mxu0
    %v11284 = vadd.f32 0.0, %v11283
    %v11285 = vpop.f32.mrb[0].mxu0
    %11286 = vmatprep.mubr.bf16.mxu0 %v9761
    %11287 = vmatmul.mubr.bf16.gmra.mrb[0].mxu0 %v9760
    %v11288 = vpop.f32.mrb[0].mxu0
    %v11289 = vadd.f32 0.0, %v11288
    %v11290 = vpop.f32.mrb[0].mxu0
    %v11291 = vpop.f32.mrb[0].mxu0
    %v11292 = vadd.f32 0.0, %v11291
    %v11293 = vpop.f32.mrb[0].mxu0
    %11294 = vmatprep.mubr.bf16.mxu0 %v9769
    %11295 = vmatmul.mubr.bf16.gmra.mrb[0].mxu0 %v9768
    %v11296 = vpop.f32.mrb[0].mxu0
    %v11297 = vadd.f32 0.0, %v11296
    %v11298 = vpop.f32.mrb[0].mxu0
    %v11299 = vpop.f32.mrb[0].mxu0
    %v11300 = vadd.f32 0.0, %v11299
    %v11301 = vpop.f32.mrb[0].mxu0
    %11302 = vmatprep.mubr.bf16.mxu0 %v9777
    %11303 = vmatmul.mubr.bf16.gmra.mrb[0].mxu0 %v9776
    %v11304 = vpop.f32.mrb[0].mxu0
    %v11305 = vadd.f32 0.0, %v11304
    %v11306 = vpop.f32.mrb[0].mxu0
    %v11307 = vpop.f32.mrb[0].mxu0
    %v11308 = vadd.f32 0.0, %v11307
    %v11309 = vpop.f32.mrb[0].mxu0
    %11310 = vmatprep.mubr.bf16.mxu0 %v9785
    %11311 = vmatmul.mubr.bf16.gmra.mrb[0].mxu0 %v9784
    %v11312 = vpop.f32.mrb[0].mxu0
    %v11313 = vadd.f32 0.0, %v11312
    %v11314 = vpop.f32.mrb[0].mxu0
    %v11315 = vpop.f32.mrb[0].mxu0
    %v11316 = vadd.f32 0.0, %v11315
    %v11317 = vpop.f32.mrb[0].mxu0
    %11318 = vmatprep.mubr.bf16.mxu0 %v9793
    %11319 = vmatmul.mubr.bf16.gmra.mrb[0].mxu0 %v9792
    %v11320 = vpop.f32.mrb[0].mxu0
    %v11321 = vadd.f32 0.0, %v11320
    %v11322 = vpop.f32.mrb[0].mxu0
    %v11323 = vpop.f32.mrb[0].mxu0
    %v11324 = vadd.f32 0.0, %v11323
    %v11325 = vpop.f32.mrb[0].mxu0
    %11326 = vmatprep.mubr.bf16.mxu0 %v9801
    %11327 = vmatmul.mubr.bf16.gmra.mrb[0].mxu0 %v9800
    %v11328 = vpop.f32.mrb[0].mxu0
    %v11329 = vadd.f32 0.0, %v11328
    %v11330 = vpop.f32.mrb[0].mxu0
    %v11331 = vpop.f32.mrb[0].mxu0
    %v11332 = vadd.f32 0.0, %v11331
    %v11333 = vpop.f32.mrb[0].mxu0
    %11334 = vdwg.mxu0
    %11335 = vmatprep.subr.bf16.mxu0 0
    %11336 = vmatpush1.bf16.msra.mxu0 %v11126
    %11337 = vmatprep.subr.bf16.mxu0 0
    %11338 = vmatpush1.bf16.msra.mxu0 %v11127
    %11339 = vmatprep.subr.bf16.mxu0 0
    %11340 = vmatpush1.bf16.msra.mxu0 %v11128
    %11341 = vmatprep.subr.bf16.mxu0 0
    %11342 = vmatpush1.bf16.msra.mxu0 %v11129
    %11343 = vmatprep.subr.bf16.mxu0 0
    %11344 = vmatpush1.bf16.msra.mxu0 %v11130
    %11345 = vmatprep.subr.bf16.mxu0 0
    %11346 = vmatpush1.bf16.msra.mxu0 %v11131
    %11347 = vmatprep.subr.bf16.mxu0 0
    %11348 = vmatpush1.bf16.msra.mxu0 %v11132
    %11349 = vmatprep.subr.bf16.mxu0 0
    %11350 = vmatpush1.bf16.msra.mxu0 %v11133
    %11351 = vmatprep.subr.bf16.mxu0 0
    %11352 = vmatpush1.bf16.msra.mxu0 %v11134
    %11353 = vmatprep.subr.bf16.mxu0 0
    %11354 = vmatpush1.bf16.msra.mxu0 %v11135
    %11355 = vmatprep.subr.bf16.mxu0 0
    %11356 = vmatpush1.bf16.msra.mxu0 %v11136
    %11357 = vmatprep.subr.bf16.mxu0 0
    %11358 = vmatpush1.bf16.msra.mxu0 %v11137
    %11359 = vmatprep.subr.bf16.mxu0 0
    %11360 = vmatpush1.bf16.msra.mxu0 %v11138
    %11361 = vmatprep.subr.bf16.mxu0 0
    %11362 = vmatpush1.bf16.msra.mxu0 %v11139
    %11363 = vmatprep.subr.bf16.mxu0 0
    %11364 = vmatpush1.bf16.msra.mxu0 %v11140
    %11365 = vmatprep.subr.bf16.mxu0 0
    %11366 = vmatpush1.bf16.msra.mxu0 %v11141
    %11367 = vmatprep.mubr.bf16.mxu0 %v9747
    %11368 = vmatmul.mubr.bf16.gmra.mrb[0].mxu0 %v9746
    %v11369 = vpop.f32.mrb[0].mxu0
    %v11370 = vadd.f32 %v11273, %v11369
    %v11371 = vpop.f32.mrb[0].mxu0
    %v11372 = vpop.f32.mrb[0].mxu0
    %v11373 = vadd.f32 %v11276, %v11372
    %v11374 = vpop.f32.mrb[0].mxu0
    %11375 = vmatprep.mubr.bf16.mxu0 %v9755
    %11376 = vmatmul.mubr.bf16.gmra.mrb[0].mxu0 %v9754
    %v11377 = vpop.f32.mrb[0].mxu0
    %v11378 = vadd.f32 %v11281, %v11377
    %v11379 = vpop.f32.mrb[0].mxu0
    %v11380 = vpop.f32.mrb[0].mxu0
    %v11381 = vadd.f32 %v11284, %v11380
    %v11382 = vpop.f32.mrb[0].mxu0
    %11383 = vmatprep.mubr.bf16.mxu0 %v9763
    %11384 = vmatmul.mubr.bf16.gmra.mrb[0].mxu0 %v9762
    %v11385 = vpop.f32.mrb[0].mxu0
    %v11386 = vadd.f32 %v11289, %v11385
    %v11387 = vpop.f32.mrb[0].mxu0
    %v11388 = vpop.f32.mrb[0].mxu0
    %v11389 = vadd.f32 %v11292, %v11388
    %v11390 = vpop.f32.mrb[0].mxu0
    %11391 = vmatprep.mubr.bf16.mxu0 %v9771
    %11392 = vmatmul.mubr.bf16.gmra.mrb[0].mxu0 %v9770
    %v11393 = vpop.f32.mrb[0].mxu0
    %v11394 = vadd.f32 %v11297, %v11393
    %v11395 = vpop.f32.mrb[0].mxu0
    %v11396 = vpop.f32.mrb[0].mxu0
    %v11397 = vadd.f32 %v11300, %v11396
    %v11398 = vpop.f32.mrb[0].mxu0
    %11399 = vmatprep.mubr.bf16.mxu0 %v9779
    %11400 = vmatmul.mubr.bf16.gmra.mrb[0].mxu0 %v9778
    %v11401 = vpop.f32.mrb[0].mxu0
    %v11402 = vadd.f32 %v11305, %v11401
    %v11403 = vpop.f32.mrb[0].mxu0
    %v11404 = vpop.f32.mrb[0].mxu0
    %v11405 = vadd.f32 %v11308, %v11404
    %v11406 = vpop.f32.mrb[0].mxu0
    %11407 = vmatprep.mubr.bf16.mxu0 %v9787
    %11408 = vmatmul.mubr.bf16.gmra.mrb[0].mxu0 %v9786
    %v11409 = vpop.f32.mrb[0].mxu0
    %v11410 = vadd.f32 %v11313, %v11409
    %v11411 = vpop.f32.mrb[0].mxu0
    %v11412 = vpop.f32.mrb[0].mxu0
    %v11413 = vadd.f32 %v11316, %v11412
    %v11414 = vpop.f32.mrb[0].mxu0
    %11415 = vmatprep.mubr.bf16.mxu0 %v9795
    %11416 = vmatmul.mubr.bf16.gmra.mrb[0].mxu0 %v9794
    %v11417 = vpop.f32.mrb[0].mxu0
    %v11418 = vadd.f32 %v11321, %v11417
    %v11419 = vpop.f32.mrb[0].mxu0
    %v11420 = vpop.f32.mrb[0].mxu0
    %v11421 = vadd.f32 %v11324, %v11420
    %v11422 = vpop.f32.mrb[0].mxu0
    %11423 = vmatprep.mubr.bf16.mxu0 %v9803
    %11424 = vmatmul.mubr.bf16.gmra.mrb[0].mxu0 %v9802
    %v11425 = vpop.f32.mrb[0].mxu0
    %v11426 = vadd.f32 %v11329, %v11425
    %v11427 = vpop.f32.mrb[0].mxu0
    %v11428 = vpop.f32.mrb[0].mxu0
    %v11429 = vadd.f32 %v11332, %v11428
    %v11430 = vpop.f32.mrb[0].mxu0
    %11431 = vdwg.mxu0
    %11432 = vmatprep.subr.bf16.mxu0 0
    %11433 = vmatpush1.bf16.msra.mxu0 %v11142
    %11434 = vmatprep.subr.bf16.mxu0 0
    %11435 = vmatpush1.bf16.msra.mxu0 %v11143
    %11436 = vmatprep.subr.bf16.mxu0 0
    %11437 = vmatpush1.bf16.msra.mxu0 %v11144
    %11438 = vmatprep.subr.bf16.mxu0 0
    %11439 = vmatpush1.bf16.msra.mxu0 %v11145
    %11440 = vmatprep.subr.bf16.mxu0 0
    %11441 = vmatpush1.bf16.msra.mxu0 %v11146
    %11442 = vmatprep.subr.bf16.mxu0 0
    %11443 = vmatpush1.bf16.msra.mxu0 %v11147
    %11444 = vmatprep.subr.bf16.mxu0 0
    %11445 = vmatpush1.bf16.msra.mxu0 %v11148
    %11446 = vmatprep.subr.bf16.mxu0 0
    %11447 = vmatpush1.bf16.msra.mxu0 %v11149
    %11448 = vmatprep.subr.bf16.mxu0 0
    %11449 = vmatpush1.bf16.msra.mxu0 %v11150
    %11450 = vmatprep.subr.bf16.mxu0 0
    %11451 = vmatpush1.bf16.msra.mxu0 %v11151
    %11452 = vmatprep.subr.bf16.mxu0 0
    %11453 = vmatpush1.bf16.msra.mxu0 %v11152
    %11454 = vmatprep.subr.bf16.mxu0 0
    %11455 = vmatpush1.bf16.msra.mxu0 %v11153
    %11456 = vmatprep.subr.bf16.mxu0 0
    %11457 = vmatpush1.bf16.msra.mxu0 %v11154
    %11458 = vmatprep.subr.bf16.mxu0 0
    %11459 = vmatpush1.bf16.msra.mxu0 %v11155
    %11460 = vmatprep.subr.bf16.mxu0 0
    %11461 = vmatpush1.bf16.msra.mxu0 %v11156
    %11462 = vmatprep.subr.bf16.mxu0 0
    %11463 = vmatpush1.bf16.msra.mxu0 %v11157
    %11464 = vmatprep.mubr.bf16.mxu0 %v9749
    %11465 = vmatmul.mubr.bf16.gmra.mrb[0].mxu0 %v9748
    %v11466 = vpop.f32.mrb[0].mxu0
    %v11467 = vadd.f32 %v11370, %v11466
    %v11468 = vpop.f32.mrb[0].mxu0
    %v11469 = vpop.f32.mrb[0].mxu0
    %v11470 = vadd.f32 %v11373, %v11469
    %v11471 = vpop.f32.mrb[0].mxu0
    %11472 = vmatprep.mubr.bf16.mxu0 %v9757
    %11473 = vmatmul.mubr.bf16.gmra.mrb[0].mxu0 %v9756
    %v11474 = vpop.f32.mrb[0].mxu0
    %v11475 = vadd.f32 %v11378, %v11474
    %v11476 = vpop.f32.mrb[0].mxu0
    %v11477 = vpop.f32.mrb[0].mxu0
    %v11478 = vadd.f32 %v11381, %v11477
    %v11479 = vpop.f32.mrb[0].mxu0
    %11480 = vmatprep.mubr.bf16.mxu0 %v9765
    %11481 = vmatmul.mubr.bf16.gmra.mrb[0].mxu0 %v9764
    %v11482 = vpop.f32.mrb[0].mxu0
    %v11483 = vadd.f32 %v11386, %v11482
    %v11484 = vpop.f32.mrb[0].mxu0
    %v11485 = vpop.f32.mrb[0].mxu0
    %v11486 = vadd.f32 %v11389, %v11485
    %v11487 = vpop.f32.mrb[0].mxu0
    %11488 = vmatprep.mubr.bf16.mxu0 %v9773
    %11489 = vmatmul.mubr.bf16.gmra.mrb[0].mxu0 %v9772
    %v11490 = vpop.f32.mrb[0].mxu0
    %v11491 = vadd.f32 %v11394, %v11490
    %v11492 = vpop.f32.mrb[0].mxu0
    %v11493 = vpop.f32.mrb[0].mxu0
    %v11494 = vadd.f32 %v11397, %v11493
    %v11495 = vpop.f32.mrb[0].mxu0
    %11496 = vmatprep.mubr.bf16.mxu0 %v9781
    %11497 = vmatmul.mubr.bf16.gmra.mrb[0].mxu0 %v9780
    %v11498 = vpop.f32.mrb[0].mxu0
    %v11499 = vadd.f32 %v11402, %v11498
    %v11500 = vpop.f32.mrb[0].mxu0
    %v11501 = vpop.f32.mrb[0].mxu0
    %v11502 = vadd.f32 %v11405, %v11501
    %v11503 = vpop.f32.mrb[0].mxu0
    %11504 = vmatprep.mubr.bf16.mxu0 %v9789
    %11505 = vmatmul.mubr.bf16.gmra.mrb[0].mxu0 %v9788
    %v11506 = vpop.f32.mrb[0].mxu0
    %v11507 = vadd.f32 %v11410, %v11506
    %v11508 = vpop.f32.mrb[0].mxu0
    %v11509 = vpop.f32.mrb[0].mxu0
    %v11510 = vadd.f32 %v11413, %v11509
    %v11511 = vpop.f32.mrb[0].mxu0
    %11512 = vmatprep.mubr.bf16.mxu0 %v9797
    %11513 = vmatmul.mubr.bf16.gmra.mrb[0].mxu0 %v9796
    %v11514 = vpop.f32.mrb[0].mxu0
    %v11515 = vadd.f32 %v11418, %v11514
    %v11516 = vpop.f32.mrb[0].mxu0
    %v11517 = vpop.f32.mrb[0].mxu0
    %v11518 = vadd.f32 %v11421, %v11517
    %v11519 = vpop.f32.mrb[0].mxu0
    %11520 = vmatprep.mubr.bf16.mxu0 %v9805
    %11521 = vmatmul.mubr.bf16.gmra.mrb[0].mxu0 %v9804
    %v11522 = vpop.f32.mrb[0].mxu0
    %v11523 = vadd.f32 %v11426, %v11522
    %v11524 = vpop.f32.mrb[0].mxu0
    %v11525 = vpop.f32.mrb[0].mxu0
    %v11526 = vadd.f32 %v11429, %v11525
    %v11527 = vpop.f32.mrb[0].mxu0
    %11528 = vdwg.mxu0
    %11529 = vmatprep.subr.bf16.mxu0 0
    %11530 = vmatpush1.bf16.msra.mxu0 %v11158
    %11531 = vmatprep.subr.bf16.mxu0 0
    %11532 = vmatpush1.bf16.msra.mxu0 %v11159
    %11533 = vmatprep.subr.bf16.mxu0 0
    %11534 = vmatpush1.bf16.msra.mxu0 %v11160
    %11535 = vmatprep.subr.bf16.mxu0 0
    %11536 = vmatpush1.bf16.msra.mxu0 %v11161
    %11537 = vmatprep.subr.bf16.mxu0 0
    %11538 = vmatpush1.bf16.msra.mxu0 %v11162
    %11539 = vmatprep.subr.bf16.mxu0 0
    %11540 = vmatpush1.bf16.msra.mxu0 %v11163
    %11541 = vmatprep.subr.bf16.mxu0 0
    %11542 = vmatpush1.bf16.msra.mxu0 %v11164
    %11543 = vmatprep.subr.bf16.mxu0 0
    %11544 = vmatpush1.bf16.msra.mxu0 %v11165
    %11545 = vmatprep.subr.bf16.mxu0 0
    %11546 = vmatpush1.bf16.msra.mxu0 %v11166
    %11547 = vmatprep.subr.bf16.mxu0 0
    %11548 = vmatpush1.bf16.msra.mxu0 %v11167
    %11549 = vmatprep.subr.bf16.mxu0 0
    %11550 = vmatpush1.bf16.msra.mxu0 %v11168
    %11551 = vmatprep.subr.bf16.mxu0 0
    %11552 = vmatpush1.bf16.msra.mxu0 %v11169
    %11553 = vmatprep.subr.bf16.mxu0 0
    %11554 = vmatpush1.bf16.msra.mxu0 %v11170
    %11555 = vmatprep.subr.bf16.mxu0 0
    %11556 = vmatpush1.bf16.msra.mxu0 %v11171
    %11557 = vmatprep.subr.bf16.mxu0 0
    %11558 = vmatpush1.bf16.msra.mxu0 %v11172
    %11559 = vmatprep.subr.bf16.mxu0 0
    %11560 = vmatpush1.bf16.msra.mxu0 %v11173
    %11561 = vmatprep.mubr.bf16.mxu0 %v9751
    %11562 = vmatmul.mubr.bf16.gmra.mrb[0].mxu0 %v9750
    %v11563 = vpop.f32.mrb[0].mxu0
    %v11564 = vadd.f32 %v11467, %v11563
    %v11565 = vpop.f32.mrb[0].mxu0
    %v11566 = vpop.f32.mrb[0].mxu0
    %v11567 = vadd.f32 %v11470, %v11566
    %v11568 = vpop.f32.mrb[0].mxu0
    %11569 = vmatprep.mubr.bf16.mxu0 %v9759
    %11570 = vmatmul.mubr.bf16.gmra.mrb[0].mxu0 %v9758
    %v11571 = vpop.f32.mrb[0].mxu0
    %v11572 = vadd.f32 %v11475, %v11571
    %v11573 = vpop.f32.mrb[0].mxu0
    %v11574 = vpop.f32.mrb[0].mxu0
    %v11575 = vadd.f32 %v11478, %v11574
    %v11576 = vpop.f32.mrb[0].mxu0
    %11577 = vmatprep.mubr.bf16.mxu0 %v9767
    %11578 = vmatmul.mubr.bf16.gmra.mrb[0].mxu0 %v9766
    %v11579 = vpop.f32.mrb[0].mxu0
    %v11580 = vadd.f32 %v11483, %v11579
    %v11581 = vpop.f32.mrb[0].mxu0
    %v11582 = vpop.f32.mrb[0].mxu0
    %v11583 = vadd.f32 %v11486, %v11582
    %v11584 = vpop.f32.mrb[0].mxu0
    %11585 = vmatprep.mubr.bf16.mxu0 %v9775
    %11586 = vmatmul.mubr.bf16.gmra.mrb[0].mxu0 %v9774
    %v11587 = vpop.f32.mrb[0].mxu0
    %v11588 = vadd.f32 %v11491, %v11587
    %v11589 = vpop.f32.mrb[0].mxu0
    %v11590 = vpop.f32.mrb[0].mxu0
    %v11591 = vadd.f32 %v11494, %v11590
    %v11592 = vpop.f32.mrb[0].mxu0
    %11593 = vmatprep.mubr.bf16.mxu0 %v9783
    %11594 = vmatmul.mubr.bf16.gmra.mrb[0].mxu0 %v9782
    %v11595 = vpop.f32.mrb[0].mxu0
    %v11596 = vadd.f32 %v11499, %v11595
    %v11597 = vpop.f32.mrb[0].mxu0
    %v11598 = vpop.f32.mrb[0].mxu0
    %v11599 = vadd.f32 %v11502, %v11598
    %v11600 = vpop.f32.mrb[0].mxu0
    %11601 = vmatprep.mubr.bf16.mxu0 %v9791
    %11602 = vmatmul.mubr.bf16.gmra.mrb[0].mxu0 %v9790
    %v11603 = vpop.f32.mrb[0].mxu0
    %v11604 = vadd.f32 %v11507, %v11603
    %v11605 = vpop.f32.mrb[0].mxu0
    %v11606 = vpop.f32.mrb[0].mxu0
    %v11607 = vadd.f32 %v11510, %v11606
    %v11608 = vpop.f32.mrb[0].mxu0
    %11609 = vmatprep.mubr.bf16.mxu0 %v9799
    %11610 = vmatmul.mubr.bf16.gmra.mrb[0].mxu0 %v9798
    %v11611 = vpop.f32.mrb[0].mxu0
    %v11612 = vadd.f32 %v11515, %v11611
    %v11613 = vpop.f32.mrb[0].mxu0
    %v11614 = vpop.f32.mrb[0].mxu0
    %v11615 = vadd.f32 %v11518, %v11614
    %v11616 = vpop.f32.mrb[0].mxu0
    %11617 = vmatprep.mubr.bf16.mxu0 %v9807
    %11618 = vmatmul.mubr.bf16.gmra.mrb[0].mxu0 %v9806
    %v11619 = vpop.f32.mrb[0].mxu0
    %v11620 = vadd.f32 %v11523, %v11619
    %v11621 = vpop.f32.mrb[0].mxu0
    %v11622 = vpop.f32.mrb[0].mxu0
    %v11623 = vadd.f32 %v11526, %v11622
    %v11624 = vpop.f32.mrb[0].mxu0
    %11625 = vdwg.mxu0
    %v11626 = vadd.f32 %v10709, %v11564
    %v11627 = vadd.f32 %v10710, %v11567
    %v11628 = vadd.f32 %v10711, %v11572
    %v11629 = vadd.f32 %v10712, %v11575
    %v11630 = vadd.f32 %v10713, %v11580
    %v11631 = vadd.f32 %v10714, %v11583
    %v11632 = vadd.f32 %v10715, %v11588
    %v11633 = vadd.f32 %v10716, %v11591
    %v11634 = vadd.f32 %v10717, %v11596
    %v11635 = vadd.f32 %v10718, %v11599
    %v11636 = vadd.f32 %v10719, %v11604
    %v11637 = vadd.f32 %v10720, %v11607
    %v11638 = vadd.f32 %v10721, %v11612
    %v11639 = vadd.f32 %v10722, %v11615
    %v11640 = vadd.f32 %v10723, %v11620
    %v11641 = vadd.f32 %v10724, %v11623
    %s11642 = scalar_lea.vmem [#allocation2], 5632
    %v11643 = vld [vmem:[%s11642] sm:$0xf]
    %v11644 = vld [vmem:[%s11642 + $0x4] sm:$0xf]
    %v11645 = vld [vmem:[%s11642 + $0x8] sm:$0xf]
    %v11646 = vld [vmem:[%s11642 + $0xc] sm:$0xf]
    %v11647 = vld [vmem:[%s11642 + $0x10] sm:$0xf]
    %v11648 = vld [vmem:[%s11642 + $0x14] sm:$0xf]
    %v11649 = vld [vmem:[%s11642 + $0x18] sm:$0xf]
    %v11650 = vld [vmem:[%s11642 + $0x1c] sm:$0xf]
    %v11651 = vld [vmem:[%s11642 + $0x20] sm:$0xf]
    %v11652 = vld [vmem:[%s11642 + $0x24] sm:$0xf]
    %v11653 = vld [vmem:[%s11642 + $0x28] sm:$0xf]
    %v11654 = vld [vmem:[%s11642 + $0x2c] sm:$0xf]
    %v11655 = vld [vmem:[%s11642 + $0x30] sm:$0xf]
    %v11656 = vld [vmem:[%s11642 + $0x34] sm:$0xf]
    %v11657 = vld [vmem:[%s11642 + $0x38] sm:$0xf]
    %v11658 = vld [vmem:[%s11642 + $0x3c] sm:$0xf]
    %v11659 = vld [vmem:[%s11642 + $0x40] sm:$0xf]
    %v11660 = vld [vmem:[%s11642 + $0x44] sm:$0xf]
    %v11661 = vld [vmem:[%s11642 + $0x48] sm:$0xf]
    %v11662 = vld [vmem:[%s11642 + $0x4c] sm:$0xf]
    %v11663 = vld [vmem:[%s11642 + $0x50] sm:$0xf]
    %v11664 = vld [vmem:[%s11642 + $0x54] sm:$0xf]
    %v11665 = vld [vmem:[%s11642 + $0x58] sm:$0xf]
    %v11666 = vld [vmem:[%s11642 + $0x5c] sm:$0xf]
    %v11667 = vld [vmem:[%s11642 + $0x60] sm:$0xf]
    %v11668 = vld [vmem:[%s11642 + $0x64] sm:$0xf]
    %v11669 = vld [vmem:[%s11642 + $0x68] sm:$0xf]
    %v11670 = vld [vmem:[%s11642 + $0x6c] sm:$0xf]
    %v11671 = vld [vmem:[%s11642 + $0x70] sm:$0xf]
    %v11672 = vld [vmem:[%s11642 + $0x74] sm:$0xf]
    %v11673 = vld [vmem:[%s11642 + $0x78] sm:$0xf]
    %v11674 = vld [vmem:[%s11642 + $0x7c] sm:$0xf]
    %v11675 = vld [vmem:[%s11642 + $0x80] sm:$0xf]
    %v11676 = vld [vmem:[%s11642 + $0x84] sm:$0xf]
    %v11677 = vld [vmem:[%s11642 + $0x88] sm:$0xf]
    %v11678 = vld [vmem:[%s11642 + $0x8c] sm:$0xf]
    %v11679 = vld [vmem:[%s11642 + $0x90] sm:$0xf]
    %v11680 = vld [vmem:[%s11642 + $0x94] sm:$0xf]
    %v11681 = vld [vmem:[%s11642 + $0x98] sm:$0xf]
    %v11682 = vld [vmem:[%s11642 + $0x9c] sm:$0xf]
    %v11683 = vld [vmem:[%s11642 + $0xa0] sm:$0xf]
    %v11684 = vld [vmem:[%s11642 + $0xa4] sm:$0xf]
    %v11685 = vld [vmem:[%s11642 + $0xa8] sm:$0xf]
    %v11686 = vld [vmem:[%s11642 + $0xac] sm:$0xf]
    %v11687 = vld [vmem:[%s11642 + $0xb0] sm:$0xf]
    %v11688 = vld [vmem:[%s11642 + $0xb4] sm:$0xf]
    %v11689 = vld [vmem:[%s11642 + $0xb8] sm:$0xf]
    %v11690 = vld [vmem:[%s11642 + $0xbc] sm:$0xf]
    %v11691 = vld [vmem:[%s11642 + $0xc0] sm:$0xf]
    %v11692 = vld [vmem:[%s11642 + $0xc4] sm:$0xf]
    %v11693 = vld [vmem:[%s11642 + $0xc8] sm:$0xf]
    %v11694 = vld [vmem:[%s11642 + $0xcc] sm:$0xf]
    %v11695 = vld [vmem:[%s11642 + $0xd0] sm:$0xf]
    %v11696 = vld [vmem:[%s11642 + $0xd4] sm:$0xf]
    %v11697 = vld [vmem:[%s11642 + $0xd8] sm:$0xf]
    %v11698 = vld [vmem:[%s11642 + $0xdc] sm:$0xf]
    %v11699 = vld [vmem:[%s11642 + $0xe0] sm:$0xf]
    %v11700 = vld [vmem:[%s11642 + $0xe4] sm:$0xf]
    %v11701 = vld [vmem:[%s11642 + $0xe8] sm:$0xf]
    %v11702 = vld [vmem:[%s11642 + $0xec] sm:$0xf]
    %v11703 = vld [vmem:[%s11642 + $0xf0] sm:$0xf]
    %v11704 = vld [vmem:[%s11642 + $0xf4] sm:$0xf]
    %v11705 = vld [vmem:[%s11642 + $0xf8] sm:$0xf]
    %v11706 = vld [vmem:[%s11642 + $0xfc] sm:$0xf]
    %v11707 = vld [vmem:[%s11642 + $0x100] sm:$0xf]
    %v11708 = vld [vmem:[%s11642 + $0x104] sm:$0xf]
    %v11709 = vld [vmem:[%s11642 + $0x108] sm:$0xf]
    %v11710 = vld [vmem:[%s11642 + $0x10c] sm:$0xf]
    %v11711 = vld [vmem:[%s11642 + $0x110] sm:$0xf]
    %v11712 = vld [vmem:[%s11642 + $0x114] sm:$0xf]
    %v11713 = vld [vmem:[%s11642 + $0x118] sm:$0xf]
    %v11714 = vld [vmem:[%s11642 + $0x11c] sm:$0xf]
    %v11715 = vld [vmem:[%s11642 + $0x120] sm:$0xf]
    %v11716 = vld [vmem:[%s11642 + $0x124] sm:$0xf]
    %v11717 = vld [vmem:[%s11642 + $0x128] sm:$0xf]
    %v11718 = vld [vmem:[%s11642 + $0x12c] sm:$0xf]
    %v11719 = vld [vmem:[%s11642 + $0x130] sm:$0xf]
    %v11720 = vld [vmem:[%s11642 + $0x134] sm:$0xf]
    %v11721 = vld [vmem:[%s11642 + $0x138] sm:$0xf]
    %v11722 = vld [vmem:[%s11642 + $0x13c] sm:$0xf]
    %v11723 = vld [vmem:[%s11642 + $0x140] sm:$0xf]
    %v11724 = vld [vmem:[%s11642 + $0x144] sm:$0xf]
    %v11725 = vld [vmem:[%s11642 + $0x148] sm:$0xf]
    %v11726 = vld [vmem:[%s11642 + $0x14c] sm:$0xf]
    %v11727 = vld [vmem:[%s11642 + $0x150] sm:$0xf]
    %v11728 = vld [vmem:[%s11642 + $0x154] sm:$0xf]
    %v11729 = vld [vmem:[%s11642 + $0x158] sm:$0xf]
    %v11730 = vld [vmem:[%s11642 + $0x15c] sm:$0xf]
    %v11731 = vld [vmem:[%s11642 + $0x160] sm:$0xf]
    %v11732 = vld [vmem:[%s11642 + $0x164] sm:$0xf]
    %v11733 = vld [vmem:[%s11642 + $0x168] sm:$0xf]
    %v11734 = vld [vmem:[%s11642 + $0x16c] sm:$0xf]
    %v11735 = vld [vmem:[%s11642 + $0x170] sm:$0xf]
    %v11736 = vld [vmem:[%s11642 + $0x174] sm:$0xf]
    %v11737 = vld [vmem:[%s11642 + $0x178] sm:$0xf]
    %v11738 = vld [vmem:[%s11642 + $0x17c] sm:$0xf]
    %v11739 = vld [vmem:[%s11642 + $0x180] sm:$0xf]
    %v11740 = vld [vmem:[%s11642 + $0x184] sm:$0xf]
    %v11741 = vld [vmem:[%s11642 + $0x188] sm:$0xf]
    %v11742 = vld [vmem:[%s11642 + $0x18c] sm:$0xf]
    %v11743 = vld [vmem:[%s11642 + $0x190] sm:$0xf]
    %v11744 = vld [vmem:[%s11642 + $0x194] sm:$0xf]
    %v11745 = vld [vmem:[%s11642 + $0x198] sm:$0xf]
    %v11746 = vld [vmem:[%s11642 + $0x19c] sm:$0xf]
    %v11747 = vld [vmem:[%s11642 + $0x1a0] sm:$0xf]
    %v11748 = vld [vmem:[%s11642 + $0x1a4] sm:$0xf]
    %v11749 = vld [vmem:[%s11642 + $0x1a8] sm:$0xf]
    %v11750 = vld [vmem:[%s11642 + $0x1ac] sm:$0xf]
    %v11751 = vld [vmem:[%s11642 + $0x1b0] sm:$0xf]
    %v11752 = vld [vmem:[%s11642 + $0x1b4] sm:$0xf]
    %v11753 = vld [vmem:[%s11642 + $0x1b8] sm:$0xf]
    %v11754 = vld [vmem:[%s11642 + $0x1bc] sm:$0xf]
    %v11755 = vld [vmem:[%s11642 + $0x1c0] sm:$0xf]
    %v11756 = vld [vmem:[%s11642 + $0x1c4] sm:$0xf]
    %v11757 = vld [vmem:[%s11642 + $0x1c8] sm:$0xf]
    %v11758 = vld [vmem:[%s11642 + $0x1cc] sm:$0xf]
    %v11759 = vld [vmem:[%s11642 + $0x1d0] sm:$0xf]
    %v11760 = vld [vmem:[%s11642 + $0x1d4] sm:$0xf]
    %v11761 = vld [vmem:[%s11642 + $0x1d8] sm:$0xf]
    %v11762 = vld [vmem:[%s11642 + $0x1dc] sm:$0xf]
    %v11763 = vld [vmem:[%s11642 + $0x1e0] sm:$0xf]
    %v11764 = vld [vmem:[%s11642 + $0x1e4] sm:$0xf]
    %v11765 = vld [vmem:[%s11642 + $0x1e8] sm:$0xf]
    %v11766 = vld [vmem:[%s11642 + $0x1ec] sm:$0xf]
    %v11767 = vld [vmem:[%s11642 + $0x1f0] sm:$0xf]
    %v11768 = vld [vmem:[%s11642 + $0x1f4] sm:$0xf]
    %v11769 = vld [vmem:[%s11642 + $0x1f8] sm:$0xf]
    %v11770 = vld [vmem:[%s11642 + $0x1fc] sm:$0xf]
    %v11899 = vunpack.c.l.b16 %v11643
    %v11900 = vunpack.c.l.b16 %v11644
    %v11901 = vunpack.c.l.b16 %v11645
    %v11902 = vunpack.c.l.b16 %v11646
    %v11903 = vunpack.c.l.b16 %v11647
    %v11904 = vunpack.c.l.b16 %v11648
    %v11905 = vunpack.c.l.b16 %v11649
    %v11906 = vunpack.c.l.b16 %v11650
    %v11907 = vunpack.c.l.b16 %v11651
    %v11908 = vunpack.c.l.b16 %v11652
    %v11909 = vunpack.c.l.b16 %v11653
    %v11910 = vunpack.c.l.b16 %v11654
    %v11911 = vunpack.c.l.b16 %v11655
    %v11912 = vunpack.c.l.b16 %v11656
    %v11913 = vunpack.c.l.b16 %v11657
    %v11914 = vunpack.c.l.b16 %v11658
    %v11915 = vunpack.c.l.b16 %v11659
    %v11916 = vunpack.c.l.b16 %v11660
    %v11917 = vunpack.c.l.b16 %v11661
    %v11918 = vunpack.c.l.b16 %v11662
    %v11919 = vunpack.c.l.b16 %v11663
    %v11920 = vunpack.c.l.b16 %v11664
    %v11921 = vunpack.c.l.b16 %v11665
    %v11922 = vunpack.c.l.b16 %v11666
    %v11923 = vunpack.c.l.b16 %v11667
    %v11924 = vunpack.c.l.b16 %v11668
    %v11925 = vunpack.c.l.b16 %v11669
    %v11926 = vunpack.c.l.b16 %v11670
    %v11927 = vunpack.c.l.b16 %v11671
    %v11928 = vunpack.c.l.b16 %v11672
    %v11929 = vunpack.c.l.b16 %v11673
    %v11930 = vunpack.c.l.b16 %v11674
    %v11931 = vunpack.c.l.b16 %v11675
    %v11932 = vunpack.c.l.b16 %v11676
    %v11933 = vunpack.c.l.b16 %v11677
    %v11934 = vunpack.c.l.b16 %v11678
    %v11935 = vunpack.c.l.b16 %v11679
    %v11936 = vunpack.c.l.b16 %v11680
    %v11937 = vunpack.c.l.b16 %v11681
    %v11938 = vunpack.c.l.b16 %v11682
    %v11939 = vunpack.c.l.b16 %v11683
    %v11940 = vunpack.c.l.b16 %v11684
    %v11941 = vunpack.c.l.b16 %v11685
    %v11942 = vunpack.c.l.b16 %v11686
    %v11943 = vunpack.c.l.b16 %v11687
    %v11944 = vunpack.c.l.b16 %v11688
    %v11945 = vunpack.c.l.b16 %v11689
    %v11946 = vunpack.c.l.b16 %v11690
    %v11947 = vunpack.c.l.b16 %v11691
    %v11948 = vunpack.c.l.b16 %v11692
    %v11949 = vunpack.c.l.b16 %v11693
    %v11950 = vunpack.c.l.b16 %v11694
    %v11951 = vunpack.c.l.b16 %v11695
    %v11952 = vunpack.c.l.b16 %v11696
    %v11953 = vunpack.c.l.b16 %v11697
    %v11954 = vunpack.c.l.b16 %v11698
    %v11955 = vunpack.c.l.b16 %v11699
    %v11956 = vunpack.c.l.b16 %v11700
    %v11957 = vunpack.c.l.b16 %v11701
    %v11958 = vunpack.c.l.b16 %v11702
    %v11959 = vunpack.c.l.b16 %v11703
    %v11960 = vunpack.c.l.b16 %v11704
    %v11961 = vunpack.c.l.b16 %v11705
    %v11962 = vunpack.c.l.b16 %v11706
    %v11963 = vunpack.c.l.b16 %v11707
    %v11964 = vunpack.c.l.b16 %v11708
    %v11965 = vunpack.c.l.b16 %v11709
    %v11966 = vunpack.c.l.b16 %v11710
    %v11967 = vunpack.c.l.b16 %v11711
    %v11968 = vunpack.c.l.b16 %v11712
    %v11969 = vunpack.c.l.b16 %v11713
    %v11970 = vunpack.c.l.b16 %v11714
    %v11971 = vunpack.c.l.b16 %v11715
    %v11972 = vunpack.c.l.b16 %v11716
    %v11973 = vunpack.c.l.b16 %v11717
    %v11974 = vunpack.c.l.b16 %v11718
    %v11975 = vunpack.c.l.b16 %v11719
    %v11976 = vunpack.c.l.b16 %v11720
    %v11977 = vunpack.c.l.b16 %v11721
    %v11978 = vunpack.c.l.b16 %v11722
    %v11979 = vunpack.c.l.b16 %v11723
    %v11980 = vunpack.c.l.b16 %v11724
    %v11981 = vunpack.c.l.b16 %v11725
    %v11982 = vunpack.c.l.b16 %v11726
    %v11983 = vunpack.c.l.b16 %v11727
    %v11984 = vunpack.c.l.b16 %v11728
    %v11985 = vunpack.c.l.b16 %v11729
    %v11986 = vunpack.c.l.b16 %v11730
    %v11987 = vunpack.c.l.b16 %v11731
    %v11988 = vunpack.c.l.b16 %v11732
    %v11989 = vunpack.c.l.b16 %v11733
    %v11990 = vunpack.c.l.b16 %v11734
    %v11991 = vunpack.c.l.b16 %v11735
    %v11992 = vunpack.c.l.b16 %v11736
    %v11993 = vunpack.c.l.b16 %v11737
    %v11994 = vunpack.c.l.b16 %v11738
    %v11995 = vunpack.c.l.b16 %v11739
    %v11996 = vunpack.c.l.b16 %v11740
    %v11997 = vunpack.c.l.b16 %v11741
    %v11998 = vunpack.c.l.b16 %v11742
    %v11999 = vunpack.c.l.b16 %v11743
    %v12000 = vunpack.c.l.b16 %v11744
    %v12001 = vunpack.c.l.b16 %v11745
    %v12002 = vunpack.c.l.b16 %v11746
    %v12003 = vunpack.c.l.b16 %v11747
    %v12004 = vunpack.c.l.b16 %v11748
    %v12005 = vunpack.c.l.b16 %v11749
    %v12006 = vunpack.c.l.b16 %v11750
    %v12007 = vunpack.c.l.b16 %v11751
    %v12008 = vunpack.c.l.b16 %v11752
    %v12009 = vunpack.c.l.b16 %v11753
    %v12010 = vunpack.c.l.b16 %v11754
    %v12011 = vunpack.c.l.b16 %v11755
    %v12012 = vunpack.c.l.b16 %v11756
    %v12013 = vunpack.c.l.b16 %v11757
    %v12014 = vunpack.c.l.b16 %v11758
    %v12015 = vunpack.c.l.b16 %v11759
    %v12016 = vunpack.c.l.b16 %v11760
    %v12017 = vunpack.c.l.b16 %v11761
    %v12018 = vunpack.c.l.b16 %v11762
    %v12019 = vunpack.c.l.b16 %v11763
    %v12020 = vunpack.c.l.b16 %v11764
    %v12021 = vunpack.c.l.b16 %v11765
    %v12022 = vunpack.c.l.b16 %v11766
    %v12023 = vunpack.c.l.b16 %v11767
    %v12024 = vunpack.c.l.b16 %v11768
    %v12025 = vunpack.c.l.b16 %v11769
    %v12026 = vunpack.c.l.b16 %v11770
    %v12027 = vpack.c.b16 %v11900, %v11899
    %v12028 = vpack.c.b16 %v11902, %v11901
    %v12029 = vpack.c.b16 %v11904, %v11903
    %v12030 = vpack.c.b16 %v11906, %v11905
    %v12031 = vpack.c.b16 %v11908, %v11907
    %v12032 = vpack.c.b16 %v11910, %v11909
    %v12033 = vpack.c.b16 %v11912, %v11911
    %v12034 = vpack.c.b16 %v11914, %v11913
    %v12035 = vpack.c.b16 %v11916, %v11915
    %v12036 = vpack.c.b16 %v11918, %v11917
    %v12037 = vpack.c.b16 %v11920, %v11919
    %v12038 = vpack.c.b16 %v11922, %v11921
    %v12039 = vpack.c.b16 %v11924, %v11923
    %v12040 = vpack.c.b16 %v11926, %v11925
    %v12041 = vpack.c.b16 %v11928, %v11927
    %v12042 = vpack.c.b16 %v11930, %v11929
    %v12043 = vpack.c.b16 %v11932, %v11931
    %v12044 = vpack.c.b16 %v11934, %v11933
    %v12045 = vpack.c.b16 %v11936, %v11935
    %v12046 = vpack.c.b16 %v11938, %v11937
    %v12047 = vpack.c.b16 %v11940, %v11939
    %v12048 = vpack.c.b16 %v11942, %v11941
    %v12049 = vpack.c.b16 %v11944, %v11943
    %v12050 = vpack.c.b16 %v11946, %v11945
    %v12051 = vpack.c.b16 %v11948, %v11947
    %v12052 = vpack.c.b16 %v11950, %v11949
    %v12053 = vpack.c.b16 %v11952, %v11951
    %v12054 = vpack.c.b16 %v11954, %v11953
    %v12055 = vpack.c.b16 %v11956, %v11955
    %v12056 = vpack.c.b16 %v11958, %v11957
    %v12057 = vpack.c.b16 %v11960, %v11959
    %v12058 = vpack.c.b16 %v11962, %v11961
    %v12059 = vpack.c.b16 %v11964, %v11963
    %v12060 = vpack.c.b16 %v11966, %v11965
    %v12061 = vpack.c.b16 %v11968, %v11967
    %v12062 = vpack.c.b16 %v11970, %v11969
    %v12063 = vpack.c.b16 %v11972, %v11971
    %v12064 = vpack.c.b16 %v11974, %v11973
    %v12065 = vpack.c.b16 %v11976, %v11975
    %v12066 = vpack.c.b16 %v11978, %v11977
    %v12067 = vpack.c.b16 %v11980, %v11979
    %v12068 = vpack.c.b16 %v11982, %v11981
    %v12069 = vpack.c.b16 %v11984, %v11983
    %v12070 = vpack.c.b16 %v11986, %v11985
    %v12071 = vpack.c.b16 %v11988, %v11987
    %v12072 = vpack.c.b16 %v11990, %v11989
    %v12073 = vpack.c.b16 %v11992, %v11991
    %v12074 = vpack.c.b16 %v11994, %v11993
    %v12075 = vpack.c.b16 %v11996, %v11995
    %v12076 = vpack.c.b16 %v11998, %v11997
    %v12077 = vpack.c.b16 %v12000, %v11999
    %v12078 = vpack.c.b16 %v12002, %v12001
    %v12079 = vpack.c.b16 %v12004, %v12003
    %v12080 = vpack.c.b16 %v12006, %v12005
    %v12081 = vpack.c.b16 %v12008, %v12007
    %v12082 = vpack.c.b16 %v12010, %v12009
    %v12083 = vpack.c.b16 %v12012, %v12011
    %v12084 = vpack.c.b16 %v12014, %v12013
    %v12085 = vpack.c.b16 %v12016, %v12015
    %v12086 = vpack.c.b16 %v12018, %v12017
    %v12087 = vpack.c.b16 %v12020, %v12019
    %v12088 = vpack.c.b16 %v12022, %v12021
    %v12089 = vpack.c.b16 %v12024, %v12023
    %v12090 = vpack.c.b16 %v12026, %v12025
    %12155 = vmatprep.subr.bf16.mxu0 0
    %12156 = vmatpush1.bf16.msra.mxu0 %v12027
    %12157 = vmatprep.subr.bf16.mxu0 0
    %12158 = vmatpush1.bf16.msra.mxu0 %v12028
    %12159 = vmatprep.subr.bf16.mxu0 0
    %12160 = vmatpush1.bf16.msra.mxu0 %v12029
    %12161 = vmatprep.subr.bf16.mxu0 0
    %12162 = vmatpush1.bf16.msra.mxu0 %v12030
    %12163 = vmatprep.subr.bf16.mxu0 0
    %12164 = vmatpush1.bf16.msra.mxu0 %v12031
    %12165 = vmatprep.subr.bf16.mxu0 0
    %12166 = vmatpush1.bf16.msra.mxu0 %v12032
    %12167 = vmatprep.subr.bf16.mxu0 0
    %12168 = vmatpush1.bf16.msra.mxu0 %v12033
    %12169 = vmatprep.subr.bf16.mxu0 0
    %12170 = vmatpush1.bf16.msra.mxu0 %v12034
    %12171 = vmatprep.subr.bf16.mxu0 0
    %12172 = vmatpush1.bf16.msra.mxu0 %v12035
    %12173 = vmatprep.subr.bf16.mxu0 0
    %12174 = vmatpush1.bf16.msra.mxu0 %v12036
    %12175 = vmatprep.subr.bf16.mxu0 0
    %12176 = vmatpush1.bf16.msra.mxu0 %v12037
    %12177 = vmatprep.subr.bf16.mxu0 0
    %12178 = vmatpush1.bf16.msra.mxu0 %v12038
    %12179 = vmatprep.subr.bf16.mxu0 0
    %12180 = vmatpush1.bf16.msra.mxu0 %v12039
    %12181 = vmatprep.subr.bf16.mxu0 0
    %12182 = vmatpush1.bf16.msra.mxu0 %v12040
    %12183 = vmatprep.subr.bf16.mxu0 0
    %12184 = vmatpush1.bf16.msra.mxu0 %v12041
    %12185 = vmatprep.subr.bf16.mxu0 0
    %12186 = vmatpush1.bf16.msra.mxu0 %v12042
    %12187 = vmatprep.mubr.bf16.mxu0 %v9745
    %12188 = vmatmul.mubr.bf16.gmra.mrb[0].mxu0 %v9744
    %v12189 = vpop.f32.mrb[0].mxu0
    %v12190 = vadd.f32 0.0, %v12189
    %v12191 = vpop.f32.mrb[0].mxu0
    %v12192 = vpop.f32.mrb[0].mxu0
    %v12193 = vadd.f32 0.0, %v12192
    %v12194 = vpop.f32.mrb[0].mxu0
    %12195 = vmatprep.mubr.bf16.mxu0 %v9753
    %12196 = vmatmul.mubr.bf16.gmra.mrb[0].mxu0 %v9752
    %v12197 = vpop.f32.mrb[0].mxu0
    %v12198 = vadd.f32 0.0, %v12197
    %v12199 = vpop.f32.mrb[0].mxu0
    %v12200 = vpop.f32.mrb[0].mxu0
    %v12201 = vadd.f32 0.0, %v12200
    %v12202 = vpop.f32.mrb[0].mxu0
    %12203 = vmatprep.mubr.bf16.mxu0 %v9761
    %12204 = vmatmul.mubr.bf16.gmra.mrb[0].mxu0 %v9760
    %v12205 = vpop.f32.mrb[0].mxu0
    %v12206 = vadd.f32 0.0, %v12205
    %v12207 = vpop.f32.mrb[0].mxu0
    %v12208 = vpop.f32.mrb[0].mxu0
    %v12209 = vadd.f32 0.0, %v12208
    %v12210 = vpop.f32.mrb[0].mxu0
    %12211 = vmatprep.mubr.bf16.mxu0 %v9769
    %12212 = vmatmul.mubr.bf16.gmra.mrb[0].mxu0 %v9768
    %v12213 = vpop.f32.mrb[0].mxu0
    %v12214 = vadd.f32 0.0, %v12213
    %v12215 = vpop.f32.mrb[0].mxu0
    %v12216 = vpop.f32.mrb[0].mxu0
    %v12217 = vadd.f32 0.0, %v12216
    %v12218 = vpop.f32.mrb[0].mxu0
    %12219 = vmatprep.mubr.bf16.mxu0 %v9777
    %12220 = vmatmul.mubr.bf16.gmra.mrb[0].mxu0 %v9776
    %v12221 = vpop.f32.mrb[0].mxu0
    %v12222 = vadd.f32 0.0, %v12221
    %v12223 = vpop.f32.mrb[0].mxu0
    %v12224 = vpop.f32.mrb[0].mxu0
    %v12225 = vadd.f32 0.0, %v12224
    %v12226 = vpop.f32.mrb[0].mxu0
    %12227 = vmatprep.mubr.bf16.mxu0 %v9785
    %12228 = vmatmul.mubr.bf16.gmra.mrb[0].mxu0 %v9784
    %v12229 = vpop.f32.mrb[0].mxu0
    %v12230 = vadd.f32 0.0, %v12229
    %v12231 = vpop.f32.mrb[0].mxu0
    %v12232 = vpop.f32.mrb[0].mxu0
    %v12233 = vadd.f32 0.0, %v12232
    %v12234 = vpop.f32.mrb[0].mxu0
    %12235 = vmatprep.mubr.bf16.mxu0 %v9793
    %12236 = vmatmul.mubr.bf16.gmra.mrb[0].mxu0 %v9792
    %v12237 = vpop.f32.mrb[0].mxu0
    %v12238 = vadd.f32 0.0, %v12237
    %v12239 = vpop.f32.mrb[0].mxu0
    %v12240 = vpop.f32.mrb[0].mxu0
    %v12241 = vadd.f32 0.0, %v12240
    %v12242 = vpop.f32.mrb[0].mxu0
    %12243 = vmatprep.mubr.bf16.mxu0 %v9801
    %12244 = vmatmul.mubr.bf16.gmra.mrb[0].mxu0 %v9800
    %v12245 = vpop.f32.mrb[0].mxu0
    %v12246 = vadd.f32 0.0, %v12245
    %v12247 = vpop.f32.mrb[0].mxu0
    %v12248 = vpop.f32.mrb[0].mxu0
    %v12249 = vadd.f32 0.0, %v12248
    %v12250 = vpop.f32.mrb[0].mxu0
    %12251 = vdwg.mxu0
    %12252 = vmatprep.subr.bf16.mxu0 0
    %12253 = vmatpush1.bf16.msra.mxu0 %v12043
    %12254 = vmatprep.subr.bf16.mxu0 0
    %12255 = vmatpush1.bf16.msra.mxu0 %v12044
    %12256 = vmatprep.subr.bf16.mxu0 0
    %12257 = vmatpush1.bf16.msra.mxu0 %v12045
    %12258 = vmatprep.subr.bf16.mxu0 0
    %12259 = vmatpush1.bf16.msra.mxu0 %v12046
    %12260 = vmatprep.subr.bf16.mxu0 0
    %12261 = vmatpush1.bf16.msra.mxu0 %v12047
    %12262 = vmatprep.subr.bf16.mxu0 0
    %12263 = vmatpush1.bf16.msra.mxu0 %v12048
    %12264 = vmatprep.subr.bf16.mxu0 0
    %12265 = vmatpush1.bf16.msra.mxu0 %v12049
    %12266 = vmatprep.subr.bf16.mxu0 0
    %12267 = vmatpush1.bf16.msra.mxu0 %v12050
    %12268 = vmatprep.subr.bf16.mxu0 0
    %12269 = vmatpush1.bf16.msra.mxu0 %v12051
    %12270 = vmatprep.subr.bf16.mxu0 0
    %12271 = vmatpush1.bf16.msra.mxu0 %v12052
    %12272 = vmatprep.subr.bf16.mxu0 0
    %12273 = vmatpush1.bf16.msra.mxu0 %v12053
    %12274 = vmatprep.subr.bf16.mxu0 0
    %12275 = vmatpush1.bf16.msra.mxu0 %v12054
    %12276 = vmatprep.subr.bf16.mxu0 0
    %12277 = vmatpush1.bf16.msra.mxu0 %v12055
    %12278 = vmatprep.subr.bf16.mxu0 0
    %12279 = vmatpush1.bf16.msra.mxu0 %v12056
    %12280 = vmatprep.subr.bf16.mxu0 0
    %12281 = vmatpush1.bf16.msra.mxu0 %v12057
    %12282 = vmatprep.subr.bf16.mxu0 0
    %12283 = vmatpush1.bf16.msra.mxu0 %v12058
    %12284 = vmatprep.mubr.bf16.mxu0 %v9747
    %12285 = vmatmul.mubr.bf16.gmra.mrb[0].mxu0 %v9746
    %v12286 = vpop.f32.mrb[0].mxu0
    %v12287 = vadd.f32 %v12190, %v12286
    %v12288 = vpop.f32.mrb[0].mxu0
    %v12289 = vpop.f32.mrb[0].mxu0
    %v12290 = vadd.f32 %v12193, %v12289
    %v12291 = vpop.f32.mrb[0].mxu0
    %12292 = vmatprep.mubr.bf16.mxu0 %v9755
    %12293 = vmatmul.mubr.bf16.gmra.mrb[0].mxu0 %v9754
    %v12294 = vpop.f32.mrb[0].mxu0
    %v12295 = vadd.f32 %v12198, %v12294
    %v12296 = vpop.f32.mrb[0].mxu0
    %v12297 = vpop.f32.mrb[0].mxu0
    %v12298 = vadd.f32 %v12201, %v12297
    %v12299 = vpop.f32.mrb[0].mxu0
    %12300 = vmatprep.mubr.bf16.mxu0 %v9763
    %12301 = vmatmul.mubr.bf16.gmra.mrb[0].mxu0 %v9762
    %v12302 = vpop.f32.mrb[0].mxu0
    %v12303 = vadd.f32 %v12206, %v12302
    %v12304 = vpop.f32.mrb[0].mxu0
    %v12305 = vpop.f32.mrb[0].mxu0
    %v12306 = vadd.f32 %v12209, %v12305
    %v12307 = vpop.f32.mrb[0].mxu0
    %12308 = vmatprep.mubr.bf16.mxu0 %v9771
    %12309 = vmatmul.mubr.bf16.gmra.mrb[0].mxu0 %v9770
    %v12310 = vpop.f32.mrb[0].mxu0
    %v12311 = vadd.f32 %v12214, %v12310
    %v12312 = vpop.f32.mrb[0].mxu0
    %v12313 = vpop.f32.mrb[0].mxu0
    %v12314 = vadd.f32 %v12217, %v12313
    %v12315 = vpop.f32.mrb[0].mxu0
    %12316 = vmatprep.mubr.bf16.mxu0 %v9779
    %12317 = vmatmul.mubr.bf16.gmra.mrb[0].mxu0 %v9778
    %v12318 = vpop.f32.mrb[0].mxu0
    %v12319 = vadd.f32 %v12222, %v12318
    %v12320 = vpop.f32.mrb[0].mxu0
    %v12321 = vpop.f32.mrb[0].mxu0
    %v12322 = vadd.f32 %v12225, %v12321
    %v12323 = vpop.f32.mrb[0].mxu0
    %12324 = vmatprep.mubr.bf16.mxu0 %v9787
    %12325 = vmatmul.mubr.bf16.gmra.mrb[0].mxu0 %v9786
    %v12326 = vpop.f32.mrb[0].mxu0
    %v12327 = vadd.f32 %v12230, %v12326
    %v12328 = vpop.f32.mrb[0].mxu0
    %v12329 = vpop.f32.mrb[0].mxu0
    %v12330 = vadd.f32 %v12233, %v12329
    %v12331 = vpop.f32.mrb[0].mxu0
    %12332 = vmatprep.mubr.bf16.mxu0 %v9795
    %12333 = vmatmul.mubr.bf16.gmra.mrb[0].mxu0 %v9794
    %v12334 = vpop.f32.mrb[0].mxu0
    %v12335 = vadd.f32 %v12238, %v12334
    %v12336 = vpop.f32.mrb[0].mxu0
    %v12337 = vpop.f32.mrb[0].mxu0
    %v12338 = vadd.f32 %v12241, %v12337
    %v12339 = vpop.f32.mrb[0].mxu0
    %12340 = vmatprep.mubr.bf16.mxu0 %v9803
    %12341 = vmatmul.mubr.bf16.gmra.mrb[0].mxu0 %v9802
    %v12342 = vpop.f32.mrb[0].mxu0
    %v12343 = vadd.f32 %v12246, %v12342
    %v12344 = vpop.f32.mrb[0].mxu0
    %v12345 = vpop.f32.mrb[0].mxu0
    %v12346 = vadd.f32 %v12249, %v12345
    %v12347 = vpop.f32.mrb[0].mxu0
    %12348 = vdwg.mxu0
    %12349 = vmatprep.subr.bf16.mxu0 0
    %12350 = vmatpush1.bf16.msra.mxu0 %v12059
    %12351 = vmatprep.subr.bf16.mxu0 0
    %12352 = vmatpush1.bf16.msra.mxu0 %v12060
    %12353 = vmatprep.subr.bf16.mxu0 0
    %12354 = vmatpush1.bf16.msra.mxu0 %v12061
    %12355 = vmatprep.subr.bf16.mxu0 0
    %12356 = vmatpush1.bf16.msra.mxu0 %v12062
    %12357 = vmatprep.subr.bf16.mxu0 0
    %12358 = vmatpush1.bf16.msra.mxu0 %v12063
    %12359 = vmatprep.subr.bf16.mxu0 0
    %12360 = vmatpush1.bf16.msra.mxu0 %v12064
    %12361 = vmatprep.subr.bf16.mxu0 0
    %12362 = vmatpush1.bf16.msra.mxu0 %v12065
    %12363 = vmatprep.subr.bf16.mxu0 0
    %12364 = vmatpush1.bf16.msra.mxu0 %v12066
    %12365 = vmatprep.subr.bf16.mxu0 0
    %12366 = vmatpush1.bf16.msra.mxu0 %v12067
    %12367 = vmatprep.subr.bf16.mxu0 0
    %12368 = vmatpush1.bf16.msra.mxu0 %v12068
    %12369 = vmatprep.subr.bf16.mxu0 0
    %12370 = vmatpush1.bf16.msra.mxu0 %v12069
    %12371 = vmatprep.subr.bf16.mxu0 0
    %12372 = vmatpush1.bf16.msra.mxu0 %v12070
    %12373 = vmatprep.subr.bf16.mxu0 0
    %12374 = vmatpush1.bf16.msra.mxu0 %v12071
    %12375 = vmatprep.subr.bf16.mxu0 0
    %12376 = vmatpush1.bf16.msra.mxu0 %v12072
    %12377 = vmatprep.subr.bf16.mxu0 0
    %12378 = vmatpush1.bf16.msra.mxu0 %v12073
    %12379 = vmatprep.subr.bf16.mxu0 0
    %12380 = vmatpush1.bf16.msra.mxu0 %v12074
    %12381 = vmatprep.mubr.bf16.mxu0 %v9749
    %12382 = vmatmul.mubr.bf16.gmra.mrb[0].mxu0 %v9748
    %v12383 = vpop.f32.mrb[0].mxu0
    %v12384 = vadd.f32 %v12287, %v12383
    %v12385 = vpop.f32.mrb[0].mxu0
    %v12386 = vpop.f32.mrb[0].mxu0
    %v12387 = vadd.f32 %v12290, %v12386
    %v12388 = vpop.f32.mrb[0].mxu0
    %12389 = vmatprep.mubr.bf16.mxu0 %v9757
    %12390 = vmatmul.mubr.bf16.gmra.mrb[0].mxu0 %v9756
    %v12391 = vpop.f32.mrb[0].mxu0
    %v12392 = vadd.f32 %v12295, %v12391
    %v12393 = vpop.f32.mrb[0].mxu0
    %v12394 = vpop.f32.mrb[0].mxu0
    %v12395 = vadd.f32 %v12298, %v12394
    %v12396 = vpop.f32.mrb[0].mxu0
    %12397 = vmatprep.mubr.bf16.mxu0 %v9765
    %12398 = vmatmul.mubr.bf16.gmra.mrb[0].mxu0 %v9764
    %v12399 = vpop.f32.mrb[0].mxu0
    %v12400 = vadd.f32 %v12303, %v12399
    %v12401 = vpop.f32.mrb[0].mxu0
    %v12402 = vpop.f32.mrb[0].mxu0
    %v12403 = vadd.f32 %v12306, %v12402
    %v12404 = vpop.f32.mrb[0].mxu0
    %12405 = vmatprep.mubr.bf16.mxu0 %v9773
    %12406 = vmatmul.mubr.bf16.gmra.mrb[0].mxu0 %v9772
    %v12407 = vpop.f32.mrb[0].mxu0
    %v12408 = vadd.f32 %v12311, %v12407
    %v12409 = vpop.f32.mrb[0].mxu0
    %v12410 = vpop.f32.mrb[0].mxu0
    %v12411 = vadd.f32 %v12314, %v12410
    %v12412 = vpop.f32.mrb[0].mxu0
    %12413 = vmatprep.mubr.bf16.mxu0 %v9781
    %12414 = vmatmul.mubr.bf16.gmra.mrb[0].mxu0 %v9780
    %v12415 = vpop.f32.mrb[0].mxu0
    %v12416 = vadd.f32 %v12319, %v12415
    %v12417 = vpop.f32.mrb[0].mxu0
    %v12418 = vpop.f32.mrb[0].mxu0
    %v12419 = vadd.f32 %v12322, %v12418
    %v12420 = vpop.f32.mrb[0].mxu0
    %12421 = vmatprep.mubr.bf16.mxu0 %v9789
    %12422 = vmatmul.mubr.bf16.gmra.mrb[0].mxu0 %v9788
    %v12423 = vpop.f32.mrb[0].mxu0
    %v12424 = vadd.f32 %v12327, %v12423
    %v12425 = vpop.f32.mrb[0].mxu0
    %v12426 = vpop.f32.mrb[0].mxu0
    %v12427 = vadd.f32 %v12330, %v12426
    %v12428 = vpop.f32.mrb[0].mxu0
    %12429 = vmatprep.mubr.bf16.mxu0 %v9797
    %12430 = vmatmul.mubr.bf16.gmra.mrb[0].mxu0 %v9796
    %v12431 = vpop.f32.mrb[0].mxu0
    %v12432 = vadd.f32 %v12335, %v12431
    %v12433 = vpop.f32.mrb[0].mxu0
    %v12434 = vpop.f32.mrb[0].mxu0
    %v12435 = vadd.f32 %v12338, %v12434
    %v12436 = vpop.f32.mrb[0].mxu0
    %12437 = vmatprep.mubr.bf16.mxu0 %v9805
    %12438 = vmatmul.mubr.bf16.gmra.mrb[0].mxu0 %v9804
    %v12439 = vpop.f32.mrb[0].mxu0
    %v12440 = vadd.f32 %v12343, %v12439
    %v12441 = vpop.f32.mrb[0].mxu0
    %v12442 = vpop.f32.mrb[0].mxu0
    %v12443 = vadd.f32 %v12346, %v12442
    %v12444 = vpop.f32.mrb[0].mxu0
    %12445 = vdwg.mxu0
    %12446 = vmatprep.subr.bf16.mxu0 0
    %12447 = vmatpush1.bf16.msra.mxu0 %v12075
    %12448 = vmatprep.subr.bf16.mxu0 0
    %12449 = vmatpush1.bf16.msra.mxu0 %v12076
    %12450 = vmatprep.subr.bf16.mxu0 0
    %12451 = vmatpush1.bf16.msra.mxu0 %v12077
    %12452 = vmatprep.subr.bf16.mxu0 0
    %12453 = vmatpush1.bf16.msra.mxu0 %v12078
    %12454 = vmatprep.subr.bf16.mxu0 0
    %12455 = vmatpush1.bf16.msra.mxu0 %v12079
    %12456 = vmatprep.subr.bf16.mxu0 0
    %12457 = vmatpush1.bf16.msra.mxu0 %v12080
    %12458 = vmatprep.subr.bf16.mxu0 0
    %12459 = vmatpush1.bf16.msra.mxu0 %v12081
    %12460 = vmatprep.subr.bf16.mxu0 0
    %12461 = vmatpush1.bf16.msra.mxu0 %v12082
    %12462 = vmatprep.subr.bf16.mxu0 0
    %12463 = vmatpush1.bf16.msra.mxu0 %v12083
    %12464 = vmatprep.subr.bf16.mxu0 0
    %12465 = vmatpush1.bf16.msra.mxu0 %v12084
    %12466 = vmatprep.subr.bf16.mxu0 0
    %12467 = vmatpush1.bf16.msra.mxu0 %v12085
    %12468 = vmatprep.subr.bf16.mxu0 0
    %12469 = vmatpush1.bf16.msra.mxu0 %v12086
    %12470 = vmatprep.subr.bf16.mxu0 0
    %12471 = vmatpush1.bf16.msra.mxu0 %v12087
    %12472 = vmatprep.subr.bf16.mxu0 0
    %12473 = vmatpush1.bf16.msra.mxu0 %v12088
    %12474 = vmatprep.subr.bf16.mxu0 0
    %12475 = vmatpush1.bf16.msra.mxu0 %v12089
    %12476 = vmatprep.subr.bf16.mxu0 0
    %12477 = vmatpush1.bf16.msra.mxu0 %v12090
    %12478 = vmatprep.mubr.bf16.mxu0 %v9751
    %12479 = vmatmul.mubr.bf16.gmra.mrb[0].mxu0 %v9750
    %v12480 = vpop.f32.mrb[0].mxu0
    %v12481 = vadd.f32 %v12384, %v12480
    %v12482 = vpop.f32.mrb[0].mxu0
    %v12483 = vpop.f32.mrb[0].mxu0
    %v12484 = vadd.f32 %v12387, %v12483
    %v12485 = vpop.f32.mrb[0].mxu0
    %12486 = vmatprep.mubr.bf16.mxu0 %v9759
    %12487 = vmatmul.mubr.bf16.gmra.mrb[0].mxu0 %v9758
    %v12488 = vpop.f32.mrb[0].mxu0
    %v12489 = vadd.f32 %v12392, %v12488
    %v12490 = vpop.f32.mrb[0].mxu0
    %v12491 = vpop.f32.mrb[0].mxu0
    %v12492 = vadd.f32 %v12395, %v12491
    %v12493 = vpop.f32.mrb[0].mxu0
    %12494 = vmatprep.mubr.bf16.mxu0 %v9767
    %12495 = vmatmul.mubr.bf16.gmra.mrb[0].mxu0 %v9766
    %v12496 = vpop.f32.mrb[0].mxu0
    %v12497 = vadd.f32 %v12400, %v12496
    %v12498 = vpop.f32.mrb[0].mxu0
    %v12499 = vpop.f32.mrb[0].mxu0
    %v12500 = vadd.f32 %v12403, %v12499
    %v12501 = vpop.f32.mrb[0].mxu0
    %12502 = vmatprep.mubr.bf16.mxu0 %v9775
    %12503 = vmatmul.mubr.bf16.gmra.mrb[0].mxu0 %v9774
    %v12504 = vpop.f32.mrb[0].mxu0
    %v12505 = vadd.f32 %v12408, %v12504
    %v12506 = vpop.f32.mrb[0].mxu0
    %v12507 = vpop.f32.mrb[0].mxu0
    %v12508 = vadd.f32 %v12411, %v12507
    %v12509 = vpop.f32.mrb[0].mxu0
    %12510 = vmatprep.mubr.bf16.mxu0 %v9783
    %12511 = vmatmul.mubr.bf16.gmra.mrb[0].mxu0 %v9782
    %v12512 = vpop.f32.mrb[0].mxu0
    %v12513 = vadd.f32 %v12416, %v12512
    %v12514 = vpop.f32.mrb[0].mxu0
    %v12515 = vpop.f32.mrb[0].mxu0
    %v12516 = vadd.f32 %v12419, %v12515
    %v12517 = vpop.f32.mrb[0].mxu0
    %12518 = vmatprep.mubr.bf16.mxu0 %v9791
    %12519 = vmatmul.mubr.bf16.gmra.mrb[0].mxu0 %v9790
    %v12520 = vpop.f32.mrb[0].mxu0
    %v12521 = vadd.f32 %v12424, %v12520
    %v12522 = vpop.f32.mrb[0].mxu0
    %v12523 = vpop.f32.mrb[0].mxu0
    %v12524 = vadd.f32 %v12427, %v12523
    %v12525 = vpop.f32.mrb[0].mxu0
    %12526 = vmatprep.mubr.bf16.mxu0 %v9799
    %12527 = vmatmul.mubr.bf16.gmra.mrb[0].mxu0 %v9798
    %v12528 = vpop.f32.mrb[0].mxu0
    %v12529 = vadd.f32 %v12432, %v12528
    %v12530 = vpop.f32.mrb[0].mxu0
    %v12531 = vpop.f32.mrb[0].mxu0
    %v12532 = vadd.f32 %v12435, %v12531
    %v12533 = vpop.f32.mrb[0].mxu0
    %12534 = vmatprep.mubr.bf16.mxu0 %v9807
    %12535 = vmatmul.mubr.bf16.gmra.mrb[0].mxu0 %v9806
    %v12536 = vpop.f32.mrb[0].mxu0
    %v12537 = vadd.f32 %v12440, %v12536
    %v12538 = vpop.f32.mrb[0].mxu0
    %v12539 = vpop.f32.mrb[0].mxu0
    %v12540 = vadd.f32 %v12443, %v12539
    %v12541 = vpop.f32.mrb[0].mxu0
    %12542 = vdwg.mxu0
    %v12543 = vadd.f32 %v11626, %v12481
    %v12544 = vadd.f32 %v11627, %v12484
    %v12545 = vadd.f32 %v11628, %v12489
    %v12546 = vadd.f32 %v11629, %v12492
    %v12547 = vadd.f32 %v11630, %v12497
    %v12548 = vadd.f32 %v11631, %v12500
    %v12549 = vadd.f32 %v11632, %v12505
    %v12550 = vadd.f32 %v11633, %v12508
    %v12551 = vadd.f32 %v11634, %v12513
    %v12552 = vadd.f32 %v11635, %v12516
    %v12553 = vadd.f32 %v11636, %v12521
    %v12554 = vadd.f32 %v11637, %v12524
    %v12555 = vadd.f32 %v11638, %v12529
    %v12556 = vadd.f32 %v11639, %v12532
    %v12557 = vadd.f32 %v11640, %v12537
    %v12558 = vadd.f32 %v11641, %v12540
    %12559 = vst [vmem:[#allocation5] sm:$0xff] %v12543
    %12560 = vst [vmem:[#allocation5 + $0x8] sm:$0xff] %v12544
    %12561 = vst [vmem:[#allocation5 + $0x10] sm:$0xff] %v12545
    %12562 = vst [vmem:[#allocation5 + $0x18] sm:$0xff] %v12546
    %12563 = vst [vmem:[#allocation5 + $0x20] sm:$0xff] %v12547
    %12564 = vst [vmem:[#allocation5 + $0x28] sm:$0xff] %v12548
    %12565 = vst [vmem:[#allocation5 + $0x30] sm:$0xff] %v12549
    %12566 = vst [vmem:[#allocation5 + $0x38] sm:$0xff] %v12550
    %12567 = vst [vmem:[#allocation5 + $0x40] sm:$0xff] %v12551
    %12568 = vst [vmem:[#allocation5 + $0x48] sm:$0xff] %v12552
    %12569 = vst [vmem:[#allocation5 + $0x50] sm:$0xff] %v12553
    %12570 = vst [vmem:[#allocation5 + $0x58] sm:$0xff] %v12554
    %12571 = vst [vmem:[#allocation5 + $0x60] sm:$0xff] %v12555
    %12572 = vst [vmem:[#allocation5 + $0x68] sm:$0xff] %v12556
    %12573 = vst [vmem:[#allocation5 + $0x70] sm:$0xff] %v12557
    %12574 = vst [vmem:[#allocation5 + $0x78] sm:$0xff] %v12558
    // Predicated region
    $region14: #{tpu_custom_call.1} parent=1 // pred_check
      _
    $region15: #{tpu_custom_call.1} parent=1 // pred_check_branch
      %12576 = sbr.rel (0) target = $region17
    $region16: #{tpu_custom_call.1} parent=1 // pred_region
      %s12578 = ssub.s32 2048, 2048
      %12579 = vsyncadd [#allocation4], %s12578
      %s12580 = sshll.u32 [#allocation5], 4
      %s12581 = int_to_ptr.vmem [resolvable:$true] %s12580
      %12586 = dma.vmem_to_hbm [thread:$0]  %s12581, 2048, %s2, [#allocation4], 128, 128, 8
    $region17: #{tpu_custom_call.1} parent=1 // pred_fallthru
      _
    // Predicated region
    $region18: #{tpu_custom_call.1} parent=1 // pred_check
      _
    $region19: #{tpu_custom_call.1} parent=1 // pred_check_branch
      %12588 = sbr.rel (0) target = $region21
    $region20: #{tpu_custom_call.1} parent=1 // pred_region
      %12589 = dma.done [#allocation4], 2048
    $region21: #{tpu_custom_call.1} parent=1 // pred_fallthru
      _
    %12590 = vsyncpa [#allocation3], 1
    %12591 = vsyncpa [#allocation4], 1

</llo_original>
